<compile_context>
chip_gen: v5e
topology: v5e:2x2
jax: 0.10.0
libtpu: 0.0.40
codegen_flags: <defaults>
</compile_context>

<pallas_src>
import functools

import jax
import jax.numpy as jnp
from jax.experimental import pallas as pl
from jax.experimental.pallas import tpu as pltpu


def _round_up(x, m):
    return ((x + m - 1) // m) * m


def _pad_gate_cols(w, H, Hp):
    """Pad the last dim (4*H, gate-blocked i|f|g|o) to 4*Hp, padding each gate chunk."""
    if Hp == H:
        return w
    lead = w.shape[:-1]
    w4 = w.reshape(lead + (4, H))
    pad = [(0, 0)] * (len(lead) + 1) + [(0, Hp - H)]
    return jnp.pad(w4, pad).reshape(lead + (4 * Hp,))


def _pad_rows(w, rows_p):
    r = w.shape[0]
    if rows_p == r:
        return w
    return jnp.pad(w, ((0, rows_p - r),) + ((0, 0),) * (w.ndim - 1))


def _const_spec(shape):
    """BlockSpec for weights/biases: same block every grid step.

    Requests single-buffering (they never change across the grid) when the JAX
    version supports pipeline_mode=pl.Buffered(1); falls back silently otherwise.
    """
    idx = lambda bi, tb: (0,) * len(shape)
    try:
        return pl.BlockSpec(shape, idx, pipeline_mode=pl.Buffered(1))
    except (AttributeError, TypeError):
        return pl.BlockSpec(shape, idx)


def _vmem_estimate(L, I, Hp, Op, t_blk, b_blk, wdt_bytes):
    """Rough VMEM footprint (bytes) for the chosen tiling (weights single-buffered)."""
    g = 4 * Hp
    x_blk = 2 * t_blk * b_blk * I * wdt_bytes                       # streamed input, 2 bufs
    weights = ((I * g + Hp * g + (L - 1) * 2 * Hp * g + Hp * Op) * wdt_bytes
               + (L * g + Op) * 4)                                   # biases in f32
    out_blk = 2 * b_blk * Op * 4
    scratch = (L * b_blk * Hp * (wdt_bytes + 4)                      # h (wdt) + c (f32)
               + t_blk * b_blk * g * 4)                              # pre-gate scratch (f32)
    return x_blk + weights + out_blk + scratch


def _lstm_kernel(L, Hp, T, t_blk, guard_pad,
                 x_ref, wih0_ref, b0_ref, wr0_ref, *refs):
    # refs layout (after the 4 named inputs):
    #   (w_ih_ref, w_hh_ref, b_ref) * (L-1)     each (Hp,4Hp),(Hp,4Hp),(1,4Hp)
    #   fc_w_ref (Hp, Op), fc_b_ref (1, Op)
    #   out_ref  (b_blk, Op)
    #   h_ref, c_ref (L, b_blk, Hp)             VMEM scratch, persists over grid
    #   pre_ref (t_blk, b_blk, 4Hp)             VMEM scratch for layer-0 pre-gates
    n_rest = 3 * (L - 1)
    layer_refs = refs[:n_rest]
    fc_w_ref = refs[n_rest]
    fc_b_ref = refs[n_rest + 1]
    out_ref = refs[n_rest + 2]
    h_ref = refs[n_rest + 3]
    c_ref = refs[n_rest + 4]
    pre_ref = refs[n_rest + 5]

    tb = pl.program_id(1)          # time-block index; innermost grid axis ("arbitrary"),
    wdt = wr0_ref.dtype            # so for a fixed batch block tb runs 0..n_tb-1 in order
    b_blk = out_ref.shape[0]
    four_hp = 4 * Hp

    @pl.when(tb == 0)
    def _():
        h_ref[...] = jnp.zeros(h_ref.shape, h_ref.dtype)
        c_ref[...] = jnp.zeros(c_ref.shape, c_ref.dtype)

    # ---- Layer-0 input projection for the whole time block: one MXU call,
    # independent of the recurrence (overlaps with the serial loop below).
    # Bias is added once here (hoisted out of the per-step loop). ----
    x2d = x_ref[...].reshape(t_blk * b_blk, x_ref.shape[-1])
    pre2d = jnp.dot(x2d, wih0_ref[...], preferred_element_type=jnp.float32)
    pre_ref[...] = (pre2d + b0_ref[...]).reshape(t_blk, b_blk, four_hp)

    # Per-layer biases loaded once per grid step (not once per timestep).
    biases = [layer_refs[3 * (l - 1) + 2][...] for l in range(1, L)]

    def cell_update(gates, c_prev):
        # PyTorch gate order i, f, g, o; Hp % 128 == 0 so slices are lane-aligned.
        i_g = jax.nn.sigmoid(gates[:, 0 * Hp:1 * Hp])
        f_g = jax.nn.sigmoid(gates[:, 1 * Hp:2 * Hp])
        g_g = jnp.tanh(gates[:, 2 * Hp:3 * Hp])
        o_g = jax.nn.sigmoid(gates[:, 3 * Hp:4 * Hp])
        c_new = f_g * c_prev + i_g * g_g
        h_new = o_g * jnp.tanh(c_new)
        return h_new, c_new

    def run_step(s, t):
        # Layer 0: only the recurrent matmul sits on the serial critical path.
        gates = pre_ref[s] + jnp.dot(h_ref[0], wr0_ref[...],
                                     preferred_element_type=jnp.float32)
        h_new, c_new = cell_update(gates, c_ref[0])
        h_c = h_new.astype(wdt)
        h_ref[0] = h_c
        c_ref[0] = c_new
        inp = h_c

        # Layers 1..L-1: two back-to-back MXU dots (no concatenate on the
        # critical path); f32 accumulation, f32 gate math.
        for l in range(1, L):
            w_ih_ref = layer_refs[3 * (l - 1)]
            w_hh_ref = layer_refs[3 * (l - 1) + 1]
            gates = (jnp.dot(inp, w_ih_ref[...],
                             preferred_element_type=jnp.float32)
                     + jnp.dot(h_ref[l], w_hh_ref[...],
                               preferred_element_type=jnp.float32)
                     + biases[l - 1])
            h_new, c_new = cell_update(gates, c_ref[l])
            h_c = h_new.astype(wdt)
            h_ref[l] = h_c
            c_ref[l] = c_new
            inp = h_c

        # Final FC on out[:, -1, :]; the output block is revisited across tb and
        # only flushed to HBM after the last time block for this batch block.
        @pl.when(t == T - 1)
        def _(inp=inp):
            out_ref[...] = (jnp.dot(inp, fc_w_ref[...],
                                    preferred_element_type=jnp.float32)
                            + fc_b_ref[...]).astype(out_ref.dtype)

    for s in range(t_blk):                        # unrolled time block
        t = tb * t_blk + s
        if guard_pad:                             # only when T % t_blk != 0
            @pl.when(t < T)
            def _(s=s, t=t):
                run_step(s, t)
        else:
            run_step(s, t)


def lstm_model_forward(x, params, *, t_block=None, b_block=None,
                       weight_dtype=jnp.float32):
    """x: [B, T, input_size] float32; returns [B, output_size] float32.

    weight_dtype=jnp.bfloat16 keeps matmul operands (weights, x, h) in bf16 with
    f32 accumulation / gate math; intended for real TPU MXU use (not exercised in
    the demo because bf16 x bf16 -> f32 dots are unsupported on CPU/interpret).
    """
    B, T, I = x.shape
    layers = params["layers"]
    L = len(layers)
    H = layers[0]["w_hh_T"].shape[0]
    O = params["fc_w_T"].shape[1]

    f32 = jnp.float32
    wdt = weight_dtype
    wdt_bytes = jnp.dtype(wdt).itemsize

    # Lane/sublane-friendly padded sizes.
    Hp = _round_up(H, 128)                    # hidden / per-gate lane width
    Op = _round_up(O, 128)                    # lane-dense output
    if b_block is None:
        # TODO(synk): allow b_block up to 256 on v6e; cap at Bp/2 on v7x so the
        # "parallel" batch axis actually shards across both TensorCores.
        b_block = min(_round_up(B, 8), 128)
    Bp = _round_up(B, b_block)
    n_b = Bp // b_block

    if t_block is None:
        # Prefer a divisor of T (no padded timesteps), capped at 32.
        t_block = min(T, 32)
        for cand in range(t_block, 0, -1):
            if T % cand == 0:
                t_block = cand
                break

    # Size the time block against a conservative VMEM budget and set the scoped
    # VMEM limit explicitly (default limits reject moderate H otherwise).
    VMEM_BUDGET = 48 * 1024 * 1024            # fits v7x's 64 MiB physical with headroom
    est = _vmem_estimate(L, I, Hp, Op, t_block, b_block, wdt_bytes)
    while est > VMEM_BUDGET and t_block > 1:
        t_block = max(1, t_block // 2)
        est = _vmem_estimate(L, I, Hp, Op, t_block, b_block, wdt_bytes)
    Tp = _round_up(T, t_block)
    n_tb = Tp // t_block
    guard_pad = (Tp != T)
    vmem_limit = int(min(max(est * 5 // 4 + (4 << 20), 32 << 20), 100 << 20))

    # ---- streamed input: time-major, padded, matmul dtype (tiny vs 4Hp pre-gates) ----
    x_tm = jnp.transpose(x, (1, 0, 2)).astype(wdt)              # (T, B, I)
    x_tm = jnp.pad(x_tm, ((0, Tp - T), (0, Bp - B), (0, 0)))    # (Tp, Bp, I)

    # ---- weights: padded per gate to Hp lanes; matmul operands in wdt, biases f32 ----
    w_ih0 = _pad_gate_cols(layers[0]["w_ih_T"].astype(f32), H, Hp).astype(wdt)   # (I, 4Hp)
    b0 = _pad_gate_cols(layers[0]["b"].astype(f32), H, Hp)                       # (1, 4Hp)
    wr0 = _pad_rows(_pad_gate_cols(layers[0]["w_hh_T"].astype(f32), H, Hp),
                    Hp).astype(wdt)                                              # (Hp, 4Hp)

    weight_inputs = [w_ih0, b0, wr0]
    weight_specs = [_const_spec((I, 4 * Hp)),
                    _const_spec((1, 4 * Hp)),
                    _const_spec((Hp, 4 * Hp))]
    for l in range(1, L):
        w_ih = _pad_rows(_pad_gate_cols(layers[l]["w_ih_T"].astype(f32), H, Hp),
                         Hp).astype(wdt)                                         # (Hp, 4Hp)
        w_hh = _pad_rows(_pad_gate_cols(layers[l]["w_hh_T"].astype(f32), H, Hp),
                         Hp).astype(wdt)                                         # (Hp, 4Hp)
        b = _pad_gate_cols(layers[l]["b"].astype(f32), H, Hp)                    # (1, 4Hp)
        weight_inputs += [w_ih, w_hh, b]
        weight_specs += [_const_spec((Hp, 4 * Hp)),
                         _const_spec((Hp, 4 * Hp)),
                         _const_spec((1, 4 * Hp))]

    fc_w = jnp.pad(params["fc_w_T"].astype(f32),
                   ((0, Hp - H), (0, Op - O))).astype(wdt)                       # (Hp, Op)
    fc_b = jnp.pad(params["fc_b"].astype(f32), ((0, 0), (0, Op - O)))            # (1, Op)
    weight_inputs += [fc_w, fc_b]
    weight_specs += [_const_spec((Hp, Op)), _const_spec((1, Op))]

    out_p = pl.pallas_call(
        functools.partial(_lstm_kernel, L, Hp, T, t_block, guard_pad),
        out_shape=jax.ShapeDtypeStruct((Bp, Op), jnp.float32),
        grid=(n_b, n_tb),
        in_specs=[pl.BlockSpec((t_block, b_block, I),
                               lambda bi, tb: (tb, bi, 0))] + weight_specs,
        out_specs=pl.BlockSpec((b_block, Op), lambda bi, tb: (bi, 0)),
        scratch_shapes=[pltpu.VMEM((L, b_block, Hp), wdt),           # h per layer
                        pltpu.VMEM((L, b_block, Hp), jnp.float32),   # c per layer
                        pltpu.VMEM((t_block, b_block, 4 * Hp), jnp.float32)],  # pre-gates
        compiler_params=pltpu.CompilerParams(
            # Batch blocks are independent (megacore-parallel); time carries the
            # recurrence and must stay the innermost, sequential axis.
            dimension_semantics=("parallel", "arbitrary"),
            vmem_limit_bytes=vmem_limit),
    )(x_tm, *weight_inputs)

    return out_p[:B, :O]


def init_params(key, input_size, hidden_size, num_layers, output_size):
    """Deterministic init mirroring PyTorch's uniform(-1/sqrt(H), 1/sqrt(H))."""
    k = 1.0 / float(hidden_size) ** 0.5
    layers = []
    for l in range(num_layers):
        in_sz = input_size if l == 0 else hidden_size
        key, k1, k2, k3, k4 = jax.random.split(key, 5)
        w_ih = jax.random.uniform(k1, (4 * hidden_size, in_sz),
                                  minval=-k, maxval=k, dtype=jnp.float32)
        w_hh = jax.random.uniform(k2, (4 * hidden_size, hidden_size),
                                  minval=-k, maxval=k, dtype=jnp.float32)
        b_ih = jax.random.uniform(k3, (4 * hidden_size,), minval=-k, maxval=k,
                                  dtype=jnp.float32)
        b_hh = jax.random.uniform(k4, (4 * hidden_size,), minval=-k, maxval=k,
                                  dtype=jnp.float32)
        layers.append(dict(w_ih_T=w_ih.T, w_hh_T=w_hh.T,
                           b=(b_ih + b_hh)[None, :]))
    key, k5, k6 = jax.random.split(key, 3)
    fc_w = jax.random.uniform(k5, (output_size, hidden_size),
                              minval=-k, maxval=k, dtype=jnp.float32)
    fc_b = jax.random.uniform(k6, (output_size,), minval=-k, maxval=k,
                              dtype=jnp.float32)
    return dict(layers=layers, fc_w_T=fc_w.T, fc_b=fc_b[None, :])


def lstm_model_ref(x, params):
    """Pure-JAX reference (same math) for a correctness check."""
    B, T, I = x.shape
    H = params["layers"][0]["w_hh_T"].shape[0]
    seq = x
    for layer in params["layers"]:
        w_ih_T, w_hh_T, b = layer["w_ih_T"], layer["w_hh_T"], layer["b"]

        def step(carry, x_t, w_ih_T=w_ih_T, w_hh_T=w_hh_T, b=b):
            h, c = carry
            gates = x_t @ w_ih_T + h @ w_hh_T + b
            i = jax.nn.sigmoid(gates[:, 0 * H:1 * H])
            f = jax.nn.sigmoid(gates[:, 1 * H:2 * H])
            g = jnp.tanh(gates[:, 2 * H:3 * H])
            o = jax.nn.sigmoid(gates[:, 3 * H:4 * H])
            c = f * c + i * g
            h = o * jnp.tanh(c)
            return (h, c), h

        init = (jnp.zeros((B, H), jnp.float32), jnp.zeros((B, H), jnp.float32))
        _, hs = jax.lax.scan(step, init, jnp.transpose(seq, (1, 0, 2)))
        seq = jnp.transpose(hs, (1, 0, 2))
    return seq[:, -1, :] @ params["fc_w_T"] + params["fc_b"]


if __name__ == "__main__":
    # Small shapes consistent with the module's forward: x is [B, T, input_size].
    B, T = 2, 8
    input_size, hidden_size, num_layers, output_size = 4, 32, 2, 3

    key = jax.random.PRNGKey(0)
    key, kx = jax.random.split(key)
    x = jax.random.normal(kx, (B, T, input_size), dtype=jnp.float32)
    params = init_params(key, input_size, hidden_size, num_layers, output_size)

    y_ref = jax.block_until_ready(lstm_model_ref(x, params))

    # f32 matmul operands: tight parity with the PyTorch/JAX reference.
    # (bf16 weight_dtype is supported for on-chip use but intentionally not run
    # here: bf16 x bf16 -> f32 dots are unsupported on the CPU/interpret backend.)
    y = jax.block_until_ready(lstm_model_forward(x, params))
    assert y.shape == (B, output_size)
    assert jnp.allclose(y, y_ref, atol=1e-4, rtol=1e-4), (y, y_ref)

    print("KERNEL_OK")
</pallas_src>

<mosaic_0001>
module attributes {stable_mosaic.version = 11 : i64} {
  func.func @_lstm_kernel(%arg0: i32, %arg1: i32, %arg2: memref<8x8x4xf32, #tpu.memory_space<vmem>>, %arg3: memref<4x512xf32, #tpu.memory_space<vmem>>, %arg4: memref<1x512xf32, #tpu.memory_space<vmem>>, %arg5: memref<128x512xf32, #tpu.memory_space<vmem>>, %arg6: memref<128x512xf32, #tpu.memory_space<vmem>>, %arg7: memref<128x512xf32, #tpu.memory_space<vmem>>, %arg8: memref<1x512xf32, #tpu.memory_space<vmem>>, %arg9: memref<128x128xf32, #tpu.memory_space<vmem>>, %arg10: memref<1x128xf32, #tpu.memory_space<vmem>>, %arg11: memref<8x128xf32, #tpu.memory_space<vmem>>, %arg12: memref<2x8x128xf32, #tpu.memory_space<vmem>>, %arg13: memref<2x8x128xf32, #tpu.memory_space<vmem>>, %arg14: memref<8x8x512xf32, #tpu.memory_space<vmem>>) attributes {dimension_semantics = [#tpu.dimension_semantics<parallel>, #tpu.dimension_semantics<arbitrary>], iteration_bounds = array<i64: 1, 1>, scalar_prefetch = 0 : i64, scratch_operands = 3 : i64, tpu.core_type = #tpu.core_type<tc>, window_params = [{transform_indices = @transform_0, window_bounds = array<i64: 8, 8, 4>}, {pipeline_mode = #tpu.pipeline_mode<synchronous>, transform_indices = @transform_1, window_bounds = array<i64: 4, 512>}, {pipeline_mode = #tpu.pipeline_mode<synchronous>, transform_indices = @transform_2, window_bounds = array<i64: 1, 512>}, {pipeline_mode = #tpu.pipeline_mode<synchronous>, transform_indices = @transform_3, window_bounds = array<i64: 128, 512>}, {pipeline_mode = #tpu.pipeline_mode<synchronous>, transform_indices = @transform_4, window_bounds = array<i64: 128, 512>}, {pipeline_mode = #tpu.pipeline_mode<synchronous>, transform_indices = @transform_5, window_bounds = array<i64: 128, 512>}, {pipeline_mode = #tpu.pipeline_mode<synchronous>, transform_indices = @transform_6, window_bounds = array<i64: 1, 512>}, {pipeline_mode = #tpu.pipeline_mode<synchronous>, transform_indices = @transform_7, window_bounds = array<i64: 128, 128>}, {pipeline_mode = #tpu.pipeline_mode<synchronous>, transform_indices = @transform_8, window_bounds = array<i64: 1, 128>}, {transform_indices = @transform_9, window_bounds = array<i64: 8, 128>}]} {
    %c0_i32 = arith.constant 0 : i32
    %0 = arith.cmpi eq, %arg1, %c0_i32 : i32
    %1 = arith.extui %0 : i1 to i32
    %c0_i32_0 = arith.constant 0 : i32
    %2 = arith.cmpi ne, %1, %c0_i32_0 : i32
    scf.if %2 {
      %cst_365 = arith.constant 0.000000e+00 : f32
      %709 = vector.broadcast %cst_365 : f32 to vector<2x8x128xf32>
      %c0_366 = arith.constant 0 : index
      %c0_367 = arith.constant 0 : index
      %c0_368 = arith.constant 0 : index
      %710 = vector.load %arg12[%c0_366, %c0_367, %c0_368] : memref<2x8x128xf32, #tpu.memory_space<vmem>>, vector<2x8x128xf32>
      tpu.vector_store %arg12[%c0_366, %c0_367, %c0_368], %709 {strides = array<i32>} : memref<2x8x128xf32, #tpu.memory_space<vmem>>, vector<2x8x128xf32>,
      %cst_369 = arith.constant 0.000000e+00 : f32
      %711 = vector.broadcast %cst_369 : f32 to vector<2x8x128xf32>
      %c0_370 = arith.constant 0 : index
      %c0_371 = arith.constant 0 : index
      %c0_372 = arith.constant 0 : index
      %712 = vector.load %arg13[%c0_370, %c0_371, %c0_372] : memref<2x8x128xf32, #tpu.memory_space<vmem>>, vector<2x8x128xf32>
      tpu.vector_store %arg13[%c0_370, %c0_371, %c0_372], %711 {strides = array<i32>} : memref<2x8x128xf32, #tpu.memory_space<vmem>>, vector<2x8x128xf32>,
    } else {
    }
    %c0 = arith.constant 0 : index
    %c0_1 = arith.constant 0 : index
    %c0_2 = arith.constant 0 : index
    %3 = vector.load %arg2[%c0, %c0_1, %c0_2] : memref<8x8x4xf32, #tpu.memory_space<vmem>>, vector<8x8x4xf32>
    %4 = vector.shape_cast %3 : vector<8x8x4xf32> to vector<64x4xf32>
    %c0_3 = arith.constant 0 : index
    %c0_4 = arith.constant 0 : index
    %5 = vector.load %arg3[%c0_3, %c0_4] : memref<4x512xf32, #tpu.memory_space<vmem>>, vector<4x512xf32>
    %cst = arith.constant dense<0.000000e+00> : vector<64x512xf32>
    %6 = tpu.matmul %4, %5, %cst {dimension_numbers = #tpu.dot_dimension_numbers<[1], [0], [0], [1], [0, 0, 1, 1], [], []>} : vector<64x4xf32>, vector<4x512xf32>, vector<64x512xf32> -> vector<64x512xf32>
    %c0_5 = arith.constant 0 : index
    %c0_6 = arith.constant 0 : index
    %7 = vector.load %arg4[%c0_5, %c0_6] : memref<1x512xf32, #tpu.memory_space<vmem>>, vector<1x512xf32>
    %8 = vector.broadcast %7 : vector<1x512xf32> to vector<64x512xf32>
    %9 = arith.addf %6, %8 : vector<64x512xf32>
    %10 = vector.shape_cast %9 : vector<64x512xf32> to vector<8x8x512xf32>
    %c0_7 = arith.constant 0 : index
    %c0_8 = arith.constant 0 : index
    %c0_9 = arith.constant 0 : index
    %11 = vector.load %arg14[%c0_7, %c0_8, %c0_9] : memref<8x8x512xf32, #tpu.memory_space<vmem>>, vector<8x8x512xf32>
    tpu.vector_store %arg14[%c0_7, %c0_8, %c0_9], %10 {strides = array<i32>} : memref<8x8x512xf32, #tpu.memory_space<vmem>>, vector<8x8x512xf32>,
    %c0_10 = arith.constant 0 : index
    %c0_11 = arith.constant 0 : index
    %12 = vector.load %arg8[%c0_10, %c0_11] : memref<1x512xf32, #tpu.memory_space<vmem>>, vector<1x512xf32>
    %c8_i32 = arith.constant 8 : i32
    %13 = arith.muli %arg1, %c8_i32 : i32
    %c0_i32_12 = arith.constant 0 : i32
    %14 = arith.addi %13, %c0_i32_12 : i32
    %c0_13 = arith.constant 0 : index
    %c0_14 = arith.constant 0 : index
    %c0_15 = arith.constant 0 : index
    %15 = vector.load %arg14[%c0_13, %c0_14, %c0_15] : memref<8x8x512xf32, #tpu.memory_space<vmem>>, vector<1x8x512xf32>
    %16 = vector.shape_cast %15 : vector<1x8x512xf32> to vector<8x512xf32>
    %c0_16 = arith.constant 0 : index
    %c0_17 = arith.constant 0 : index
    %c0_18 = arith.constant 0 : index
    %17 = vector.load %arg12[%c0_16, %c0_17, %c0_18] : memref<2x8x128xf32, #tpu.memory_space<vmem>>, vector<1x8x128xf32>
    %18 = vector.shape_cast %17 : vector<1x8x128xf32> to vector<8x128xf32>
    %c0_19 = arith.constant 0 : index
    %c0_20 = arith.constant 0 : index
    %19 = vector.load %arg5[%c0_19, %c0_20] : memref<128x512xf32, #tpu.memory_space<vmem>>, vector<128x512xf32>
    %cst_21 = arith.constant dense<0.000000e+00> : vector<8x512xf32>
    %20 = tpu.matmul %18, %19, %cst_21 {dimension_numbers = #tpu.dot_dimension_numbers<[1], [0], [0], [1], [0, 0, 1, 1], [], []>} : vector<8x128xf32>, vector<128x512xf32>, vector<8x512xf32> -> vector<8x512xf32>
    %21 = arith.addf %16, %20 : vector<8x512xf32>
    %c0_22 = arith.constant 0 : index
    %c0_23 = arith.constant 0 : index
    %c0_24 = arith.constant 0 : index
    %22 = vector.load %arg13[%c0_22, %c0_23, %c0_24] : memref<2x8x128xf32, #tpu.memory_space<vmem>>, vector<1x8x128xf32>
    %23 = vector.shape_cast %22 : vector<1x8x128xf32> to vector<8x128xf32>
    %24 = vector.extract_strided_slice %21 {offsets = [0, 0], sizes = [8, 128], strides = [1, 1]} : vector<8x512xf32> to vector<8x128xf32>
    %25 = arith.negf %24 : vector<8x128xf32>
    %26 = math.exp %25 : vector<8x128xf32>
    %cst_25 = arith.constant 1.000000e+00 : f32
    %27 = vector.broadcast %cst_25 : f32 to vector<8x128xf32>
    %28 = arith.addf %27, %26 : vector<8x128xf32>
    %29 = arith.divf %27, %28 : vector<8x128xf32>
    %30 = vector.extract_strided_slice %21 {offsets = [0, 128], sizes = [8, 128], strides = [1, 1]} : vector<8x512xf32> to vector<8x128xf32>
    %31 = arith.negf %30 : vector<8x128xf32>
    %32 = math.exp %31 : vector<8x128xf32>
    %cst_26 = arith.constant 1.000000e+00 : f32
    %33 = vector.broadcast %cst_26 : f32 to vector<8x128xf32>
    %34 = arith.addf %33, %32 : vector<8x128xf32>
    %35 = arith.divf %33, %34 : vector<8x128xf32>
    %36 = vector.extract_strided_slice %21 {offsets = [0, 256], sizes = [8, 128], strides = [1, 1]} : vector<8x512xf32> to vector<8x128xf32>
    %37 = math.tanh %36 : vector<8x128xf32>
    %38 = vector.extract_strided_slice %21 {offsets = [0, 384], sizes = [8, 128], strides = [1, 1]} : vector<8x512xf32> to vector<8x128xf32>
    %39 = arith.negf %38 : vector<8x128xf32>
    %40 = math.exp %39 : vector<8x128xf32>
    %cst_27 = arith.constant 1.000000e+00 : f32
    %41 = vector.broadcast %cst_27 : f32 to vector<8x128xf32>
    %42 = arith.addf %41, %40 : vector<8x128xf32>
    %43 = arith.divf %41, %42 : vector<8x128xf32>
    %44 = arith.mulf %35, %23 : vector<8x128xf32>
    %45 = arith.mulf %29, %37 : vector<8x128xf32>
    %46 = arith.addf %44, %45 : vector<8x128xf32>
    %47 = math.tanh %46 : vector<8x128xf32>
    %48 = arith.mulf %43, %47 : vector<8x128xf32>
    %c0_28 = arith.constant 0 : index
    %c0_29 = arith.constant 0 : index
    %c0_30 = arith.constant 0 : index
    %49 = vector.load %arg12[%c0_28, %c0_29, %c0_30] : memref<2x8x128xf32, #tpu.memory_space<vmem>>, vector<1x8x128xf32>
    %50 = vector.shape_cast %49 : vector<1x8x128xf32> to vector<8x128xf32>
    %51 = vector.shape_cast %48 : vector<8x128xf32> to vector<1x8x128xf32>
    tpu.vector_store %arg12[%c0_28, %c0_29, %c0_30], %51 {strides = array<i32>} : memref<2x8x128xf32, #tpu.memory_space<vmem>>, vector<1x8x128xf32>,
    %c0_31 = arith.constant 0 : index
    %c0_32 = arith.constant 0 : index
    %c0_33 = arith.constant 0 : index
    %52 = vector.load %arg13[%c0_31, %c0_32, %c0_33] : memref<2x8x128xf32, #tpu.memory_space<vmem>>, vector<1x8x128xf32>
    %53 = vector.shape_cast %52 : vector<1x8x128xf32> to vector<8x128xf32>
    %54 = vector.shape_cast %46 : vector<8x128xf32> to vector<1x8x128xf32>
    tpu.vector_store %arg13[%c0_31, %c0_32, %c0_33], %54 {strides = array<i32>} : memref<2x8x128xf32, #tpu.memory_space<vmem>>, vector<1x8x128xf32>,
    %c0_34 = arith.constant 0 : index
    %c0_35 = arith.constant 0 : index
    %55 = vector.load %arg6[%c0_34, %c0_35] : memref<128x512xf32, #tpu.memory_space<vmem>>, vector<128x512xf32>
    %cst_36 = arith.constant dense<0.000000e+00> : vector<8x512xf32>
    %56 = tpu.matmul %48, %55, %cst_36 {dimension_numbers = #tpu.dot_dimension_numbers<[1], [0], [0], [1], [0, 0, 1, 1], [], []>} : vector<8x128xf32>, vector<128x512xf32>, vector<8x512xf32> -> vector<8x512xf32>
    %c1 = arith.constant 1 : index
    %c0_37 = arith.constant 0 : index
    %c0_38 = arith.constant 0 : index
    %57 = vector.load %arg12[%c1, %c0_37, %c0_38] : memref<2x8x128xf32, #tpu.memory_space<vmem>>, vector<1x8x128xf32>
    %58 = vector.shape_cast %57 : vector<1x8x128xf32> to vector<8x128xf32>
    %c0_39 = arith.constant 0 : index
    %c0_40 = arith.constant 0 : index
    %59 = vector.load %arg7[%c0_39, %c0_40] : memref<128x512xf32, #tpu.memory_space<vmem>>, vector<128x512xf32>
    %cst_41 = arith.constant dense<0.000000e+00> : vector<8x512xf32>
    %60 = tpu.matmul %58, %59, %cst_41 {dimension_numbers = #tpu.dot_dimension_numbers<[1], [0], [0], [1], [0, 0, 1, 1], [], []>} : vector<8x128xf32>, vector<128x512xf32>, vector<8x512xf32> -> vector<8x512xf32>
    %61 = arith.addf %56, %60 : vector<8x512xf32>
    %62 = vector.broadcast %12 : vector<1x512xf32> to vector<8x512xf32>
    %63 = arith.addf %61, %62 : vector<8x512xf32>
    %c1_42 = arith.constant 1 : index
    %c0_43 = arith.constant 0 : index
    %c0_44 = arith.constant 0 : index
    %64 = vector.load %arg13[%c1_42, %c0_43, %c0_44] : memref<2x8x128xf32, #tpu.memory_space<vmem>>, vector<1x8x128xf32>
    %65 = vector.shape_cast %64 : vector<1x8x128xf32> to vector<8x128xf32>
    %66 = vector.extract_strided_slice %63 {offsets = [0, 0], sizes = [8, 128], strides = [1, 1]} : vector<8x512xf32> to vector<8x128xf32>
    %67 = arith.negf %66 : vector<8x128xf32>
    %68 = math.exp %67 : vector<8x128xf32>
    %cst_45 = arith.constant 1.000000e+00 : f32
    %69 = vector.broadcast %cst_45 : f32 to vector<8x128xf32>
    %70 = arith.addf %69, %68 : vector<8x128xf32>
    %71 = arith.divf %69, %70 : vector<8x128xf32>
    %72 = vector.extract_strided_slice %63 {offsets = [0, 128], sizes = [8, 128], strides = [1, 1]} : vector<8x512xf32> to vector<8x128xf32>
    %73 = arith.negf %72 : vector<8x128xf32>
    %74 = math.exp %73 : vector<8x128xf32>
    %cst_46 = arith.constant 1.000000e+00 : f32
    %75 = vector.broadcast %cst_46 : f32 to vector<8x128xf32>
    %76 = arith.addf %75, %74 : vector<8x128xf32>
    %77 = arith.divf %75, %76 : vector<8x128xf32>
    %78 = vector.extract_strided_slice %63 {offsets = [0, 256], sizes = [8, 128], strides = [1, 1]} : vector<8x512xf32> to vector<8x128xf32>
    %79 = math.tanh %78 : vector<8x128xf32>
    %80 = vector.extract_strided_slice %63 {offsets = [0, 384], sizes = [8, 128], strides = [1, 1]} : vector<8x512xf32> to vector<8x128xf32>
    %81 = arith.negf %80 : vector<8x128xf32>
    %82 = math.exp %81 : vector<8x128xf32>
    %cst_47 = arith.constant 1.000000e+00 : f32
    %83 = vector.broadcast %cst_47 : f32 to vector<8x128xf32>
    %84 = arith.addf %83, %82 : vector<8x128xf32>
    %85 = arith.divf %83, %84 : vector<8x128xf32>
    %86 = arith.mulf %77, %65 : vector<8x128xf32>
    %87 = arith.mulf %71, %79 : vector<8x128xf32>
    %88 = arith.addf %86, %87 : vector<8x128xf32>
    %89 = math.tanh %88 : vector<8x128xf32>
    %90 = arith.mulf %85, %89 : vector<8x128xf32>
    %c1_48 = arith.constant 1 : index
    %c0_49 = arith.constant 0 : index
    %c0_50 = arith.constant 0 : index
    %91 = vector.load %arg12[%c1_48, %c0_49, %c0_50] : memref<2x8x128xf32, #tpu.memory_space<vmem>>, vector<1x8x128xf32>
    %92 = vector.shape_cast %91 : vector<1x8x128xf32> to vector<8x128xf32>
    %93 = vector.shape_cast %90 : vector<8x128xf32> to vector<1x8x128xf32>
    tpu.vector_store %arg12[%c1_48, %c0_49, %c0_50], %93 {strides = array<i32>} : memref<2x8x128xf32, #tpu.memory_space<vmem>>, vector<1x8x128xf32>,
    %c1_51 = arith.constant 1 : index
    %c0_52 = arith.constant 0 : index
    %c0_53 = arith.constant 0 : index
    %94 = vector.load %arg13[%c1_51, %c0_52, %c0_53] : memref<2x8x128xf32, #tpu.memory_space<vmem>>, vector<1x8x128xf32>
    %95 = vector.shape_cast %94 : vector<1x8x128xf32> to vector<8x128xf32>
    %96 = vector.shape_cast %88 : vector<8x128xf32> to vector<1x8x128xf32>
    tpu.vector_store %arg13[%c1_51, %c0_52, %c0_53], %96 {strides = array<i32>} : memref<2x8x128xf32, #tpu.memory_space<vmem>>, vector<1x8x128xf32>,
    %c7_i32 = arith.constant 7 : i32
    %97 = arith.cmpi eq, %14, %c7_i32 : i32
    %98 = arith.extui %97 : i1 to i32
    %c0_i32_54 = arith.constant 0 : i32
    %99 = arith.cmpi ne, %98, %c0_i32_54 : i32
    scf.if %99 {
      %c0_365 = arith.constant 0 : index
      %c0_366 = arith.constant 0 : index
      %709 = vector.load %arg9[%c0_365, %c0_366] : memref<128x128xf32, #tpu.memory_space<vmem>>, vector<128x128xf32>
      %cst_367 = arith.constant dense<0.000000e+00> : vector<8x128xf32>
      %710 = tpu.matmul %90, %709, %cst_367 {dimension_numbers = #tpu.dot_dimension_numbers<[1], [0], [0], [1], [0, 0, 1, 1], [], []>} : vector<8x128xf32>, vector<128x128xf32>, vector<8x128xf32> -> vector<8x128xf32>
      %c0_368 = arith.constant 0 : index
      %c0_369 = arith.constant 0 : index
      %711 = vector.load %arg10[%c0_368, %c0_369] : memref<1x128xf32, #tpu.memory_space<vmem>>, vector<1x128xf32>
      %712 = vector.broadcast %711 : vector<1x128xf32> to vector<8x128xf32>
      %713 = arith.addf %710, %712 : vector<8x128xf32>
      %c0_370 = arith.constant 0 : index
      %c0_371 = arith.constant 0 : index
      %714 = vector.load %arg11[%c0_370, %c0_371] : memref<8x128xf32, #tpu.memory_space<vmem>>, vector<8x128xf32>
      tpu.vector_store %arg11[%c0_370, %c0_371], %713 {strides = array<i32>} : memref<8x128xf32, #tpu.memory_space<vmem>>, vector<8x128xf32>,
    } else {
    }
    %c8_i32_55 = arith.constant 8 : i32
    %100 = arith.muli %arg1, %c8_i32_55 : i32
    %c1_i32 = arith.constant 1 : i32
    %101 = arith.addi %100, %c1_i32 : i32
    %c1_56 = arith.constant 1 : index
    %c0_57 = arith.constant 0 : index
    %c0_58 = arith.constant 0 : index
    %102 = vector.load %arg14[%c1_56, %c0_57, %c0_58] : memref<8x8x512xf32, #tpu.memory_space<vmem>>, vector<1x8x512xf32>
    %103 = vector.shape_cast %102 : vector<1x8x512xf32> to vector<8x512xf32>
    %c0_59 = arith.constant 0 : index
    %c0_60 = arith.constant 0 : index
    %c0_61 = arith.constant 0 : index
    %104 = vector.load %arg12[%c0_59, %c0_60, %c0_61] : memref<2x8x128xf32, #tpu.memory_space<vmem>>, vector<1x8x128xf32>
    %105 = vector.shape_cast %104 : vector<1x8x128xf32> to vector<8x128xf32>
    %c0_62 = arith.constant 0 : index
    %c0_63 = arith.constant 0 : index
    %106 = vector.load %arg5[%c0_62, %c0_63] : memref<128x512xf32, #tpu.memory_space<vmem>>, vector<128x512xf32>
    %cst_64 = arith.constant dense<0.000000e+00> : vector<8x512xf32>
    %107 = tpu.matmul %105, %106, %cst_64 {dimension_numbers = #tpu.dot_dimension_numbers<[1], [0], [0], [1], [0, 0, 1, 1], [], []>} : vector<8x128xf32>, vector<128x512xf32>, vector<8x512xf32> -> vector<8x512xf32>
    %108 = arith.addf %103, %107 : vector<8x512xf32>
    %c0_65 = arith.constant 0 : index
    %c0_66 = arith.constant 0 : index
    %c0_67 = arith.constant 0 : index
    %109 = vector.load %arg13[%c0_65, %c0_66, %c0_67] : memref<2x8x128xf32, #tpu.memory_space<vmem>>, vector<1x8x128xf32>
    %110 = vector.shape_cast %109 : vector<1x8x128xf32> to vector<8x128xf32>
    %111 = vector.extract_strided_slice %108 {offsets = [0, 0], sizes = [8, 128], strides = [1, 1]} : vector<8x512xf32> to vector<8x128xf32>
    %112 = arith.negf %111 : vector<8x128xf32>
    %113 = math.exp %112 : vector<8x128xf32>
    %cst_68 = arith.constant 1.000000e+00 : f32
    %114 = vector.broadcast %cst_68 : f32 to vector<8x128xf32>
    %115 = arith.addf %114, %113 : vector<8x128xf32>
    %116 = arith.divf %114, %115 : vector<8x128xf32>
    %117 = vector.extract_strided_slice %108 {offsets = [0, 128], sizes = [8, 128], strides = [1, 1]} : vector<8x512xf32> to vector<8x128xf32>
    %118 = arith.negf %117 : vector<8x128xf32>
    %119 = math.exp %118 : vector<8x128xf32>
    %cst_69 = arith.constant 1.000000e+00 : f32
    %120 = vector.broadcast %cst_69 : f32 to vector<8x128xf32>
    %121 = arith.addf %120, %119 : vector<8x128xf32>
    %122 = arith.divf %120, %121 : vector<8x128xf32>
    %123 = vector.extract_strided_slice %108 {offsets = [0, 256], sizes = [8, 128], strides = [1, 1]} : vector<8x512xf32> to vector<8x128xf32>
    %124 = math.tanh %123 : vector<8x128xf32>
    %125 = vector.extract_strided_slice %108 {offsets = [0, 384], sizes = [8, 128], strides = [1, 1]} : vector<8x512xf32> to vector<8x128xf32>
    %126 = arith.negf %125 : vector<8x128xf32>
    %127 = math.exp %126 : vector<8x128xf32>
    %cst_70 = arith.constant 1.000000e+00 : f32
    %128 = vector.broadcast %cst_70 : f32 to vector<8x128xf32>
    %129 = arith.addf %128, %127 : vector<8x128xf32>
    %130 = arith.divf %128, %129 : vector<8x128xf32>
    %131 = arith.mulf %122, %110 : vector<8x128xf32>
    %132 = arith.mulf %116, %124 : vector<8x128xf32>
    %133 = arith.addf %131, %132 : vector<8x128xf32>
    %134 = math.tanh %133 : vector<8x128xf32>
    %135 = arith.mulf %130, %134 : vector<8x128xf32>
    %c0_71 = arith.constant 0 : index
    %c0_72 = arith.constant 0 : index
    %c0_73 = arith.constant 0 : index
    %136 = vector.load %arg12[%c0_71, %c0_72, %c0_73] : memref<2x8x128xf32, #tpu.memory_space<vmem>>, vector<1x8x128xf32>
    %137 = vector.shape_cast %136 : vector<1x8x128xf32> to vector<8x128xf32>
    %138 = vector.shape_cast %135 : vector<8x128xf32> to vector<1x8x128xf32>
    tpu.vector_store %arg12[%c0_71, %c0_72, %c0_73], %138 {strides = array<i32>} : memref<2x8x128xf32, #tpu.memory_space<vmem>>, vector<1x8x128xf32>,
    %c0_74 = arith.constant 0 : index
    %c0_75 = arith.constant 0 : index
    %c0_76 = arith.constant 0 : index
    %139 = vector.load %arg13[%c0_74, %c0_75, %c0_76] : memref<2x8x128xf32, #tpu.memory_space<vmem>>, vector<1x8x128xf32>
    %140 = vector.shape_cast %139 : vector<1x8x128xf32> to vector<8x128xf32>
    %141 = vector.shape_cast %133 : vector<8x128xf32> to vector<1x8x128xf32>
    tpu.vector_store %arg13[%c0_74, %c0_75, %c0_76], %141 {strides = array<i32>} : memref<2x8x128xf32, #tpu.memory_space<vmem>>, vector<1x8x128xf32>,
    %c0_77 = arith.constant 0 : index
    %c0_78 = arith.constant 0 : index
    %142 = vector.load %arg6[%c0_77, %c0_78] : memref<128x512xf32, #tpu.memory_space<vmem>>, vector<128x512xf32>
    %cst_79 = arith.constant dense<0.000000e+00> : vector<8x512xf32>
    %143 = tpu.matmul %135, %142, %cst_79 {dimension_numbers = #tpu.dot_dimension_numbers<[1], [0], [0], [1], [0, 0, 1, 1], [], []>} : vector<8x128xf32>, vector<128x512xf32>, vector<8x512xf32> -> vector<8x512xf32>
    %c1_80 = arith.constant 1 : index
    %c0_81 = arith.constant 0 : index
    %c0_82 = arith.constant 0 : index
    %144 = vector.load %arg12[%c1_80, %c0_81, %c0_82] : memref<2x8x128xf32, #tpu.memory_space<vmem>>, vector<1x8x128xf32>
    %145 = vector.shape_cast %144 : vector<1x8x128xf32> to vector<8x128xf32>
    %c0_83 = arith.constant 0 : index
    %c0_84 = arith.constant 0 : index
    %146 = vector.load %arg7[%c0_83, %c0_84] : memref<128x512xf32, #tpu.memory_space<vmem>>, vector<128x512xf32>
    %cst_85 = arith.constant dense<0.000000e+00> : vector<8x512xf32>
    %147 = tpu.matmul %145, %146, %cst_85 {dimension_numbers = #tpu.dot_dimension_numbers<[1], [0], [0], [1], [0, 0, 1, 1], [], []>} : vector<8x128xf32>, vector<128x512xf32>, vector<8x512xf32> -> vector<8x512xf32>
    %148 = arith.addf %143, %147 : vector<8x512xf32>
    %149 = vector.broadcast %12 : vector<1x512xf32> to vector<8x512xf32>
    %150 = arith.addf %148, %149 : vector<8x512xf32>
    %c1_86 = arith.constant 1 : index
    %c0_87 = arith.constant 0 : index
    %c0_88 = arith.constant 0 : index
    %151 = vector.load %arg13[%c1_86, %c0_87, %c0_88] : memref<2x8x128xf32, #tpu.memory_space<vmem>>, vector<1x8x128xf32>
    %152 = vector.shape_cast %151 : vector<1x8x128xf32> to vector<8x128xf32>
    %153 = vector.extract_strided_slice %150 {offsets = [0, 0], sizes = [8, 128], strides = [1, 1]} : vector<8x512xf32> to vector<8x128xf32>
    %154 = arith.negf %153 : vector<8x128xf32>
    %155 = math.exp %154 : vector<8x128xf32>
    %cst_89 = arith.constant 1.000000e+00 : f32
    %156 = vector.broadcast %cst_89 : f32 to vector<8x128xf32>
    %157 = arith.addf %156, %155 : vector<8x128xf32>
    %158 = arith.divf %156, %157 : vector<8x128xf32>
    %159 = vector.extract_strided_slice %150 {offsets = [0, 128], sizes = [8, 128], strides = [1, 1]} : vector<8x512xf32> to vector<8x128xf32>
    %160 = arith.negf %159 : vector<8x128xf32>
    %161 = math.exp %160 : vector<8x128xf32>
    %cst_90 = arith.constant 1.000000e+00 : f32
    %162 = vector.broadcast %cst_90 : f32 to vector<8x128xf32>
    %163 = arith.addf %162, %161 : vector<8x128xf32>
    %164 = arith.divf %162, %163 : vector<8x128xf32>
    %165 = vector.extract_strided_slice %150 {offsets = [0, 256], sizes = [8, 128], strides = [1, 1]} : vector<8x512xf32> to vector<8x128xf32>
    %166 = math.tanh %165 : vector<8x128xf32>
    %167 = vector.extract_strided_slice %150 {offsets = [0, 384], sizes = [8, 128], strides = [1, 1]} : vector<8x512xf32> to vector<8x128xf32>
    %168 = arith.negf %167 : vector<8x128xf32>
    %169 = math.exp %168 : vector<8x128xf32>
    %cst_91 = arith.constant 1.000000e+00 : f32
    %170 = vector.broadcast %cst_91 : f32 to vector<8x128xf32>
    %171 = arith.addf %170, %169 : vector<8x128xf32>
    %172 = arith.divf %170, %171 : vector<8x128xf32>
    %173 = arith.mulf %164, %152 : vector<8x128xf32>
    %174 = arith.mulf %158, %166 : vector<8x128xf32>
    %175 = arith.addf %173, %174 : vector<8x128xf32>
    %176 = math.tanh %175 : vector<8x128xf32>
    %177 = arith.mulf %172, %176 : vector<8x128xf32>
    %c1_92 = arith.constant 1 : index
    %c0_93 = arith.constant 0 : index
    %c0_94 = arith.constant 0 : index
    %178 = vector.load %arg12[%c1_92, %c0_93, %c0_94] : memref<2x8x128xf32, #tpu.memory_space<vmem>>, vector<1x8x128xf32>
    %179 = vector.shape_cast %178 : vector<1x8x128xf32> to vector<8x128xf32>
    %180 = vector.shape_cast %177 : vector<8x128xf32> to vector<1x8x128xf32>
    tpu.vector_store %arg12[%c1_92, %c0_93, %c0_94], %180 {strides = array<i32>} : memref<2x8x128xf32, #tpu.memory_space<vmem>>, vector<1x8x128xf32>,
    %c1_95 = arith.constant 1 : index
    %c0_96 = arith.constant 0 : index
    %c0_97 = arith.constant 0 : index
    %181 = vector.load %arg13[%c1_95, %c0_96, %c0_97] : memref<2x8x128xf32, #tpu.memory_space<vmem>>, vector<1x8x128xf32>
    %182 = vector.shape_cast %181 : vector<1x8x128xf32> to vector<8x128xf32>
    %183 = vector.shape_cast %175 : vector<8x128xf32> to vector<1x8x128xf32>
    tpu.vector_store %arg13[%c1_95, %c0_96, %c0_97], %183 {strides = array<i32>} : memref<2x8x128xf32, #tpu.memory_space<vmem>>, vector<1x8x128xf32>,
    %c7_i32_98 = arith.constant 7 : i32
    %184 = arith.cmpi eq, %101, %c7_i32_98 : i32
    %185 = arith.extui %184 : i1 to i32
    %c0_i32_99 = arith.constant 0 : i32
    %186 = arith.cmpi ne, %185, %c0_i32_99 : i32
    scf.if %186 {
      %c0_365 = arith.constant 0 : index
      %c0_366 = arith.constant 0 : index
      %709 = vector.load %arg9[%c0_365, %c0_366] : memref<128x128xf32, #tpu.memory_space<vmem>>, vector<128x128xf32>
      %cst_367 = arith.constant dense<0.000000e+00> : vector<8x128xf32>
      %710 = tpu.matmul %177, %709, %cst_367 {dimension_numbers = #tpu.dot_dimension_numbers<[1], [0], [0], [1], [0, 0, 1, 1], [], []>} : vector<8x128xf32>, vector<128x128xf32>, vector<8x128xf32> -> vector<8x128xf32>
      %c0_368 = arith.constant 0 : index
      %c0_369 = arith.constant 0 : index
      %711 = vector.load %arg10[%c0_368, %c0_369] : memref<1x128xf32, #tpu.memory_space<vmem>>, vector<1x128xf32>
      %712 = vector.broadcast %711 : vector<1x128xf32> to vector<8x128xf32>
      %713 = arith.addf %710, %712 : vector<8x128xf32>
      %c0_370 = arith.constant 0 : index
      %c0_371 = arith.constant 0 : index
      %714 = vector.load %arg11[%c0_370, %c0_371] : memref<8x128xf32, #tpu.memory_space<vmem>>, vector<8x128xf32>
      tpu.vector_store %arg11[%c0_370, %c0_371], %713 {strides = array<i32>} : memref<8x128xf32, #tpu.memory_space<vmem>>, vector<8x128xf32>,
    } else {
    }
    %c8_i32_100 = arith.constant 8 : i32
    %187 = arith.muli %arg1, %c8_i32_100 : i32
    %c2_i32 = arith.constant 2 : i32
    %188 = arith.addi %187, %c2_i32 : i32
    %c2 = arith.constant 2 : index
    %c0_101 = arith.constant 0 : index
    %c0_102 = arith.constant 0 : index
    %189 = vector.load %arg14[%c2, %c0_101, %c0_102] : memref<8x8x512xf32, #tpu.memory_space<vmem>>, vector<1x8x512xf32>
    %190 = vector.shape_cast %189 : vector<1x8x512xf32> to vector<8x512xf32>
    %c0_103 = arith.constant 0 : index
    %c0_104 = arith.constant 0 : index
    %c0_105 = arith.constant 0 : index
    %191 = vector.load %arg12[%c0_103, %c0_104, %c0_105] : memref<2x8x128xf32, #tpu.memory_space<vmem>>, vector<1x8x128xf32>
    %192 = vector.shape_cast %191 : vector<1x8x128xf32> to vector<8x128xf32>
    %c0_106 = arith.constant 0 : index
    %c0_107 = arith.constant 0 : index
    %193 = vector.load %arg5[%c0_106, %c0_107] : memref<128x512xf32, #tpu.memory_space<vmem>>, vector<128x512xf32>
    %cst_108 = arith.constant dense<0.000000e+00> : vector<8x512xf32>
    %194 = tpu.matmul %192, %193, %cst_108 {dimension_numbers = #tpu.dot_dimension_numbers<[1], [0], [0], [1], [0, 0, 1, 1], [], []>} : vector<8x128xf32>, vector<128x512xf32>, vector<8x512xf32> -> vector<8x512xf32>
    %195 = arith.addf %190, %194 : vector<8x512xf32>
    %c0_109 = arith.constant 0 : index
    %c0_110 = arith.constant 0 : index
    %c0_111 = arith.constant 0 : index
    %196 = vector.load %arg13[%c0_109, %c0_110, %c0_111] : memref<2x8x128xf32, #tpu.memory_space<vmem>>, vector<1x8x128xf32>
    %197 = vector.shape_cast %196 : vector<1x8x128xf32> to vector<8x128xf32>
    %198 = vector.extract_strided_slice %195 {offsets = [0, 0], sizes = [8, 128], strides = [1, 1]} : vector<8x512xf32> to vector<8x128xf32>
    %199 = arith.negf %198 : vector<8x128xf32>
    %200 = math.exp %199 : vector<8x128xf32>
    %cst_112 = arith.constant 1.000000e+00 : f32
    %201 = vector.broadcast %cst_112 : f32 to vector<8x128xf32>
    %202 = arith.addf %201, %200 : vector<8x128xf32>
    %203 = arith.divf %201, %202 : vector<8x128xf32>
    %204 = vector.extract_strided_slice %195 {offsets = [0, 128], sizes = [8, 128], strides = [1, 1]} : vector<8x512xf32> to vector<8x128xf32>
    %205 = arith.negf %204 : vector<8x128xf32>
    %206 = math.exp %205 : vector<8x128xf32>
    %cst_113 = arith.constant 1.000000e+00 : f32
    %207 = vector.broadcast %cst_113 : f32 to vector<8x128xf32>
    %208 = arith.addf %207, %206 : vector<8x128xf32>
    %209 = arith.divf %207, %208 : vector<8x128xf32>
    %210 = vector.extract_strided_slice %195 {offsets = [0, 256], sizes = [8, 128], strides = [1, 1]} : vector<8x512xf32> to vector<8x128xf32>
    %211 = math.tanh %210 : vector<8x128xf32>
    %212 = vector.extract_strided_slice %195 {offsets = [0, 384], sizes = [8, 128], strides = [1, 1]} : vector<8x512xf32> to vector<8x128xf32>
    %213 = arith.negf %212 : vector<8x128xf32>
    %214 = math.exp %213 : vector<8x128xf32>
    %cst_114 = arith.constant 1.000000e+00 : f32
    %215 = vector.broadcast %cst_114 : f32 to vector<8x128xf32>
    %216 = arith.addf %215, %214 : vector<8x128xf32>
    %217 = arith.divf %215, %216 : vector<8x128xf32>
    %218 = arith.mulf %209, %197 : vector<8x128xf32>
    %219 = arith.mulf %203, %211 : vector<8x128xf32>
    %220 = arith.addf %218, %219 : vector<8x128xf32>
    %221 = math.tanh %220 : vector<8x128xf32>
    %222 = arith.mulf %217, %221 : vector<8x128xf32>
    %c0_115 = arith.constant 0 : index
    %c0_116 = arith.constant 0 : index
    %c0_117 = arith.constant 0 : index
    %223 = vector.load %arg12[%c0_115, %c0_116, %c0_117] : memref<2x8x128xf32, #tpu.memory_space<vmem>>, vector<1x8x128xf32>
    %224 = vector.shape_cast %223 : vector<1x8x128xf32> to vector<8x128xf32>
    %225 = vector.shape_cast %222 : vector<8x128xf32> to vector<1x8x128xf32>
    tpu.vector_store %arg12[%c0_115, %c0_116, %c0_117], %225 {strides = array<i32>} : memref<2x8x128xf32, #tpu.memory_space<vmem>>, vector<1x8x128xf32>,
    %c0_118 = arith.constant 0 : index
    %c0_119 = arith.constant 0 : index
    %c0_120 = arith.constant 0 : index
    %226 = vector.load %arg13[%c0_118, %c0_119, %c0_120] : memref<2x8x128xf32, #tpu.memory_space<vmem>>, vector<1x8x128xf32>
    %227 = vector.shape_cast %226 : vector<1x8x128xf32> to vector<8x128xf32>
    %228 = vector.shape_cast %220 : vector<8x128xf32> to vector<1x8x128xf32>
    tpu.vector_store %arg13[%c0_118, %c0_119, %c0_120], %228 {strides = array<i32>} : memref<2x8x128xf32, #tpu.memory_space<vmem>>, vector<1x8x128xf32>,
    %c0_121 = arith.constant 0 : index
    %c0_122 = arith.constant 0 : index
    %229 = vector.load %arg6[%c0_121, %c0_122] : memref<128x512xf32, #tpu.memory_space<vmem>>, vector<128x512xf32>
    %cst_123 = arith.constant dense<0.000000e+00> : vector<8x512xf32>
    %230 = tpu.matmul %222, %229, %cst_123 {dimension_numbers = #tpu.dot_dimension_numbers<[1], [0], [0], [1], [0, 0, 1, 1], [], []>} : vector<8x128xf32>, vector<128x512xf32>, vector<8x512xf32> -> vector<8x512xf32>
    %c1_124 = arith.constant 1 : index
    %c0_125 = arith.constant 0 : index
    %c0_126 = arith.constant 0 : index
    %231 = vector.load %arg12[%c1_124, %c0_125, %c0_126] : memref<2x8x128xf32, #tpu.memory_space<vmem>>, vector<1x8x128xf32>
    %232 = vector.shape_cast %231 : vector<1x8x128xf32> to vector<8x128xf32>
    %c0_127 = arith.constant 0 : index
    %c0_128 = arith.constant 0 : index
    %233 = vector.load %arg7[%c0_127, %c0_128] : memref<128x512xf32, #tpu.memory_space<vmem>>, vector<128x512xf32>
    %cst_129 = arith.constant dense<0.000000e+00> : vector<8x512xf32>
    %234 = tpu.matmul %232, %233, %cst_129 {dimension_numbers = #tpu.dot_dimension_numbers<[1], [0], [0], [1], [0, 0, 1, 1], [], []>} : vector<8x128xf32>, vector<128x512xf32>, vector<8x512xf32> -> vector<8x512xf32>
    %235 = arith.addf %230, %234 : vector<8x512xf32>
    %236 = vector.broadcast %12 : vector<1x512xf32> to vector<8x512xf32>
    %237 = arith.addf %235, %236 : vector<8x512xf32>
    %c1_130 = arith.constant 1 : index
    %c0_131 = arith.constant 0 : index
    %c0_132 = arith.constant 0 : index
    %238 = vector.load %arg13[%c1_130, %c0_131, %c0_132] : memref<2x8x128xf32, #tpu.memory_space<vmem>>, vector<1x8x128xf32>
    %239 = vector.shape_cast %238 : vector<1x8x128xf32> to vector<8x128xf32>
    %240 = vector.extract_strided_slice %237 {offsets = [0, 0], sizes = [8, 128], strides = [1, 1]} : vector<8x512xf32> to vector<8x128xf32>
    %241 = arith.negf %240 : vector<8x128xf32>
    %242 = math.exp %241 : vector<8x128xf32>
    %cst_133 = arith.constant 1.000000e+00 : f32
    %243 = vector.broadcast %cst_133 : f32 to vector<8x128xf32>
    %244 = arith.addf %243, %242 : vector<8x128xf32>
    %245 = arith.divf %243, %244 : vector<8x128xf32>
    %246 = vector.extract_strided_slice %237 {offsets = [0, 128], sizes = [8, 128], strides = [1, 1]} : vector<8x512xf32> to vector<8x128xf32>
    %247 = arith.negf %246 : vector<8x128xf32>
    %248 = math.exp %247 : vector<8x128xf32>
    %cst_134 = arith.constant 1.000000e+00 : f32
    %249 = vector.broadcast %cst_134 : f32 to vector<8x128xf32>
    %250 = arith.addf %249, %248 : vector<8x128xf32>
    %251 = arith.divf %249, %250 : vector<8x128xf32>
    %252 = vector.extract_strided_slice %237 {offsets = [0, 256], sizes = [8, 128], strides = [1, 1]} : vector<8x512xf32> to vector<8x128xf32>
    %253 = math.tanh %252 : vector<8x128xf32>
    %254 = vector.extract_strided_slice %237 {offsets = [0, 384], sizes = [8, 128], strides = [1, 1]} : vector<8x512xf32> to vector<8x128xf32>
    %255 = arith.negf %254 : vector<8x128xf32>
    %256 = math.exp %255 : vector<8x128xf32>
    %cst_135 = arith.constant 1.000000e+00 : f32
    %257 = vector.broadcast %cst_135 : f32 to vector<8x128xf32>
    %258 = arith.addf %257, %256 : vector<8x128xf32>
    %259 = arith.divf %257, %258 : vector<8x128xf32>
    %260 = arith.mulf %251, %239 : vector<8x128xf32>
    %261 = arith.mulf %245, %253 : vector<8x128xf32>
    %262 = arith.addf %260, %261 : vector<8x128xf32>
    %263 = math.tanh %262 : vector<8x128xf32>
    %264 = arith.mulf %259, %263 : vector<8x128xf32>
    %c1_136 = arith.constant 1 : index
    %c0_137 = arith.constant 0 : index
    %c0_138 = arith.constant 0 : index
    %265 = vector.load %arg12[%c1_136, %c0_137, %c0_138] : memref<2x8x128xf32, #tpu.memory_space<vmem>>, vector<1x8x128xf32>
    %266 = vector.shape_cast %265 : vector<1x8x128xf32> to vector<8x128xf32>
    %267 = vector.shape_cast %264 : vector<8x128xf32> to vector<1x8x128xf32>
    tpu.vector_store %arg12[%c1_136, %c0_137, %c0_138], %267 {strides = array<i32>} : memref<2x8x128xf32, #tpu.memory_space<vmem>>, vector<1x8x128xf32>,
    %c1_139 = arith.constant 1 : index
    %c0_140 = arith.constant 0 : index
    %c0_141 = arith.constant 0 : index
    %268 = vector.load %arg13[%c1_139, %c0_140, %c0_141] : memref<2x8x128xf32, #tpu.memory_space<vmem>>, vector<1x8x128xf32>
    %269 = vector.shape_cast %268 : vector<1x8x128xf32> to vector<8x128xf32>
    %270 = vector.shape_cast %262 : vector<8x128xf32> to vector<1x8x128xf32>
    tpu.vector_store %arg13[%c1_139, %c0_140, %c0_141], %270 {strides = array<i32>} : memref<2x8x128xf32, #tpu.memory_space<vmem>>, vector<1x8x128xf32>,
    %c7_i32_142 = arith.constant 7 : i32
    %271 = arith.cmpi eq, %188, %c7_i32_142 : i32
    %272 = arith.extui %271 : i1 to i32
    %c0_i32_143 = arith.constant 0 : i32
    %273 = arith.cmpi ne, %272, %c0_i32_143 : i32
    scf.if %273 {
      %c0_365 = arith.constant 0 : index
      %c0_366 = arith.constant 0 : index
      %709 = vector.load %arg9[%c0_365, %c0_366] : memref<128x128xf32, #tpu.memory_space<vmem>>, vector<128x128xf32>
      %cst_367 = arith.constant dense<0.000000e+00> : vector<8x128xf32>
      %710 = tpu.matmul %264, %709, %cst_367 {dimension_numbers = #tpu.dot_dimension_numbers<[1], [0], [0], [1], [0, 0, 1, 1], [], []>} : vector<8x128xf32>, vector<128x128xf32>, vector<8x128xf32> -> vector<8x128xf32>
      %c0_368 = arith.constant 0 : index
      %c0_369 = arith.constant 0 : index
      %711 = vector.load %arg10[%c0_368, %c0_369] : memref<1x128xf32, #tpu.memory_space<vmem>>, vector<1x128xf32>
      %712 = vector.broadcast %711 : vector<1x128xf32> to vector<8x128xf32>
      %713 = arith.addf %710, %712 : vector<8x128xf32>
      %c0_370 = arith.constant 0 : index
      %c0_371 = arith.constant 0 : index
      %714 = vector.load %arg11[%c0_370, %c0_371] : memref<8x128xf32, #tpu.memory_space<vmem>>, vector<8x128xf32>
      tpu.vector_store %arg11[%c0_370, %c0_371], %713 {strides = array<i32>} : memref<8x128xf32, #tpu.memory_space<vmem>>, vector<8x128xf32>,
    } else {
    }
    %c8_i32_144 = arith.constant 8 : i32
    %274 = arith.muli %arg1, %c8_i32_144 : i32
    %c3_i32 = arith.constant 3 : i32
    %275 = arith.addi %274, %c3_i32 : i32
    %c3 = arith.constant 3 : index
    %c0_145 = arith.constant 0 : index
    %c0_146 = arith.constant 0 : index
    %276 = vector.load %arg14[%c3, %c0_145, %c0_146] : memref<8x8x512xf32, #tpu.memory_space<vmem>>, vector<1x8x512xf32>
    %277 = vector.shape_cast %276 : vector<1x8x512xf32> to vector<8x512xf32>
    %c0_147 = arith.constant 0 : index
    %c0_148 = arith.constant 0 : index
    %c0_149 = arith.constant 0 : index
    %278 = vector.load %arg12[%c0_147, %c0_148, %c0_149] : memref<2x8x128xf32, #tpu.memory_space<vmem>>, vector<1x8x128xf32>
    %279 = vector.shape_cast %278 : vector<1x8x128xf32> to vector<8x128xf32>
    %c0_150 = arith.constant 0 : index
    %c0_151 = arith.constant 0 : index
    %280 = vector.load %arg5[%c0_150, %c0_151] : memref<128x512xf32, #tpu.memory_space<vmem>>, vector<128x512xf32>
    %cst_152 = arith.constant dense<0.000000e+00> : vector<8x512xf32>
    %281 = tpu.matmul %279, %280, %cst_152 {dimension_numbers = #tpu.dot_dimension_numbers<[1], [0], [0], [1], [0, 0, 1, 1], [], []>} : vector<8x128xf32>, vector<128x512xf32>, vector<8x512xf32> -> vector<8x512xf32>
    %282 = arith.addf %277, %281 : vector<8x512xf32>
    %c0_153 = arith.constant 0 : index
    %c0_154 = arith.constant 0 : index
    %c0_155 = arith.constant 0 : index
    %283 = vector.load %arg13[%c0_153, %c0_154, %c0_155] : memref<2x8x128xf32, #tpu.memory_space<vmem>>, vector<1x8x128xf32>
    %284 = vector.shape_cast %283 : vector<1x8x128xf32> to vector<8x128xf32>
    %285 = vector.extract_strided_slice %282 {offsets = [0, 0], sizes = [8, 128], strides = [1, 1]} : vector<8x512xf32> to vector<8x128xf32>
    %286 = arith.negf %285 : vector<8x128xf32>
    %287 = math.exp %286 : vector<8x128xf32>
    %cst_156 = arith.constant 1.000000e+00 : f32
    %288 = vector.broadcast %cst_156 : f32 to vector<8x128xf32>
    %289 = arith.addf %288, %287 : vector<8x128xf32>
    %290 = arith.divf %288, %289 : vector<8x128xf32>
    %291 = vector.extract_strided_slice %282 {offsets = [0, 128], sizes = [8, 128], strides = [1, 1]} : vector<8x512xf32> to vector<8x128xf32>
    %292 = arith.negf %291 : vector<8x128xf32>
    %293 = math.exp %292 : vector<8x128xf32>
    %cst_157 = arith.constant 1.000000e+00 : f32
    %294 = vector.broadcast %cst_157 : f32 to vector<8x128xf32>
    %295 = arith.addf %294, %293 : vector<8x128xf32>
    %296 = arith.divf %294, %295 : vector<8x128xf32>
    %297 = vector.extract_strided_slice %282 {offsets = [0, 256], sizes = [8, 128], strides = [1, 1]} : vector<8x512xf32> to vector<8x128xf32>
    %298 = math.tanh %297 : vector<8x128xf32>
    %299 = vector.extract_strided_slice %282 {offsets = [0, 384], sizes = [8, 128], strides = [1, 1]} : vector<8x512xf32> to vector<8x128xf32>
    %300 = arith.negf %299 : vector<8x128xf32>
    %301 = math.exp %300 : vector<8x128xf32>
    %cst_158 = arith.constant 1.000000e+00 : f32
    %302 = vector.broadcast %cst_158 : f32 to vector<8x128xf32>
    %303 = arith.addf %302, %301 : vector<8x128xf32>
    %304 = arith.divf %302, %303 : vector<8x128xf32>
    %305 = arith.mulf %296, %284 : vector<8x128xf32>
    %306 = arith.mulf %290, %298 : vector<8x128xf32>
    %307 = arith.addf %305, %306 : vector<8x128xf32>
    %308 = math.tanh %307 : vector<8x128xf32>
    %309 = arith.mulf %304, %308 : vector<8x128xf32>
    %c0_159 = arith.constant 0 : index
    %c0_160 = arith.constant 0 : index
    %c0_161 = arith.constant 0 : index
    %310 = vector.load %arg12[%c0_159, %c0_160, %c0_161] : memref<2x8x128xf32, #tpu.memory_space<vmem>>, vector<1x8x128xf32>
    %311 = vector.shape_cast %310 : vector<1x8x128xf32> to vector<8x128xf32>
    %312 = vector.shape_cast %309 : vector<8x128xf32> to vector<1x8x128xf32>
    tpu.vector_store %arg12[%c0_159, %c0_160, %c0_161], %312 {strides = array<i32>} : memref<2x8x128xf32, #tpu.memory_space<vmem>>, vector<1x8x128xf32>,
    %c0_162 = arith.constant 0 : index
    %c0_163 = arith.constant 0 : index
    %c0_164 = arith.constant 0 : index
    %313 = vector.load %arg13[%c0_162, %c0_163, %c0_164] : memref<2x8x128xf32, #tpu.memory_space<vmem>>, vector<1x8x128xf32>
    %314 = vector.shape_cast %313 : vector<1x8x128xf32> to vector<8x128xf32>
    %315 = vector.shape_cast %307 : vector<8x128xf32> to vector<1x8x128xf32>
    tpu.vector_store %arg13[%c0_162, %c0_163, %c0_164], %315 {strides = array<i32>} : memref<2x8x128xf32, #tpu.memory_space<vmem>>, vector<1x8x128xf32>,
    %c0_165 = arith.constant 0 : index
    %c0_166 = arith.constant 0 : index
    %316 = vector.load %arg6[%c0_165, %c0_166] : memref<128x512xf32, #tpu.memory_space<vmem>>, vector<128x512xf32>
    %cst_167 = arith.constant dense<0.000000e+00> : vector<8x512xf32>
    %317 = tpu.matmul %309, %316, %cst_167 {dimension_numbers = #tpu.dot_dimension_numbers<[1], [0], [0], [1], [0, 0, 1, 1], [], []>} : vector<8x128xf32>, vector<128x512xf32>, vector<8x512xf32> -> vector<8x512xf32>
    %c1_168 = arith.constant 1 : index
    %c0_169 = arith.constant 0 : index
    %c0_170 = arith.constant 0 : index
    %318 = vector.load %arg12[%c1_168, %c0_169, %c0_170] : memref<2x8x128xf32, #tpu.memory_space<vmem>>, vector<1x8x128xf32>
    %319 = vector.shape_cast %318 : vector<1x8x128xf32> to vector<8x128xf32>
    %c0_171 = arith.constant 0 : index
    %c0_172 = arith.constant 0 : index
    %320 = vector.load %arg7[%c0_171, %c0_172] : memref<128x512xf32, #tpu.memory_space<vmem>>, vector<128x512xf32>
    %cst_173 = arith.constant dense<0.000000e+00> : vector<8x512xf32>
    %321 = tpu.matmul %319, %320, %cst_173 {dimension_numbers = #tpu.dot_dimension_numbers<[1], [0], [0], [1], [0, 0, 1, 1], [], []>} : vector<8x128xf32>, vector<128x512xf32>, vector<8x512xf32> -> vector<8x512xf32>
    %322 = arith.addf %317, %321 : vector<8x512xf32>
    %323 = vector.broadcast %12 : vector<1x512xf32> to vector<8x512xf32>
    %324 = arith.addf %322, %323 : vector<8x512xf32>
    %c1_174 = arith.constant 1 : index
    %c0_175 = arith.constant 0 : index
    %c0_176 = arith.constant 0 : index
    %325 = vector.load %arg13[%c1_174, %c0_175, %c0_176] : memref<2x8x128xf32, #tpu.memory_space<vmem>>, vector<1x8x128xf32>
    %326 = vector.shape_cast %325 : vector<1x8x128xf32> to vector<8x128xf32>
    %327 = vector.extract_strided_slice %324 {offsets = [0, 0], sizes = [8, 128], strides = [1, 1]} : vector<8x512xf32> to vector<8x128xf32>
    %328 = arith.negf %327 : vector<8x128xf32>
    %329 = math.exp %328 : vector<8x128xf32>
    %cst_177 = arith.constant 1.000000e+00 : f32
    %330 = vector.broadcast %cst_177 : f32 to vector<8x128xf32>
    %331 = arith.addf %330, %329 : vector<8x128xf32>
    %332 = arith.divf %330, %331 : vector<8x128xf32>
    %333 = vector.extract_strided_slice %324 {offsets = [0, 128], sizes = [8, 128], strides = [1, 1]} : vector<8x512xf32> to vector<8x128xf32>
    %334 = arith.negf %333 : vector<8x128xf32>
    %335 = math.exp %334 : vector<8x128xf32>
    %cst_178 = arith.constant 1.000000e+00 : f32
    %336 = vector.broadcast %cst_178 : f32 to vector<8x128xf32>
    %337 = arith.addf %336, %335 : vector<8x128xf32>
    %338 = arith.divf %336, %337 : vector<8x128xf32>
    %339 = vector.extract_strided_slice %324 {offsets = [0, 256], sizes = [8, 128], strides = [1, 1]} : vector<8x512xf32> to vector<8x128xf32>
    %340 = math.tanh %339 : vector<8x128xf32>
    %341 = vector.extract_strided_slice %324 {offsets = [0, 384], sizes = [8, 128], strides = [1, 1]} : vector<8x512xf32> to vector<8x128xf32>
    %342 = arith.negf %341 : vector<8x128xf32>
    %343 = math.exp %342 : vector<8x128xf32>
    %cst_179 = arith.constant 1.000000e+00 : f32
    %344 = vector.broadcast %cst_179 : f32 to vector<8x128xf32>
    %345 = arith.addf %344, %343 : vector<8x128xf32>
    %346 = arith.divf %344, %345 : vector<8x128xf32>
    %347 = arith.mulf %338, %326 : vector<8x128xf32>
    %348 = arith.mulf %332, %340 : vector<8x128xf32>
    %349 = arith.addf %347, %348 : vector<8x128xf32>
    %350 = math.tanh %349 : vector<8x128xf32>
    %351 = arith.mulf %346, %350 : vector<8x128xf32>
    %c1_180 = arith.constant 1 : index
    %c0_181 = arith.constant 0 : index
    %c0_182 = arith.constant 0 : index
    %352 = vector.load %arg12[%c1_180, %c0_181, %c0_182] : memref<2x8x128xf32, #tpu.memory_space<vmem>>, vector<1x8x128xf32>
    %353 = vector.shape_cast %352 : vector<1x8x128xf32> to vector<8x128xf32>
    %354 = vector.shape_cast %351 : vector<8x128xf32> to vector<1x8x128xf32>
    tpu.vector_store %arg12[%c1_180, %c0_181, %c0_182], %354 {strides = array<i32>} : memref<2x8x128xf32, #tpu.memory_space<vmem>>, vector<1x8x128xf32>,
    %c1_183 = arith.constant 1 : index
    %c0_184 = arith.constant 0 : index
    %c0_185 = arith.constant 0 : index
    %355 = vector.load %arg13[%c1_183, %c0_184, %c0_185] : memref<2x8x128xf32, #tpu.memory_space<vmem>>, vector<1x8x128xf32>
    %356 = vector.shape_cast %355 : vector<1x8x128xf32> to vector<8x128xf32>
    %357 = vector.shape_cast %349 : vector<8x128xf32> to vector<1x8x128xf32>
    tpu.vector_store %arg13[%c1_183, %c0_184, %c0_185], %357 {strides = array<i32>} : memref<2x8x128xf32, #tpu.memory_space<vmem>>, vector<1x8x128xf32>,
    %c7_i32_186 = arith.constant 7 : i32
    %358 = arith.cmpi eq, %275, %c7_i32_186 : i32
    %359 = arith.extui %358 : i1 to i32
    %c0_i32_187 = arith.constant 0 : i32
    %360 = arith.cmpi ne, %359, %c0_i32_187 : i32
    scf.if %360 {
      %c0_365 = arith.constant 0 : index
      %c0_366 = arith.constant 0 : index
      %709 = vector.load %arg9[%c0_365, %c0_366] : memref<128x128xf32, #tpu.memory_space<vmem>>, vector<128x128xf32>
      %cst_367 = arith.constant dense<0.000000e+00> : vector<8x128xf32>
      %710 = tpu.matmul %351, %709, %cst_367 {dimension_numbers = #tpu.dot_dimension_numbers<[1], [0], [0], [1], [0, 0, 1, 1], [], []>} : vector<8x128xf32>, vector<128x128xf32>, vector<8x128xf32> -> vector<8x128xf32>
      %c0_368 = arith.constant 0 : index
      %c0_369 = arith.constant 0 : index
      %711 = vector.load %arg10[%c0_368, %c0_369] : memref<1x128xf32, #tpu.memory_space<vmem>>, vector<1x128xf32>
      %712 = vector.broadcast %711 : vector<1x128xf32> to vector<8x128xf32>
      %713 = arith.addf %710, %712 : vector<8x128xf32>
      %c0_370 = arith.constant 0 : index
      %c0_371 = arith.constant 0 : index
      %714 = vector.load %arg11[%c0_370, %c0_371] : memref<8x128xf32, #tpu.memory_space<vmem>>, vector<8x128xf32>
      tpu.vector_store %arg11[%c0_370, %c0_371], %713 {strides = array<i32>} : memref<8x128xf32, #tpu.memory_space<vmem>>, vector<8x128xf32>,
    } else {
    }
    %c8_i32_188 = arith.constant 8 : i32
    %361 = arith.muli %arg1, %c8_i32_188 : i32
    %c4_i32 = arith.constant 4 : i32
    %362 = arith.addi %361, %c4_i32 : i32
    %c4 = arith.constant 4 : index
    %c0_189 = arith.constant 0 : index
    %c0_190 = arith.constant 0 : index
    %363 = vector.load %arg14[%c4, %c0_189, %c0_190] : memref<8x8x512xf32, #tpu.memory_space<vmem>>, vector<1x8x512xf32>
    %364 = vector.shape_cast %363 : vector<1x8x512xf32> to vector<8x512xf32>
    %c0_191 = arith.constant 0 : index
    %c0_192 = arith.constant 0 : index
    %c0_193 = arith.constant 0 : index
    %365 = vector.load %arg12[%c0_191, %c0_192, %c0_193] : memref<2x8x128xf32, #tpu.memory_space<vmem>>, vector<1x8x128xf32>
    %366 = vector.shape_cast %365 : vector<1x8x128xf32> to vector<8x128xf32>
    %c0_194 = arith.constant 0 : index
    %c0_195 = arith.constant 0 : index
    %367 = vector.load %arg5[%c0_194, %c0_195] : memref<128x512xf32, #tpu.memory_space<vmem>>, vector<128x512xf32>
    %cst_196 = arith.constant dense<0.000000e+00> : vector<8x512xf32>
    %368 = tpu.matmul %366, %367, %cst_196 {dimension_numbers = #tpu.dot_dimension_numbers<[1], [0], [0], [1], [0, 0, 1, 1], [], []>} : vector<8x128xf32>, vector<128x512xf32>, vector<8x512xf32> -> vector<8x512xf32>
    %369 = arith.addf %364, %368 : vector<8x512xf32>
    %c0_197 = arith.constant 0 : index
    %c0_198 = arith.constant 0 : index
    %c0_199 = arith.constant 0 : index
    %370 = vector.load %arg13[%c0_197, %c0_198, %c0_199] : memref<2x8x128xf32, #tpu.memory_space<vmem>>, vector<1x8x128xf32>
    %371 = vector.shape_cast %370 : vector<1x8x128xf32> to vector<8x128xf32>
    %372 = vector.extract_strided_slice %369 {offsets = [0, 0], sizes = [8, 128], strides = [1, 1]} : vector<8x512xf32> to vector<8x128xf32>
    %373 = arith.negf %372 : vector<8x128xf32>
    %374 = math.exp %373 : vector<8x128xf32>
    %cst_200 = arith.constant 1.000000e+00 : f32
    %375 = vector.broadcast %cst_200 : f32 to vector<8x128xf32>
    %376 = arith.addf %375, %374 : vector<8x128xf32>
    %377 = arith.divf %375, %376 : vector<8x128xf32>
    %378 = vector.extract_strided_slice %369 {offsets = [0, 128], sizes = [8, 128], strides = [1, 1]} : vector<8x512xf32> to vector<8x128xf32>
    %379 = arith.negf %378 : vector<8x128xf32>
    %380 = math.exp %379 : vector<8x128xf32>
    %cst_201 = arith.constant 1.000000e+00 : f32
    %381 = vector.broadcast %cst_201 : f32 to vector<8x128xf32>
    %382 = arith.addf %381, %380 : vector<8x128xf32>
    %383 = arith.divf %381, %382 : vector<8x128xf32>
    %384 = vector.extract_strided_slice %369 {offsets = [0, 256], sizes = [8, 128], strides = [1, 1]} : vector<8x512xf32> to vector<8x128xf32>
    %385 = math.tanh %384 : vector<8x128xf32>
    %386 = vector.extract_strided_slice %369 {offsets = [0, 384], sizes = [8, 128], strides = [1, 1]} : vector<8x512xf32> to vector<8x128xf32>
    %387 = arith.negf %386 : vector<8x128xf32>
    %388 = math.exp %387 : vector<8x128xf32>
    %cst_202 = arith.constant 1.000000e+00 : f32
    %389 = vector.broadcast %cst_202 : f32 to vector<8x128xf32>
    %390 = arith.addf %389, %388 : vector<8x128xf32>
    %391 = arith.divf %389, %390 : vector<8x128xf32>
    %392 = arith.mulf %383, %371 : vector<8x128xf32>
    %393 = arith.mulf %377, %385 : vector<8x128xf32>
    %394 = arith.addf %392, %393 : vector<8x128xf32>
    %395 = math.tanh %394 : vector<8x128xf32>
    %396 = arith.mulf %391, %395 : vector<8x128xf32>
    %c0_203 = arith.constant 0 : index
    %c0_204 = arith.constant 0 : index
    %c0_205 = arith.constant 0 : index
    %397 = vector.load %arg12[%c0_203, %c0_204, %c0_205] : memref<2x8x128xf32, #tpu.memory_space<vmem>>, vector<1x8x128xf32>
    %398 = vector.shape_cast %397 : vector<1x8x128xf32> to vector<8x128xf32>
    %399 = vector.shape_cast %396 : vector<8x128xf32> to vector<1x8x128xf32>
    tpu.vector_store %arg12[%c0_203, %c0_204, %c0_205], %399 {strides = array<i32>} : memref<2x8x128xf32, #tpu.memory_space<vmem>>, vector<1x8x128xf32>,
    %c0_206 = arith.constant 0 : index
    %c0_207 = arith.constant 0 : index
    %c0_208 = arith.constant 0 : index
    %400 = vector.load %arg13[%c0_206, %c0_207, %c0_208] : memref<2x8x128xf32, #tpu.memory_space<vmem>>, vector<1x8x128xf32>
    %401 = vector.shape_cast %400 : vector<1x8x128xf32> to vector<8x128xf32>
    %402 = vector.shape_cast %394 : vector<8x128xf32> to vector<1x8x128xf32>
    tpu.vector_store %arg13[%c0_206, %c0_207, %c0_208], %402 {strides = array<i32>} : memref<2x8x128xf32, #tpu.memory_space<vmem>>, vector<1x8x128xf32>,
    %c0_209 = arith.constant 0 : index
    %c0_210 = arith.constant 0 : index
    %403 = vector.load %arg6[%c0_209, %c0_210] : memref<128x512xf32, #tpu.memory_space<vmem>>, vector<128x512xf32>
    %cst_211 = arith.constant dense<0.000000e+00> : vector<8x512xf32>
    %404 = tpu.matmul %396, %403, %cst_211 {dimension_numbers = #tpu.dot_dimension_numbers<[1], [0], [0], [1], [0, 0, 1, 1], [], []>} : vector<8x128xf32>, vector<128x512xf32>, vector<8x512xf32> -> vector<8x512xf32>
    %c1_212 = arith.constant 1 : index
    %c0_213 = arith.constant 0 : index
    %c0_214 = arith.constant 0 : index
    %405 = vector.load %arg12[%c1_212, %c0_213, %c0_214] : memref<2x8x128xf32, #tpu.memory_space<vmem>>, vector<1x8x128xf32>
    %406 = vector.shape_cast %405 : vector<1x8x128xf32> to vector<8x128xf32>
    %c0_215 = arith.constant 0 : index
    %c0_216 = arith.constant 0 : index
    %407 = vector.load %arg7[%c0_215, %c0_216] : memref<128x512xf32, #tpu.memory_space<vmem>>, vector<128x512xf32>
    %cst_217 = arith.constant dense<0.000000e+00> : vector<8x512xf32>
    %408 = tpu.matmul %406, %407, %cst_217 {dimension_numbers = #tpu.dot_dimension_numbers<[1], [0], [0], [1], [0, 0, 1, 1], [], []>} : vector<8x128xf32>, vector<128x512xf32>, vector<8x512xf32> -> vector<8x512xf32>
    %409 = arith.addf %404, %408 : vector<8x512xf32>
    %410 = vector.broadcast %12 : vector<1x512xf32> to vector<8x512xf32>
    %411 = arith.addf %409, %410 : vector<8x512xf32>
    %c1_218 = arith.constant 1 : index
    %c0_219 = arith.constant 0 : index
    %c0_220 = arith.constant 0 : index
    %412 = vector.load %arg13[%c1_218, %c0_219, %c0_220] : memref<2x8x128xf32, #tpu.memory_space<vmem>>, vector<1x8x128xf32>
    %413 = vector.shape_cast %412 : vector<1x8x128xf32> to vector<8x128xf32>
    %414 = vector.extract_strided_slice %411 {offsets = [0, 0], sizes = [8, 128], strides = [1, 1]} : vector<8x512xf32> to vector<8x128xf32>
    %415 = arith.negf %414 : vector<8x128xf32>
    %416 = math.exp %415 : vector<8x128xf32>
    %cst_221 = arith.constant 1.000000e+00 : f32
    %417 = vector.broadcast %cst_221 : f32 to vector<8x128xf32>
    %418 = arith.addf %417, %416 : vector<8x128xf32>
    %419 = arith.divf %417, %418 : vector<8x128xf32>
    %420 = vector.extract_strided_slice %411 {offsets = [0, 128], sizes = [8, 128], strides = [1, 1]} : vector<8x512xf32> to vector<8x128xf32>
    %421 = arith.negf %420 : vector<8x128xf32>
    %422 = math.exp %421 : vector<8x128xf32>
    %cst_222 = arith.constant 1.000000e+00 : f32
    %423 = vector.broadcast %cst_222 : f32 to vector<8x128xf32>
    %424 = arith.addf %423, %422 : vector<8x128xf32>
    %425 = arith.divf %423, %424 : vector<8x128xf32>
    %426 = vector.extract_strided_slice %411 {offsets = [0, 256], sizes = [8, 128], strides = [1, 1]} : vector<8x512xf32> to vector<8x128xf32>
    %427 = math.tanh %426 : vector<8x128xf32>
    %428 = vector.extract_strided_slice %411 {offsets = [0, 384], sizes = [8, 128], strides = [1, 1]} : vector<8x512xf32> to vector<8x128xf32>
    %429 = arith.negf %428 : vector<8x128xf32>
    %430 = math.exp %429 : vector<8x128xf32>
    %cst_223 = arith.constant 1.000000e+00 : f32
    %431 = vector.broadcast %cst_223 : f32 to vector<8x128xf32>
    %432 = arith.addf %431, %430 : vector<8x128xf32>
    %433 = arith.divf %431, %432 : vector<8x128xf32>
    %434 = arith.mulf %425, %413 : vector<8x128xf32>
    %435 = arith.mulf %419, %427 : vector<8x128xf32>
    %436 = arith.addf %434, %435 : vector<8x128xf32>
    %437 = math.tanh %436 : vector<8x128xf32>
    %438 = arith.mulf %433, %437 : vector<8x128xf32>
    %c1_224 = arith.constant 1 : index
    %c0_225 = arith.constant 0 : index
    %c0_226 = arith.constant 0 : index
    %439 = vector.load %arg12[%c1_224, %c0_225, %c0_226] : memref<2x8x128xf32, #tpu.memory_space<vmem>>, vector<1x8x128xf32>
    %440 = vector.shape_cast %439 : vector<1x8x128xf32> to vector<8x128xf32>
    %441 = vector.shape_cast %438 : vector<8x128xf32> to vector<1x8x128xf32>
    tpu.vector_store %arg12[%c1_224, %c0_225, %c0_226], %441 {strides = array<i32>} : memref<2x8x128xf32, #tpu.memory_space<vmem>>, vector<1x8x128xf32>,
    %c1_227 = arith.constant 1 : index
    %c0_228 = arith.constant 0 : index
    %c0_229 = arith.constant 0 : index
    %442 = vector.load %arg13[%c1_227, %c0_228, %c0_229] : memref<2x8x128xf32, #tpu.memory_space<vmem>>, vector<1x8x128xf32>
    %443 = vector.shape_cast %442 : vector<1x8x128xf32> to vector<8x128xf32>
    %444 = vector.shape_cast %436 : vector<8x128xf32> to vector<1x8x128xf32>
    tpu.vector_store %arg13[%c1_227, %c0_228, %c0_229], %444 {strides = array<i32>} : memref<2x8x128xf32, #tpu.memory_space<vmem>>, vector<1x8x128xf32>,
    %c7_i32_230 = arith.constant 7 : i32
    %445 = arith.cmpi eq, %362, %c7_i32_230 : i32
    %446 = arith.extui %445 : i1 to i32
    %c0_i32_231 = arith.constant 0 : i32
    %447 = arith.cmpi ne, %446, %c0_i32_231 : i32
    scf.if %447 {
      %c0_365 = arith.constant 0 : index
      %c0_366 = arith.constant 0 : index
      %709 = vector.load %arg9[%c0_365, %c0_366] : memref<128x128xf32, #tpu.memory_space<vmem>>, vector<128x128xf32>
      %cst_367 = arith.constant dense<0.000000e+00> : vector<8x128xf32>
      %710 = tpu.matmul %438, %709, %cst_367 {dimension_numbers = #tpu.dot_dimension_numbers<[1], [0], [0], [1], [0, 0, 1, 1], [], []>} : vector<8x128xf32>, vector<128x128xf32>, vector<8x128xf32> -> vector<8x128xf32>
      %c0_368 = arith.constant 0 : index
      %c0_369 = arith.constant 0 : index
      %711 = vector.load %arg10[%c0_368, %c0_369] : memref<1x128xf32, #tpu.memory_space<vmem>>, vector<1x128xf32>
      %712 = vector.broadcast %711 : vector<1x128xf32> to vector<8x128xf32>
      %713 = arith.addf %710, %712 : vector<8x128xf32>
      %c0_370 = arith.constant 0 : index
      %c0_371 = arith.constant 0 : index
      %714 = vector.load %arg11[%c0_370, %c0_371] : memref<8x128xf32, #tpu.memory_space<vmem>>, vector<8x128xf32>
      tpu.vector_store %arg11[%c0_370, %c0_371], %713 {strides = array<i32>} : memref<8x128xf32, #tpu.memory_space<vmem>>, vector<8x128xf32>,
    } else {
    }
    %c8_i32_232 = arith.constant 8 : i32
    %448 = arith.muli %arg1, %c8_i32_232 : i32
    %c5_i32 = arith.constant 5 : i32
    %449 = arith.addi %448, %c5_i32 : i32
    %c5 = arith.constant 5 : index
    %c0_233 = arith.constant 0 : index
    %c0_234 = arith.constant 0 : index
    %450 = vector.load %arg14[%c5, %c0_233, %c0_234] : memref<8x8x512xf32, #tpu.memory_space<vmem>>, vector<1x8x512xf32>
    %451 = vector.shape_cast %450 : vector<1x8x512xf32> to vector<8x512xf32>
    %c0_235 = arith.constant 0 : index
    %c0_236 = arith.constant 0 : index
    %c0_237 = arith.constant 0 : index
    %452 = vector.load %arg12[%c0_235, %c0_236, %c0_237] : memref<2x8x128xf32, #tpu.memory_space<vmem>>, vector<1x8x128xf32>
    %453 = vector.shape_cast %452 : vector<1x8x128xf32> to vector<8x128xf32>
    %c0_238 = arith.constant 0 : index
    %c0_239 = arith.constant 0 : index
    %454 = vector.load %arg5[%c0_238, %c0_239] : memref<128x512xf32, #tpu.memory_space<vmem>>, vector<128x512xf32>
    %cst_240 = arith.constant dense<0.000000e+00> : vector<8x512xf32>
    %455 = tpu.matmul %453, %454, %cst_240 {dimension_numbers = #tpu.dot_dimension_numbers<[1], [0], [0], [1], [0, 0, 1, 1], [], []>} : vector<8x128xf32>, vector<128x512xf32>, vector<8x512xf32> -> vector<8x512xf32>
    %456 = arith.addf %451, %455 : vector<8x512xf32>
    %c0_241 = arith.constant 0 : index
    %c0_242 = arith.constant 0 : index
    %c0_243 = arith.constant 0 : index
    %457 = vector.load %arg13[%c0_241, %c0_242, %c0_243] : memref<2x8x128xf32, #tpu.memory_space<vmem>>, vector<1x8x128xf32>
    %458 = vector.shape_cast %457 : vector<1x8x128xf32> to vector<8x128xf32>
    %459 = vector.extract_strided_slice %456 {offsets = [0, 0], sizes = [8, 128], strides = [1, 1]} : vector<8x512xf32> to vector<8x128xf32>
    %460 = arith.negf %459 : vector<8x128xf32>
    %461 = math.exp %460 : vector<8x128xf32>
    %cst_244 = arith.constant 1.000000e+00 : f32
    %462 = vector.broadcast %cst_244 : f32 to vector<8x128xf32>
    %463 = arith.addf %462, %461 : vector<8x128xf32>
    %464 = arith.divf %462, %463 : vector<8x128xf32>
    %465 = vector.extract_strided_slice %456 {offsets = [0, 128], sizes = [8, 128], strides = [1, 1]} : vector<8x512xf32> to vector<8x128xf32>
    %466 = arith.negf %465 : vector<8x128xf32>
    %467 = math.exp %466 : vector<8x128xf32>
    %cst_245 = arith.constant 1.000000e+00 : f32
    %468 = vector.broadcast %cst_245 : f32 to vector<8x128xf32>
    %469 = arith.addf %468, %467 : vector<8x128xf32>
    %470 = arith.divf %468, %469 : vector<8x128xf32>
    %471 = vector.extract_strided_slice %456 {offsets = [0, 256], sizes = [8, 128], strides = [1, 1]} : vector<8x512xf32> to vector<8x128xf32>
    %472 = math.tanh %471 : vector<8x128xf32>
    %473 = vector.extract_strided_slice %456 {offsets = [0, 384], sizes = [8, 128], strides = [1, 1]} : vector<8x512xf32> to vector<8x128xf32>
    %474 = arith.negf %473 : vector<8x128xf32>
    %475 = math.exp %474 : vector<8x128xf32>
    %cst_246 = arith.constant 1.000000e+00 : f32
    %476 = vector.broadcast %cst_246 : f32 to vector<8x128xf32>
    %477 = arith.addf %476, %475 : vector<8x128xf32>
    %478 = arith.divf %476, %477 : vector<8x128xf32>
    %479 = arith.mulf %470, %458 : vector<8x128xf32>
    %480 = arith.mulf %464, %472 : vector<8x128xf32>
    %481 = arith.addf %479, %480 : vector<8x128xf32>
    %482 = math.tanh %481 : vector<8x128xf32>
    %483 = arith.mulf %478, %482 : vector<8x128xf32>
    %c0_247 = arith.constant 0 : index
    %c0_248 = arith.constant 0 : index
    %c0_249 = arith.constant 0 : index
    %484 = vector.load %arg12[%c0_247, %c0_248, %c0_249] : memref<2x8x128xf32, #tpu.memory_space<vmem>>, vector<1x8x128xf32>
    %485 = vector.shape_cast %484 : vector<1x8x128xf32> to vector<8x128xf32>
    %486 = vector.shape_cast %483 : vector<8x128xf32> to vector<1x8x128xf32>
    tpu.vector_store %arg12[%c0_247, %c0_248, %c0_249], %486 {strides = array<i32>} : memref<2x8x128xf32, #tpu.memory_space<vmem>>, vector<1x8x128xf32>,
    %c0_250 = arith.constant 0 : index
    %c0_251 = arith.constant 0 : index
    %c0_252 = arith.constant 0 : index
    %487 = vector.load %arg13[%c0_250, %c0_251, %c0_252] : memref<2x8x128xf32, #tpu.memory_space<vmem>>, vector<1x8x128xf32>
    %488 = vector.shape_cast %487 : vector<1x8x128xf32> to vector<8x128xf32>
    %489 = vector.shape_cast %481 : vector<8x128xf32> to vector<1x8x128xf32>
    tpu.vector_store %arg13[%c0_250, %c0_251, %c0_252], %489 {strides = array<i32>} : memref<2x8x128xf32, #tpu.memory_space<vmem>>, vector<1x8x128xf32>,
    %c0_253 = arith.constant 0 : index
    %c0_254 = arith.constant 0 : index
    %490 = vector.load %arg6[%c0_253, %c0_254] : memref<128x512xf32, #tpu.memory_space<vmem>>, vector<128x512xf32>
    %cst_255 = arith.constant dense<0.000000e+00> : vector<8x512xf32>
    %491 = tpu.matmul %483, %490, %cst_255 {dimension_numbers = #tpu.dot_dimension_numbers<[1], [0], [0], [1], [0, 0, 1, 1], [], []>} : vector<8x128xf32>, vector<128x512xf32>, vector<8x512xf32> -> vector<8x512xf32>
    %c1_256 = arith.constant 1 : index
    %c0_257 = arith.constant 0 : index
    %c0_258 = arith.constant 0 : index
    %492 = vector.load %arg12[%c1_256, %c0_257, %c0_258] : memref<2x8x128xf32, #tpu.memory_space<vmem>>, vector<1x8x128xf32>
    %493 = vector.shape_cast %492 : vector<1x8x128xf32> to vector<8x128xf32>
    %c0_259 = arith.constant 0 : index
    %c0_260 = arith.constant 0 : index
    %494 = vector.load %arg7[%c0_259, %c0_260] : memref<128x512xf32, #tpu.memory_space<vmem>>, vector<128x512xf32>
    %cst_261 = arith.constant dense<0.000000e+00> : vector<8x512xf32>
    %495 = tpu.matmul %493, %494, %cst_261 {dimension_numbers = #tpu.dot_dimension_numbers<[1], [0], [0], [1], [0, 0, 1, 1], [], []>} : vector<8x128xf32>, vector<128x512xf32>, vector<8x512xf32> -> vector<8x512xf32>
    %496 = arith.addf %491, %495 : vector<8x512xf32>
    %497 = vector.broadcast %12 : vector<1x512xf32> to vector<8x512xf32>
    %498 = arith.addf %496, %497 : vector<8x512xf32>
    %c1_262 = arith.constant 1 : index
    %c0_263 = arith.constant 0 : index
    %c0_264 = arith.constant 0 : index
    %499 = vector.load %arg13[%c1_262, %c0_263, %c0_264] : memref<2x8x128xf32, #tpu.memory_space<vmem>>, vector<1x8x128xf32>
    %500 = vector.shape_cast %499 : vector<1x8x128xf32> to vector<8x128xf32>
    %501 = vector.extract_strided_slice %498 {offsets = [0, 0], sizes = [8, 128], strides = [1, 1]} : vector<8x512xf32> to vector<8x128xf32>
    %502 = arith.negf %501 : vector<8x128xf32>
    %503 = math.exp %502 : vector<8x128xf32>
    %cst_265 = arith.constant 1.000000e+00 : f32
    %504 = vector.broadcast %cst_265 : f32 to vector<8x128xf32>
    %505 = arith.addf %504, %503 : vector<8x128xf32>
    %506 = arith.divf %504, %505 : vector<8x128xf32>
    %507 = vector.extract_strided_slice %498 {offsets = [0, 128], sizes = [8, 128], strides = [1, 1]} : vector<8x512xf32> to vector<8x128xf32>
    %508 = arith.negf %507 : vector<8x128xf32>
    %509 = math.exp %508 : vector<8x128xf32>
    %cst_266 = arith.constant 1.000000e+00 : f32
    %510 = vector.broadcast %cst_266 : f32 to vector<8x128xf32>
    %511 = arith.addf %510, %509 : vector<8x128xf32>
    %512 = arith.divf %510, %511 : vector<8x128xf32>
    %513 = vector.extract_strided_slice %498 {offsets = [0, 256], sizes = [8, 128], strides = [1, 1]} : vector<8x512xf32> to vector<8x128xf32>
    %514 = math.tanh %513 : vector<8x128xf32>
    %515 = vector.extract_strided_slice %498 {offsets = [0, 384], sizes = [8, 128], strides = [1, 1]} : vector<8x512xf32> to vector<8x128xf32>
    %516 = arith.negf %515 : vector<8x128xf32>
    %517 = math.exp %516 : vector<8x128xf32>
    %cst_267 = arith.constant 1.000000e+00 : f32
    %518 = vector.broadcast %cst_267 : f32 to vector<8x128xf32>
    %519 = arith.addf %518, %517 : vector<8x128xf32>
    %520 = arith.divf %518, %519 : vector<8x128xf32>
    %521 = arith.mulf %512, %500 : vector<8x128xf32>
    %522 = arith.mulf %506, %514 : vector<8x128xf32>
    %523 = arith.addf %521, %522 : vector<8x128xf32>
    %524 = math.tanh %523 : vector<8x128xf32>
    %525 = arith.mulf %520, %524 : vector<8x128xf32>
    %c1_268 = arith.constant 1 : index
    %c0_269 = arith.constant 0 : index
    %c0_270 = arith.constant 0 : index
    %526 = vector.load %arg12[%c1_268, %c0_269, %c0_270] : memref<2x8x128xf32, #tpu.memory_space<vmem>>, vector<1x8x128xf32>
    %527 = vector.shape_cast %526 : vector<1x8x128xf32> to vector<8x128xf32>
    %528 = vector.shape_cast %525 : vector<8x128xf32> to vector<1x8x128xf32>
    tpu.vector_store %arg12[%c1_268, %c0_269, %c0_270], %528 {strides = array<i32>} : memref<2x8x128xf32, #tpu.memory_space<vmem>>, vector<1x8x128xf32>,
    %c1_271 = arith.constant 1 : index
    %c0_272 = arith.constant 0 : index
    %c0_273 = arith.constant 0 : index
    %529 = vector.load %arg13[%c1_271, %c0_272, %c0_273] : memref<2x8x128xf32, #tpu.memory_space<vmem>>, vector<1x8x128xf32>
    %530 = vector.shape_cast %529 : vector<1x8x128xf32> to vector<8x128xf32>
    %531 = vector.shape_cast %523 : vector<8x128xf32> to vector<1x8x128xf32>
    tpu.vector_store %arg13[%c1_271, %c0_272, %c0_273], %531 {strides = array<i32>} : memref<2x8x128xf32, #tpu.memory_space<vmem>>, vector<1x8x128xf32>,
    %c7_i32_274 = arith.constant 7 : i32
    %532 = arith.cmpi eq, %449, %c7_i32_274 : i32
    %533 = arith.extui %532 : i1 to i32
    %c0_i32_275 = arith.constant 0 : i32
    %534 = arith.cmpi ne, %533, %c0_i32_275 : i32
    scf.if %534 {
      %c0_365 = arith.constant 0 : index
      %c0_366 = arith.constant 0 : index
      %709 = vector.load %arg9[%c0_365, %c0_366] : memref<128x128xf32, #tpu.memory_space<vmem>>, vector<128x128xf32>
      %cst_367 = arith.constant dense<0.000000e+00> : vector<8x128xf32>
      %710 = tpu.matmul %525, %709, %cst_367 {dimension_numbers = #tpu.dot_dimension_numbers<[1], [0], [0], [1], [0, 0, 1, 1], [], []>} : vector<8x128xf32>, vector<128x128xf32>, vector<8x128xf32> -> vector<8x128xf32>
      %c0_368 = arith.constant 0 : index
      %c0_369 = arith.constant 0 : index
      %711 = vector.load %arg10[%c0_368, %c0_369] : memref<1x128xf32, #tpu.memory_space<vmem>>, vector<1x128xf32>
      %712 = vector.broadcast %711 : vector<1x128xf32> to vector<8x128xf32>
      %713 = arith.addf %710, %712 : vector<8x128xf32>
      %c0_370 = arith.constant 0 : index
      %c0_371 = arith.constant 0 : index
      %714 = vector.load %arg11[%c0_370, %c0_371] : memref<8x128xf32, #tpu.memory_space<vmem>>, vector<8x128xf32>
      tpu.vector_store %arg11[%c0_370, %c0_371], %713 {strides = array<i32>} : memref<8x128xf32, #tpu.memory_space<vmem>>, vector<8x128xf32>,
    } else {
    }
    %c8_i32_276 = arith.constant 8 : i32
    %535 = arith.muli %arg1, %c8_i32_276 : i32
    %c6_i32 = arith.constant 6 : i32
    %536 = arith.addi %535, %c6_i32 : i32
    %c6 = arith.constant 6 : index
    %c0_277 = arith.constant 0 : index
    %c0_278 = arith.constant 0 : index
    %537 = vector.load %arg14[%c6, %c0_277, %c0_278] : memref<8x8x512xf32, #tpu.memory_space<vmem>>, vector<1x8x512xf32>
    %538 = vector.shape_cast %537 : vector<1x8x512xf32> to vector<8x512xf32>
    %c0_279 = arith.constant 0 : index
    %c0_280 = arith.constant 0 : index
    %c0_281 = arith.constant 0 : index
    %539 = vector.load %arg12[%c0_279, %c0_280, %c0_281] : memref<2x8x128xf32, #tpu.memory_space<vmem>>, vector<1x8x128xf32>
    %540 = vector.shape_cast %539 : vector<1x8x128xf32> to vector<8x128xf32>
    %c0_282 = arith.constant 0 : index
    %c0_283 = arith.constant 0 : index
    %541 = vector.load %arg5[%c0_282, %c0_283] : memref<128x512xf32, #tpu.memory_space<vmem>>, vector<128x512xf32>
    %cst_284 = arith.constant dense<0.000000e+00> : vector<8x512xf32>
    %542 = tpu.matmul %540, %541, %cst_284 {dimension_numbers = #tpu.dot_dimension_numbers<[1], [0], [0], [1], [0, 0, 1, 1], [], []>} : vector<8x128xf32>, vector<128x512xf32>, vector<8x512xf32> -> vector<8x512xf32>
    %543 = arith.addf %538, %542 : vector<8x512xf32>
    %c0_285 = arith.constant 0 : index
    %c0_286 = arith.constant 0 : index
    %c0_287 = arith.constant 0 : index
    %544 = vector.load %arg13[%c0_285, %c0_286, %c0_287] : memref<2x8x128xf32, #tpu.memory_space<vmem>>, vector<1x8x128xf32>
    %545 = vector.shape_cast %544 : vector<1x8x128xf32> to vector<8x128xf32>
    %546 = vector.extract_strided_slice %543 {offsets = [0, 0], sizes = [8, 128], strides = [1, 1]} : vector<8x512xf32> to vector<8x128xf32>
    %547 = arith.negf %546 : vector<8x128xf32>
    %548 = math.exp %547 : vector<8x128xf32>
    %cst_288 = arith.constant 1.000000e+00 : f32
    %549 = vector.broadcast %cst_288 : f32 to vector<8x128xf32>
    %550 = arith.addf %549, %548 : vector<8x128xf32>
    %551 = arith.divf %549, %550 : vector<8x128xf32>
    %552 = vector.extract_strided_slice %543 {offsets = [0, 128], sizes = [8, 128], strides = [1, 1]} : vector<8x512xf32> to vector<8x128xf32>
    %553 = arith.negf %552 : vector<8x128xf32>
    %554 = math.exp %553 : vector<8x128xf32>
    %cst_289 = arith.constant 1.000000e+00 : f32
    %555 = vector.broadcast %cst_289 : f32 to vector<8x128xf32>
    %556 = arith.addf %555, %554 : vector<8x128xf32>
    %557 = arith.divf %555, %556 : vector<8x128xf32>
    %558 = vector.extract_strided_slice %543 {offsets = [0, 256], sizes = [8, 128], strides = [1, 1]} : vector<8x512xf32> to vector<8x128xf32>
    %559 = math.tanh %558 : vector<8x128xf32>
    %560 = vector.extract_strided_slice %543 {offsets = [0, 384], sizes = [8, 128], strides = [1, 1]} : vector<8x512xf32> to vector<8x128xf32>
    %561 = arith.negf %560 : vector<8x128xf32>
    %562 = math.exp %561 : vector<8x128xf32>
    %cst_290 = arith.constant 1.000000e+00 : f32
    %563 = vector.broadcast %cst_290 : f32 to vector<8x128xf32>
    %564 = arith.addf %563, %562 : vector<8x128xf32>
    %565 = arith.divf %563, %564 : vector<8x128xf32>
    %566 = arith.mulf %557, %545 : vector<8x128xf32>
    %567 = arith.mulf %551, %559 : vector<8x128xf32>
    %568 = arith.addf %566, %567 : vector<8x128xf32>
    %569 = math.tanh %568 : vector<8x128xf32>
    %570 = arith.mulf %565, %569 : vector<8x128xf32>
    %c0_291 = arith.constant 0 : index
    %c0_292 = arith.constant 0 : index
    %c0_293 = arith.constant 0 : index
    %571 = vector.load %arg12[%c0_291, %c0_292, %c0_293] : memref<2x8x128xf32, #tpu.memory_space<vmem>>, vector<1x8x128xf32>
    %572 = vector.shape_cast %571 : vector<1x8x128xf32> to vector<8x128xf32>
    %573 = vector.shape_cast %570 : vector<8x128xf32> to vector<1x8x128xf32>
    tpu.vector_store %arg12[%c0_291, %c0_292, %c0_293], %573 {strides = array<i32>} : memref<2x8x128xf32, #tpu.memory_space<vmem>>, vector<1x8x128xf32>,
    %c0_294 = arith.constant 0 : index
    %c0_295 = arith.constant 0 : index
    %c0_296 = arith.constant 0 : index
    %574 = vector.load %arg13[%c0_294, %c0_295, %c0_296] : memref<2x8x128xf32, #tpu.memory_space<vmem>>, vector<1x8x128xf32>
    %575 = vector.shape_cast %574 : vector<1x8x128xf32> to vector<8x128xf32>
    %576 = vector.shape_cast %568 : vector<8x128xf32> to vector<1x8x128xf32>
    tpu.vector_store %arg13[%c0_294, %c0_295, %c0_296], %576 {strides = array<i32>} : memref<2x8x128xf32, #tpu.memory_space<vmem>>, vector<1x8x128xf32>,
    %c0_297 = arith.constant 0 : index
    %c0_298 = arith.constant 0 : index
    %577 = vector.load %arg6[%c0_297, %c0_298] : memref<128x512xf32, #tpu.memory_space<vmem>>, vector<128x512xf32>
    %cst_299 = arith.constant dense<0.000000e+00> : vector<8x512xf32>
    %578 = tpu.matmul %570, %577, %cst_299 {dimension_numbers = #tpu.dot_dimension_numbers<[1], [0], [0], [1], [0, 0, 1, 1], [], []>} : vector<8x128xf32>, vector<128x512xf32>, vector<8x512xf32> -> vector<8x512xf32>
    %c1_300 = arith.constant 1 : index
    %c0_301 = arith.constant 0 : index
    %c0_302 = arith.constant 0 : index
    %579 = vector.load %arg12[%c1_300, %c0_301, %c0_302] : memref<2x8x128xf32, #tpu.memory_space<vmem>>, vector<1x8x128xf32>
    %580 = vector.shape_cast %579 : vector<1x8x128xf32> to vector<8x128xf32>
    %c0_303 = arith.constant 0 : index
    %c0_304 = arith.constant 0 : index
    %581 = vector.load %arg7[%c0_303, %c0_304] : memref<128x512xf32, #tpu.memory_space<vmem>>, vector<128x512xf32>
    %cst_305 = arith.constant dense<0.000000e+00> : vector<8x512xf32>
    %582 = tpu.matmul %580, %581, %cst_305 {dimension_numbers = #tpu.dot_dimension_numbers<[1], [0], [0], [1], [0, 0, 1, 1], [], []>} : vector<8x128xf32>, vector<128x512xf32>, vector<8x512xf32> -> vector<8x512xf32>
    %583 = arith.addf %578, %582 : vector<8x512xf32>
    %584 = vector.broadcast %12 : vector<1x512xf32> to vector<8x512xf32>
    %585 = arith.addf %583, %584 : vector<8x512xf32>
    %c1_306 = arith.constant 1 : index
    %c0_307 = arith.constant 0 : index
    %c0_308 = arith.constant 0 : index
    %586 = vector.load %arg13[%c1_306, %c0_307, %c0_308] : memref<2x8x128xf32, #tpu.memory_space<vmem>>, vector<1x8x128xf32>
    %587 = vector.shape_cast %586 : vector<1x8x128xf32> to vector<8x128xf32>
    %588 = vector.extract_strided_slice %585 {offsets = [0, 0], sizes = [8, 128], strides = [1, 1]} : vector<8x512xf32> to vector<8x128xf32>
    %589 = arith.negf %588 : vector<8x128xf32>
    %590 = math.exp %589 : vector<8x128xf32>
    %cst_309 = arith.constant 1.000000e+00 : f32
    %591 = vector.broadcast %cst_309 : f32 to vector<8x128xf32>
    %592 = arith.addf %591, %590 : vector<8x128xf32>
    %593 = arith.divf %591, %592 : vector<8x128xf32>
    %594 = vector.extract_strided_slice %585 {offsets = [0, 128], sizes = [8, 128], strides = [1, 1]} : vector<8x512xf32> to vector<8x128xf32>
    %595 = arith.negf %594 : vector<8x128xf32>
    %596 = math.exp %595 : vector<8x128xf32>
    %cst_310 = arith.constant 1.000000e+00 : f32
    %597 = vector.broadcast %cst_310 : f32 to vector<8x128xf32>
    %598 = arith.addf %597, %596 : vector<8x128xf32>
    %599 = arith.divf %597, %598 : vector<8x128xf32>
    %600 = vector.extract_strided_slice %585 {offsets = [0, 256], sizes = [8, 128], strides = [1, 1]} : vector<8x512xf32> to vector<8x128xf32>
    %601 = math.tanh %600 : vector<8x128xf32>
    %602 = vector.extract_strided_slice %585 {offsets = [0, 384], sizes = [8, 128], strides = [1, 1]} : vector<8x512xf32> to vector<8x128xf32>
    %603 = arith.negf %602 : vector<8x128xf32>
    %604 = math.exp %603 : vector<8x128xf32>
    %cst_311 = arith.constant 1.000000e+00 : f32
    %605 = vector.broadcast %cst_311 : f32 to vector<8x128xf32>
    %606 = arith.addf %605, %604 : vector<8x128xf32>
    %607 = arith.divf %605, %606 : vector<8x128xf32>
    %608 = arith.mulf %599, %587 : vector<8x128xf32>
    %609 = arith.mulf %593, %601 : vector<8x128xf32>
    %610 = arith.addf %608, %609 : vector<8x128xf32>
    %611 = math.tanh %610 : vector<8x128xf32>
    %612 = arith.mulf %607, %611 : vector<8x128xf32>
    %c1_312 = arith.constant 1 : index
    %c0_313 = arith.constant 0 : index
    %c0_314 = arith.constant 0 : index
    %613 = vector.load %arg12[%c1_312, %c0_313, %c0_314] : memref<2x8x128xf32, #tpu.memory_space<vmem>>, vector<1x8x128xf32>
    %614 = vector.shape_cast %613 : vector<1x8x128xf32> to vector<8x128xf32>
    %615 = vector.shape_cast %612 : vector<8x128xf32> to vector<1x8x128xf32>
    tpu.vector_store %arg12[%c1_312, %c0_313, %c0_314], %615 {strides = array<i32>} : memref<2x8x128xf32, #tpu.memory_space<vmem>>, vector<1x8x128xf32>,
    %c1_315 = arith.constant 1 : index
    %c0_316 = arith.constant 0 : index
    %c0_317 = arith.constant 0 : index
    %616 = vector.load %arg13[%c1_315, %c0_316, %c0_317] : memref<2x8x128xf32, #tpu.memory_space<vmem>>, vector<1x8x128xf32>
    %617 = vector.shape_cast %616 : vector<1x8x128xf32> to vector<8x128xf32>
    %618 = vector.shape_cast %610 : vector<8x128xf32> to vector<1x8x128xf32>
    tpu.vector_store %arg13[%c1_315, %c0_316, %c0_317], %618 {strides = array<i32>} : memref<2x8x128xf32, #tpu.memory_space<vmem>>, vector<1x8x128xf32>,
    %c7_i32_318 = arith.constant 7 : i32
    %619 = arith.cmpi eq, %536, %c7_i32_318 : i32
    %620 = arith.extui %619 : i1 to i32
    %c0_i32_319 = arith.constant 0 : i32
    %621 = arith.cmpi ne, %620, %c0_i32_319 : i32
    scf.if %621 {
      %c0_365 = arith.constant 0 : index
      %c0_366 = arith.constant 0 : index
      %709 = vector.load %arg9[%c0_365, %c0_366] : memref<128x128xf32, #tpu.memory_space<vmem>>, vector<128x128xf32>
      %cst_367 = arith.constant dense<0.000000e+00> : vector<8x128xf32>
      %710 = tpu.matmul %612, %709, %cst_367 {dimension_numbers = #tpu.dot_dimension_numbers<[1], [0], [0], [1], [0, 0, 1, 1], [], []>} : vector<8x128xf32>, vector<128x128xf32>, vector<8x128xf32> -> vector<8x128xf32>
      %c0_368 = arith.constant 0 : index
      %c0_369 = arith.constant 0 : index
      %711 = vector.load %arg10[%c0_368, %c0_369] : memref<1x128xf32, #tpu.memory_space<vmem>>, vector<1x128xf32>
      %712 = vector.broadcast %711 : vector<1x128xf32> to vector<8x128xf32>
      %713 = arith.addf %710, %712 : vector<8x128xf32>
      %c0_370 = arith.constant 0 : index
      %c0_371 = arith.constant 0 : index
      %714 = vector.load %arg11[%c0_370, %c0_371] : memref<8x128xf32, #tpu.memory_space<vmem>>, vector<8x128xf32>
      tpu.vector_store %arg11[%c0_370, %c0_371], %713 {strides = array<i32>} : memref<8x128xf32, #tpu.memory_space<vmem>>, vector<8x128xf32>,
    } else {
    }
    %c8_i32_320 = arith.constant 8 : i32
    %622 = arith.muli %arg1, %c8_i32_320 : i32
    %c7_i32_321 = arith.constant 7 : i32
    %623 = arith.addi %622, %c7_i32_321 : i32
    %c7 = arith.constant 7 : index
    %c0_322 = arith.constant 0 : index
    %c0_323 = arith.constant 0 : index
    %624 = vector.load %arg14[%c7, %c0_322, %c0_323] : memref<8x8x512xf32, #tpu.memory_space<vmem>>, vector<1x8x512xf32>
    %625 = vector.shape_cast %624 : vector<1x8x512xf32> to vector<8x512xf32>
    %c0_324 = arith.constant 0 : index
    %c0_325 = arith.constant 0 : index
    %c0_326 = arith.constant 0 : index
    %626 = vector.load %arg12[%c0_324, %c0_325, %c0_326] : memref<2x8x128xf32, #tpu.memory_space<vmem>>, vector<1x8x128xf32>
    %627 = vector.shape_cast %626 : vector<1x8x128xf32> to vector<8x128xf32>
    %c0_327 = arith.constant 0 : index
    %c0_328 = arith.constant 0 : index
    %628 = vector.load %arg5[%c0_327, %c0_328] : memref<128x512xf32, #tpu.memory_space<vmem>>, vector<128x512xf32>
    %cst_329 = arith.constant dense<0.000000e+00> : vector<8x512xf32>
    %629 = tpu.matmul %627, %628, %cst_329 {dimension_numbers = #tpu.dot_dimension_numbers<[1], [0], [0], [1], [0, 0, 1, 1], [], []>} : vector<8x128xf32>, vector<128x512xf32>, vector<8x512xf32> -> vector<8x512xf32>
    %630 = arith.addf %625, %629 : vector<8x512xf32>
    %c0_330 = arith.constant 0 : index
    %c0_331 = arith.constant 0 : index
    %c0_332 = arith.constant 0 : index
    %631 = vector.load %arg13[%c0_330, %c0_331, %c0_332] : memref<2x8x128xf32, #tpu.memory_space<vmem>>, vector<1x8x128xf32>
    %632 = vector.shape_cast %631 : vector<1x8x128xf32> to vector<8x128xf32>
    %633 = vector.extract_strided_slice %630 {offsets = [0, 0], sizes = [8, 128], strides = [1, 1]} : vector<8x512xf32> to vector<8x128xf32>
    %634 = arith.negf %633 : vector<8x128xf32>
    %635 = math.exp %634 : vector<8x128xf32>
    %cst_333 = arith.constant 1.000000e+00 : f32
    %636 = vector.broadcast %cst_333 : f32 to vector<8x128xf32>
    %637 = arith.addf %636, %635 : vector<8x128xf32>
    %638 = arith.divf %636, %637 : vector<8x128xf32>
    %639 = vector.extract_strided_slice %630 {offsets = [0, 128], sizes = [8, 128], strides = [1, 1]} : vector<8x512xf32> to vector<8x128xf32>
    %640 = arith.negf %639 : vector<8x128xf32>
    %641 = math.exp %640 : vector<8x128xf32>
    %cst_334 = arith.constant 1.000000e+00 : f32
    %642 = vector.broadcast %cst_334 : f32 to vector<8x128xf32>
    %643 = arith.addf %642, %641 : vector<8x128xf32>
    %644 = arith.divf %642, %643 : vector<8x128xf32>
    %645 = vector.extract_strided_slice %630 {offsets = [0, 256], sizes = [8, 128], strides = [1, 1]} : vector<8x512xf32> to vector<8x128xf32>
    %646 = math.tanh %645 : vector<8x128xf32>
    %647 = vector.extract_strided_slice %630 {offsets = [0, 384], sizes = [8, 128], strides = [1, 1]} : vector<8x512xf32> to vector<8x128xf32>
    %648 = arith.negf %647 : vector<8x128xf32>
    %649 = math.exp %648 : vector<8x128xf32>
    %cst_335 = arith.constant 1.000000e+00 : f32
    %650 = vector.broadcast %cst_335 : f32 to vector<8x128xf32>
    %651 = arith.addf %650, %649 : vector<8x128xf32>
    %652 = arith.divf %650, %651 : vector<8x128xf32>
    %653 = arith.mulf %644, %632 : vector<8x128xf32>
    %654 = arith.mulf %638, %646 : vector<8x128xf32>
    %655 = arith.addf %653, %654 : vector<8x128xf32>
    %656 = math.tanh %655 : vector<8x128xf32>
    %657 = arith.mulf %652, %656 : vector<8x128xf32>
    %c0_336 = arith.constant 0 : index
    %c0_337 = arith.constant 0 : index
    %c0_338 = arith.constant 0 : index
    %658 = vector.load %arg12[%c0_336, %c0_337, %c0_338] : memref<2x8x128xf32, #tpu.memory_space<vmem>>, vector<1x8x128xf32>
    %659 = vector.shape_cast %658 : vector<1x8x128xf32> to vector<8x128xf32>
    %660 = vector.shape_cast %657 : vector<8x128xf32> to vector<1x8x128xf32>
    tpu.vector_store %arg12[%c0_336, %c0_337, %c0_338], %660 {strides = array<i32>} : memref<2x8x128xf32, #tpu.memory_space<vmem>>, vector<1x8x128xf32>,
    %c0_339 = arith.constant 0 : index
    %c0_340 = arith.constant 0 : index
    %c0_341 = arith.constant 0 : index
    %661 = vector.load %arg13[%c0_339, %c0_340, %c0_341] : memref<2x8x128xf32, #tpu.memory_space<vmem>>, vector<1x8x128xf32>
    %662 = vector.shape_cast %661 : vector<1x8x128xf32> to vector<8x128xf32>
    %663 = vector.shape_cast %655 : vector<8x128xf32> to vector<1x8x128xf32>
    tpu.vector_store %arg13[%c0_339, %c0_340, %c0_341], %663 {strides = array<i32>} : memref<2x8x128xf32, #tpu.memory_space<vmem>>, vector<1x8x128xf32>,
    %c0_342 = arith.constant 0 : index
    %c0_343 = arith.constant 0 : index
    %664 = vector.load %arg6[%c0_342, %c0_343] : memref<128x512xf32, #tpu.memory_space<vmem>>, vector<128x512xf32>
    %cst_344 = arith.constant dense<0.000000e+00> : vector<8x512xf32>
    %665 = tpu.matmul %657, %664, %cst_344 {dimension_numbers = #tpu.dot_dimension_numbers<[1], [0], [0], [1], [0, 0, 1, 1], [], []>} : vector<8x128xf32>, vector<128x512xf32>, vector<8x512xf32> -> vector<8x512xf32>
    %c1_345 = arith.constant 1 : index
    %c0_346 = arith.constant 0 : index
    %c0_347 = arith.constant 0 : index
    %666 = vector.load %arg12[%c1_345, %c0_346, %c0_347] : memref<2x8x128xf32, #tpu.memory_space<vmem>>, vector<1x8x128xf32>
    %667 = vector.shape_cast %666 : vector<1x8x128xf32> to vector<8x128xf32>
    %c0_348 = arith.constant 0 : index
    %c0_349 = arith.constant 0 : index
    %668 = vector.load %arg7[%c0_348, %c0_349] : memref<128x512xf32, #tpu.memory_space<vmem>>, vector<128x512xf32>
    %cst_350 = arith.constant dense<0.000000e+00> : vector<8x512xf32>
    %669 = tpu.matmul %667, %668, %cst_350 {dimension_numbers = #tpu.dot_dimension_numbers<[1], [0], [0], [1], [0, 0, 1, 1], [], []>} : vector<8x128xf32>, vector<128x512xf32>, vector<8x512xf32> -> vector<8x512xf32>
    %670 = arith.addf %665, %669 : vector<8x512xf32>
    %671 = vector.broadcast %12 : vector<1x512xf32> to vector<8x512xf32>
    %672 = arith.addf %670, %671 : vector<8x512xf32>
    %c1_351 = arith.constant 1 : index
    %c0_352 = arith.constant 0 : index
    %c0_353 = arith.constant 0 : index
    %673 = vector.load %arg13[%c1_351, %c0_352, %c0_353] : memref<2x8x128xf32, #tpu.memory_space<vmem>>, vector<1x8x128xf32>
    %674 = vector.shape_cast %673 : vector<1x8x128xf32> to vector<8x128xf32>
    %675 = vector.extract_strided_slice %672 {offsets = [0, 0], sizes = [8, 128], strides = [1, 1]} : vector<8x512xf32> to vector<8x128xf32>
    %676 = arith.negf %675 : vector<8x128xf32>
    %677 = math.exp %676 : vector<8x128xf32>
    %cst_354 = arith.constant 1.000000e+00 : f32
    %678 = vector.broadcast %cst_354 : f32 to vector<8x128xf32>
    %679 = arith.addf %678, %677 : vector<8x128xf32>
    %680 = arith.divf %678, %679 : vector<8x128xf32>
    %681 = vector.extract_strided_slice %672 {offsets = [0, 128], sizes = [8, 128], strides = [1, 1]} : vector<8x512xf32> to vector<8x128xf32>
    %682 = arith.negf %681 : vector<8x128xf32>
    %683 = math.exp %682 : vector<8x128xf32>
    %cst_355 = arith.constant 1.000000e+00 : f32
    %684 = vector.broadcast %cst_355 : f32 to vector<8x128xf32>
    %685 = arith.addf %684, %683 : vector<8x128xf32>
    %686 = arith.divf %684, %685 : vector<8x128xf32>
    %687 = vector.extract_strided_slice %672 {offsets = [0, 256], sizes = [8, 128], strides = [1, 1]} : vector<8x512xf32> to vector<8x128xf32>
    %688 = math.tanh %687 : vector<8x128xf32>
    %689 = vector.extract_strided_slice %672 {offsets = [0, 384], sizes = [8, 128], strides = [1, 1]} : vector<8x512xf32> to vector<8x128xf32>
    %690 = arith.negf %689 : vector<8x128xf32>
    %691 = math.exp %690 : vector<8x128xf32>
    %cst_356 = arith.constant 1.000000e+00 : f32
    %692 = vector.broadcast %cst_356 : f32 to vector<8x128xf32>
    %693 = arith.addf %692, %691 : vector<8x128xf32>
    %694 = arith.divf %692, %693 : vector<8x128xf32>
    %695 = arith.mulf %686, %674 : vector<8x128xf32>
    %696 = arith.mulf %680, %688 : vector<8x128xf32>
    %697 = arith.addf %695, %696 : vector<8x128xf32>
    %698 = math.tanh %697 : vector<8x128xf32>
    %699 = arith.mulf %694, %698 : vector<8x128xf32>
    %c1_357 = arith.constant 1 : index
    %c0_358 = arith.constant 0 : index
    %c0_359 = arith.constant 0 : index
    %700 = vector.load %arg12[%c1_357, %c0_358, %c0_359] : memref<2x8x128xf32, #tpu.memory_space<vmem>>, vector<1x8x128xf32>
    %701 = vector.shape_cast %700 : vector<1x8x128xf32> to vector<8x128xf32>
    %702 = vector.shape_cast %699 : vector<8x128xf32> to vector<1x8x128xf32>
    tpu.vector_store %arg12[%c1_357, %c0_358, %c0_359], %702 {strides = array<i32>} : memref<2x8x128xf32, #tpu.memory_space<vmem>>, vector<1x8x128xf32>,
    %c1_360 = arith.constant 1 : index
    %c0_361 = arith.constant 0 : index
    %c0_362 = arith.constant 0 : index
    %703 = vector.load %arg13[%c1_360, %c0_361, %c0_362] : memref<2x8x128xf32, #tpu.memory_space<vmem>>, vector<1x8x128xf32>
    %704 = vector.shape_cast %703 : vector<1x8x128xf32> to vector<8x128xf32>
    %705 = vector.shape_cast %697 : vector<8x128xf32> to vector<1x8x128xf32>
    tpu.vector_store %arg13[%c1_360, %c0_361, %c0_362], %705 {strides = array<i32>} : memref<2x8x128xf32, #tpu.memory_space<vmem>>, vector<1x8x128xf32>,
    %c7_i32_363 = arith.constant 7 : i32
    %706 = arith.cmpi eq, %623, %c7_i32_363 : i32
    %707 = arith.extui %706 : i1 to i32
    %c0_i32_364 = arith.constant 0 : i32
    %708 = arith.cmpi ne, %707, %c0_i32_364 : i32
    scf.if %708 {
      %c0_365 = arith.constant 0 : index
      %c0_366 = arith.constant 0 : index
      %709 = vector.load %arg9[%c0_365, %c0_366] : memref<128x128xf32, #tpu.memory_space<vmem>>, vector<128x128xf32>
      %cst_367 = arith.constant dense<0.000000e+00> : vector<8x128xf32>
      %710 = tpu.matmul %699, %709, %cst_367 {dimension_numbers = #tpu.dot_dimension_numbers<[1], [0], [0], [1], [0, 0, 1, 1], [], []>} : vector<8x128xf32>, vector<128x128xf32>, vector<8x128xf32> -> vector<8x128xf32>
      %c0_368 = arith.constant 0 : index
      %c0_369 = arith.constant 0 : index
      %711 = vector.load %arg10[%c0_368, %c0_369] : memref<1x128xf32, #tpu.memory_space<vmem>>, vector<1x128xf32>
      %712 = vector.broadcast %711 : vector<1x128xf32> to vector<8x128xf32>
      %713 = arith.addf %710, %712 : vector<8x128xf32>
      %c0_370 = arith.constant 0 : index
      %c0_371 = arith.constant 0 : index
      %714 = vector.load %arg11[%c0_370, %c0_371] : memref<8x128xf32, #tpu.memory_space<vmem>>, vector<8x128xf32>
      tpu.vector_store %arg11[%c0_370, %c0_371], %713 {strides = array<i32>} : memref<8x128xf32, #tpu.memory_space<vmem>>, vector<8x128xf32>,
    } else {
    }
    return
  }
  func.func @transform_0(%arg0: i32, %arg1: i32) -> (i32, i32, i32) {
    %c0_i32 = arith.constant 0 : i32
    %c0_i32_0 = arith.constant 0 : i32
    return %arg1, %arg0, %c0_i32 : i32, i32, i32
  }
  func.func @transform_1(%arg0: i32, %arg1: i32) -> (i32, i32) {
    %c0_i32 = arith.constant 0 : i32
    %c0_i32_0 = arith.constant 0 : i32
    %c0_i32_1 = arith.constant 0 : i32
    return %c0_i32, %c0_i32_0 : i32, i32
  }
  func.func @transform_2(%arg0: i32, %arg1: i32) -> (i32, i32) {
    %c0_i32 = arith.constant 0 : i32
    %c0_i32_0 = arith.constant 0 : i32
    %c0_i32_1 = arith.constant 0 : i32
    return %c0_i32, %c0_i32_0 : i32, i32
  }
  func.func @transform_3(%arg0: i32, %arg1: i32) -> (i32, i32) {
    %c0_i32 = arith.constant 0 : i32
    %c0_i32_0 = arith.constant 0 : i32
    %c0_i32_1 = arith.constant 0 : i32
    return %c0_i32, %c0_i32_0 : i32, i32
  }
  func.func @transform_4(%arg0: i32, %arg1: i32) -> (i32, i32) {
    %c0_i32 = arith.constant 0 : i32
    %c0_i32_0 = arith.constant 0 : i32
    %c0_i32_1 = arith.constant 0 : i32
    return %c0_i32, %c0_i32_0 : i32, i32
  }
  func.func @transform_5(%arg0: i32, %arg1: i32) -> (i32, i32) {
    %c0_i32 = arith.constant 0 : i32
    %c0_i32_0 = arith.constant 0 : i32
    %c0_i32_1 = arith.constant 0 : i32
    return %c0_i32, %c0_i32_0 : i32, i32
  }
  func.func @transform_6(%arg0: i32, %arg1: i32) -> (i32, i32) {
    %c0_i32 = arith.constant 0 : i32
    %c0_i32_0 = arith.constant 0 : i32
    %c0_i32_1 = arith.constant 0 : i32
    return %c0_i32, %c0_i32_0 : i32, i32
  }
  func.func @transform_7(%arg0: i32, %arg1: i32) -> (i32, i32) {
    %c0_i32 = arith.constant 0 : i32
    %c0_i32_0 = arith.constant 0 : i32
    %c0_i32_1 = arith.constant 0 : i32
    return %c0_i32, %c0_i32_0 : i32, i32
  }
  func.func @transform_8(%arg0: i32, %arg1: i32) -> (i32, i32) {
    %c0_i32 = arith.constant 0 : i32
    %c0_i32_0 = arith.constant 0 : i32
    %c0_i32_1 = arith.constant 0 : i32
    return %c0_i32, %c0_i32_0 : i32, i32
  }
  func.func @transform_9(%arg0: i32, %arg1: i32) -> (i32, i32) {
    %c0_i32 = arith.constant 0 : i32
    %c0_i32_0 = arith.constant 0 : i32
    return %arg0, %c0_i32 : i32, i32
  }
}

</mosaic_0001>

<llo_original>
// kernel: tpu_custom_call.1
$region0: #{tpu_custom_call.1}
  #allocation0 [shape = 'u32[]', space=smem, size = 0x4, offset = 0x4, fixed_abs, tag = 'smem constant byte address 0x4 - core index']
  #allocation1 [shape = 'u32[72,128]{1,0:T(1,128)}', space=vmem, size = 0x9000, scoped, tag = 'internal scratch']
  #allocation2 [shape = 'f32[2,8,128]{2,1,0:T(8,128)}', space=vmem, size = 0x2000, scoped, tag = 'scratch operand']
  #allocation3 [shape = 'f32[2,8,128]{2,1,0:T(8,128)}', space=vmem, size = 0x2000, scoped, tag = 'scratch operand']
  #allocation4 [shape = 'f32[8,8,512]{2,1,0:T(8,128)}', space=vmem, size = 0x20000, scoped, tag = 'scratch operand']
  %s0 = inlined_call_operand.vmem [shape: f32[8,8,4], index: 0, kind: input, shape index: {}]
  %s1 = inlined_call_operand.vmem [shape: f32[4,512], index: 1, kind: input, shape index: {}]
  %s2 = inlined_call_operand.vmem [shape: f32[1,512], index: 2, kind: input, shape index: {}]
  %s3 = inlined_call_operand.hbm [shape: f32[128,512], index: 3, kind: input, shape index: {}]
  %s4 = inlined_call_operand.hbm [shape: f32[128,512], index: 4, kind: input, shape index: {}]
  %s5 = inlined_call_operand.hbm [shape: f32[128,512], index: 5, kind: input, shape index: {}]
  %s6 = inlined_call_operand.vmem [shape: f32[1,512], index: 6, kind: input, shape index: {}]
  %s7 = inlined_call_operand.hbm [shape: f32[128,128], index: 7, kind: input, shape index: {}]
  %s8 = inlined_call_operand.vmem [shape: f32[1,128], index: 8, kind: input, shape index: {}]
  %s9 = inlined_call_operand.hbm [shape: f32[8,128], index: 9, kind: output, shape index: {}]
  %s10 = sld [smem:[#allocation0]]
  $region98: #{tpu_custom_call.1} parent=0
    _
  %s12 = ssub.s32 1, %s10
  %s13 = scalar_select 0, %s12, %s10
  $region1: #{tpu_custom_call.1} parent=0
    #allocation5 [shape = 'u8[262144]{0}', space=vmem, size = 0x40000, scoped, tag = 'input window, operand 3, single buffered']
    #allocation6 [shape = 's32[1]{0}', space=sflag, size = 0x4, scoped, tag = 'scoped memory for tpu_custom_call.1']
    #allocation7 [shape = 's32[1]{0}', space=sflag, size = 0x4, scoped, tag = 'scoped memory for tpu_custom_call.1']
    #allocation8 [shape = 'u8[262144]{0}', space=vmem, size = 0x40000, scoped, tag = 'input window, operand 4, single buffered']
    #allocation9 [shape = 's32[1]{0}', space=sflag, size = 0x4, scoped, tag = 'scoped memory for tpu_custom_call.1']
    #allocation10 [shape = 'u8[262144]{0}', space=vmem, size = 0x40000, scoped, tag = 'input window, operand 5, single buffered']
    #allocation11 [shape = 'u8[65536]{0}', space=vmem, size = 0x10000, scoped, tag = 'input window, operand 7, single buffered']
    #allocation12 [shape = 's32[1]{0}', space=sflag, size = 0x4, scoped, tag = 'scoped memory for tpu_custom_call.1']
    #allocation13 [shape = 'u8[4096]{0}', space=vmem, size = 0x1000, scoped, tag = 'output window, operand 0, single buffered']
    %14 = vsyncpa [#allocation6], 0
    %15 = vsyncpa [#allocation9], 0
    %16 = vsyncpa [#allocation12], 0
    %17 = vsyncpa [#allocation7], 0
    // Predicated region
    $region2: #{tpu_custom_call.1} parent=1 // pred_check
      _
    $region3: #{tpu_custom_call.1} parent=1 // pred_check_branch
      %19 = sbr.rel (0) target = $region5
    $region4: #{tpu_custom_call.1} parent=1 // pred_region
      _
    $region5: #{tpu_custom_call.1} parent=1 // pred_fallthru
      _
    // Predicated region
    $region6: #{tpu_custom_call.1} parent=1 // pred_check
      _
    $region7: #{tpu_custom_call.1} parent=1 // pred_check_branch
      %21 = sbr.rel (0) target = $region9
    $region8: #{tpu_custom_call.1} parent=1 // pred_region
      _
    $region9: #{tpu_custom_call.1} parent=1 // pred_fallthru
      _
    // Predicated region
    $region10: #{tpu_custom_call.1} parent=1 // pred_check
      _
    $region11: #{tpu_custom_call.1} parent=1 // pred_check_branch
      %23 = sbr.rel (0) target = $region13
    $region12: #{tpu_custom_call.1} parent=1 // pred_region
      _
    $region13: #{tpu_custom_call.1} parent=1 // pred_fallthru
      _
    // Predicated region
    $region14: #{tpu_custom_call.1} parent=1 // pred_check
      _
    $region15: #{tpu_custom_call.1} parent=1 // pred_check_branch
      %25 = sbr.rel (0) target = $region17
    $region16: #{tpu_custom_call.1} parent=1 // pred_region
      %27 = vsyncadd [#allocation6], 0
      %s28 = sshll.u32 %s3, 4
      %s29 = int_to_ptr.hbm [resolvable:$true] %s28
      %s30 = sshll.u32 [#allocation5], 4
      %s31 = int_to_ptr.vmem [resolvable:$true] %s30
      %36 = dma.hbm_to_vmem [thread:$0]  %s29, 8192, %s31, [#allocation6], 512, 512, 32
    $region17: #{tpu_custom_call.1} parent=1 // pred_fallthru
      _
    // Predicated region
    $region18: #{tpu_custom_call.1} parent=1 // pred_check
      _
    $region19: #{tpu_custom_call.1} parent=1 // pred_check_branch
      %38 = sbr.rel (0) target = $region21
    $region20: #{tpu_custom_call.1} parent=1 // pred_region
      %40 = vsyncadd [#allocation9], 0
      %s41 = sshll.u32 %s4, 4
      %s42 = int_to_ptr.hbm [resolvable:$true] %s41
      %s43 = sshll.u32 [#allocation8], 4
      %s44 = int_to_ptr.vmem [resolvable:$true] %s43
      %49 = dma.hbm_to_vmem [thread:$0]  %s42, 8192, %s44, [#allocation9], 512, 512, 32
    $region21: #{tpu_custom_call.1} parent=1 // pred_fallthru
      _
    // Predicated region
    $region22: #{tpu_custom_call.1} parent=1 // pred_check
      _
    $region23: #{tpu_custom_call.1} parent=1 // pred_check_branch
      %51 = sbr.rel (0) target = $region25
    $region24: #{tpu_custom_call.1} parent=1 // pred_region
      %53 = vsyncadd [#allocation9], 0
      %s54 = sshll.u32 %s5, 4
      %s55 = int_to_ptr.hbm [resolvable:$true] %s54
      %s56 = sshll.u32 [#allocation10], 4
      %s57 = int_to_ptr.vmem [resolvable:$true] %s56
      %62 = dma.hbm_to_vmem [thread:$0]  %s55, 8192, %s57, [#allocation9], 512, 512, 32
    $region25: #{tpu_custom_call.1} parent=1 // pred_fallthru
      _
    // Predicated region
    $region26: #{tpu_custom_call.1} parent=1 // pred_check
      _
    $region27: #{tpu_custom_call.1} parent=1 // pred_check_branch
      %64 = sbr.rel (0) target = $region29
    $region28: #{tpu_custom_call.1} parent=1 // pred_region
      _
    $region29: #{tpu_custom_call.1} parent=1 // pred_fallthru
      _
    // Predicated region
    $region30: #{tpu_custom_call.1} parent=1 // pred_check
      _
    $region31: #{tpu_custom_call.1} parent=1 // pred_check_branch
      %66 = sbr.rel (0) target = $region33
    $region32: #{tpu_custom_call.1} parent=1 // pred_region
      %68 = vsyncadd [#allocation12], 0
      %s69 = sshll.u32 %s7, 4
      %s70 = int_to_ptr.hbm [resolvable:$true] %s69
      %s71 = sshll.u32 [#allocation11], 4
      %s72 = int_to_ptr.vmem [resolvable:$true] %s71
      %77 = dma.hbm_to_vmem [thread:$0]  %s70, 2048, %s72, [#allocation12], 128, 128, 8
    $region33: #{tpu_custom_call.1} parent=1 // pred_fallthru
      _
    // Predicated region
    $region34: #{tpu_custom_call.1} parent=1 // pred_check
      _
    $region35: #{tpu_custom_call.1} parent=1 // pred_check_branch
      %79 = sbr.rel (0) target = $region37
    $region36: #{tpu_custom_call.1} parent=1 // pred_region
      _
    $region37: #{tpu_custom_call.1} parent=1 // pred_fallthru
      _
    // Predicated region
    $region38: #{tpu_custom_call.1} parent=1 // pred_check
      _
    $region39: #{tpu_custom_call.1} parent=1 // pred_check_branch
      %81 = sbr.rel (0) target = $region41
    $region40: #{tpu_custom_call.1} parent=1 // pred_region
      %83 = dma.done [#allocation6], 8192
    $region41: #{tpu_custom_call.1} parent=1 // pred_fallthru
      _
    // Predicated region
    $region42: #{tpu_custom_call.1} parent=1 // pred_check
      _
    $region43: #{tpu_custom_call.1} parent=1 // pred_check_branch
      %85 = sbr.rel (0) target = $region45
    $region44: #{tpu_custom_call.1} parent=1 // pred_region
      %87 = dma.done [#allocation9], 8192
    $region45: #{tpu_custom_call.1} parent=1 // pred_fallthru
      _
    // Predicated region
    $region46: #{tpu_custom_call.1} parent=1 // pred_check
      _
    $region47: #{tpu_custom_call.1} parent=1 // pred_check_branch
      %89 = sbr.rel (0) target = $region49
    $region48: #{tpu_custom_call.1} parent=1 // pred_region
      %91 = dma.done [#allocation9], 8192
    $region49: #{tpu_custom_call.1} parent=1 // pred_fallthru
      _
    // Predicated region
    $region50: #{tpu_custom_call.1} parent=1 // pred_check
      _
    $region51: #{tpu_custom_call.1} parent=1 // pred_check_branch
      %93 = sbr.rel (0) target = $region53
    $region52: #{tpu_custom_call.1} parent=1 // pred_region
      %95 = dma.done [#allocation12], 2048
    $region53: #{tpu_custom_call.1} parent=1 // pred_fallthru
      _
    %p96 = scmp.eq.s32.totalorder 0, 0
    // Predicated region
    $region54: #{tpu_custom_call.1} parent=1 // pred_check
      %p97 = pneg %p96
    $region55: #{tpu_custom_call.1} parent=1 // pred_check_branch
      %99 = sbr.rel (%p97) target = $region57
    $region56: #{tpu_custom_call.1} parent=1 // pred_region
      %100 = vst [vmem:[#allocation2] sm:$0xff] 0.0
      %101 = vst [vmem:[#allocation2 + $0x8] sm:$0xff] 0.0
      %102 = vst [vmem:[#allocation3] sm:$0xff] 0.0
      %103 = vst [vmem:[#allocation3 + $0x8] sm:$0xff] 0.0
    $region57: #{tpu_custom_call.1} parent=1 // pred_fallthru
      _
    %v104 = vld [vmem:[%s0] sm:$0xff]
    %v105 = vld [vmem:[%s0 + $0x8] sm:$0xff]
    %v106 = vld [vmem:[%s0 + $0x10] sm:$0xff]
    %v107 = vld [vmem:[%s0 + $0x18] sm:$0xff]
    %v108 = vld [vmem:[%s0 + $0x20] sm:$0xff]
    %v109 = vld [vmem:[%s0 + $0x28] sm:$0xff]
    %v110 = vld [vmem:[%s0 + $0x30] sm:$0xff]
    %v111 = vld [vmem:[%s0 + $0x38] sm:$0xff]
    %v112 = vld [vmem:[%s1] sm:$0xff]
    %v113 = vld [vmem:[%s1 + $0x8] sm:$0xff]
    %v114 = vld [vmem:[%s2] sm:$0xf]
    %v116 = vperm.slane %v114, 0
    %v117 = vperm.slane %v114, 1
    %v118 = vperm.slane %v114, 2
    %v119 = vperm.slane %v114, 3
    %126 = vst [vmem:[#allocation1] ss:$2 sm:$0xff] %v112
    %s127 = scalar_lea.vmem [#allocation1], 16
    %128 = vst [vmem:[%s127] ss:$2 sm:$0xff] %v113
    %v129 = vld.sshfl [vmem:[#allocation1] sm:$0xff pattern:$0x75316420]
    %v130 = vld.sshfl [vmem:[#allocation1 + $0x8] sm:$0xff pattern:$0x75316420]
    %v131 = vld.sshfl [vmem:[#allocation1 + $0x10] sm:$0xff pattern:$0x75316420]
    %v132 = vld.sshfl [vmem:[#allocation1 + $0x18] sm:$0xff pattern:$0x75316420]
    %vm133 = vcmask 31744
    %v135 = vsel %vm133, %v104, 0
    %v138 = vsel %vm133, %v105, 0
    %v141 = vsel %vm133, %v106, 0
    %v144 = vsel %vm133, %v107, 0
    %v147 = vsel %vm133, %v108, 0
    %v150 = vsel %vm133, %v109, 0
    %v153 = vsel %vm133, %v110, 0
    %v156 = vsel %vm133, %v111, 0
    %vm158 = vcmask 1043456
    %v159 = vsel %vm158, %v129, 0
    %v161 = vsel %vm158, %v130, 0
    %v163 = vsel %vm158, %v131, 0
    %v165 = vsel %vm158, %v132, 0
    %167 = vmatpush.msra.mxu0 0.0
    %168 = vmatpush.msra.mxu0 0.0
    %169 = vmatpush.msra.mxu0 0.0
    %170 = vmatpush.msra.mxu0 0.0
    %171 = vmatpush.msra.mxu0 0.0
    %172 = vmatpush.msra.mxu0 0.0
    %173 = vmatpush.msra.mxu0 0.0
    %174 = vmatpush.msra.mxu0 0.0
    %175 = vmatpush.msra.mxu0 0.0
    %176 = vmatpush.msra.mxu0 0.0
    %177 = vmatpush.msra.mxu0 0.0
    %178 = vmatpush.msra.mxu0 0.0
    %179 = vmatpush.msra.mxu0 0.0
    %180 = vmatpush.msra.mxu0 0.0
    %181 = vmatpush.msra.mxu0 0.0
    %182 = vmatpush.msra.mxu0 %v159
    %183 = vmatmul.f32.gmra.mxu0 %v135
    %v184 = vpop.f32.mrf.mxu0
    %v185 = vadd.f32 %v116, %v184
    %186 = vmatmul.f32.gmra.mxu0 %v138
    %v187 = vpop.f32.mrf.mxu0
    %v188 = vadd.f32 %v116, %v187
    %189 = vmatmul.f32.gmra.mxu0 %v141
    %v190 = vpop.f32.mrf.mxu0
    %v191 = vadd.f32 %v116, %v190
    %192 = vmatmul.f32.gmra.mxu0 %v144
    %v193 = vpop.f32.mrf.mxu0
    %v194 = vadd.f32 %v116, %v193
    %195 = vmatmul.f32.gmra.mxu0 %v147
    %v196 = vpop.f32.mrf.mxu0
    %v197 = vadd.f32 %v116, %v196
    %198 = vmatmul.f32.gmra.mxu0 %v150
    %v199 = vpop.f32.mrf.mxu0
    %v200 = vadd.f32 %v116, %v199
    %201 = vmatmul.f32.gmra.mxu0 %v153
    %v202 = vpop.f32.mrf.mxu0
    %v203 = vadd.f32 %v116, %v202
    %204 = vmatmul.f32.gmra.mxu0 %v156
    %v205 = vpop.f32.mrf.mxu0
    %v206 = vadd.f32 %v116, %v205
    %207 = vdwg.mxu0
    %208 = vmatpush.msra.mxu0 0.0
    %209 = vmatpush.msra.mxu0 0.0
    %210 = vmatpush.msra.mxu0 0.0
    %211 = vmatpush.msra.mxu0 0.0
    %212 = vmatpush.msra.mxu0 0.0
    %213 = vmatpush.msra.mxu0 0.0
    %214 = vmatpush.msra.mxu0 0.0
    %215 = vmatpush.msra.mxu0 0.0
    %216 = vmatpush.msra.mxu0 0.0
    %217 = vmatpush.msra.mxu0 0.0
    %218 = vmatpush.msra.mxu0 0.0
    %219 = vmatpush.msra.mxu0 0.0
    %220 = vmatpush.msra.mxu0 0.0
    %221 = vmatpush.msra.mxu0 0.0
    %222 = vmatpush.msra.mxu0 0.0
    %223 = vmatpush.msra.mxu0 %v161
    %224 = vmatmul.f32.gmra.mxu0 %v135
    %v225 = vpop.f32.mrf.mxu0
    %v226 = vadd.f32 %v117, %v225
    %227 = vmatmul.f32.gmra.mxu0 %v138
    %v228 = vpop.f32.mrf.mxu0
    %v229 = vadd.f32 %v117, %v228
    %230 = vmatmul.f32.gmra.mxu0 %v141
    %v231 = vpop.f32.mrf.mxu0
    %v232 = vadd.f32 %v117, %v231
    %233 = vmatmul.f32.gmra.mxu0 %v144
    %v234 = vpop.f32.mrf.mxu0
    %v235 = vadd.f32 %v117, %v234
    %236 = vmatmul.f32.gmra.mxu0 %v147
    %v237 = vpop.f32.mrf.mxu0
    %v238 = vadd.f32 %v117, %v237
    %239 = vmatmul.f32.gmra.mxu0 %v150
    %v240 = vpop.f32.mrf.mxu0
    %v241 = vadd.f32 %v117, %v240
    %242 = vmatmul.f32.gmra.mxu0 %v153
    %v243 = vpop.f32.mrf.mxu0
    %v244 = vadd.f32 %v117, %v243
    %245 = vmatmul.f32.gmra.mxu0 %v156
    %v246 = vpop.f32.mrf.mxu0
    %v247 = vadd.f32 %v117, %v246
    %248 = vdwg.mxu0
    %249 = vmatpush.msra.mxu0 0.0
    %250 = vmatpush.msra.mxu0 0.0
    %251 = vmatpush.msra.mxu0 0.0
    %252 = vmatpush.msra.mxu0 0.0
    %253 = vmatpush.msra.mxu0 0.0
    %254 = vmatpush.msra.mxu0 0.0
    %255 = vmatpush.msra.mxu0 0.0
    %256 = vmatpush.msra.mxu0 0.0
    %257 = vmatpush.msra.mxu0 0.0
    %258 = vmatpush.msra.mxu0 0.0
    %259 = vmatpush.msra.mxu0 0.0
    %260 = vmatpush.msra.mxu0 0.0
    %261 = vmatpush.msra.mxu0 0.0
    %262 = vmatpush.msra.mxu0 0.0
    %263 = vmatpush.msra.mxu0 0.0
    %264 = vmatpush.msra.mxu0 %v163
    %265 = vmatmul.f32.gmra.mxu0 %v135
    %v266 = vpop.f32.mrf.mxu0
    %v267 = vadd.f32 %v118, %v266
    %268 = vmatmul.f32.gmra.mxu0 %v138
    %v269 = vpop.f32.mrf.mxu0
    %v270 = vadd.f32 %v118, %v269
    %271 = vmatmul.f32.gmra.mxu0 %v141
    %v272 = vpop.f32.mrf.mxu0
    %v273 = vadd.f32 %v118, %v272
    %274 = vmatmul.f32.gmra.mxu0 %v144
    %v275 = vpop.f32.mrf.mxu0
    %v276 = vadd.f32 %v118, %v275
    %277 = vmatmul.f32.gmra.mxu0 %v147
    %v278 = vpop.f32.mrf.mxu0
    %v279 = vadd.f32 %v118, %v278
    %280 = vmatmul.f32.gmra.mxu0 %v150
    %v281 = vpop.f32.mrf.mxu0
    %v282 = vadd.f32 %v118, %v281
    %283 = vmatmul.f32.gmra.mxu0 %v153
    %v284 = vpop.f32.mrf.mxu0
    %v285 = vadd.f32 %v118, %v284
    %286 = vmatmul.f32.gmra.mxu0 %v156
    %v287 = vpop.f32.mrf.mxu0
    %v288 = vadd.f32 %v118, %v287
    %289 = vdwg.mxu0
    %290 = vmatpush.msra.mxu0 0.0
    %291 = vmatpush.msra.mxu0 0.0
    %292 = vmatpush.msra.mxu0 0.0
    %293 = vmatpush.msra.mxu0 0.0
    %294 = vmatpush.msra.mxu0 0.0
    %295 = vmatpush.msra.mxu0 0.0
    %296 = vmatpush.msra.mxu0 0.0
    %297 = vmatpush.msra.mxu0 0.0
    %298 = vmatpush.msra.mxu0 0.0
    %299 = vmatpush.msra.mxu0 0.0
    %300 = vmatpush.msra.mxu0 0.0
    %301 = vmatpush.msra.mxu0 0.0
    %302 = vmatpush.msra.mxu0 0.0
    %303 = vmatpush.msra.mxu0 0.0
    %304 = vmatpush.msra.mxu0 0.0
    %305 = vmatpush.msra.mxu0 %v165
    %306 = vmatmul.f32.gmra.mxu0 %v135
    %v307 = vpop.f32.mrf.mxu0
    %v308 = vadd.f32 %v119, %v307
    %309 = vmatmul.f32.gmra.mxu0 %v138
    %v310 = vpop.f32.mrf.mxu0
    %v311 = vadd.f32 %v119, %v310
    %312 = vmatmul.f32.gmra.mxu0 %v141
    %v313 = vpop.f32.mrf.mxu0
    %v314 = vadd.f32 %v119, %v313
    %315 = vmatmul.f32.gmra.mxu0 %v144
    %v316 = vpop.f32.mrf.mxu0
    %v317 = vadd.f32 %v119, %v316
    %318 = vmatmul.f32.gmra.mxu0 %v147
    %v319 = vpop.f32.mrf.mxu0
    %v320 = vadd.f32 %v119, %v319
    %321 = vmatmul.f32.gmra.mxu0 %v150
    %v322 = vpop.f32.mrf.mxu0
    %v323 = vadd.f32 %v119, %v322
    %324 = vmatmul.f32.gmra.mxu0 %v153
    %v325 = vpop.f32.mrf.mxu0
    %v326 = vadd.f32 %v119, %v325
    %327 = vmatmul.f32.gmra.mxu0 %v156
    %v328 = vpop.f32.mrf.mxu0
    %v329 = vadd.f32 %v119, %v328
    %330 = vdwg.mxu0
    %331 = vst [vmem:[#allocation4] sm:$0xff] %v185
    %332 = vst [vmem:[#allocation4 + $0x8] sm:$0xff] %v226
    %333 = vst [vmem:[#allocation4 + $0x10] sm:$0xff] %v267
    %334 = vst [vmem:[#allocation4 + $0x18] sm:$0xff] %v308
    %335 = vst [vmem:[#allocation4 + $0x20] sm:$0xff] %v188
    %336 = vst [vmem:[#allocation4 + $0x28] sm:$0xff] %v229
    %337 = vst [vmem:[#allocation4 + $0x30] sm:$0xff] %v270
    %338 = vst [vmem:[#allocation4 + $0x38] sm:$0xff] %v311
    %339 = vst [vmem:[#allocation4 + $0x40] sm:$0xff] %v191
    %340 = vst [vmem:[#allocation4 + $0x48] sm:$0xff] %v232
    %341 = vst [vmem:[#allocation4 + $0x50] sm:$0xff] %v273
    %342 = vst [vmem:[#allocation4 + $0x58] sm:$0xff] %v314
    %343 = vst [vmem:[#allocation4 + $0x60] sm:$0xff] %v194
    %344 = vst [vmem:[#allocation4 + $0x68] sm:$0xff] %v235
    %345 = vst [vmem:[#allocation4 + $0x70] sm:$0xff] %v276
    %346 = vst [vmem:[#allocation4 + $0x78] sm:$0xff] %v317
    %347 = vst [vmem:[#allocation4 + $0x80] sm:$0xff] %v197
    %348 = vst [vmem:[#allocation4 + $0x88] sm:$0xff] %v238
    %349 = vst [vmem:[#allocation4 + $0x90] sm:$0xff] %v279
    %350 = vst [vmem:[#allocation4 + $0x98] sm:$0xff] %v320
    %351 = vst [vmem:[#allocation4 + $0xa0] sm:$0xff] %v200
    %352 = vst [vmem:[#allocation4 + $0xa8] sm:$0xff] %v241
    %353 = vst [vmem:[#allocation4 + $0xb0] sm:$0xff] %v282
    %354 = vst [vmem:[#allocation4 + $0xb8] sm:$0xff] %v323
    %355 = vst [vmem:[#allocation4 + $0xc0] sm:$0xff] %v203
    %356 = vst [vmem:[#allocation4 + $0xc8] sm:$0xff] %v244
    %357 = vst [vmem:[#allocation4 + $0xd0] sm:$0xff] %v285
    %358 = vst [vmem:[#allocation4 + $0xd8] sm:$0xff] %v326
    %359 = vst [vmem:[#allocation4 + $0xe0] sm:$0xff] %v206
    %360 = vst [vmem:[#allocation4 + $0xe8] sm:$0xff] %v247
    %361 = vst [vmem:[#allocation4 + $0xf0] sm:$0xff] %v288
    %362 = vst [vmem:[#allocation4 + $0xf8] sm:$0xff] %v329
    %v363 = vld [vmem:[%s6] sm:$0xf]
    %s364 = smul.u32 0, 8
    %v365 = vld [vmem:[#allocation4] sm:$0xff]
    %v366 = vld [vmem:[#allocation4 + $0x8] sm:$0xff]
    %v367 = vld [vmem:[#allocation4 + $0x10] sm:$0xff]
    %v368 = vld [vmem:[#allocation4 + $0x18] sm:$0xff]
    %v369 = vld [vmem:[#allocation2] sm:$0xff]
    %v370 = vld [vmem:[#allocation5] sm:$0xff]
    %v371 = vld [vmem:[#allocation5 + $0x8] sm:$0xff]
    %v372 = vld [vmem:[#allocation5 + $0x10] sm:$0xff]
    %v373 = vld [vmem:[#allocation5 + $0x18] sm:$0xff]
    %v374 = vld [vmem:[#allocation5 + $0x20] sm:$0xff]
    %v375 = vld [vmem:[#allocation5 + $0x28] sm:$0xff]
    %v376 = vld [vmem:[#allocation5 + $0x30] sm:$0xff]
    %v377 = vld [vmem:[#allocation5 + $0x38] sm:$0xff]
    %v378 = vld [vmem:[#allocation5 + $0x40] sm:$0xff]
    %v379 = vld [vmem:[#allocation5 + $0x48] sm:$0xff]
    %v380 = vld [vmem:[#allocation5 + $0x50] sm:$0xff]
    %v381 = vld [vmem:[#allocation5 + $0x58] sm:$0xff]
    %v382 = vld [vmem:[#allocation5 + $0x60] sm:$0xff]
    %v383 = vld [vmem:[#allocation5 + $0x68] sm:$0xff]
    %v384 = vld [vmem:[#allocation5 + $0x70] sm:$0xff]
    %v385 = vld [vmem:[#allocation5 + $0x78] sm:$0xff]
    %v386 = vld [vmem:[#allocation5 + $0x80] sm:$0xff]
    %v387 = vld [vmem:[#allocation5 + $0x88] sm:$0xff]
    %v388 = vld [vmem:[#allocation5 + $0x90] sm:$0xff]
    %v389 = vld [vmem:[#allocation5 + $0x98] sm:$0xff]
    %v390 = vld [vmem:[#allocation5 + $0xa0] sm:$0xff]
    %v391 = vld [vmem:[#allocation5 + $0xa8] sm:$0xff]
    %v392 = vld [vmem:[#allocation5 + $0xb0] sm:$0xff]
    %v393 = vld [vmem:[#allocation5 + $0xb8] sm:$0xff]
    %v394 = vld [vmem:[#allocation5 + $0xc0] sm:$0xff]
    %v395 = vld [vmem:[#allocation5 + $0xc8] sm:$0xff]
    %v396 = vld [vmem:[#allocation5 + $0xd0] sm:$0xff]
    %v397 = vld [vmem:[#allocation5 + $0xd8] sm:$0xff]
    %v398 = vld [vmem:[#allocation5 + $0xe0] sm:$0xff]
    %v399 = vld [vmem:[#allocation5 + $0xe8] sm:$0xff]
    %v400 = vld [vmem:[#allocation5 + $0xf0] sm:$0xff]
    %v401 = vld [vmem:[#allocation5 + $0xf8] sm:$0xff]
    %v402 = vld [vmem:[#allocation5 + $0x100] sm:$0xff]
    %v403 = vld [vmem:[#allocation5 + $0x108] sm:$0xff]
    %v404 = vld [vmem:[#allocation5 + $0x110] sm:$0xff]
    %v405 = vld [vmem:[#allocation5 + $0x118] sm:$0xff]
    %v406 = vld [vmem:[#allocation5 + $0x120] sm:$0xff]
    %v407 = vld [vmem:[#allocation5 + $0x128] sm:$0xff]
    %v408 = vld [vmem:[#allocation5 + $0x130] sm:$0xff]
    %v409 = vld [vmem:[#allocation5 + $0x138] sm:$0xff]
    %v410 = vld [vmem:[#allocation5 + $0x140] sm:$0xff]
    %v411 = vld [vmem:[#allocation5 + $0x148] sm:$0xff]
    %v412 = vld [vmem:[#allocation5 + $0x150] sm:$0xff]
    %v413 = vld [vmem:[#allocation5 + $0x158] sm:$0xff]
    %v414 = vld [vmem:[#allocation5 + $0x160] sm:$0xff]
    %v415 = vld [vmem:[#allocation5 + $0x168] sm:$0xff]
    %v416 = vld [vmem:[#allocation5 + $0x170] sm:$0xff]
    %v417 = vld [vmem:[#allocation5 + $0x178] sm:$0xff]
    %v418 = vld [vmem:[#allocation5 + $0x180] sm:$0xff]
    %v419 = vld [vmem:[#allocation5 + $0x188] sm:$0xff]
    %v420 = vld [vmem:[#allocation5 + $0x190] sm:$0xff]
    %v421 = vld [vmem:[#allocation5 + $0x198] sm:$0xff]
    %v422 = vld [vmem:[#allocation5 + $0x1a0] sm:$0xff]
    %v423 = vld [vmem:[#allocation5 + $0x1a8] sm:$0xff]
    %v424 = vld [vmem:[#allocation5 + $0x1b0] sm:$0xff]
    %v425 = vld [vmem:[#allocation5 + $0x1b8] sm:$0xff]
    %v426 = vld [vmem:[#allocation5 + $0x1c0] sm:$0xff]
    %v427 = vld [vmem:[#allocation5 + $0x1c8] sm:$0xff]
    %v428 = vld [vmem:[#allocation5 + $0x1d0] sm:$0xff]
    %v429 = vld [vmem:[#allocation5 + $0x1d8] sm:$0xff]
    %v430 = vld [vmem:[#allocation5 + $0x1e0] sm:$0xff]
    %v431 = vld [vmem:[#allocation5 + $0x1e8] sm:$0xff]
    %v432 = vld [vmem:[#allocation5 + $0x1f0] sm:$0xff]
    %v433 = vld [vmem:[#allocation5 + $0x1f8] sm:$0xff]
    %434 = vmatpush.msra.mxu0 %v430
    %435 = vmatpush.msra.mxu0 %v426
    %436 = vmatpush.msra.mxu0 %v422
    %437 = vmatpush.msra.mxu0 %v418
    %438 = vmatpush.msra.mxu0 %v414
    %439 = vmatpush.msra.mxu0 %v410
    %440 = vmatpush.msra.mxu0 %v406
    %441 = vmatpush.msra.mxu0 %v402
    %442 = vmatpush.msra.mxu0 %v398
    %443 = vmatpush.msra.mxu0 %v394
    %444 = vmatpush.msra.mxu0 %v390
    %445 = vmatpush.msra.mxu0 %v386
    %446 = vmatpush.msra.mxu0 %v382
    %447 = vmatpush.msra.mxu0 %v378
    %448 = vmatpush.msra.mxu0 %v374
    %449 = vmatpush.msra.mxu0 %v370
    %450 = vmatmul.f32.gmra.mxu0 %v369
    %v451 = vpop.f32.mrf.mxu0
    %v452 = vadd.f32 0.0, %v451
    %453 = vdwg.mxu0
    %454 = vmatpush.msra.mxu0 %v431
    %455 = vmatpush.msra.mxu0 %v427
    %456 = vmatpush.msra.mxu0 %v423
    %457 = vmatpush.msra.mxu0 %v419
    %458 = vmatpush.msra.mxu0 %v415
    %459 = vmatpush.msra.mxu0 %v411
    %460 = vmatpush.msra.mxu0 %v407
    %461 = vmatpush.msra.mxu0 %v403
    %462 = vmatpush.msra.mxu0 %v399
    %463 = vmatpush.msra.mxu0 %v395
    %464 = vmatpush.msra.mxu0 %v391
    %465 = vmatpush.msra.mxu0 %v387
    %466 = vmatpush.msra.mxu0 %v383
    %467 = vmatpush.msra.mxu0 %v379
    %468 = vmatpush.msra.mxu0 %v375
    %469 = vmatpush.msra.mxu0 %v371
    %470 = vmatmul.f32.gmra.mxu0 %v369
    %v471 = vpop.f32.mrf.mxu0
    %v472 = vadd.f32 0.0, %v471
    %473 = vdwg.mxu0
    %474 = vmatpush.msra.mxu0 %v432
    %475 = vmatpush.msra.mxu0 %v428
    %476 = vmatpush.msra.mxu0 %v424
    %477 = vmatpush.msra.mxu0 %v420
    %478 = vmatpush.msra.mxu0 %v416
    %479 = vmatpush.msra.mxu0 %v412
    %480 = vmatpush.msra.mxu0 %v408
    %481 = vmatpush.msra.mxu0 %v404
    %482 = vmatpush.msra.mxu0 %v400
    %483 = vmatpush.msra.mxu0 %v396
    %484 = vmatpush.msra.mxu0 %v392
    %485 = vmatpush.msra.mxu0 %v388
    %486 = vmatpush.msra.mxu0 %v384
    %487 = vmatpush.msra.mxu0 %v380
    %488 = vmatpush.msra.mxu0 %v376
    %489 = vmatpush.msra.mxu0 %v372
    %490 = vmatmul.f32.gmra.mxu0 %v369
    %v491 = vpop.f32.mrf.mxu0
    %v492 = vadd.f32 0.0, %v491
    %493 = vdwg.mxu0
    %494 = vmatpush.msra.mxu0 %v433
    %495 = vmatpush.msra.mxu0 %v429
    %496 = vmatpush.msra.mxu0 %v425
    %497 = vmatpush.msra.mxu0 %v421
    %498 = vmatpush.msra.mxu0 %v417
    %499 = vmatpush.msra.mxu0 %v413
    %500 = vmatpush.msra.mxu0 %v409
    %501 = vmatpush.msra.mxu0 %v405
    %502 = vmatpush.msra.mxu0 %v401
    %503 = vmatpush.msra.mxu0 %v397
    %504 = vmatpush.msra.mxu0 %v393
    %505 = vmatpush.msra.mxu0 %v389
    %506 = vmatpush.msra.mxu0 %v385
    %507 = vmatpush.msra.mxu0 %v381
    %508 = vmatpush.msra.mxu0 %v377
    %509 = vmatpush.msra.mxu0 %v373
    %510 = vmatmul.f32.gmra.mxu0 %v369
    %v511 = vpop.f32.mrf.mxu0
    %v512 = vadd.f32 0.0, %v511
    %513 = vdwg.mxu0
    %v514 = vadd.f32 %v365, %v452
    %v515 = vadd.f32 %v366, %v472
    %v516 = vadd.f32 %v367, %v492
    %v517 = vadd.f32 %v368, %v512
    %v518 = vld [vmem:[#allocation3] sm:$0xff]
    %v519 = vxor.u32 %v514, 2147483648
    %v520 = vmul.f32 %v519, 1.442695
    %v521 = vpow.pop %v520
    %v522 = vadd.f32 %v521, 1.0
    %v523 = vrcp.pop %v522
    %v524 = vmul.f32 %v522, %v523
    %v525 = vsub.f32 1.0, %v524
    %v526 = vmul.f32 %v523, %v525
    %v527 = vadd.f32 %v523, %v526
    %vm528 = vweird.f32 %v522
    %vm529 = vweird.f32 %v523
    %vm530 = vmor %vm528, %vm529
    %v531 = vsel %vm530, %v523, %v527
    %v532 = vand.u32 2147483647, %v522
    %vm533 = vcmp.eq.f32.partialorder %v532, 8.507059e+37
    %v534 = vand.u32 %v522, 2147483648
    %v535 = vor.u32 1.1754944e-38, %v534
    %v536 = vsel %vm533, %v535, %v531
    %v537 = vmul.f32 1.0, %v536
    %v538 = vxor.u32 %v515, 2147483648
    %v539 = vmul.f32 %v538, 1.442695
    %v540 = vpow.pop %v539
    %v541 = vadd.f32 %v540, 1.0
    %v542 = vrcp.pop %v541
    %v543 = vmul.f32 %v541, %v542
    %v544 = vsub.f32 1.0, %v543
    %v545 = vmul.f32 %v542, %v544
    %v546 = vadd.f32 %v542, %v545
    %vm547 = vweird.f32 %v541
    %vm548 = vweird.f32 %v542
    %vm549 = vmor %vm547, %vm548
    %v550 = vsel %vm549, %v542, %v546
    %v551 = vand.u32 2147483647, %v541
    %vm552 = vcmp.eq.f32.partialorder %v551, 8.507059e+37
    %v553 = vand.u32 %v541, 2147483648
    %v554 = vor.u32 1.1754944e-38, %v553
    %v555 = vsel %vm552, %v554, %v550
    %v556 = vmul.f32 1.0, %v555
    %v557 = vtanh.pop %v516
    %v558 = vxor.u32 %v517, 2147483648
    %v559 = vmul.f32 %v558, 1.442695
    %v560 = vpow.pop %v559
    %v561 = vadd.f32 %v560, 1.0
    %v562 = vrcp.pop %v561
    %v563 = vmul.f32 %v561, %v562
    %v564 = vsub.f32 1.0, %v563
    %v565 = vmul.f32 %v562, %v564
    %v566 = vadd.f32 %v562, %v565
    %vm567 = vweird.f32 %v561
    %vm568 = vweird.f32 %v562
    %vm569 = vmor %vm567, %vm568
    %v570 = vsel %vm569, %v562, %v566
    %v571 = vand.u32 2147483647, %v561
    %vm572 = vcmp.eq.f32.partialorder %v571, 8.507059e+37
    %v573 = vand.u32 %v561, 2147483648
    %v574 = vor.u32 1.1754944e-38, %v573
    %v575 = vsel %vm572, %v574, %v570
    %v576 = vmul.f32 1.0, %v575
    %v577 = vmul.f32 %v556, %v518
    %v578 = vmul.f32 %v537, %v557
    %v579 = vadd.f32 %v577, %v578
    %v580 = vtanh.pop %v579
    %v581 = vmul.f32 %v576, %v580
    %582 = vst [vmem:[#allocation2] sm:$0xff] %v581
    %583 = vst [vmem:[#allocation3] sm:$0xff] %v579
    %v584 = vld [vmem:[#allocation8] sm:$0xff]
    %v585 = vld [vmem:[#allocation8 + $0x8] sm:$0xff]
    %v586 = vld [vmem:[#allocation8 + $0x10] sm:$0xff]
    %v587 = vld [vmem:[#allocation8 + $0x18] sm:$0xff]
    %v588 = vld [vmem:[#allocation8 + $0x20] sm:$0xff]
    %v589 = vld [vmem:[#allocation8 + $0x28] sm:$0xff]
    %v590 = vld [vmem:[#allocation8 + $0x30] sm:$0xff]
    %v591 = vld [vmem:[#allocation8 + $0x38] sm:$0xff]
    %v592 = vld [vmem:[#allocation8 + $0x40] sm:$0xff]
    %v593 = vld [vmem:[#allocation8 + $0x48] sm:$0xff]
    %v594 = vld [vmem:[#allocation8 + $0x50] sm:$0xff]
    %v595 = vld [vmem:[#allocation8 + $0x58] sm:$0xff]
    %v596 = vld [vmem:[#allocation8 + $0x60] sm:$0xff]
    %v597 = vld [vmem:[#allocation8 + $0x68] sm:$0xff]
    %v598 = vld [vmem:[#allocation8 + $0x70] sm:$0xff]
    %v599 = vld [vmem:[#allocation8 + $0x78] sm:$0xff]
    %v600 = vld [vmem:[#allocation8 + $0x80] sm:$0xff]
    %v601 = vld [vmem:[#allocation8 + $0x88] sm:$0xff]
    %v602 = vld [vmem:[#allocation8 + $0x90] sm:$0xff]
    %v603 = vld [vmem:[#allocation8 + $0x98] sm:$0xff]
    %v604 = vld [vmem:[#allocation8 + $0xa0] sm:$0xff]
    %v605 = vld [vmem:[#allocation8 + $0xa8] sm:$0xff]
    %v606 = vld [vmem:[#allocation8 + $0xb0] sm:$0xff]
    %v607 = vld [vmem:[#allocation8 + $0xb8] sm:$0xff]
    %v608 = vld [vmem:[#allocation8 + $0xc0] sm:$0xff]
    %v609 = vld [vmem:[#allocation8 + $0xc8] sm:$0xff]
    %v610 = vld [vmem:[#allocation8 + $0xd0] sm:$0xff]
    %v611 = vld [vmem:[#allocation8 + $0xd8] sm:$0xff]
    %v612 = vld [vmem:[#allocation8 + $0xe0] sm:$0xff]
    %v613 = vld [vmem:[#allocation8 + $0xe8] sm:$0xff]
    %v614 = vld [vmem:[#allocation8 + $0xf0] sm:$0xff]
    %v615 = vld [vmem:[#allocation8 + $0xf8] sm:$0xff]
    %v616 = vld [vmem:[#allocation8 + $0x100] sm:$0xff]
    %v617 = vld [vmem:[#allocation8 + $0x108] sm:$0xff]
    %v618 = vld [vmem:[#allocation8 + $0x110] sm:$0xff]
    %v619 = vld [vmem:[#allocation8 + $0x118] sm:$0xff]
    %v620 = vld [vmem:[#allocation8 + $0x120] sm:$0xff]
    %v621 = vld [vmem:[#allocation8 + $0x128] sm:$0xff]
    %v622 = vld [vmem:[#allocation8 + $0x130] sm:$0xff]
    %v623 = vld [vmem:[#allocation8 + $0x138] sm:$0xff]
    %v624 = vld [vmem:[#allocation8 + $0x140] sm:$0xff]
    %v625 = vld [vmem:[#allocation8 + $0x148] sm:$0xff]
    %v626 = vld [vmem:[#allocation8 + $0x150] sm:$0xff]
    %v627 = vld [vmem:[#allocation8 + $0x158] sm:$0xff]
    %v628 = vld [vmem:[#allocation8 + $0x160] sm:$0xff]
    %v629 = vld [vmem:[#allocation8 + $0x168] sm:$0xff]
    %v630 = vld [vmem:[#allocation8 + $0x170] sm:$0xff]
    %v631 = vld [vmem:[#allocation8 + $0x178] sm:$0xff]
    %v632 = vld [vmem:[#allocation8 + $0x180] sm:$0xff]
    %v633 = vld [vmem:[#allocation8 + $0x188] sm:$0xff]
    %v634 = vld [vmem:[#allocation8 + $0x190] sm:$0xff]
    %v635 = vld [vmem:[#allocation8 + $0x198] sm:$0xff]
    %v636 = vld [vmem:[#allocation8 + $0x1a0] sm:$0xff]
    %v637 = vld [vmem:[#allocation8 + $0x1a8] sm:$0xff]
    %v638 = vld [vmem:[#allocation8 + $0x1b0] sm:$0xff]
    %v639 = vld [vmem:[#allocation8 + $0x1b8] sm:$0xff]
    %v640 = vld [vmem:[#allocation8 + $0x1c0] sm:$0xff]
    %v641 = vld [vmem:[#allocation8 + $0x1c8] sm:$0xff]
    %v642 = vld [vmem:[#allocation8 + $0x1d0] sm:$0xff]
    %v643 = vld [vmem:[#allocation8 + $0x1d8] sm:$0xff]
    %v644 = vld [vmem:[#allocation8 + $0x1e0] sm:$0xff]
    %v645 = vld [vmem:[#allocation8 + $0x1e8] sm:$0xff]
    %v646 = vld [vmem:[#allocation8 + $0x1f0] sm:$0xff]
    %v647 = vld [vmem:[#allocation8 + $0x1f8] sm:$0xff]
    %s648 = scalar_lea.vmem [#allocation2], 8
    %v649 = vld [vmem:[%s648] sm:$0xff]
    %v650 = vld [vmem:[#allocation10] sm:$0xff]
    %v651 = vld [vmem:[#allocation10 + $0x8] sm:$0xff]
    %v652 = vld [vmem:[#allocation10 + $0x10] sm:$0xff]
    %v653 = vld [vmem:[#allocation10 + $0x18] sm:$0xff]
    %v654 = vld [vmem:[#allocation10 + $0x20] sm:$0xff]
    %v655 = vld [vmem:[#allocation10 + $0x28] sm:$0xff]
    %v656 = vld [vmem:[#allocation10 + $0x30] sm:$0xff]
    %v657 = vld [vmem:[#allocation10 + $0x38] sm:$0xff]
    %v658 = vld [vmem:[#allocation10 + $0x40] sm:$0xff]
    %v659 = vld [vmem:[#allocation10 + $0x48] sm:$0xff]
    %v660 = vld [vmem:[#allocation10 + $0x50] sm:$0xff]
    %v661 = vld [vmem:[#allocation10 + $0x58] sm:$0xff]
    %v662 = vld [vmem:[#allocation10 + $0x60] sm:$0xff]
    %v663 = vld [vmem:[#allocation10 + $0x68] sm:$0xff]
    %v664 = vld [vmem:[#allocation10 + $0x70] sm:$0xff]
    %v665 = vld [vmem:[#allocation10 + $0x78] sm:$0xff]
    %v666 = vld [vmem:[#allocation10 + $0x80] sm:$0xff]
    %v667 = vld [vmem:[#allocation10 + $0x88] sm:$0xff]
    %v668 = vld [vmem:[#allocation10 + $0x90] sm:$0xff]
    %v669 = vld [vmem:[#allocation10 + $0x98] sm:$0xff]
    %v670 = vld [vmem:[#allocation10 + $0xa0] sm:$0xff]
    %v671 = vld [vmem:[#allocation10 + $0xa8] sm:$0xff]
    %v672 = vld [vmem:[#allocation10 + $0xb0] sm:$0xff]
    %v673 = vld [vmem:[#allocation10 + $0xb8] sm:$0xff]
    %v674 = vld [vmem:[#allocation10 + $0xc0] sm:$0xff]
    %v675 = vld [vmem:[#allocation10 + $0xc8] sm:$0xff]
    %v676 = vld [vmem:[#allocation10 + $0xd0] sm:$0xff]
    %v677 = vld [vmem:[#allocation10 + $0xd8] sm:$0xff]
    %v678 = vld [vmem:[#allocation10 + $0xe0] sm:$0xff]
    %v679 = vld [vmem:[#allocation10 + $0xe8] sm:$0xff]
    %v680 = vld [vmem:[#allocation10 + $0xf0] sm:$0xff]
    %v681 = vld [vmem:[#allocation10 + $0xf8] sm:$0xff]
    %v682 = vld [vmem:[#allocation10 + $0x100] sm:$0xff]
    %v683 = vld [vmem:[#allocation10 + $0x108] sm:$0xff]
    %v684 = vld [vmem:[#allocation10 + $0x110] sm:$0xff]
    %v685 = vld [vmem:[#allocation10 + $0x118] sm:$0xff]
    %v686 = vld [vmem:[#allocation10 + $0x120] sm:$0xff]
    %v687 = vld [vmem:[#allocation10 + $0x128] sm:$0xff]
    %v688 = vld [vmem:[#allocation10 + $0x130] sm:$0xff]
    %v689 = vld [vmem:[#allocation10 + $0x138] sm:$0xff]
    %v690 = vld [vmem:[#allocation10 + $0x140] sm:$0xff]
    %v691 = vld [vmem:[#allocation10 + $0x148] sm:$0xff]
    %v692 = vld [vmem:[#allocation10 + $0x150] sm:$0xff]
    %v693 = vld [vmem:[#allocation10 + $0x158] sm:$0xff]
    %v694 = vld [vmem:[#allocation10 + $0x160] sm:$0xff]
    %v695 = vld [vmem:[#allocation10 + $0x168] sm:$0xff]
    %v696 = vld [vmem:[#allocation10 + $0x170] sm:$0xff]
    %v697 = vld [vmem:[#allocation10 + $0x178] sm:$0xff]
    %v698 = vld [vmem:[#allocation10 + $0x180] sm:$0xff]
    %v699 = vld [vmem:[#allocation10 + $0x188] sm:$0xff]
    %v700 = vld [vmem:[#allocation10 + $0x190] sm:$0xff]
    %v701 = vld [vmem:[#allocation10 + $0x198] sm:$0xff]
    %v702 = vld [vmem:[#allocation10 + $0x1a0] sm:$0xff]
    %v703 = vld [vmem:[#allocation10 + $0x1a8] sm:$0xff]
    %v704 = vld [vmem:[#allocation10 + $0x1b0] sm:$0xff]
    %v705 = vld [vmem:[#allocation10 + $0x1b8] sm:$0xff]
    %v706 = vld [vmem:[#allocation10 + $0x1c0] sm:$0xff]
    %v707 = vld [vmem:[#allocation10 + $0x1c8] sm:$0xff]
    %v708 = vld [vmem:[#allocation10 + $0x1d0] sm:$0xff]
    %v709 = vld [vmem:[#allocation10 + $0x1d8] sm:$0xff]
    %v710 = vld [vmem:[#allocation10 + $0x1e0] sm:$0xff]
    %v711 = vld [vmem:[#allocation10 + $0x1e8] sm:$0xff]
    %v712 = vld [vmem:[#allocation10 + $0x1f0] sm:$0xff]
    %v713 = vld [vmem:[#allocation10 + $0x1f8] sm:$0xff]
    %714 = vmatpush.msra.mxu0 %v710
    %715 = vmatpush.msra.mxu0 %v706
    %716 = vmatpush.msra.mxu0 %v702
    %717 = vmatpush.msra.mxu0 %v698
    %718 = vmatpush.msra.mxu0 %v694
    %719 = vmatpush.msra.mxu0 %v690
    %720 = vmatpush.msra.mxu0 %v686
    %721 = vmatpush.msra.mxu0 %v682
    %722 = vmatpush.msra.mxu0 %v678
    %723 = vmatpush.msra.mxu0 %v674
    %724 = vmatpush.msra.mxu0 %v670
    %725 = vmatpush.msra.mxu0 %v666
    %726 = vmatpush.msra.mxu0 %v662
    %727 = vmatpush.msra.mxu0 %v658
    %728 = vmatpush.msra.mxu0 %v654
    %729 = vmatpush.msra.mxu0 %v650
    %730 = vmatmul.f32.gmra.mxu0 %v649
    %v731 = vpop.f32.mrf.mxu0
    %v732 = vadd.f32 0.0, %v731
    %733 = vdwg.mxu0
    %734 = vmatpush.msra.mxu0 %v711
    %735 = vmatpush.msra.mxu0 %v707
    %736 = vmatpush.msra.mxu0 %v703
    %737 = vmatpush.msra.mxu0 %v699
    %738 = vmatpush.msra.mxu0 %v695
    %739 = vmatpush.msra.mxu0 %v691
    %740 = vmatpush.msra.mxu0 %v687
    %741 = vmatpush.msra.mxu0 %v683
    %742 = vmatpush.msra.mxu0 %v679
    %743 = vmatpush.msra.mxu0 %v675
    %744 = vmatpush.msra.mxu0 %v671
    %745 = vmatpush.msra.mxu0 %v667
    %746 = vmatpush.msra.mxu0 %v663
    %747 = vmatpush.msra.mxu0 %v659
    %748 = vmatpush.msra.mxu0 %v655
    %749 = vmatpush.msra.mxu0 %v651
    %750 = vmatmul.f32.gmra.mxu0 %v649
    %v751 = vpop.f32.mrf.mxu0
    %v752 = vadd.f32 0.0, %v751
    %753 = vdwg.mxu0
    %754 = vmatpush.msra.mxu0 %v712
    %755 = vmatpush.msra.mxu0 %v708
    %756 = vmatpush.msra.mxu0 %v704
    %757 = vmatpush.msra.mxu0 %v700
    %758 = vmatpush.msra.mxu0 %v696
    %759 = vmatpush.msra.mxu0 %v692
    %760 = vmatpush.msra.mxu0 %v688
    %761 = vmatpush.msra.mxu0 %v684
    %762 = vmatpush.msra.mxu0 %v680
    %763 = vmatpush.msra.mxu0 %v676
    %764 = vmatpush.msra.mxu0 %v672
    %765 = vmatpush.msra.mxu0 %v668
    %766 = vmatpush.msra.mxu0 %v664
    %767 = vmatpush.msra.mxu0 %v660
    %768 = vmatpush.msra.mxu0 %v656
    %769 = vmatpush.msra.mxu0 %v652
    %770 = vmatmul.f32.gmra.mxu0 %v649
    %v771 = vpop.f32.mrf.mxu0
    %v772 = vadd.f32 0.0, %v771
    %773 = vdwg.mxu0
    %774 = vmatpush.msra.mxu0 %v713
    %775 = vmatpush.msra.mxu0 %v709
    %776 = vmatpush.msra.mxu0 %v705
    %777 = vmatpush.msra.mxu0 %v701
    %778 = vmatpush.msra.mxu0 %v697
    %779 = vmatpush.msra.mxu0 %v693
    %780 = vmatpush.msra.mxu0 %v689
    %781 = vmatpush.msra.mxu0 %v685
    %782 = vmatpush.msra.mxu0 %v681
    %783 = vmatpush.msra.mxu0 %v677
    %784 = vmatpush.msra.mxu0 %v673
    %785 = vmatpush.msra.mxu0 %v669
    %786 = vmatpush.msra.mxu0 %v665
    %787 = vmatpush.msra.mxu0 %v661
    %788 = vmatpush.msra.mxu0 %v657
    %789 = vmatpush.msra.mxu0 %v653
    %790 = vmatmul.f32.gmra.mxu0 %v649
    %v791 = vpop.f32.mrf.mxu0
    %v792 = vadd.f32 0.0, %v791
    %793 = vdwg.mxu0
    %794 = vmatpush.msra.mxu0 %v644
    %795 = vmatpush.msra.mxu0 %v640
    %796 = vmatpush.msra.mxu0 %v636
    %797 = vmatpush.msra.mxu0 %v632
    %798 = vmatpush.msra.mxu0 %v628
    %799 = vmatpush.msra.mxu0 %v624
    %800 = vmatpush.msra.mxu0 %v620
    %801 = vmatpush.msra.mxu0 %v616
    %802 = vmatpush.msra.mxu0 %v612
    %803 = vmatpush.msra.mxu0 %v608
    %804 = vmatpush.msra.mxu0 %v604
    %805 = vmatpush.msra.mxu0 %v600
    %806 = vmatpush.msra.mxu0 %v596
    %807 = vmatpush.msra.mxu0 %v592
    %808 = vmatpush.msra.mxu0 %v588
    %809 = vmatpush.msra.mxu0 %v584
    %810 = vmatmul.f32.gmra.mxu0 %v581
    %v811 = vpop.f32.mrf.mxu0
    %v812 = vadd.f32 %v732, %v811
    %813 = vdwg.mxu0
    %814 = vmatpush.msra.mxu0 %v645
    %815 = vmatpush.msra.mxu0 %v641
    %816 = vmatpush.msra.mxu0 %v637
    %817 = vmatpush.msra.mxu0 %v633
    %818 = vmatpush.msra.mxu0 %v629
    %819 = vmatpush.msra.mxu0 %v625
    %820 = vmatpush.msra.mxu0 %v621
    %821 = vmatpush.msra.mxu0 %v617
    %822 = vmatpush.msra.mxu0 %v613
    %823 = vmatpush.msra.mxu0 %v609
    %824 = vmatpush.msra.mxu0 %v605
    %825 = vmatpush.msra.mxu0 %v601
    %826 = vmatpush.msra.mxu0 %v597
    %827 = vmatpush.msra.mxu0 %v593
    %828 = vmatpush.msra.mxu0 %v589
    %829 = vmatpush.msra.mxu0 %v585
    %830 = vmatmul.f32.gmra.mxu0 %v581
    %v831 = vpop.f32.mrf.mxu0
    %v832 = vadd.f32 %v752, %v831
    %833 = vdwg.mxu0
    %834 = vmatpush.msra.mxu0 %v646
    %835 = vmatpush.msra.mxu0 %v642
    %836 = vmatpush.msra.mxu0 %v638
    %837 = vmatpush.msra.mxu0 %v634
    %838 = vmatpush.msra.mxu0 %v630
    %839 = vmatpush.msra.mxu0 %v626
    %840 = vmatpush.msra.mxu0 %v622
    %841 = vmatpush.msra.mxu0 %v618
    %842 = vmatpush.msra.mxu0 %v614
    %843 = vmatpush.msra.mxu0 %v610
    %844 = vmatpush.msra.mxu0 %v606
    %845 = vmatpush.msra.mxu0 %v602
    %846 = vmatpush.msra.mxu0 %v598
    %847 = vmatpush.msra.mxu0 %v594
    %848 = vmatpush.msra.mxu0 %v590
    %849 = vmatpush.msra.mxu0 %v586
    %850 = vmatmul.f32.gmra.mxu0 %v581
    %v851 = vpop.f32.mrf.mxu0
    %v852 = vadd.f32 %v772, %v851
    %853 = vdwg.mxu0
    %854 = vmatpush.msra.mxu0 %v647
    %855 = vmatpush.msra.mxu0 %v643
    %856 = vmatpush.msra.mxu0 %v639
    %857 = vmatpush.msra.mxu0 %v635
    %858 = vmatpush.msra.mxu0 %v631
    %859 = vmatpush.msra.mxu0 %v627
    %860 = vmatpush.msra.mxu0 %v623
    %861 = vmatpush.msra.mxu0 %v619
    %862 = vmatpush.msra.mxu0 %v615
    %863 = vmatpush.msra.mxu0 %v611
    %864 = vmatpush.msra.mxu0 %v607
    %865 = vmatpush.msra.mxu0 %v603
    %866 = vmatpush.msra.mxu0 %v599
    %867 = vmatpush.msra.mxu0 %v595
    %868 = vmatpush.msra.mxu0 %v591
    %869 = vmatpush.msra.mxu0 %v587
    %870 = vmatmul.f32.gmra.mxu0 %v581
    %v871 = vpop.f32.mrf.mxu0
    %v872 = vadd.f32 %v792, %v871
    %873 = vdwg.mxu0
    %v875 = vperm.slane %v363, 0
    %v876 = vperm.slane %v363, 1
    %v877 = vperm.slane %v363, 2
    %v878 = vperm.slane %v363, 3
    %v883 = vadd.f32 %v812, %v875
    %v884 = vadd.f32 %v832, %v876
    %v885 = vadd.f32 %v852, %v877
    %v886 = vadd.f32 %v872, %v878
    %s887 = scalar_lea.vmem [#allocation3], 8
    %v888 = vld [vmem:[%s887] sm:$0xff]
    %v889 = vxor.u32 %v883, 2147483648
    %v890 = vmul.f32 %v889, 1.442695
    %v891 = vpow.pop %v890
    %v892 = vadd.f32 %v891, 1.0
    %v893 = vrcp.pop %v892
    %v894 = vmul.f32 %v892, %v893
    %v895 = vsub.f32 1.0, %v894
    %v896 = vmul.f32 %v893, %v895
    %v897 = vadd.f32 %v893, %v896
    %vm898 = vweird.f32 %v892
    %vm899 = vweird.f32 %v893
    %vm900 = vmor %vm898, %vm899
    %v901 = vsel %vm900, %v893, %v897
    %v902 = vand.u32 2147483647, %v892
    %vm903 = vcmp.eq.f32.partialorder %v902, 8.507059e+37
    %v904 = vand.u32 %v892, 2147483648
    %v905 = vor.u32 1.1754944e-38, %v904
    %v906 = vsel %vm903, %v905, %v901
    %v907 = vmul.f32 1.0, %v906
    %v908 = vxor.u32 %v884, 2147483648
    %v909 = vmul.f32 %v908, 1.442695
    %v910 = vpow.pop %v909
    %v911 = vadd.f32 %v910, 1.0
    %v912 = vrcp.pop %v911
    %v913 = vmul.f32 %v911, %v912
    %v914 = vsub.f32 1.0, %v913
    %v915 = vmul.f32 %v912, %v914
    %v916 = vadd.f32 %v912, %v915
    %vm917 = vweird.f32 %v911
    %vm918 = vweird.f32 %v912
    %vm919 = vmor %vm917, %vm918
    %v920 = vsel %vm919, %v912, %v916
    %v921 = vand.u32 2147483647, %v911
    %vm922 = vcmp.eq.f32.partialorder %v921, 8.507059e+37
    %v923 = vand.u32 %v911, 2147483648
    %v924 = vor.u32 1.1754944e-38, %v923
    %v925 = vsel %vm922, %v924, %v920
    %v926 = vmul.f32 1.0, %v925
    %v927 = vtanh.pop %v885
    %v928 = vxor.u32 %v886, 2147483648
    %v929 = vmul.f32 %v928, 1.442695
    %v930 = vpow.pop %v929
    %v931 = vadd.f32 %v930, 1.0
    %v932 = vrcp.pop %v931
    %v933 = vmul.f32 %v931, %v932
    %v934 = vsub.f32 1.0, %v933
    %v935 = vmul.f32 %v932, %v934
    %v936 = vadd.f32 %v932, %v935
    %vm937 = vweird.f32 %v931
    %vm938 = vweird.f32 %v932
    %vm939 = vmor %vm937, %vm938
    %v940 = vsel %vm939, %v932, %v936
    %v941 = vand.u32 2147483647, %v931
    %vm942 = vcmp.eq.f32.partialorder %v941, 8.507059e+37
    %v943 = vand.u32 %v931, 2147483648
    %v944 = vor.u32 1.1754944e-38, %v943
    %v945 = vsel %vm942, %v944, %v940
    %v946 = vmul.f32 1.0, %v945
    %v947 = vmul.f32 %v926, %v888
    %v948 = vmul.f32 %v907, %v927
    %v949 = vadd.f32 %v947, %v948
    %v950 = vtanh.pop %v949
    %v951 = vmul.f32 %v946, %v950
    %952 = vst [vmem:[%s648] sm:$0xff] %v951
    %953 = vst [vmem:[%s887] sm:$0xff] %v949
    %p954 = scmp.eq.s32.totalorder %s364, 7
    // Predicated region
    $region58: #{tpu_custom_call.1} parent=1 // pred_check
      %p955 = pneg %p954
    $region59: #{tpu_custom_call.1} parent=1 // pred_check_branch
      %957 = sbr.rel (%p955) target = $region61
    $region60: #{tpu_custom_call.1} parent=1 // pred_region
      %v958 = vld [vmem:[#allocation11] sm:$0xff]
      %v959 = vld [vmem:[#allocation11 + $0x8] sm:$0xff]
      %v960 = vld [vmem:[#allocation11 + $0x10] sm:$0xff]
      %v961 = vld [vmem:[#allocation11 + $0x18] sm:$0xff]
      %v962 = vld [vmem:[#allocation11 + $0x20] sm:$0xff]
      %v963 = vld [vmem:[#allocation11 + $0x28] sm:$0xff]
      %v964 = vld [vmem:[#allocation11 + $0x30] sm:$0xff]
      %v965 = vld [vmem:[#allocation11 + $0x38] sm:$0xff]
      %v966 = vld [vmem:[#allocation11 + $0x40] sm:$0xff]
      %v967 = vld [vmem:[#allocation11 + $0x48] sm:$0xff]
      %v968 = vld [vmem:[#allocation11 + $0x50] sm:$0xff]
      %v969 = vld [vmem:[#allocation11 + $0x58] sm:$0xff]
      %v970 = vld [vmem:[#allocation11 + $0x60] sm:$0xff]
      %v971 = vld [vmem:[#allocation11 + $0x68] sm:$0xff]
      %v972 = vld [vmem:[#allocation11 + $0x70] sm:$0xff]
      %v973 = vld [vmem:[#allocation11 + $0x78] sm:$0xff]
      %v974 = vld [vmem:[%s8] sm:$0x1]
      %v976 = vperm.slane %v974, 0
      %978 = vmatpush.msra.mxu0 %v973
      %979 = vmatpush.msra.mxu0 %v972
      %980 = vmatpush.msra.mxu0 %v971
      %981 = vmatpush.msra.mxu0 %v970
      %982 = vmatpush.msra.mxu0 %v969
      %983 = vmatpush.msra.mxu0 %v968
      %984 = vmatpush.msra.mxu0 %v967
      %985 = vmatpush.msra.mxu0 %v966
      %986 = vmatpush.msra.mxu0 %v965
      %987 = vmatpush.msra.mxu0 %v964
      %988 = vmatpush.msra.mxu0 %v963
      %989 = vmatpush.msra.mxu0 %v962
      %990 = vmatpush.msra.mxu0 %v961
      %991 = vmatpush.msra.mxu0 %v960
      %992 = vmatpush.msra.mxu0 %v959
      %993 = vmatpush.msra.mxu0 %v958
      %994 = vmatmul.f32.gmra.mxu0 %v951
      %v995 = vpop.f32.mrf.mxu0
      %v996 = vadd.f32 %v976, %v995
      %997 = vdwg.mxu0
      %998 = vst [vmem:[#allocation13] sm:$0xff] %v996
    $region61: #{tpu_custom_call.1} parent=1 // pred_fallthru
      _
    %s999 = sadd.s32 %s364, 1
    %s1000 = scalar_lea.vmem [#allocation4], 32
    %v1001 = vld [vmem:[%s1000] sm:$0xff]
    %v1002 = vld [vmem:[%s1000 + $0x8] sm:$0xff]
    %v1003 = vld [vmem:[%s1000 + $0x10] sm:$0xff]
    %v1004 = vld [vmem:[%s1000 + $0x18] sm:$0xff]
    %v1005 = vld [vmem:[#allocation2] sm:$0xff]
    %v1006 = vld [vmem:[#allocation5] sm:$0xff]
    %v1007 = vld [vmem:[#allocation5 + $0x8] sm:$0xff]
    %v1008 = vld [vmem:[#allocation5 + $0x10] sm:$0xff]
    %v1009 = vld [vmem:[#allocation5 + $0x18] sm:$0xff]
    %v1010 = vld [vmem:[#allocation5 + $0x20] sm:$0xff]
    %v1011 = vld [vmem:[#allocation5 + $0x28] sm:$0xff]
    %v1012 = vld [vmem:[#allocation5 + $0x30] sm:$0xff]
    %v1013 = vld [vmem:[#allocation5 + $0x38] sm:$0xff]
    %v1014 = vld [vmem:[#allocation5 + $0x40] sm:$0xff]
    %v1015 = vld [vmem:[#allocation5 + $0x48] sm:$0xff]
    %v1016 = vld [vmem:[#allocation5 + $0x50] sm:$0xff]
    %v1017 = vld [vmem:[#allocation5 + $0x58] sm:$0xff]
    %v1018 = vld [vmem:[#allocation5 + $0x60] sm:$0xff]
    %v1019 = vld [vmem:[#allocation5 + $0x68] sm:$0xff]
    %v1020 = vld [vmem:[#allocation5 + $0x70] sm:$0xff]
    %v1021 = vld [vmem:[#allocation5 + $0x78] sm:$0xff]
    %v1022 = vld [vmem:[#allocation5 + $0x80] sm:$0xff]
    %v1023 = vld [vmem:[#allocation5 + $0x88] sm:$0xff]
    %v1024 = vld [vmem:[#allocation5 + $0x90] sm:$0xff]
    %v1025 = vld [vmem:[#allocation5 + $0x98] sm:$0xff]
    %v1026 = vld [vmem:[#allocation5 + $0xa0] sm:$0xff]
    %v1027 = vld [vmem:[#allocation5 + $0xa8] sm:$0xff]
    %v1028 = vld [vmem:[#allocation5 + $0xb0] sm:$0xff]
    %v1029 = vld [vmem:[#allocation5 + $0xb8] sm:$0xff]
    %v1030 = vld [vmem:[#allocation5 + $0xc0] sm:$0xff]
    %v1031 = vld [vmem:[#allocation5 + $0xc8] sm:$0xff]
    %v1032 = vld [vmem:[#allocation5 + $0xd0] sm:$0xff]
    %v1033 = vld [vmem:[#allocation5 + $0xd8] sm:$0xff]
    %v1034 = vld [vmem:[#allocation5 + $0xe0] sm:$0xff]
    %v1035 = vld [vmem:[#allocation5 + $0xe8] sm:$0xff]
    %v1036 = vld [vmem:[#allocation5 + $0xf0] sm:$0xff]
    %v1037 = vld [vmem:[#allocation5 + $0xf8] sm:$0xff]
    %v1038 = vld [vmem:[#allocation5 + $0x100] sm:$0xff]
    %v1039 = vld [vmem:[#allocation5 + $0x108] sm:$0xff]
    %v1040 = vld [vmem:[#allocation5 + $0x110] sm:$0xff]
    %v1041 = vld [vmem:[#allocation5 + $0x118] sm:$0xff]
    %v1042 = vld [vmem:[#allocation5 + $0x120] sm:$0xff]
    %v1043 = vld [vmem:[#allocation5 + $0x128] sm:$0xff]
    %v1044 = vld [vmem:[#allocation5 + $0x130] sm:$0xff]
    %v1045 = vld [vmem:[#allocation5 + $0x138] sm:$0xff]
    %v1046 = vld [vmem:[#allocation5 + $0x140] sm:$0xff]
    %v1047 = vld [vmem:[#allocation5 + $0x148] sm:$0xff]
    %v1048 = vld [vmem:[#allocation5 + $0x150] sm:$0xff]
    %v1049 = vld [vmem:[#allocation5 + $0x158] sm:$0xff]
    %v1050 = vld [vmem:[#allocation5 + $0x160] sm:$0xff]
    %v1051 = vld [vmem:[#allocation5 + $0x168] sm:$0xff]
    %v1052 = vld [vmem:[#allocation5 + $0x170] sm:$0xff]
    %v1053 = vld [vmem:[#allocation5 + $0x178] sm:$0xff]
    %v1054 = vld [vmem:[#allocation5 + $0x180] sm:$0xff]
    %v1055 = vld [vmem:[#allocation5 + $0x188] sm:$0xff]
    %v1056 = vld [vmem:[#allocation5 + $0x190] sm:$0xff]
    %v1057 = vld [vmem:[#allocation5 + $0x198] sm:$0xff]
    %v1058 = vld [vmem:[#allocation5 + $0x1a0] sm:$0xff]
    %v1059 = vld [vmem:[#allocation5 + $0x1a8] sm:$0xff]
    %v1060 = vld [vmem:[#allocation5 + $0x1b0] sm:$0xff]
    %v1061 = vld [vmem:[#allocation5 + $0x1b8] sm:$0xff]
    %v1062 = vld [vmem:[#allocation5 + $0x1c0] sm:$0xff]
    %v1063 = vld [vmem:[#allocation5 + $0x1c8] sm:$0xff]
    %v1064 = vld [vmem:[#allocation5 + $0x1d0] sm:$0xff]
    %v1065 = vld [vmem:[#allocation5 + $0x1d8] sm:$0xff]
    %v1066 = vld [vmem:[#allocation5 + $0x1e0] sm:$0xff]
    %v1067 = vld [vmem:[#allocation5 + $0x1e8] sm:$0xff]
    %v1068 = vld [vmem:[#allocation5 + $0x1f0] sm:$0xff]
    %v1069 = vld [vmem:[#allocation5 + $0x1f8] sm:$0xff]
    %1070 = vmatpush.msra.mxu0 %v1066
    %1071 = vmatpush.msra.mxu0 %v1062
    %1072 = vmatpush.msra.mxu0 %v1058
    %1073 = vmatpush.msra.mxu0 %v1054
    %1074 = vmatpush.msra.mxu0 %v1050
    %1075 = vmatpush.msra.mxu0 %v1046
    %1076 = vmatpush.msra.mxu0 %v1042
    %1077 = vmatpush.msra.mxu0 %v1038
    %1078 = vmatpush.msra.mxu0 %v1034
    %1079 = vmatpush.msra.mxu0 %v1030
    %1080 = vmatpush.msra.mxu0 %v1026
    %1081 = vmatpush.msra.mxu0 %v1022
    %1082 = vmatpush.msra.mxu0 %v1018
    %1083 = vmatpush.msra.mxu0 %v1014
    %1084 = vmatpush.msra.mxu0 %v1010
    %1085 = vmatpush.msra.mxu0 %v1006
    %1086 = vmatmul.f32.gmra.mxu0 %v1005
    %v1087 = vpop.f32.mrf.mxu0
    %v1088 = vadd.f32 0.0, %v1087
    %1089 = vdwg.mxu0
    %1090 = vmatpush.msra.mxu0 %v1067
    %1091 = vmatpush.msra.mxu0 %v1063
    %1092 = vmatpush.msra.mxu0 %v1059
    %1093 = vmatpush.msra.mxu0 %v1055
    %1094 = vmatpush.msra.mxu0 %v1051
    %1095 = vmatpush.msra.mxu0 %v1047
    %1096 = vmatpush.msra.mxu0 %v1043
    %1097 = vmatpush.msra.mxu0 %v1039
    %1098 = vmatpush.msra.mxu0 %v1035
    %1099 = vmatpush.msra.mxu0 %v1031
    %1100 = vmatpush.msra.mxu0 %v1027
    %1101 = vmatpush.msra.mxu0 %v1023
    %1102 = vmatpush.msra.mxu0 %v1019
    %1103 = vmatpush.msra.mxu0 %v1015
    %1104 = vmatpush.msra.mxu0 %v1011
    %1105 = vmatpush.msra.mxu0 %v1007
    %1106 = vmatmul.f32.gmra.mxu0 %v1005
    %v1107 = vpop.f32.mrf.mxu0
    %v1108 = vadd.f32 0.0, %v1107
    %1109 = vdwg.mxu0
    %1110 = vmatpush.msra.mxu0 %v1068
    %1111 = vmatpush.msra.mxu0 %v1064
    %1112 = vmatpush.msra.mxu0 %v1060
    %1113 = vmatpush.msra.mxu0 %v1056
    %1114 = vmatpush.msra.mxu0 %v1052
    %1115 = vmatpush.msra.mxu0 %v1048
    %1116 = vmatpush.msra.mxu0 %v1044
    %1117 = vmatpush.msra.mxu0 %v1040
    %1118 = vmatpush.msra.mxu0 %v1036
    %1119 = vmatpush.msra.mxu0 %v1032
    %1120 = vmatpush.msra.mxu0 %v1028
    %1121 = vmatpush.msra.mxu0 %v1024
    %1122 = vmatpush.msra.mxu0 %v1020
    %1123 = vmatpush.msra.mxu0 %v1016
    %1124 = vmatpush.msra.mxu0 %v1012
    %1125 = vmatpush.msra.mxu0 %v1008
    %1126 = vmatmul.f32.gmra.mxu0 %v1005
    %v1127 = vpop.f32.mrf.mxu0
    %v1128 = vadd.f32 0.0, %v1127
    %1129 = vdwg.mxu0
    %1130 = vmatpush.msra.mxu0 %v1069
    %1131 = vmatpush.msra.mxu0 %v1065
    %1132 = vmatpush.msra.mxu0 %v1061
    %1133 = vmatpush.msra.mxu0 %v1057
    %1134 = vmatpush.msra.mxu0 %v1053
    %1135 = vmatpush.msra.mxu0 %v1049
    %1136 = vmatpush.msra.mxu0 %v1045
    %1137 = vmatpush.msra.mxu0 %v1041
    %1138 = vmatpush.msra.mxu0 %v1037
    %1139 = vmatpush.msra.mxu0 %v1033
    %1140 = vmatpush.msra.mxu0 %v1029
    %1141 = vmatpush.msra.mxu0 %v1025
    %1142 = vmatpush.msra.mxu0 %v1021
    %1143 = vmatpush.msra.mxu0 %v1017
    %1144 = vmatpush.msra.mxu0 %v1013
    %1145 = vmatpush.msra.mxu0 %v1009
    %1146 = vmatmul.f32.gmra.mxu0 %v1005
    %v1147 = vpop.f32.mrf.mxu0
    %v1148 = vadd.f32 0.0, %v1147
    %1149 = vdwg.mxu0
    %v1150 = vadd.f32 %v1001, %v1088
    %v1151 = vadd.f32 %v1002, %v1108
    %v1152 = vadd.f32 %v1003, %v1128
    %v1153 = vadd.f32 %v1004, %v1148
    %v1154 = vld [vmem:[#allocation3] sm:$0xff]
    %v1155 = vxor.u32 %v1150, 2147483648
    %v1156 = vmul.f32 %v1155, 1.442695
    %v1157 = vpow.pop %v1156
    %v1158 = vadd.f32 %v1157, 1.0
    %v1159 = vrcp.pop %v1158
    %v1160 = vmul.f32 %v1158, %v1159
    %v1161 = vsub.f32 1.0, %v1160
    %v1162 = vmul.f32 %v1159, %v1161
    %v1163 = vadd.f32 %v1159, %v1162
    %vm1164 = vweird.f32 %v1158
    %vm1165 = vweird.f32 %v1159
    %vm1166 = vmor %vm1164, %vm1165
    %v1167 = vsel %vm1166, %v1159, %v1163
    %v1168 = vand.u32 2147483647, %v1158
    %vm1169 = vcmp.eq.f32.partialorder %v1168, 8.507059e+37
    %v1170 = vand.u32 %v1158, 2147483648
    %v1171 = vor.u32 1.1754944e-38, %v1170
    %v1172 = vsel %vm1169, %v1171, %v1167
    %v1173 = vmul.f32 1.0, %v1172
    %v1174 = vxor.u32 %v1151, 2147483648
    %v1175 = vmul.f32 %v1174, 1.442695
    %v1176 = vpow.pop %v1175
    %v1177 = vadd.f32 %v1176, 1.0
    %v1178 = vrcp.pop %v1177
    %v1179 = vmul.f32 %v1177, %v1178
    %v1180 = vsub.f32 1.0, %v1179
    %v1181 = vmul.f32 %v1178, %v1180
    %v1182 = vadd.f32 %v1178, %v1181
    %vm1183 = vweird.f32 %v1177
    %vm1184 = vweird.f32 %v1178
    %vm1185 = vmor %vm1183, %vm1184
    %v1186 = vsel %vm1185, %v1178, %v1182
    %v1187 = vand.u32 2147483647, %v1177
    %vm1188 = vcmp.eq.f32.partialorder %v1187, 8.507059e+37
    %v1189 = vand.u32 %v1177, 2147483648
    %v1190 = vor.u32 1.1754944e-38, %v1189
    %v1191 = vsel %vm1188, %v1190, %v1186
    %v1192 = vmul.f32 1.0, %v1191
    %v1193 = vtanh.pop %v1152
    %v1194 = vxor.u32 %v1153, 2147483648
    %v1195 = vmul.f32 %v1194, 1.442695
    %v1196 = vpow.pop %v1195
    %v1197 = vadd.f32 %v1196, 1.0
    %v1198 = vrcp.pop %v1197
    %v1199 = vmul.f32 %v1197, %v1198
    %v1200 = vsub.f32 1.0, %v1199
    %v1201 = vmul.f32 %v1198, %v1200
    %v1202 = vadd.f32 %v1198, %v1201
    %vm1203 = vweird.f32 %v1197
    %vm1204 = vweird.f32 %v1198
    %vm1205 = vmor %vm1203, %vm1204
    %v1206 = vsel %vm1205, %v1198, %v1202
    %v1207 = vand.u32 2147483647, %v1197
    %vm1208 = vcmp.eq.f32.partialorder %v1207, 8.507059e+37
    %v1209 = vand.u32 %v1197, 2147483648
    %v1210 = vor.u32 1.1754944e-38, %v1209
    %v1211 = vsel %vm1208, %v1210, %v1206
    %v1212 = vmul.f32 1.0, %v1211
    %v1213 = vmul.f32 %v1192, %v1154
    %v1214 = vmul.f32 %v1173, %v1193
    %v1215 = vadd.f32 %v1213, %v1214
    %v1216 = vtanh.pop %v1215
    %v1217 = vmul.f32 %v1212, %v1216
    %1218 = vst [vmem:[#allocation2] sm:$0xff] %v1217
    %1219 = vst [vmem:[#allocation3] sm:$0xff] %v1215
    %v1220 = vld [vmem:[#allocation8] sm:$0xff]
    %v1221 = vld [vmem:[#allocation8 + $0x8] sm:$0xff]
    %v1222 = vld [vmem:[#allocation8 + $0x10] sm:$0xff]
    %v1223 = vld [vmem:[#allocation8 + $0x18] sm:$0xff]
    %v1224 = vld [vmem:[#allocation8 + $0x20] sm:$0xff]
    %v1225 = vld [vmem:[#allocation8 + $0x28] sm:$0xff]
    %v1226 = vld [vmem:[#allocation8 + $0x30] sm:$0xff]
    %v1227 = vld [vmem:[#allocation8 + $0x38] sm:$0xff]
    %v1228 = vld [vmem:[#allocation8 + $0x40] sm:$0xff]
    %v1229 = vld [vmem:[#allocation8 + $0x48] sm:$0xff]
    %v1230 = vld [vmem:[#allocation8 + $0x50] sm:$0xff]
    %v1231 = vld [vmem:[#allocation8 + $0x58] sm:$0xff]
    %v1232 = vld [vmem:[#allocation8 + $0x60] sm:$0xff]
    %v1233 = vld [vmem:[#allocation8 + $0x68] sm:$0xff]
    %v1234 = vld [vmem:[#allocation8 + $0x70] sm:$0xff]
    %v1235 = vld [vmem:[#allocation8 + $0x78] sm:$0xff]
    %v1236 = vld [vmem:[#allocation8 + $0x80] sm:$0xff]
    %v1237 = vld [vmem:[#allocation8 + $0x88] sm:$0xff]
    %v1238 = vld [vmem:[#allocation8 + $0x90] sm:$0xff]
    %v1239 = vld [vmem:[#allocation8 + $0x98] sm:$0xff]
    %v1240 = vld [vmem:[#allocation8 + $0xa0] sm:$0xff]
    %v1241 = vld [vmem:[#allocation8 + $0xa8] sm:$0xff]
    %v1242 = vld [vmem:[#allocation8 + $0xb0] sm:$0xff]
    %v1243 = vld [vmem:[#allocation8 + $0xb8] sm:$0xff]
    %v1244 = vld [vmem:[#allocation8 + $0xc0] sm:$0xff]
    %v1245 = vld [vmem:[#allocation8 + $0xc8] sm:$0xff]
    %v1246 = vld [vmem:[#allocation8 + $0xd0] sm:$0xff]
    %v1247 = vld [vmem:[#allocation8 + $0xd8] sm:$0xff]
    %v1248 = vld [vmem:[#allocation8 + $0xe0] sm:$0xff]
    %v1249 = vld [vmem:[#allocation8 + $0xe8] sm:$0xff]
    %v1250 = vld [vmem:[#allocation8 + $0xf0] sm:$0xff]
    %v1251 = vld [vmem:[#allocation8 + $0xf8] sm:$0xff]
    %v1252 = vld [vmem:[#allocation8 + $0x100] sm:$0xff]
    %v1253 = vld [vmem:[#allocation8 + $0x108] sm:$0xff]
    %v1254 = vld [vmem:[#allocation8 + $0x110] sm:$0xff]
    %v1255 = vld [vmem:[#allocation8 + $0x118] sm:$0xff]
    %v1256 = vld [vmem:[#allocation8 + $0x120] sm:$0xff]
    %v1257 = vld [vmem:[#allocation8 + $0x128] sm:$0xff]
    %v1258 = vld [vmem:[#allocation8 + $0x130] sm:$0xff]
    %v1259 = vld [vmem:[#allocation8 + $0x138] sm:$0xff]
    %v1260 = vld [vmem:[#allocation8 + $0x140] sm:$0xff]
    %v1261 = vld [vmem:[#allocation8 + $0x148] sm:$0xff]
    %v1262 = vld [vmem:[#allocation8 + $0x150] sm:$0xff]
    %v1263 = vld [vmem:[#allocation8 + $0x158] sm:$0xff]
    %v1264 = vld [vmem:[#allocation8 + $0x160] sm:$0xff]
    %v1265 = vld [vmem:[#allocation8 + $0x168] sm:$0xff]
    %v1266 = vld [vmem:[#allocation8 + $0x170] sm:$0xff]
    %v1267 = vld [vmem:[#allocation8 + $0x178] sm:$0xff]
    %v1268 = vld [vmem:[#allocation8 + $0x180] sm:$0xff]
    %v1269 = vld [vmem:[#allocation8 + $0x188] sm:$0xff]
    %v1270 = vld [vmem:[#allocation8 + $0x190] sm:$0xff]
    %v1271 = vld [vmem:[#allocation8 + $0x198] sm:$0xff]
    %v1272 = vld [vmem:[#allocation8 + $0x1a0] sm:$0xff]
    %v1273 = vld [vmem:[#allocation8 + $0x1a8] sm:$0xff]
    %v1274 = vld [vmem:[#allocation8 + $0x1b0] sm:$0xff]
    %v1275 = vld [vmem:[#allocation8 + $0x1b8] sm:$0xff]
    %v1276 = vld [vmem:[#allocation8 + $0x1c0] sm:$0xff]
    %v1277 = vld [vmem:[#allocation8 + $0x1c8] sm:$0xff]
    %v1278 = vld [vmem:[#allocation8 + $0x1d0] sm:$0xff]
    %v1279 = vld [vmem:[#allocation8 + $0x1d8] sm:$0xff]
    %v1280 = vld [vmem:[#allocation8 + $0x1e0] sm:$0xff]
    %v1281 = vld [vmem:[#allocation8 + $0x1e8] sm:$0xff]
    %v1282 = vld [vmem:[#allocation8 + $0x1f0] sm:$0xff]
    %v1283 = vld [vmem:[#allocation8 + $0x1f8] sm:$0xff]
    %v1284 = vld [vmem:[%s648] sm:$0xff]
    %v1285 = vld [vmem:[#allocation10] sm:$0xff]
    %v1286 = vld [vmem:[#allocation10 + $0x8] sm:$0xff]
    %v1287 = vld [vmem:[#allocation10 + $0x10] sm:$0xff]
    %v1288 = vld [vmem:[#allocation10 + $0x18] sm:$0xff]
    %v1289 = vld [vmem:[#allocation10 + $0x20] sm:$0xff]
    %v1290 = vld [vmem:[#allocation10 + $0x28] sm:$0xff]
    %v1291 = vld [vmem:[#allocation10 + $0x30] sm:$0xff]
    %v1292 = vld [vmem:[#allocation10 + $0x38] sm:$0xff]
    %v1293 = vld [vmem:[#allocation10 + $0x40] sm:$0xff]
    %v1294 = vld [vmem:[#allocation10 + $0x48] sm:$0xff]
    %v1295 = vld [vmem:[#allocation10 + $0x50] sm:$0xff]
    %v1296 = vld [vmem:[#allocation10 + $0x58] sm:$0xff]
    %v1297 = vld [vmem:[#allocation10 + $0x60] sm:$0xff]
    %v1298 = vld [vmem:[#allocation10 + $0x68] sm:$0xff]
    %v1299 = vld [vmem:[#allocation10 + $0x70] sm:$0xff]
    %v1300 = vld [vmem:[#allocation10 + $0x78] sm:$0xff]
    %v1301 = vld [vmem:[#allocation10 + $0x80] sm:$0xff]
    %v1302 = vld [vmem:[#allocation10 + $0x88] sm:$0xff]
    %v1303 = vld [vmem:[#allocation10 + $0x90] sm:$0xff]
    %v1304 = vld [vmem:[#allocation10 + $0x98] sm:$0xff]
    %v1305 = vld [vmem:[#allocation10 + $0xa0] sm:$0xff]
    %v1306 = vld [vmem:[#allocation10 + $0xa8] sm:$0xff]
    %v1307 = vld [vmem:[#allocation10 + $0xb0] sm:$0xff]
    %v1308 = vld [vmem:[#allocation10 + $0xb8] sm:$0xff]
    %v1309 = vld [vmem:[#allocation10 + $0xc0] sm:$0xff]
    %v1310 = vld [vmem:[#allocation10 + $0xc8] sm:$0xff]
    %v1311 = vld [vmem:[#allocation10 + $0xd0] sm:$0xff]
    %v1312 = vld [vmem:[#allocation10 + $0xd8] sm:$0xff]
    %v1313 = vld [vmem:[#allocation10 + $0xe0] sm:$0xff]
    %v1314 = vld [vmem:[#allocation10 + $0xe8] sm:$0xff]
    %v1315 = vld [vmem:[#allocation10 + $0xf0] sm:$0xff]
    %v1316 = vld [vmem:[#allocation10 + $0xf8] sm:$0xff]
    %v1317 = vld [vmem:[#allocation10 + $0x100] sm:$0xff]
    %v1318 = vld [vmem:[#allocation10 + $0x108] sm:$0xff]
    %v1319 = vld [vmem:[#allocation10 + $0x110] sm:$0xff]
    %v1320 = vld [vmem:[#allocation10 + $0x118] sm:$0xff]
    %v1321 = vld [vmem:[#allocation10 + $0x120] sm:$0xff]
    %v1322 = vld [vmem:[#allocation10 + $0x128] sm:$0xff]
    %v1323 = vld [vmem:[#allocation10 + $0x130] sm:$0xff]
    %v1324 = vld [vmem:[#allocation10 + $0x138] sm:$0xff]
    %v1325 = vld [vmem:[#allocation10 + $0x140] sm:$0xff]
    %v1326 = vld [vmem:[#allocation10 + $0x148] sm:$0xff]
    %v1327 = vld [vmem:[#allocation10 + $0x150] sm:$0xff]
    %v1328 = vld [vmem:[#allocation10 + $0x158] sm:$0xff]
    %v1329 = vld [vmem:[#allocation10 + $0x160] sm:$0xff]
    %v1330 = vld [vmem:[#allocation10 + $0x168] sm:$0xff]
    %v1331 = vld [vmem:[#allocation10 + $0x170] sm:$0xff]
    %v1332 = vld [vmem:[#allocation10 + $0x178] sm:$0xff]
    %v1333 = vld [vmem:[#allocation10 + $0x180] sm:$0xff]
    %v1334 = vld [vmem:[#allocation10 + $0x188] sm:$0xff]
    %v1335 = vld [vmem:[#allocation10 + $0x190] sm:$0xff]
    %v1336 = vld [vmem:[#allocation10 + $0x198] sm:$0xff]
    %v1337 = vld [vmem:[#allocation10 + $0x1a0] sm:$0xff]
    %v1338 = vld [vmem:[#allocation10 + $0x1a8] sm:$0xff]
    %v1339 = vld [vmem:[#allocation10 + $0x1b0] sm:$0xff]
    %v1340 = vld [vmem:[#allocation10 + $0x1b8] sm:$0xff]
    %v1341 = vld [vmem:[#allocation10 + $0x1c0] sm:$0xff]
    %v1342 = vld [vmem:[#allocation10 + $0x1c8] sm:$0xff]
    %v1343 = vld [vmem:[#allocation10 + $0x1d0] sm:$0xff]
    %v1344 = vld [vmem:[#allocation10 + $0x1d8] sm:$0xff]
    %v1345 = vld [vmem:[#allocation10 + $0x1e0] sm:$0xff]
    %v1346 = vld [vmem:[#allocation10 + $0x1e8] sm:$0xff]
    %v1347 = vld [vmem:[#allocation10 + $0x1f0] sm:$0xff]
    %v1348 = vld [vmem:[#allocation10 + $0x1f8] sm:$0xff]
    %1349 = vmatpush.msra.mxu0 %v1345
    %1350 = vmatpush.msra.mxu0 %v1341
    %1351 = vmatpush.msra.mxu0 %v1337
    %1352 = vmatpush.msra.mxu0 %v1333
    %1353 = vmatpush.msra.mxu0 %v1329
    %1354 = vmatpush.msra.mxu0 %v1325
    %1355 = vmatpush.msra.mxu0 %v1321
    %1356 = vmatpush.msra.mxu0 %v1317
    %1357 = vmatpush.msra.mxu0 %v1313
    %1358 = vmatpush.msra.mxu0 %v1309
    %1359 = vmatpush.msra.mxu0 %v1305
    %1360 = vmatpush.msra.mxu0 %v1301
    %1361 = vmatpush.msra.mxu0 %v1297
    %1362 = vmatpush.msra.mxu0 %v1293
    %1363 = vmatpush.msra.mxu0 %v1289
    %1364 = vmatpush.msra.mxu0 %v1285
    %1365 = vmatmul.f32.gmra.mxu0 %v1284
    %v1366 = vpop.f32.mrf.mxu0
    %v1367 = vadd.f32 0.0, %v1366
    %1368 = vdwg.mxu0
    %1369 = vmatpush.msra.mxu0 %v1346
    %1370 = vmatpush.msra.mxu0 %v1342
    %1371 = vmatpush.msra.mxu0 %v1338
    %1372 = vmatpush.msra.mxu0 %v1334
    %1373 = vmatpush.msra.mxu0 %v1330
    %1374 = vmatpush.msra.mxu0 %v1326
    %1375 = vmatpush.msra.mxu0 %v1322
    %1376 = vmatpush.msra.mxu0 %v1318
    %1377 = vmatpush.msra.mxu0 %v1314
    %1378 = vmatpush.msra.mxu0 %v1310
    %1379 = vmatpush.msra.mxu0 %v1306
    %1380 = vmatpush.msra.mxu0 %v1302
    %1381 = vmatpush.msra.mxu0 %v1298
    %1382 = vmatpush.msra.mxu0 %v1294
    %1383 = vmatpush.msra.mxu0 %v1290
    %1384 = vmatpush.msra.mxu0 %v1286
    %1385 = vmatmul.f32.gmra.mxu0 %v1284
    %v1386 = vpop.f32.mrf.mxu0
    %v1387 = vadd.f32 0.0, %v1386
    %1388 = vdwg.mxu0
    %1389 = vmatpush.msra.mxu0 %v1347
    %1390 = vmatpush.msra.mxu0 %v1343
    %1391 = vmatpush.msra.mxu0 %v1339
    %1392 = vmatpush.msra.mxu0 %v1335
    %1393 = vmatpush.msra.mxu0 %v1331
    %1394 = vmatpush.msra.mxu0 %v1327
    %1395 = vmatpush.msra.mxu0 %v1323
    %1396 = vmatpush.msra.mxu0 %v1319
    %1397 = vmatpush.msra.mxu0 %v1315
    %1398 = vmatpush.msra.mxu0 %v1311
    %1399 = vmatpush.msra.mxu0 %v1307
    %1400 = vmatpush.msra.mxu0 %v1303
    %1401 = vmatpush.msra.mxu0 %v1299
    %1402 = vmatpush.msra.mxu0 %v1295
    %1403 = vmatpush.msra.mxu0 %v1291
    %1404 = vmatpush.msra.mxu0 %v1287
    %1405 = vmatmul.f32.gmra.mxu0 %v1284
    %v1406 = vpop.f32.mrf.mxu0
    %v1407 = vadd.f32 0.0, %v1406
    %1408 = vdwg.mxu0
    %1409 = vmatpush.msra.mxu0 %v1348
    %1410 = vmatpush.msra.mxu0 %v1344
    %1411 = vmatpush.msra.mxu0 %v1340
    %1412 = vmatpush.msra.mxu0 %v1336
    %1413 = vmatpush.msra.mxu0 %v1332
    %1414 = vmatpush.msra.mxu0 %v1328
    %1415 = vmatpush.msra.mxu0 %v1324
    %1416 = vmatpush.msra.mxu0 %v1320
    %1417 = vmatpush.msra.mxu0 %v1316
    %1418 = vmatpush.msra.mxu0 %v1312
    %1419 = vmatpush.msra.mxu0 %v1308
    %1420 = vmatpush.msra.mxu0 %v1304
    %1421 = vmatpush.msra.mxu0 %v1300
    %1422 = vmatpush.msra.mxu0 %v1296
    %1423 = vmatpush.msra.mxu0 %v1292
    %1424 = vmatpush.msra.mxu0 %v1288
    %1425 = vmatmul.f32.gmra.mxu0 %v1284
    %v1426 = vpop.f32.mrf.mxu0
    %v1427 = vadd.f32 0.0, %v1426
    %1428 = vdwg.mxu0
    %1429 = vmatpush.msra.mxu0 %v1280
    %1430 = vmatpush.msra.mxu0 %v1276
    %1431 = vmatpush.msra.mxu0 %v1272
    %1432 = vmatpush.msra.mxu0 %v1268
    %1433 = vmatpush.msra.mxu0 %v1264
    %1434 = vmatpush.msra.mxu0 %v1260
    %1435 = vmatpush.msra.mxu0 %v1256
    %1436 = vmatpush.msra.mxu0 %v1252
    %1437 = vmatpush.msra.mxu0 %v1248
    %1438 = vmatpush.msra.mxu0 %v1244
    %1439 = vmatpush.msra.mxu0 %v1240
    %1440 = vmatpush.msra.mxu0 %v1236
    %1441 = vmatpush.msra.mxu0 %v1232
    %1442 = vmatpush.msra.mxu0 %v1228
    %1443 = vmatpush.msra.mxu0 %v1224
    %1444 = vmatpush.msra.mxu0 %v1220
    %1445 = vmatmul.f32.gmra.mxu0 %v1217
    %v1446 = vpop.f32.mrf.mxu0
    %v1447 = vadd.f32 %v1367, %v1446
    %1448 = vdwg.mxu0
    %1449 = vmatpush.msra.mxu0 %v1281
    %1450 = vmatpush.msra.mxu0 %v1277
    %1451 = vmatpush.msra.mxu0 %v1273
    %1452 = vmatpush.msra.mxu0 %v1269
    %1453 = vmatpush.msra.mxu0 %v1265
    %1454 = vmatpush.msra.mxu0 %v1261
    %1455 = vmatpush.msra.mxu0 %v1257
    %1456 = vmatpush.msra.mxu0 %v1253
    %1457 = vmatpush.msra.mxu0 %v1249
    %1458 = vmatpush.msra.mxu0 %v1245
    %1459 = vmatpush.msra.mxu0 %v1241
    %1460 = vmatpush.msra.mxu0 %v1237
    %1461 = vmatpush.msra.mxu0 %v1233
    %1462 = vmatpush.msra.mxu0 %v1229
    %1463 = vmatpush.msra.mxu0 %v1225
    %1464 = vmatpush.msra.mxu0 %v1221
    %1465 = vmatmul.f32.gmra.mxu0 %v1217
    %v1466 = vpop.f32.mrf.mxu0
    %v1467 = vadd.f32 %v1387, %v1466
    %1468 = vdwg.mxu0
    %1469 = vmatpush.msra.mxu0 %v1282
    %1470 = vmatpush.msra.mxu0 %v1278
    %1471 = vmatpush.msra.mxu0 %v1274
    %1472 = vmatpush.msra.mxu0 %v1270
    %1473 = vmatpush.msra.mxu0 %v1266
    %1474 = vmatpush.msra.mxu0 %v1262
    %1475 = vmatpush.msra.mxu0 %v1258
    %1476 = vmatpush.msra.mxu0 %v1254
    %1477 = vmatpush.msra.mxu0 %v1250
    %1478 = vmatpush.msra.mxu0 %v1246
    %1479 = vmatpush.msra.mxu0 %v1242
    %1480 = vmatpush.msra.mxu0 %v1238
    %1481 = vmatpush.msra.mxu0 %v1234
    %1482 = vmatpush.msra.mxu0 %v1230
    %1483 = vmatpush.msra.mxu0 %v1226
    %1484 = vmatpush.msra.mxu0 %v1222
    %1485 = vmatmul.f32.gmra.mxu0 %v1217
    %v1486 = vpop.f32.mrf.mxu0
    %v1487 = vadd.f32 %v1407, %v1486
    %1488 = vdwg.mxu0
    %1489 = vmatpush.msra.mxu0 %v1283
    %1490 = vmatpush.msra.mxu0 %v1279
    %1491 = vmatpush.msra.mxu0 %v1275
    %1492 = vmatpush.msra.mxu0 %v1271
    %1493 = vmatpush.msra.mxu0 %v1267
    %1494 = vmatpush.msra.mxu0 %v1263
    %1495 = vmatpush.msra.mxu0 %v1259
    %1496 = vmatpush.msra.mxu0 %v1255
    %1497 = vmatpush.msra.mxu0 %v1251
    %1498 = vmatpush.msra.mxu0 %v1247
    %1499 = vmatpush.msra.mxu0 %v1243
    %1500 = vmatpush.msra.mxu0 %v1239
    %1501 = vmatpush.msra.mxu0 %v1235
    %1502 = vmatpush.msra.mxu0 %v1231
    %1503 = vmatpush.msra.mxu0 %v1227
    %1504 = vmatpush.msra.mxu0 %v1223
    %1505 = vmatmul.f32.gmra.mxu0 %v1217
    %v1506 = vpop.f32.mrf.mxu0
    %v1507 = vadd.f32 %v1427, %v1506
    %1508 = vdwg.mxu0
    %v1509 = vadd.f32 %v1447, %v875
    %v1510 = vadd.f32 %v1467, %v876
    %v1511 = vadd.f32 %v1487, %v877
    %v1512 = vadd.f32 %v1507, %v878
    %v1513 = vld [vmem:[%s887] sm:$0xff]
    %v1514 = vxor.u32 %v1509, 2147483648
    %v1515 = vmul.f32 %v1514, 1.442695
    %v1516 = vpow.pop %v1515
    %v1517 = vadd.f32 %v1516, 1.0
    %v1518 = vrcp.pop %v1517
    %v1519 = vmul.f32 %v1517, %v1518
    %v1520 = vsub.f32 1.0, %v1519
    %v1521 = vmul.f32 %v1518, %v1520
    %v1522 = vadd.f32 %v1518, %v1521
    %vm1523 = vweird.f32 %v1517
    %vm1524 = vweird.f32 %v1518
    %vm1525 = vmor %vm1523, %vm1524
    %v1526 = vsel %vm1525, %v1518, %v1522
    %v1527 = vand.u32 2147483647, %v1517
    %vm1528 = vcmp.eq.f32.partialorder %v1527, 8.507059e+37
    %v1529 = vand.u32 %v1517, 2147483648
    %v1530 = vor.u32 1.1754944e-38, %v1529
    %v1531 = vsel %vm1528, %v1530, %v1526
    %v1532 = vmul.f32 1.0, %v1531
    %v1533 = vxor.u32 %v1510, 2147483648
    %v1534 = vmul.f32 %v1533, 1.442695
    %v1535 = vpow.pop %v1534
    %v1536 = vadd.f32 %v1535, 1.0
    %v1537 = vrcp.pop %v1536
    %v1538 = vmul.f32 %v1536, %v1537
    %v1539 = vsub.f32 1.0, %v1538
    %v1540 = vmul.f32 %v1537, %v1539
    %v1541 = vadd.f32 %v1537, %v1540
    %vm1542 = vweird.f32 %v1536
    %vm1543 = vweird.f32 %v1537
    %vm1544 = vmor %vm1542, %vm1543
    %v1545 = vsel %vm1544, %v1537, %v1541
    %v1546 = vand.u32 2147483647, %v1536
    %vm1547 = vcmp.eq.f32.partialorder %v1546, 8.507059e+37
    %v1548 = vand.u32 %v1536, 2147483648
    %v1549 = vor.u32 1.1754944e-38, %v1548
    %v1550 = vsel %vm1547, %v1549, %v1545
    %v1551 = vmul.f32 1.0, %v1550
    %v1552 = vtanh.pop %v1511
    %v1553 = vxor.u32 %v1512, 2147483648
    %v1554 = vmul.f32 %v1553, 1.442695
    %v1555 = vpow.pop %v1554
    %v1556 = vadd.f32 %v1555, 1.0
    %v1557 = vrcp.pop %v1556
    %v1558 = vmul.f32 %v1556, %v1557
    %v1559 = vsub.f32 1.0, %v1558
    %v1560 = vmul.f32 %v1557, %v1559
    %v1561 = vadd.f32 %v1557, %v1560
    %vm1562 = vweird.f32 %v1556
    %vm1563 = vweird.f32 %v1557
    %vm1564 = vmor %vm1562, %vm1563
    %v1565 = vsel %vm1564, %v1557, %v1561
    %v1566 = vand.u32 2147483647, %v1556
    %vm1567 = vcmp.eq.f32.partialorder %v1566, 8.507059e+37
    %v1568 = vand.u32 %v1556, 2147483648
    %v1569 = vor.u32 1.1754944e-38, %v1568
    %v1570 = vsel %vm1567, %v1569, %v1565
    %v1571 = vmul.f32 1.0, %v1570
    %v1572 = vmul.f32 %v1551, %v1513
    %v1573 = vmul.f32 %v1532, %v1552
    %v1574 = vadd.f32 %v1572, %v1573
    %v1575 = vtanh.pop %v1574
    %v1576 = vmul.f32 %v1571, %v1575
    %1577 = vst [vmem:[%s648] sm:$0xff] %v1576
    %1578 = vst [vmem:[%s887] sm:$0xff] %v1574
    %p1579 = scmp.eq.s32.totalorder %s999, 7
    // Predicated region
    $region62: #{tpu_custom_call.1} parent=1 // pred_check
      %p1580 = pneg %p1579
    $region63: #{tpu_custom_call.1} parent=1 // pred_check_branch
      %1582 = sbr.rel (%p1580) target = $region65
    $region64: #{tpu_custom_call.1} parent=1 // pred_region
      %v1583 = vld [vmem:[#allocation11] sm:$0xff]
      %v1584 = vld [vmem:[#allocation11 + $0x8] sm:$0xff]
      %v1585 = vld [vmem:[#allocation11 + $0x10] sm:$0xff]
      %v1586 = vld [vmem:[#allocation11 + $0x18] sm:$0xff]
      %v1587 = vld [vmem:[#allocation11 + $0x20] sm:$0xff]
      %v1588 = vld [vmem:[#allocation11 + $0x28] sm:$0xff]
      %v1589 = vld [vmem:[#allocation11 + $0x30] sm:$0xff]
      %v1590 = vld [vmem:[#allocation11 + $0x38] sm:$0xff]
      %v1591 = vld [vmem:[#allocation11 + $0x40] sm:$0xff]
      %v1592 = vld [vmem:[#allocation11 + $0x48] sm:$0xff]
      %v1593 = vld [vmem:[#allocation11 + $0x50] sm:$0xff]
      %v1594 = vld [vmem:[#allocation11 + $0x58] sm:$0xff]
      %v1595 = vld [vmem:[#allocation11 + $0x60] sm:$0xff]
      %v1596 = vld [vmem:[#allocation11 + $0x68] sm:$0xff]
      %v1597 = vld [vmem:[#allocation11 + $0x70] sm:$0xff]
      %v1598 = vld [vmem:[#allocation11 + $0x78] sm:$0xff]
      %v1599 = vld [vmem:[%s8] sm:$0x1]
      %v1601 = vperm.slane %v1599, 0
      %1603 = vmatpush.msra.mxu0 %v1598
      %1604 = vmatpush.msra.mxu0 %v1597
      %1605 = vmatpush.msra.mxu0 %v1596
      %1606 = vmatpush.msra.mxu0 %v1595
      %1607 = vmatpush.msra.mxu0 %v1594
      %1608 = vmatpush.msra.mxu0 %v1593
      %1609 = vmatpush.msra.mxu0 %v1592
      %1610 = vmatpush.msra.mxu0 %v1591
      %1611 = vmatpush.msra.mxu0 %v1590
      %1612 = vmatpush.msra.mxu0 %v1589
      %1613 = vmatpush.msra.mxu0 %v1588
      %1614 = vmatpush.msra.mxu0 %v1587
      %1615 = vmatpush.msra.mxu0 %v1586
      %1616 = vmatpush.msra.mxu0 %v1585
      %1617 = vmatpush.msra.mxu0 %v1584
      %1618 = vmatpush.msra.mxu0 %v1583
      %1619 = vmatmul.f32.gmra.mxu0 %v1576
      %v1620 = vpop.f32.mrf.mxu0
      %v1621 = vadd.f32 %v1601, %v1620
      %1622 = vdwg.mxu0
      %1623 = vst [vmem:[#allocation13] sm:$0xff] %v1621
    $region65: #{tpu_custom_call.1} parent=1 // pred_fallthru
      _
    %s1624 = sadd.s32 %s364, 2
    %s1625 = scalar_lea.vmem [#allocation4], 64
    %v1626 = vld [vmem:[%s1625] sm:$0xff]
    %v1627 = vld [vmem:[%s1625 + $0x8] sm:$0xff]
    %v1628 = vld [vmem:[%s1625 + $0x10] sm:$0xff]
    %v1629 = vld [vmem:[%s1625 + $0x18] sm:$0xff]
    %v1630 = vld [vmem:[#allocation2] sm:$0xff]
    %v1631 = vld [vmem:[#allocation5] sm:$0xff]
    %v1632 = vld [vmem:[#allocation5 + $0x8] sm:$0xff]
    %v1633 = vld [vmem:[#allocation5 + $0x10] sm:$0xff]
    %v1634 = vld [vmem:[#allocation5 + $0x18] sm:$0xff]
    %v1635 = vld [vmem:[#allocation5 + $0x20] sm:$0xff]
    %v1636 = vld [vmem:[#allocation5 + $0x28] sm:$0xff]
    %v1637 = vld [vmem:[#allocation5 + $0x30] sm:$0xff]
    %v1638 = vld [vmem:[#allocation5 + $0x38] sm:$0xff]
    %v1639 = vld [vmem:[#allocation5 + $0x40] sm:$0xff]
    %v1640 = vld [vmem:[#allocation5 + $0x48] sm:$0xff]
    %v1641 = vld [vmem:[#allocation5 + $0x50] sm:$0xff]
    %v1642 = vld [vmem:[#allocation5 + $0x58] sm:$0xff]
    %v1643 = vld [vmem:[#allocation5 + $0x60] sm:$0xff]
    %v1644 = vld [vmem:[#allocation5 + $0x68] sm:$0xff]
    %v1645 = vld [vmem:[#allocation5 + $0x70] sm:$0xff]
    %v1646 = vld [vmem:[#allocation5 + $0x78] sm:$0xff]
    %v1647 = vld [vmem:[#allocation5 + $0x80] sm:$0xff]
    %v1648 = vld [vmem:[#allocation5 + $0x88] sm:$0xff]
    %v1649 = vld [vmem:[#allocation5 + $0x90] sm:$0xff]
    %v1650 = vld [vmem:[#allocation5 + $0x98] sm:$0xff]
    %v1651 = vld [vmem:[#allocation5 + $0xa0] sm:$0xff]
    %v1652 = vld [vmem:[#allocation5 + $0xa8] sm:$0xff]
    %v1653 = vld [vmem:[#allocation5 + $0xb0] sm:$0xff]
    %v1654 = vld [vmem:[#allocation5 + $0xb8] sm:$0xff]
    %v1655 = vld [vmem:[#allocation5 + $0xc0] sm:$0xff]
    %v1656 = vld [vmem:[#allocation5 + $0xc8] sm:$0xff]
    %v1657 = vld [vmem:[#allocation5 + $0xd0] sm:$0xff]
    %v1658 = vld [vmem:[#allocation5 + $0xd8] sm:$0xff]
    %v1659 = vld [vmem:[#allocation5 + $0xe0] sm:$0xff]
    %v1660 = vld [vmem:[#allocation5 + $0xe8] sm:$0xff]
    %v1661 = vld [vmem:[#allocation5 + $0xf0] sm:$0xff]
    %v1662 = vld [vmem:[#allocation5 + $0xf8] sm:$0xff]
    %v1663 = vld [vmem:[#allocation5 + $0x100] sm:$0xff]
    %v1664 = vld [vmem:[#allocation5 + $0x108] sm:$0xff]
    %v1665 = vld [vmem:[#allocation5 + $0x110] sm:$0xff]
    %v1666 = vld [vmem:[#allocation5 + $0x118] sm:$0xff]
    %v1667 = vld [vmem:[#allocation5 + $0x120] sm:$0xff]
    %v1668 = vld [vmem:[#allocation5 + $0x128] sm:$0xff]
    %v1669 = vld [vmem:[#allocation5 + $0x130] sm:$0xff]
    %v1670 = vld [vmem:[#allocation5 + $0x138] sm:$0xff]
    %v1671 = vld [vmem:[#allocation5 + $0x140] sm:$0xff]
    %v1672 = vld [vmem:[#allocation5 + $0x148] sm:$0xff]
    %v1673 = vld [vmem:[#allocation5 + $0x150] sm:$0xff]
    %v1674 = vld [vmem:[#allocation5 + $0x158] sm:$0xff]
    %v1675 = vld [vmem:[#allocation5 + $0x160] sm:$0xff]
    %v1676 = vld [vmem:[#allocation5 + $0x168] sm:$0xff]
    %v1677 = vld [vmem:[#allocation5 + $0x170] sm:$0xff]
    %v1678 = vld [vmem:[#allocation5 + $0x178] sm:$0xff]
    %v1679 = vld [vmem:[#allocation5 + $0x180] sm:$0xff]
    %v1680 = vld [vmem:[#allocation5 + $0x188] sm:$0xff]
    %v1681 = vld [vmem:[#allocation5 + $0x190] sm:$0xff]
    %v1682 = vld [vmem:[#allocation5 + $0x198] sm:$0xff]
    %v1683 = vld [vmem:[#allocation5 + $0x1a0] sm:$0xff]
    %v1684 = vld [vmem:[#allocation5 + $0x1a8] sm:$0xff]
    %v1685 = vld [vmem:[#allocation5 + $0x1b0] sm:$0xff]
    %v1686 = vld [vmem:[#allocation5 + $0x1b8] sm:$0xff]
    %v1687 = vld [vmem:[#allocation5 + $0x1c0] sm:$0xff]
    %v1688 = vld [vmem:[#allocation5 + $0x1c8] sm:$0xff]
    %v1689 = vld [vmem:[#allocation5 + $0x1d0] sm:$0xff]
    %v1690 = vld [vmem:[#allocation5 + $0x1d8] sm:$0xff]
    %v1691 = vld [vmem:[#allocation5 + $0x1e0] sm:$0xff]
    %v1692 = vld [vmem:[#allocation5 + $0x1e8] sm:$0xff]
    %v1693 = vld [vmem:[#allocation5 + $0x1f0] sm:$0xff]
    %v1694 = vld [vmem:[#allocation5 + $0x1f8] sm:$0xff]
    %1695 = vmatpush.msra.mxu0 %v1691
    %1696 = vmatpush.msra.mxu0 %v1687
    %1697 = vmatpush.msra.mxu0 %v1683
    %1698 = vmatpush.msra.mxu0 %v1679
    %1699 = vmatpush.msra.mxu0 %v1675
    %1700 = vmatpush.msra.mxu0 %v1671
    %1701 = vmatpush.msra.mxu0 %v1667
    %1702 = vmatpush.msra.mxu0 %v1663
    %1703 = vmatpush.msra.mxu0 %v1659
    %1704 = vmatpush.msra.mxu0 %v1655
    %1705 = vmatpush.msra.mxu0 %v1651
    %1706 = vmatpush.msra.mxu0 %v1647
    %1707 = vmatpush.msra.mxu0 %v1643
    %1708 = vmatpush.msra.mxu0 %v1639
    %1709 = vmatpush.msra.mxu0 %v1635
    %1710 = vmatpush.msra.mxu0 %v1631
    %1711 = vmatmul.f32.gmra.mxu0 %v1630
    %v1712 = vpop.f32.mrf.mxu0
    %v1713 = vadd.f32 0.0, %v1712
    %1714 = vdwg.mxu0
    %1715 = vmatpush.msra.mxu0 %v1692
    %1716 = vmatpush.msra.mxu0 %v1688
    %1717 = vmatpush.msra.mxu0 %v1684
    %1718 = vmatpush.msra.mxu0 %v1680
    %1719 = vmatpush.msra.mxu0 %v1676
    %1720 = vmatpush.msra.mxu0 %v1672
    %1721 = vmatpush.msra.mxu0 %v1668
    %1722 = vmatpush.msra.mxu0 %v1664
    %1723 = vmatpush.msra.mxu0 %v1660
    %1724 = vmatpush.msra.mxu0 %v1656
    %1725 = vmatpush.msra.mxu0 %v1652
    %1726 = vmatpush.msra.mxu0 %v1648
    %1727 = vmatpush.msra.mxu0 %v1644
    %1728 = vmatpush.msra.mxu0 %v1640
    %1729 = vmatpush.msra.mxu0 %v1636
    %1730 = vmatpush.msra.mxu0 %v1632
    %1731 = vmatmul.f32.gmra.mxu0 %v1630
    %v1732 = vpop.f32.mrf.mxu0
    %v1733 = vadd.f32 0.0, %v1732
    %1734 = vdwg.mxu0
    %1735 = vmatpush.msra.mxu0 %v1693
    %1736 = vmatpush.msra.mxu0 %v1689
    %1737 = vmatpush.msra.mxu0 %v1685
    %1738 = vmatpush.msra.mxu0 %v1681
    %1739 = vmatpush.msra.mxu0 %v1677
    %1740 = vmatpush.msra.mxu0 %v1673
    %1741 = vmatpush.msra.mxu0 %v1669
    %1742 = vmatpush.msra.mxu0 %v1665
    %1743 = vmatpush.msra.mxu0 %v1661
    %1744 = vmatpush.msra.mxu0 %v1657
    %1745 = vmatpush.msra.mxu0 %v1653
    %1746 = vmatpush.msra.mxu0 %v1649
    %1747 = vmatpush.msra.mxu0 %v1645
    %1748 = vmatpush.msra.mxu0 %v1641
    %1749 = vmatpush.msra.mxu0 %v1637
    %1750 = vmatpush.msra.mxu0 %v1633
    %1751 = vmatmul.f32.gmra.mxu0 %v1630
    %v1752 = vpop.f32.mrf.mxu0
    %v1753 = vadd.f32 0.0, %v1752
    %1754 = vdwg.mxu0
    %1755 = vmatpush.msra.mxu0 %v1694
    %1756 = vmatpush.msra.mxu0 %v1690
    %1757 = vmatpush.msra.mxu0 %v1686
    %1758 = vmatpush.msra.mxu0 %v1682
    %1759 = vmatpush.msra.mxu0 %v1678
    %1760 = vmatpush.msra.mxu0 %v1674
    %1761 = vmatpush.msra.mxu0 %v1670
    %1762 = vmatpush.msra.mxu0 %v1666
    %1763 = vmatpush.msra.mxu0 %v1662
    %1764 = vmatpush.msra.mxu0 %v1658
    %1765 = vmatpush.msra.mxu0 %v1654
    %1766 = vmatpush.msra.mxu0 %v1650
    %1767 = vmatpush.msra.mxu0 %v1646
    %1768 = vmatpush.msra.mxu0 %v1642
    %1769 = vmatpush.msra.mxu0 %v1638
    %1770 = vmatpush.msra.mxu0 %v1634
    %1771 = vmatmul.f32.gmra.mxu0 %v1630
    %v1772 = vpop.f32.mrf.mxu0
    %v1773 = vadd.f32 0.0, %v1772
    %1774 = vdwg.mxu0
    %v1775 = vadd.f32 %v1626, %v1713
    %v1776 = vadd.f32 %v1627, %v1733
    %v1777 = vadd.f32 %v1628, %v1753
    %v1778 = vadd.f32 %v1629, %v1773
    %v1779 = vld [vmem:[#allocation3] sm:$0xff]
    %v1780 = vxor.u32 %v1775, 2147483648
    %v1781 = vmul.f32 %v1780, 1.442695
    %v1782 = vpow.pop %v1781
    %v1783 = vadd.f32 %v1782, 1.0
    %v1784 = vrcp.pop %v1783
    %v1785 = vmul.f32 %v1783, %v1784
    %v1786 = vsub.f32 1.0, %v1785
    %v1787 = vmul.f32 %v1784, %v1786
    %v1788 = vadd.f32 %v1784, %v1787
    %vm1789 = vweird.f32 %v1783
    %vm1790 = vweird.f32 %v1784
    %vm1791 = vmor %vm1789, %vm1790
    %v1792 = vsel %vm1791, %v1784, %v1788
    %v1793 = vand.u32 2147483647, %v1783
    %vm1794 = vcmp.eq.f32.partialorder %v1793, 8.507059e+37
    %v1795 = vand.u32 %v1783, 2147483648
    %v1796 = vor.u32 1.1754944e-38, %v1795
    %v1797 = vsel %vm1794, %v1796, %v1792
    %v1798 = vmul.f32 1.0, %v1797
    %v1799 = vxor.u32 %v1776, 2147483648
    %v1800 = vmul.f32 %v1799, 1.442695
    %v1801 = vpow.pop %v1800
    %v1802 = vadd.f32 %v1801, 1.0
    %v1803 = vrcp.pop %v1802
    %v1804 = vmul.f32 %v1802, %v1803
    %v1805 = vsub.f32 1.0, %v1804
    %v1806 = vmul.f32 %v1803, %v1805
    %v1807 = vadd.f32 %v1803, %v1806
    %vm1808 = vweird.f32 %v1802
    %vm1809 = vweird.f32 %v1803
    %vm1810 = vmor %vm1808, %vm1809
    %v1811 = vsel %vm1810, %v1803, %v1807
    %v1812 = vand.u32 2147483647, %v1802
    %vm1813 = vcmp.eq.f32.partialorder %v1812, 8.507059e+37
    %v1814 = vand.u32 %v1802, 2147483648
    %v1815 = vor.u32 1.1754944e-38, %v1814
    %v1816 = vsel %vm1813, %v1815, %v1811
    %v1817 = vmul.f32 1.0, %v1816
    %v1818 = vtanh.pop %v1777
    %v1819 = vxor.u32 %v1778, 2147483648
    %v1820 = vmul.f32 %v1819, 1.442695
    %v1821 = vpow.pop %v1820
    %v1822 = vadd.f32 %v1821, 1.0
    %v1823 = vrcp.pop %v1822
    %v1824 = vmul.f32 %v1822, %v1823
    %v1825 = vsub.f32 1.0, %v1824
    %v1826 = vmul.f32 %v1823, %v1825
    %v1827 = vadd.f32 %v1823, %v1826
    %vm1828 = vweird.f32 %v1822
    %vm1829 = vweird.f32 %v1823
    %vm1830 = vmor %vm1828, %vm1829
    %v1831 = vsel %vm1830, %v1823, %v1827
    %v1832 = vand.u32 2147483647, %v1822
    %vm1833 = vcmp.eq.f32.partialorder %v1832, 8.507059e+37
    %v1834 = vand.u32 %v1822, 2147483648
    %v1835 = vor.u32 1.1754944e-38, %v1834
    %v1836 = vsel %vm1833, %v1835, %v1831
    %v1837 = vmul.f32 1.0, %v1836
    %v1838 = vmul.f32 %v1817, %v1779
    %v1839 = vmul.f32 %v1798, %v1818
    %v1840 = vadd.f32 %v1838, %v1839
    %v1841 = vtanh.pop %v1840
    %v1842 = vmul.f32 %v1837, %v1841
    %1843 = vst [vmem:[#allocation2] sm:$0xff] %v1842
    %1844 = vst [vmem:[#allocation3] sm:$0xff] %v1840
    %v1845 = vld [vmem:[#allocation8] sm:$0xff]
    %v1846 = vld [vmem:[#allocation8 + $0x8] sm:$0xff]
    %v1847 = vld [vmem:[#allocation8 + $0x10] sm:$0xff]
    %v1848 = vld [vmem:[#allocation8 + $0x18] sm:$0xff]
    %v1849 = vld [vmem:[#allocation8 + $0x20] sm:$0xff]
    %v1850 = vld [vmem:[#allocation8 + $0x28] sm:$0xff]
    %v1851 = vld [vmem:[#allocation8 + $0x30] sm:$0xff]
    %v1852 = vld [vmem:[#allocation8 + $0x38] sm:$0xff]
    %v1853 = vld [vmem:[#allocation8 + $0x40] sm:$0xff]
    %v1854 = vld [vmem:[#allocation8 + $0x48] sm:$0xff]
    %v1855 = vld [vmem:[#allocation8 + $0x50] sm:$0xff]
    %v1856 = vld [vmem:[#allocation8 + $0x58] sm:$0xff]
    %v1857 = vld [vmem:[#allocation8 + $0x60] sm:$0xff]
    %v1858 = vld [vmem:[#allocation8 + $0x68] sm:$0xff]
    %v1859 = vld [vmem:[#allocation8 + $0x70] sm:$0xff]
    %v1860 = vld [vmem:[#allocation8 + $0x78] sm:$0xff]
    %v1861 = vld [vmem:[#allocation8 + $0x80] sm:$0xff]
    %v1862 = vld [vmem:[#allocation8 + $0x88] sm:$0xff]
    %v1863 = vld [vmem:[#allocation8 + $0x90] sm:$0xff]
    %v1864 = vld [vmem:[#allocation8 + $0x98] sm:$0xff]
    %v1865 = vld [vmem:[#allocation8 + $0xa0] sm:$0xff]
    %v1866 = vld [vmem:[#allocation8 + $0xa8] sm:$0xff]
    %v1867 = vld [vmem:[#allocation8 + $0xb0] sm:$0xff]
    %v1868 = vld [vmem:[#allocation8 + $0xb8] sm:$0xff]
    %v1869 = vld [vmem:[#allocation8 + $0xc0] sm:$0xff]
    %v1870 = vld [vmem:[#allocation8 + $0xc8] sm:$0xff]
    %v1871 = vld [vmem:[#allocation8 + $0xd0] sm:$0xff]
    %v1872 = vld [vmem:[#allocation8 + $0xd8] sm:$0xff]
    %v1873 = vld [vmem:[#allocation8 + $0xe0] sm:$0xff]
    %v1874 = vld [vmem:[#allocation8 + $0xe8] sm:$0xff]
    %v1875 = vld [vmem:[#allocation8 + $0xf0] sm:$0xff]
    %v1876 = vld [vmem:[#allocation8 + $0xf8] sm:$0xff]
    %v1877 = vld [vmem:[#allocation8 + $0x100] sm:$0xff]
    %v1878 = vld [vmem:[#allocation8 + $0x108] sm:$0xff]
    %v1879 = vld [vmem:[#allocation8 + $0x110] sm:$0xff]
    %v1880 = vld [vmem:[#allocation8 + $0x118] sm:$0xff]
    %v1881 = vld [vmem:[#allocation8 + $0x120] sm:$0xff]
    %v1882 = vld [vmem:[#allocation8 + $0x128] sm:$0xff]
    %v1883 = vld [vmem:[#allocation8 + $0x130] sm:$0xff]
    %v1884 = vld [vmem:[#allocation8 + $0x138] sm:$0xff]
    %v1885 = vld [vmem:[#allocation8 + $0x140] sm:$0xff]
    %v1886 = vld [vmem:[#allocation8 + $0x148] sm:$0xff]
    %v1887 = vld [vmem:[#allocation8 + $0x150] sm:$0xff]
    %v1888 = vld [vmem:[#allocation8 + $0x158] sm:$0xff]
    %v1889 = vld [vmem:[#allocation8 + $0x160] sm:$0xff]
    %v1890 = vld [vmem:[#allocation8 + $0x168] sm:$0xff]
    %v1891 = vld [vmem:[#allocation8 + $0x170] sm:$0xff]
    %v1892 = vld [vmem:[#allocation8 + $0x178] sm:$0xff]
    %v1893 = vld [vmem:[#allocation8 + $0x180] sm:$0xff]
    %v1894 = vld [vmem:[#allocation8 + $0x188] sm:$0xff]
    %v1895 = vld [vmem:[#allocation8 + $0x190] sm:$0xff]
    %v1896 = vld [vmem:[#allocation8 + $0x198] sm:$0xff]
    %v1897 = vld [vmem:[#allocation8 + $0x1a0] sm:$0xff]
    %v1898 = vld [vmem:[#allocation8 + $0x1a8] sm:$0xff]
    %v1899 = vld [vmem:[#allocation8 + $0x1b0] sm:$0xff]
    %v1900 = vld [vmem:[#allocation8 + $0x1b8] sm:$0xff]
    %v1901 = vld [vmem:[#allocation8 + $0x1c0] sm:$0xff]
    %v1902 = vld [vmem:[#allocation8 + $0x1c8] sm:$0xff]
    %v1903 = vld [vmem:[#allocation8 + $0x1d0] sm:$0xff]
    %v1904 = vld [vmem:[#allocation8 + $0x1d8] sm:$0xff]
    %v1905 = vld [vmem:[#allocation8 + $0x1e0] sm:$0xff]
    %v1906 = vld [vmem:[#allocation8 + $0x1e8] sm:$0xff]
    %v1907 = vld [vmem:[#allocation8 + $0x1f0] sm:$0xff]
    %v1908 = vld [vmem:[#allocation8 + $0x1f8] sm:$0xff]
    %v1909 = vld [vmem:[%s648] sm:$0xff]
    %v1910 = vld [vmem:[#allocation10] sm:$0xff]
    %v1911 = vld [vmem:[#allocation10 + $0x8] sm:$0xff]
    %v1912 = vld [vmem:[#allocation10 + $0x10] sm:$0xff]
    %v1913 = vld [vmem:[#allocation10 + $0x18] sm:$0xff]
    %v1914 = vld [vmem:[#allocation10 + $0x20] sm:$0xff]
    %v1915 = vld [vmem:[#allocation10 + $0x28] sm:$0xff]
    %v1916 = vld [vmem:[#allocation10 + $0x30] sm:$0xff]
    %v1917 = vld [vmem:[#allocation10 + $0x38] sm:$0xff]
    %v1918 = vld [vmem:[#allocation10 + $0x40] sm:$0xff]
    %v1919 = vld [vmem:[#allocation10 + $0x48] sm:$0xff]
    %v1920 = vld [vmem:[#allocation10 + $0x50] sm:$0xff]
    %v1921 = vld [vmem:[#allocation10 + $0x58] sm:$0xff]
    %v1922 = vld [vmem:[#allocation10 + $0x60] sm:$0xff]
    %v1923 = vld [vmem:[#allocation10 + $0x68] sm:$0xff]
    %v1924 = vld [vmem:[#allocation10 + $0x70] sm:$0xff]
    %v1925 = vld [vmem:[#allocation10 + $0x78] sm:$0xff]
    %v1926 = vld [vmem:[#allocation10 + $0x80] sm:$0xff]
    %v1927 = vld [vmem:[#allocation10 + $0x88] sm:$0xff]
    %v1928 = vld [vmem:[#allocation10 + $0x90] sm:$0xff]
    %v1929 = vld [vmem:[#allocation10 + $0x98] sm:$0xff]
    %v1930 = vld [vmem:[#allocation10 + $0xa0] sm:$0xff]
    %v1931 = vld [vmem:[#allocation10 + $0xa8] sm:$0xff]
    %v1932 = vld [vmem:[#allocation10 + $0xb0] sm:$0xff]
    %v1933 = vld [vmem:[#allocation10 + $0xb8] sm:$0xff]
    %v1934 = vld [vmem:[#allocation10 + $0xc0] sm:$0xff]
    %v1935 = vld [vmem:[#allocation10 + $0xc8] sm:$0xff]
    %v1936 = vld [vmem:[#allocation10 + $0xd0] sm:$0xff]
    %v1937 = vld [vmem:[#allocation10 + $0xd8] sm:$0xff]
    %v1938 = vld [vmem:[#allocation10 + $0xe0] sm:$0xff]
    %v1939 = vld [vmem:[#allocation10 + $0xe8] sm:$0xff]
    %v1940 = vld [vmem:[#allocation10 + $0xf0] sm:$0xff]
    %v1941 = vld [vmem:[#allocation10 + $0xf8] sm:$0xff]
    %v1942 = vld [vmem:[#allocation10 + $0x100] sm:$0xff]
    %v1943 = vld [vmem:[#allocation10 + $0x108] sm:$0xff]
    %v1944 = vld [vmem:[#allocation10 + $0x110] sm:$0xff]
    %v1945 = vld [vmem:[#allocation10 + $0x118] sm:$0xff]
    %v1946 = vld [vmem:[#allocation10 + $0x120] sm:$0xff]
    %v1947 = vld [vmem:[#allocation10 + $0x128] sm:$0xff]
    %v1948 = vld [vmem:[#allocation10 + $0x130] sm:$0xff]
    %v1949 = vld [vmem:[#allocation10 + $0x138] sm:$0xff]
    %v1950 = vld [vmem:[#allocation10 + $0x140] sm:$0xff]
    %v1951 = vld [vmem:[#allocation10 + $0x148] sm:$0xff]
    %v1952 = vld [vmem:[#allocation10 + $0x150] sm:$0xff]
    %v1953 = vld [vmem:[#allocation10 + $0x158] sm:$0xff]
    %v1954 = vld [vmem:[#allocation10 + $0x160] sm:$0xff]
    %v1955 = vld [vmem:[#allocation10 + $0x168] sm:$0xff]
    %v1956 = vld [vmem:[#allocation10 + $0x170] sm:$0xff]
    %v1957 = vld [vmem:[#allocation10 + $0x178] sm:$0xff]
    %v1958 = vld [vmem:[#allocation10 + $0x180] sm:$0xff]
    %v1959 = vld [vmem:[#allocation10 + $0x188] sm:$0xff]
    %v1960 = vld [vmem:[#allocation10 + $0x190] sm:$0xff]
    %v1961 = vld [vmem:[#allocation10 + $0x198] sm:$0xff]
    %v1962 = vld [vmem:[#allocation10 + $0x1a0] sm:$0xff]
    %v1963 = vld [vmem:[#allocation10 + $0x1a8] sm:$0xff]
    %v1964 = vld [vmem:[#allocation10 + $0x1b0] sm:$0xff]
    %v1965 = vld [vmem:[#allocation10 + $0x1b8] sm:$0xff]
    %v1966 = vld [vmem:[#allocation10 + $0x1c0] sm:$0xff]
    %v1967 = vld [vmem:[#allocation10 + $0x1c8] sm:$0xff]
    %v1968 = vld [vmem:[#allocation10 + $0x1d0] sm:$0xff]
    %v1969 = vld [vmem:[#allocation10 + $0x1d8] sm:$0xff]
    %v1970 = vld [vmem:[#allocation10 + $0x1e0] sm:$0xff]
    %v1971 = vld [vmem:[#allocation10 + $0x1e8] sm:$0xff]
    %v1972 = vld [vmem:[#allocation10 + $0x1f0] sm:$0xff]
    %v1973 = vld [vmem:[#allocation10 + $0x1f8] sm:$0xff]
    %1974 = vmatpush.msra.mxu0 %v1970
    %1975 = vmatpush.msra.mxu0 %v1966
    %1976 = vmatpush.msra.mxu0 %v1962
    %1977 = vmatpush.msra.mxu0 %v1958
    %1978 = vmatpush.msra.mxu0 %v1954
    %1979 = vmatpush.msra.mxu0 %v1950
    %1980 = vmatpush.msra.mxu0 %v1946
    %1981 = vmatpush.msra.mxu0 %v1942
    %1982 = vmatpush.msra.mxu0 %v1938
    %1983 = vmatpush.msra.mxu0 %v1934
    %1984 = vmatpush.msra.mxu0 %v1930
    %1985 = vmatpush.msra.mxu0 %v1926
    %1986 = vmatpush.msra.mxu0 %v1922
    %1987 = vmatpush.msra.mxu0 %v1918
    %1988 = vmatpush.msra.mxu0 %v1914
    %1989 = vmatpush.msra.mxu0 %v1910
    %1990 = vmatmul.f32.gmra.mxu0 %v1909
    %v1991 = vpop.f32.mrf.mxu0
    %v1992 = vadd.f32 0.0, %v1991
    %1993 = vdwg.mxu0
    %1994 = vmatpush.msra.mxu0 %v1971
    %1995 = vmatpush.msra.mxu0 %v1967
    %1996 = vmatpush.msra.mxu0 %v1963
    %1997 = vmatpush.msra.mxu0 %v1959
    %1998 = vmatpush.msra.mxu0 %v1955
    %1999 = vmatpush.msra.mxu0 %v1951
    %2000 = vmatpush.msra.mxu0 %v1947
    %2001 = vmatpush.msra.mxu0 %v1943
    %2002 = vmatpush.msra.mxu0 %v1939
    %2003 = vmatpush.msra.mxu0 %v1935
    %2004 = vmatpush.msra.mxu0 %v1931
    %2005 = vmatpush.msra.mxu0 %v1927
    %2006 = vmatpush.msra.mxu0 %v1923
    %2007 = vmatpush.msra.mxu0 %v1919
    %2008 = vmatpush.msra.mxu0 %v1915
    %2009 = vmatpush.msra.mxu0 %v1911
    %2010 = vmatmul.f32.gmra.mxu0 %v1909
    %v2011 = vpop.f32.mrf.mxu0
    %v2012 = vadd.f32 0.0, %v2011
    %2013 = vdwg.mxu0
    %2014 = vmatpush.msra.mxu0 %v1972
    %2015 = vmatpush.msra.mxu0 %v1968
    %2016 = vmatpush.msra.mxu0 %v1964
    %2017 = vmatpush.msra.mxu0 %v1960
    %2018 = vmatpush.msra.mxu0 %v1956
    %2019 = vmatpush.msra.mxu0 %v1952
    %2020 = vmatpush.msra.mxu0 %v1948
    %2021 = vmatpush.msra.mxu0 %v1944
    %2022 = vmatpush.msra.mxu0 %v1940
    %2023 = vmatpush.msra.mxu0 %v1936
    %2024 = vmatpush.msra.mxu0 %v1932
    %2025 = vmatpush.msra.mxu0 %v1928
    %2026 = vmatpush.msra.mxu0 %v1924
    %2027 = vmatpush.msra.mxu0 %v1920
    %2028 = vmatpush.msra.mxu0 %v1916
    %2029 = vmatpush.msra.mxu0 %v1912
    %2030 = vmatmul.f32.gmra.mxu0 %v1909
    %v2031 = vpop.f32.mrf.mxu0
    %v2032 = vadd.f32 0.0, %v2031
    %2033 = vdwg.mxu0
    %2034 = vmatpush.msra.mxu0 %v1973
    %2035 = vmatpush.msra.mxu0 %v1969
    %2036 = vmatpush.msra.mxu0 %v1965
    %2037 = vmatpush.msra.mxu0 %v1961
    %2038 = vmatpush.msra.mxu0 %v1957
    %2039 = vmatpush.msra.mxu0 %v1953
    %2040 = vmatpush.msra.mxu0 %v1949
    %2041 = vmatpush.msra.mxu0 %v1945
    %2042 = vmatpush.msra.mxu0 %v1941
    %2043 = vmatpush.msra.mxu0 %v1937
    %2044 = vmatpush.msra.mxu0 %v1933
    %2045 = vmatpush.msra.mxu0 %v1929
    %2046 = vmatpush.msra.mxu0 %v1925
    %2047 = vmatpush.msra.mxu0 %v1921
    %2048 = vmatpush.msra.mxu0 %v1917
    %2049 = vmatpush.msra.mxu0 %v1913
    %2050 = vmatmul.f32.gmra.mxu0 %v1909
    %v2051 = vpop.f32.mrf.mxu0
    %v2052 = vadd.f32 0.0, %v2051
    %2053 = vdwg.mxu0
    %2054 = vmatpush.msra.mxu0 %v1905
    %2055 = vmatpush.msra.mxu0 %v1901
    %2056 = vmatpush.msra.mxu0 %v1897
    %2057 = vmatpush.msra.mxu0 %v1893
    %2058 = vmatpush.msra.mxu0 %v1889
    %2059 = vmatpush.msra.mxu0 %v1885
    %2060 = vmatpush.msra.mxu0 %v1881
    %2061 = vmatpush.msra.mxu0 %v1877
    %2062 = vmatpush.msra.mxu0 %v1873
    %2063 = vmatpush.msra.mxu0 %v1869
    %2064 = vmatpush.msra.mxu0 %v1865
    %2065 = vmatpush.msra.mxu0 %v1861
    %2066 = vmatpush.msra.mxu0 %v1857
    %2067 = vmatpush.msra.mxu0 %v1853
    %2068 = vmatpush.msra.mxu0 %v1849
    %2069 = vmatpush.msra.mxu0 %v1845
    %2070 = vmatmul.f32.gmra.mxu0 %v1842
    %v2071 = vpop.f32.mrf.mxu0
    %v2072 = vadd.f32 %v1992, %v2071
    %2073 = vdwg.mxu0
    %2074 = vmatpush.msra.mxu0 %v1906
    %2075 = vmatpush.msra.mxu0 %v1902
    %2076 = vmatpush.msra.mxu0 %v1898
    %2077 = vmatpush.msra.mxu0 %v1894
    %2078 = vmatpush.msra.mxu0 %v1890
    %2079 = vmatpush.msra.mxu0 %v1886
    %2080 = vmatpush.msra.mxu0 %v1882
    %2081 = vmatpush.msra.mxu0 %v1878
    %2082 = vmatpush.msra.mxu0 %v1874
    %2083 = vmatpush.msra.mxu0 %v1870
    %2084 = vmatpush.msra.mxu0 %v1866
    %2085 = vmatpush.msra.mxu0 %v1862
    %2086 = vmatpush.msra.mxu0 %v1858
    %2087 = vmatpush.msra.mxu0 %v1854
    %2088 = vmatpush.msra.mxu0 %v1850
    %2089 = vmatpush.msra.mxu0 %v1846
    %2090 = vmatmul.f32.gmra.mxu0 %v1842
    %v2091 = vpop.f32.mrf.mxu0
    %v2092 = vadd.f32 %v2012, %v2091
    %2093 = vdwg.mxu0
    %2094 = vmatpush.msra.mxu0 %v1907
    %2095 = vmatpush.msra.mxu0 %v1903
    %2096 = vmatpush.msra.mxu0 %v1899
    %2097 = vmatpush.msra.mxu0 %v1895
    %2098 = vmatpush.msra.mxu0 %v1891
    %2099 = vmatpush.msra.mxu0 %v1887
    %2100 = vmatpush.msra.mxu0 %v1883
    %2101 = vmatpush.msra.mxu0 %v1879
    %2102 = vmatpush.msra.mxu0 %v1875
    %2103 = vmatpush.msra.mxu0 %v1871
    %2104 = vmatpush.msra.mxu0 %v1867
    %2105 = vmatpush.msra.mxu0 %v1863
    %2106 = vmatpush.msra.mxu0 %v1859
    %2107 = vmatpush.msra.mxu0 %v1855
    %2108 = vmatpush.msra.mxu0 %v1851
    %2109 = vmatpush.msra.mxu0 %v1847
    %2110 = vmatmul.f32.gmra.mxu0 %v1842
    %v2111 = vpop.f32.mrf.mxu0
    %v2112 = vadd.f32 %v2032, %v2111
    %2113 = vdwg.mxu0
    %2114 = vmatpush.msra.mxu0 %v1908
    %2115 = vmatpush.msra.mxu0 %v1904
    %2116 = vmatpush.msra.mxu0 %v1900
    %2117 = vmatpush.msra.mxu0 %v1896
    %2118 = vmatpush.msra.mxu0 %v1892
    %2119 = vmatpush.msra.mxu0 %v1888
    %2120 = vmatpush.msra.mxu0 %v1884
    %2121 = vmatpush.msra.mxu0 %v1880
    %2122 = vmatpush.msra.mxu0 %v1876
    %2123 = vmatpush.msra.mxu0 %v1872
    %2124 = vmatpush.msra.mxu0 %v1868
    %2125 = vmatpush.msra.mxu0 %v1864
    %2126 = vmatpush.msra.mxu0 %v1860
    %2127 = vmatpush.msra.mxu0 %v1856
    %2128 = vmatpush.msra.mxu0 %v1852
    %2129 = vmatpush.msra.mxu0 %v1848
    %2130 = vmatmul.f32.gmra.mxu0 %v1842
    %v2131 = vpop.f32.mrf.mxu0
    %v2132 = vadd.f32 %v2052, %v2131
    %2133 = vdwg.mxu0
    %v2134 = vadd.f32 %v2072, %v875
    %v2135 = vadd.f32 %v2092, %v876
    %v2136 = vadd.f32 %v2112, %v877
    %v2137 = vadd.f32 %v2132, %v878
    %v2138 = vld [vmem:[%s887] sm:$0xff]
    %v2139 = vxor.u32 %v2134, 2147483648
    %v2140 = vmul.f32 %v2139, 1.442695
    %v2141 = vpow.pop %v2140
    %v2142 = vadd.f32 %v2141, 1.0
    %v2143 = vrcp.pop %v2142
    %v2144 = vmul.f32 %v2142, %v2143
    %v2145 = vsub.f32 1.0, %v2144
    %v2146 = vmul.f32 %v2143, %v2145
    %v2147 = vadd.f32 %v2143, %v2146
    %vm2148 = vweird.f32 %v2142
    %vm2149 = vweird.f32 %v2143
    %vm2150 = vmor %vm2148, %vm2149
    %v2151 = vsel %vm2150, %v2143, %v2147
    %v2152 = vand.u32 2147483647, %v2142
    %vm2153 = vcmp.eq.f32.partialorder %v2152, 8.507059e+37
    %v2154 = vand.u32 %v2142, 2147483648
    %v2155 = vor.u32 1.1754944e-38, %v2154
    %v2156 = vsel %vm2153, %v2155, %v2151
    %v2157 = vmul.f32 1.0, %v2156
    %v2158 = vxor.u32 %v2135, 2147483648
    %v2159 = vmul.f32 %v2158, 1.442695
    %v2160 = vpow.pop %v2159
    %v2161 = vadd.f32 %v2160, 1.0
    %v2162 = vrcp.pop %v2161
    %v2163 = vmul.f32 %v2161, %v2162
    %v2164 = vsub.f32 1.0, %v2163
    %v2165 = vmul.f32 %v2162, %v2164
    %v2166 = vadd.f32 %v2162, %v2165
    %vm2167 = vweird.f32 %v2161
    %vm2168 = vweird.f32 %v2162
    %vm2169 = vmor %vm2167, %vm2168
    %v2170 = vsel %vm2169, %v2162, %v2166
    %v2171 = vand.u32 2147483647, %v2161
    %vm2172 = vcmp.eq.f32.partialorder %v2171, 8.507059e+37
    %v2173 = vand.u32 %v2161, 2147483648
    %v2174 = vor.u32 1.1754944e-38, %v2173
    %v2175 = vsel %vm2172, %v2174, %v2170
    %v2176 = vmul.f32 1.0, %v2175
    %v2177 = vtanh.pop %v2136
    %v2178 = vxor.u32 %v2137, 2147483648
    %v2179 = vmul.f32 %v2178, 1.442695
    %v2180 = vpow.pop %v2179
    %v2181 = vadd.f32 %v2180, 1.0
    %v2182 = vrcp.pop %v2181
    %v2183 = vmul.f32 %v2181, %v2182
    %v2184 = vsub.f32 1.0, %v2183
    %v2185 = vmul.f32 %v2182, %v2184
    %v2186 = vadd.f32 %v2182, %v2185
    %vm2187 = vweird.f32 %v2181
    %vm2188 = vweird.f32 %v2182
    %vm2189 = vmor %vm2187, %vm2188
    %v2190 = vsel %vm2189, %v2182, %v2186
    %v2191 = vand.u32 2147483647, %v2181
    %vm2192 = vcmp.eq.f32.partialorder %v2191, 8.507059e+37
    %v2193 = vand.u32 %v2181, 2147483648
    %v2194 = vor.u32 1.1754944e-38, %v2193
    %v2195 = vsel %vm2192, %v2194, %v2190
    %v2196 = vmul.f32 1.0, %v2195
    %v2197 = vmul.f32 %v2176, %v2138
    %v2198 = vmul.f32 %v2157, %v2177
    %v2199 = vadd.f32 %v2197, %v2198
    %v2200 = vtanh.pop %v2199
    %v2201 = vmul.f32 %v2196, %v2200
    %2202 = vst [vmem:[%s648] sm:$0xff] %v2201
    %2203 = vst [vmem:[%s887] sm:$0xff] %v2199
    %p2204 = scmp.eq.s32.totalorder %s1624, 7
    // Predicated region
    $region66: #{tpu_custom_call.1} parent=1 // pred_check
      %p2205 = pneg %p2204
    $region67: #{tpu_custom_call.1} parent=1 // pred_check_branch
      %2207 = sbr.rel (%p2205) target = $region69
    $region68: #{tpu_custom_call.1} parent=1 // pred_region
      %v2208 = vld [vmem:[#allocation11] sm:$0xff]
      %v2209 = vld [vmem:[#allocation11 + $0x8] sm:$0xff]
      %v2210 = vld [vmem:[#allocation11 + $0x10] sm:$0xff]
      %v2211 = vld [vmem:[#allocation11 + $0x18] sm:$0xff]
      %v2212 = vld [vmem:[#allocation11 + $0x20] sm:$0xff]
      %v2213 = vld [vmem:[#allocation11 + $0x28] sm:$0xff]
      %v2214 = vld [vmem:[#allocation11 + $0x30] sm:$0xff]
      %v2215 = vld [vmem:[#allocation11 + $0x38] sm:$0xff]
      %v2216 = vld [vmem:[#allocation11 + $0x40] sm:$0xff]
      %v2217 = vld [vmem:[#allocation11 + $0x48] sm:$0xff]
      %v2218 = vld [vmem:[#allocation11 + $0x50] sm:$0xff]
      %v2219 = vld [vmem:[#allocation11 + $0x58] sm:$0xff]
      %v2220 = vld [vmem:[#allocation11 + $0x60] sm:$0xff]
      %v2221 = vld [vmem:[#allocation11 + $0x68] sm:$0xff]
      %v2222 = vld [vmem:[#allocation11 + $0x70] sm:$0xff]
      %v2223 = vld [vmem:[#allocation11 + $0x78] sm:$0xff]
      %v2224 = vld [vmem:[%s8] sm:$0x1]
      %v2226 = vperm.slane %v2224, 0
      %2228 = vmatpush.msra.mxu0 %v2223
      %2229 = vmatpush.msra.mxu0 %v2222
      %2230 = vmatpush.msra.mxu0 %v2221
      %2231 = vmatpush.msra.mxu0 %v2220
      %2232 = vmatpush.msra.mxu0 %v2219
      %2233 = vmatpush.msra.mxu0 %v2218
      %2234 = vmatpush.msra.mxu0 %v2217
      %2235 = vmatpush.msra.mxu0 %v2216
      %2236 = vmatpush.msra.mxu0 %v2215
      %2237 = vmatpush.msra.mxu0 %v2214
      %2238 = vmatpush.msra.mxu0 %v2213
      %2239 = vmatpush.msra.mxu0 %v2212
      %2240 = vmatpush.msra.mxu0 %v2211
      %2241 = vmatpush.msra.mxu0 %v2210
      %2242 = vmatpush.msra.mxu0 %v2209
      %2243 = vmatpush.msra.mxu0 %v2208
      %2244 = vmatmul.f32.gmra.mxu0 %v2201
      %v2245 = vpop.f32.mrf.mxu0
      %v2246 = vadd.f32 %v2226, %v2245
      %2247 = vdwg.mxu0
      %2248 = vst [vmem:[#allocation13] sm:$0xff] %v2246
    $region69: #{tpu_custom_call.1} parent=1 // pred_fallthru
      _
    %s2249 = sadd.s32 %s364, 3
    %s2250 = scalar_lea.vmem [#allocation4], 96
    %v2251 = vld [vmem:[%s2250] sm:$0xff]
    %v2252 = vld [vmem:[%s2250 + $0x8] sm:$0xff]
    %v2253 = vld [vmem:[%s2250 + $0x10] sm:$0xff]
    %v2254 = vld [vmem:[%s2250 + $0x18] sm:$0xff]
    %v2255 = vld [vmem:[#allocation2] sm:$0xff]
    %v2256 = vld [vmem:[#allocation5] sm:$0xff]
    %v2257 = vld [vmem:[#allocation5 + $0x8] sm:$0xff]
    %v2258 = vld [vmem:[#allocation5 + $0x10] sm:$0xff]
    %v2259 = vld [vmem:[#allocation5 + $0x18] sm:$0xff]
    %v2260 = vld [vmem:[#allocation5 + $0x20] sm:$0xff]
    %v2261 = vld [vmem:[#allocation5 + $0x28] sm:$0xff]
    %v2262 = vld [vmem:[#allocation5 + $0x30] sm:$0xff]
    %v2263 = vld [vmem:[#allocation5 + $0x38] sm:$0xff]
    %v2264 = vld [vmem:[#allocation5 + $0x40] sm:$0xff]
    %v2265 = vld [vmem:[#allocation5 + $0x48] sm:$0xff]
    %v2266 = vld [vmem:[#allocation5 + $0x50] sm:$0xff]
    %v2267 = vld [vmem:[#allocation5 + $0x58] sm:$0xff]
    %v2268 = vld [vmem:[#allocation5 + $0x60] sm:$0xff]
    %v2269 = vld [vmem:[#allocation5 + $0x68] sm:$0xff]
    %v2270 = vld [vmem:[#allocation5 + $0x70] sm:$0xff]
    %v2271 = vld [vmem:[#allocation5 + $0x78] sm:$0xff]
    %v2272 = vld [vmem:[#allocation5 + $0x80] sm:$0xff]
    %v2273 = vld [vmem:[#allocation5 + $0x88] sm:$0xff]
    %v2274 = vld [vmem:[#allocation5 + $0x90] sm:$0xff]
    %v2275 = vld [vmem:[#allocation5 + $0x98] sm:$0xff]
    %v2276 = vld [vmem:[#allocation5 + $0xa0] sm:$0xff]
    %v2277 = vld [vmem:[#allocation5 + $0xa8] sm:$0xff]
    %v2278 = vld [vmem:[#allocation5 + $0xb0] sm:$0xff]
    %v2279 = vld [vmem:[#allocation5 + $0xb8] sm:$0xff]
    %v2280 = vld [vmem:[#allocation5 + $0xc0] sm:$0xff]
    %v2281 = vld [vmem:[#allocation5 + $0xc8] sm:$0xff]
    %v2282 = vld [vmem:[#allocation5 + $0xd0] sm:$0xff]
    %v2283 = vld [vmem:[#allocation5 + $0xd8] sm:$0xff]
    %v2284 = vld [vmem:[#allocation5 + $0xe0] sm:$0xff]
    %v2285 = vld [vmem:[#allocation5 + $0xe8] sm:$0xff]
    %v2286 = vld [vmem:[#allocation5 + $0xf0] sm:$0xff]
    %v2287 = vld [vmem:[#allocation5 + $0xf8] sm:$0xff]
    %v2288 = vld [vmem:[#allocation5 + $0x100] sm:$0xff]
    %v2289 = vld [vmem:[#allocation5 + $0x108] sm:$0xff]
    %v2290 = vld [vmem:[#allocation5 + $0x110] sm:$0xff]
    %v2291 = vld [vmem:[#allocation5 + $0x118] sm:$0xff]
    %v2292 = vld [vmem:[#allocation5 + $0x120] sm:$0xff]
    %v2293 = vld [vmem:[#allocation5 + $0x128] sm:$0xff]
    %v2294 = vld [vmem:[#allocation5 + $0x130] sm:$0xff]
    %v2295 = vld [vmem:[#allocation5 + $0x138] sm:$0xff]
    %v2296 = vld [vmem:[#allocation5 + $0x140] sm:$0xff]
    %v2297 = vld [vmem:[#allocation5 + $0x148] sm:$0xff]
    %v2298 = vld [vmem:[#allocation5 + $0x150] sm:$0xff]
    %v2299 = vld [vmem:[#allocation5 + $0x158] sm:$0xff]
    %v2300 = vld [vmem:[#allocation5 + $0x160] sm:$0xff]
    %v2301 = vld [vmem:[#allocation5 + $0x168] sm:$0xff]
    %v2302 = vld [vmem:[#allocation5 + $0x170] sm:$0xff]
    %v2303 = vld [vmem:[#allocation5 + $0x178] sm:$0xff]
    %v2304 = vld [vmem:[#allocation5 + $0x180] sm:$0xff]
    %v2305 = vld [vmem:[#allocation5 + $0x188] sm:$0xff]
    %v2306 = vld [vmem:[#allocation5 + $0x190] sm:$0xff]
    %v2307 = vld [vmem:[#allocation5 + $0x198] sm:$0xff]
    %v2308 = vld [vmem:[#allocation5 + $0x1a0] sm:$0xff]
    %v2309 = vld [vmem:[#allocation5 + $0x1a8] sm:$0xff]
    %v2310 = vld [vmem:[#allocation5 + $0x1b0] sm:$0xff]
    %v2311 = vld [vmem:[#allocation5 + $0x1b8] sm:$0xff]
    %v2312 = vld [vmem:[#allocation5 + $0x1c0] sm:$0xff]
    %v2313 = vld [vmem:[#allocation5 + $0x1c8] sm:$0xff]
    %v2314 = vld [vmem:[#allocation5 + $0x1d0] sm:$0xff]
    %v2315 = vld [vmem:[#allocation5 + $0x1d8] sm:$0xff]
    %v2316 = vld [vmem:[#allocation5 + $0x1e0] sm:$0xff]
    %v2317 = vld [vmem:[#allocation5 + $0x1e8] sm:$0xff]
    %v2318 = vld [vmem:[#allocation5 + $0x1f0] sm:$0xff]
    %v2319 = vld [vmem:[#allocation5 + $0x1f8] sm:$0xff]
    %2320 = vmatpush.msra.mxu0 %v2316
    %2321 = vmatpush.msra.mxu0 %v2312
    %2322 = vmatpush.msra.mxu0 %v2308
    %2323 = vmatpush.msra.mxu0 %v2304
    %2324 = vmatpush.msra.mxu0 %v2300
    %2325 = vmatpush.msra.mxu0 %v2296
    %2326 = vmatpush.msra.mxu0 %v2292
    %2327 = vmatpush.msra.mxu0 %v2288
    %2328 = vmatpush.msra.mxu0 %v2284
    %2329 = vmatpush.msra.mxu0 %v2280
    %2330 = vmatpush.msra.mxu0 %v2276
    %2331 = vmatpush.msra.mxu0 %v2272
    %2332 = vmatpush.msra.mxu0 %v2268
    %2333 = vmatpush.msra.mxu0 %v2264
    %2334 = vmatpush.msra.mxu0 %v2260
    %2335 = vmatpush.msra.mxu0 %v2256
    %2336 = vmatmul.f32.gmra.mxu0 %v2255
    %v2337 = vpop.f32.mrf.mxu0
    %v2338 = vadd.f32 0.0, %v2337
    %2339 = vdwg.mxu0
    %2340 = vmatpush.msra.mxu0 %v2317
    %2341 = vmatpush.msra.mxu0 %v2313
    %2342 = vmatpush.msra.mxu0 %v2309
    %2343 = vmatpush.msra.mxu0 %v2305
    %2344 = vmatpush.msra.mxu0 %v2301
    %2345 = vmatpush.msra.mxu0 %v2297
    %2346 = vmatpush.msra.mxu0 %v2293
    %2347 = vmatpush.msra.mxu0 %v2289
    %2348 = vmatpush.msra.mxu0 %v2285
    %2349 = vmatpush.msra.mxu0 %v2281
    %2350 = vmatpush.msra.mxu0 %v2277
    %2351 = vmatpush.msra.mxu0 %v2273
    %2352 = vmatpush.msra.mxu0 %v2269
    %2353 = vmatpush.msra.mxu0 %v2265
    %2354 = vmatpush.msra.mxu0 %v2261
    %2355 = vmatpush.msra.mxu0 %v2257
    %2356 = vmatmul.f32.gmra.mxu0 %v2255
    %v2357 = vpop.f32.mrf.mxu0
    %v2358 = vadd.f32 0.0, %v2357
    %2359 = vdwg.mxu0
    %2360 = vmatpush.msra.mxu0 %v2318
    %2361 = vmatpush.msra.mxu0 %v2314
    %2362 = vmatpush.msra.mxu0 %v2310
    %2363 = vmatpush.msra.mxu0 %v2306
    %2364 = vmatpush.msra.mxu0 %v2302
    %2365 = vmatpush.msra.mxu0 %v2298
    %2366 = vmatpush.msra.mxu0 %v2294
    %2367 = vmatpush.msra.mxu0 %v2290
    %2368 = vmatpush.msra.mxu0 %v2286
    %2369 = vmatpush.msra.mxu0 %v2282
    %2370 = vmatpush.msra.mxu0 %v2278
    %2371 = vmatpush.msra.mxu0 %v2274
    %2372 = vmatpush.msra.mxu0 %v2270
    %2373 = vmatpush.msra.mxu0 %v2266
    %2374 = vmatpush.msra.mxu0 %v2262
    %2375 = vmatpush.msra.mxu0 %v2258
    %2376 = vmatmul.f32.gmra.mxu0 %v2255
    %v2377 = vpop.f32.mrf.mxu0
    %v2378 = vadd.f32 0.0, %v2377
    %2379 = vdwg.mxu0
    %2380 = vmatpush.msra.mxu0 %v2319
    %2381 = vmatpush.msra.mxu0 %v2315
    %2382 = vmatpush.msra.mxu0 %v2311
    %2383 = vmatpush.msra.mxu0 %v2307
    %2384 = vmatpush.msra.mxu0 %v2303
    %2385 = vmatpush.msra.mxu0 %v2299
    %2386 = vmatpush.msra.mxu0 %v2295
    %2387 = vmatpush.msra.mxu0 %v2291
    %2388 = vmatpush.msra.mxu0 %v2287
    %2389 = vmatpush.msra.mxu0 %v2283
    %2390 = vmatpush.msra.mxu0 %v2279
    %2391 = vmatpush.msra.mxu0 %v2275
    %2392 = vmatpush.msra.mxu0 %v2271
    %2393 = vmatpush.msra.mxu0 %v2267
    %2394 = vmatpush.msra.mxu0 %v2263
    %2395 = vmatpush.msra.mxu0 %v2259
    %2396 = vmatmul.f32.gmra.mxu0 %v2255
    %v2397 = vpop.f32.mrf.mxu0
    %v2398 = vadd.f32 0.0, %v2397
    %2399 = vdwg.mxu0
    %v2400 = vadd.f32 %v2251, %v2338
    %v2401 = vadd.f32 %v2252, %v2358
    %v2402 = vadd.f32 %v2253, %v2378
    %v2403 = vadd.f32 %v2254, %v2398
    %v2404 = vld [vmem:[#allocation3] sm:$0xff]
    %v2405 = vxor.u32 %v2400, 2147483648
    %v2406 = vmul.f32 %v2405, 1.442695
    %v2407 = vpow.pop %v2406
    %v2408 = vadd.f32 %v2407, 1.0
    %v2409 = vrcp.pop %v2408
    %v2410 = vmul.f32 %v2408, %v2409
    %v2411 = vsub.f32 1.0, %v2410
    %v2412 = vmul.f32 %v2409, %v2411
    %v2413 = vadd.f32 %v2409, %v2412
    %vm2414 = vweird.f32 %v2408
    %vm2415 = vweird.f32 %v2409
    %vm2416 = vmor %vm2414, %vm2415
    %v2417 = vsel %vm2416, %v2409, %v2413
    %v2418 = vand.u32 2147483647, %v2408
    %vm2419 = vcmp.eq.f32.partialorder %v2418, 8.507059e+37
    %v2420 = vand.u32 %v2408, 2147483648
    %v2421 = vor.u32 1.1754944e-38, %v2420
    %v2422 = vsel %vm2419, %v2421, %v2417
    %v2423 = vmul.f32 1.0, %v2422
    %v2424 = vxor.u32 %v2401, 2147483648
    %v2425 = vmul.f32 %v2424, 1.442695
    %v2426 = vpow.pop %v2425
    %v2427 = vadd.f32 %v2426, 1.0
    %v2428 = vrcp.pop %v2427
    %v2429 = vmul.f32 %v2427, %v2428
    %v2430 = vsub.f32 1.0, %v2429
    %v2431 = vmul.f32 %v2428, %v2430
    %v2432 = vadd.f32 %v2428, %v2431
    %vm2433 = vweird.f32 %v2427
    %vm2434 = vweird.f32 %v2428
    %vm2435 = vmor %vm2433, %vm2434
    %v2436 = vsel %vm2435, %v2428, %v2432
    %v2437 = vand.u32 2147483647, %v2427
    %vm2438 = vcmp.eq.f32.partialorder %v2437, 8.507059e+37
    %v2439 = vand.u32 %v2427, 2147483648
    %v2440 = vor.u32 1.1754944e-38, %v2439
    %v2441 = vsel %vm2438, %v2440, %v2436
    %v2442 = vmul.f32 1.0, %v2441
    %v2443 = vtanh.pop %v2402
    %v2444 = vxor.u32 %v2403, 2147483648
    %v2445 = vmul.f32 %v2444, 1.442695
    %v2446 = vpow.pop %v2445
    %v2447 = vadd.f32 %v2446, 1.0
    %v2448 = vrcp.pop %v2447
    %v2449 = vmul.f32 %v2447, %v2448
    %v2450 = vsub.f32 1.0, %v2449
    %v2451 = vmul.f32 %v2448, %v2450
    %v2452 = vadd.f32 %v2448, %v2451
    %vm2453 = vweird.f32 %v2447
    %vm2454 = vweird.f32 %v2448
    %vm2455 = vmor %vm2453, %vm2454
    %v2456 = vsel %vm2455, %v2448, %v2452
    %v2457 = vand.u32 2147483647, %v2447
    %vm2458 = vcmp.eq.f32.partialorder %v2457, 8.507059e+37
    %v2459 = vand.u32 %v2447, 2147483648
    %v2460 = vor.u32 1.1754944e-38, %v2459
    %v2461 = vsel %vm2458, %v2460, %v2456
    %v2462 = vmul.f32 1.0, %v2461
    %v2463 = vmul.f32 %v2442, %v2404
    %v2464 = vmul.f32 %v2423, %v2443
    %v2465 = vadd.f32 %v2463, %v2464
    %v2466 = vtanh.pop %v2465
    %v2467 = vmul.f32 %v2462, %v2466
    %2468 = vst [vmem:[#allocation2] sm:$0xff] %v2467
    %2469 = vst [vmem:[#allocation3] sm:$0xff] %v2465
    %v2470 = vld [vmem:[#allocation8] sm:$0xff]
    %v2471 = vld [vmem:[#allocation8 + $0x8] sm:$0xff]
    %v2472 = vld [vmem:[#allocation8 + $0x10] sm:$0xff]
    %v2473 = vld [vmem:[#allocation8 + $0x18] sm:$0xff]
    %v2474 = vld [vmem:[#allocation8 + $0x20] sm:$0xff]
    %v2475 = vld [vmem:[#allocation8 + $0x28] sm:$0xff]
    %v2476 = vld [vmem:[#allocation8 + $0x30] sm:$0xff]
    %v2477 = vld [vmem:[#allocation8 + $0x38] sm:$0xff]
    %v2478 = vld [vmem:[#allocation8 + $0x40] sm:$0xff]
    %v2479 = vld [vmem:[#allocation8 + $0x48] sm:$0xff]
    %v2480 = vld [vmem:[#allocation8 + $0x50] sm:$0xff]
    %v2481 = vld [vmem:[#allocation8 + $0x58] sm:$0xff]
    %v2482 = vld [vmem:[#allocation8 + $0x60] sm:$0xff]
    %v2483 = vld [vmem:[#allocation8 + $0x68] sm:$0xff]
    %v2484 = vld [vmem:[#allocation8 + $0x70] sm:$0xff]
    %v2485 = vld [vmem:[#allocation8 + $0x78] sm:$0xff]
    %v2486 = vld [vmem:[#allocation8 + $0x80] sm:$0xff]
    %v2487 = vld [vmem:[#allocation8 + $0x88] sm:$0xff]
    %v2488 = vld [vmem:[#allocation8 + $0x90] sm:$0xff]
    %v2489 = vld [vmem:[#allocation8 + $0x98] sm:$0xff]
    %v2490 = vld [vmem:[#allocation8 + $0xa0] sm:$0xff]
    %v2491 = vld [vmem:[#allocation8 + $0xa8] sm:$0xff]
    %v2492 = vld [vmem:[#allocation8 + $0xb0] sm:$0xff]
    %v2493 = vld [vmem:[#allocation8 + $0xb8] sm:$0xff]
    %v2494 = vld [vmem:[#allocation8 + $0xc0] sm:$0xff]
    %v2495 = vld [vmem:[#allocation8 + $0xc8] sm:$0xff]
    %v2496 = vld [vmem:[#allocation8 + $0xd0] sm:$0xff]
    %v2497 = vld [vmem:[#allocation8 + $0xd8] sm:$0xff]
    %v2498 = vld [vmem:[#allocation8 + $0xe0] sm:$0xff]
    %v2499 = vld [vmem:[#allocation8 + $0xe8] sm:$0xff]
    %v2500 = vld [vmem:[#allocation8 + $0xf0] sm:$0xff]
    %v2501 = vld [vmem:[#allocation8 + $0xf8] sm:$0xff]
    %v2502 = vld [vmem:[#allocation8 + $0x100] sm:$0xff]
    %v2503 = vld [vmem:[#allocation8 + $0x108] sm:$0xff]
    %v2504 = vld [vmem:[#allocation8 + $0x110] sm:$0xff]
    %v2505 = vld [vmem:[#allocation8 + $0x118] sm:$0xff]
    %v2506 = vld [vmem:[#allocation8 + $0x120] sm:$0xff]
    %v2507 = vld [vmem:[#allocation8 + $0x128] sm:$0xff]
    %v2508 = vld [vmem:[#allocation8 + $0x130] sm:$0xff]
    %v2509 = vld [vmem:[#allocation8 + $0x138] sm:$0xff]
    %v2510 = vld [vmem:[#allocation8 + $0x140] sm:$0xff]
    %v2511 = vld [vmem:[#allocation8 + $0x148] sm:$0xff]
    %v2512 = vld [vmem:[#allocation8 + $0x150] sm:$0xff]
    %v2513 = vld [vmem:[#allocation8 + $0x158] sm:$0xff]
    %v2514 = vld [vmem:[#allocation8 + $0x160] sm:$0xff]
    %v2515 = vld [vmem:[#allocation8 + $0x168] sm:$0xff]
    %v2516 = vld [vmem:[#allocation8 + $0x170] sm:$0xff]
    %v2517 = vld [vmem:[#allocation8 + $0x178] sm:$0xff]
    %v2518 = vld [vmem:[#allocation8 + $0x180] sm:$0xff]
    %v2519 = vld [vmem:[#allocation8 + $0x188] sm:$0xff]
    %v2520 = vld [vmem:[#allocation8 + $0x190] sm:$0xff]
    %v2521 = vld [vmem:[#allocation8 + $0x198] sm:$0xff]
    %v2522 = vld [vmem:[#allocation8 + $0x1a0] sm:$0xff]
    %v2523 = vld [vmem:[#allocation8 + $0x1a8] sm:$0xff]
    %v2524 = vld [vmem:[#allocation8 + $0x1b0] sm:$0xff]
    %v2525 = vld [vmem:[#allocation8 + $0x1b8] sm:$0xff]
    %v2526 = vld [vmem:[#allocation8 + $0x1c0] sm:$0xff]
    %v2527 = vld [vmem:[#allocation8 + $0x1c8] sm:$0xff]
    %v2528 = vld [vmem:[#allocation8 + $0x1d0] sm:$0xff]
    %v2529 = vld [vmem:[#allocation8 + $0x1d8] sm:$0xff]
    %v2530 = vld [vmem:[#allocation8 + $0x1e0] sm:$0xff]
    %v2531 = vld [vmem:[#allocation8 + $0x1e8] sm:$0xff]
    %v2532 = vld [vmem:[#allocation8 + $0x1f0] sm:$0xff]
    %v2533 = vld [vmem:[#allocation8 + $0x1f8] sm:$0xff]
    %v2534 = vld [vmem:[%s648] sm:$0xff]
    %v2535 = vld [vmem:[#allocation10] sm:$0xff]
    %v2536 = vld [vmem:[#allocation10 + $0x8] sm:$0xff]
    %v2537 = vld [vmem:[#allocation10 + $0x10] sm:$0xff]
    %v2538 = vld [vmem:[#allocation10 + $0x18] sm:$0xff]
    %v2539 = vld [vmem:[#allocation10 + $0x20] sm:$0xff]
    %v2540 = vld [vmem:[#allocation10 + $0x28] sm:$0xff]
    %v2541 = vld [vmem:[#allocation10 + $0x30] sm:$0xff]
    %v2542 = vld [vmem:[#allocation10 + $0x38] sm:$0xff]
    %v2543 = vld [vmem:[#allocation10 + $0x40] sm:$0xff]
    %v2544 = vld [vmem:[#allocation10 + $0x48] sm:$0xff]
    %v2545 = vld [vmem:[#allocation10 + $0x50] sm:$0xff]
    %v2546 = vld [vmem:[#allocation10 + $0x58] sm:$0xff]
    %v2547 = vld [vmem:[#allocation10 + $0x60] sm:$0xff]
    %v2548 = vld [vmem:[#allocation10 + $0x68] sm:$0xff]
    %v2549 = vld [vmem:[#allocation10 + $0x70] sm:$0xff]
    %v2550 = vld [vmem:[#allocation10 + $0x78] sm:$0xff]
    %v2551 = vld [vmem:[#allocation10 + $0x80] sm:$0xff]
    %v2552 = vld [vmem:[#allocation10 + $0x88] sm:$0xff]
    %v2553 = vld [vmem:[#allocation10 + $0x90] sm:$0xff]
    %v2554 = vld [vmem:[#allocation10 + $0x98] sm:$0xff]
    %v2555 = vld [vmem:[#allocation10 + $0xa0] sm:$0xff]
    %v2556 = vld [vmem:[#allocation10 + $0xa8] sm:$0xff]
    %v2557 = vld [vmem:[#allocation10 + $0xb0] sm:$0xff]
    %v2558 = vld [vmem:[#allocation10 + $0xb8] sm:$0xff]
    %v2559 = vld [vmem:[#allocation10 + $0xc0] sm:$0xff]
    %v2560 = vld [vmem:[#allocation10 + $0xc8] sm:$0xff]
    %v2561 = vld [vmem:[#allocation10 + $0xd0] sm:$0xff]
    %v2562 = vld [vmem:[#allocation10 + $0xd8] sm:$0xff]
    %v2563 = vld [vmem:[#allocation10 + $0xe0] sm:$0xff]
    %v2564 = vld [vmem:[#allocation10 + $0xe8] sm:$0xff]
    %v2565 = vld [vmem:[#allocation10 + $0xf0] sm:$0xff]
    %v2566 = vld [vmem:[#allocation10 + $0xf8] sm:$0xff]
    %v2567 = vld [vmem:[#allocation10 + $0x100] sm:$0xff]
    %v2568 = vld [vmem:[#allocation10 + $0x108] sm:$0xff]
    %v2569 = vld [vmem:[#allocation10 + $0x110] sm:$0xff]
    %v2570 = vld [vmem:[#allocation10 + $0x118] sm:$0xff]
    %v2571 = vld [vmem:[#allocation10 + $0x120] sm:$0xff]
    %v2572 = vld [vmem:[#allocation10 + $0x128] sm:$0xff]
    %v2573 = vld [vmem:[#allocation10 + $0x130] sm:$0xff]
    %v2574 = vld [vmem:[#allocation10 + $0x138] sm:$0xff]
    %v2575 = vld [vmem:[#allocation10 + $0x140] sm:$0xff]
    %v2576 = vld [vmem:[#allocation10 + $0x148] sm:$0xff]
    %v2577 = vld [vmem:[#allocation10 + $0x150] sm:$0xff]
    %v2578 = vld [vmem:[#allocation10 + $0x158] sm:$0xff]
    %v2579 = vld [vmem:[#allocation10 + $0x160] sm:$0xff]
    %v2580 = vld [vmem:[#allocation10 + $0x168] sm:$0xff]
    %v2581 = vld [vmem:[#allocation10 + $0x170] sm:$0xff]
    %v2582 = vld [vmem:[#allocation10 + $0x178] sm:$0xff]
    %v2583 = vld [vmem:[#allocation10 + $0x180] sm:$0xff]
    %v2584 = vld [vmem:[#allocation10 + $0x188] sm:$0xff]
    %v2585 = vld [vmem:[#allocation10 + $0x190] sm:$0xff]
    %v2586 = vld [vmem:[#allocation10 + $0x198] sm:$0xff]
    %v2587 = vld [vmem:[#allocation10 + $0x1a0] sm:$0xff]
    %v2588 = vld [vmem:[#allocation10 + $0x1a8] sm:$0xff]
    %v2589 = vld [vmem:[#allocation10 + $0x1b0] sm:$0xff]
    %v2590 = vld [vmem:[#allocation10 + $0x1b8] sm:$0xff]
    %v2591 = vld [vmem:[#allocation10 + $0x1c0] sm:$0xff]
    %v2592 = vld [vmem:[#allocation10 + $0x1c8] sm:$0xff]
    %v2593 = vld [vmem:[#allocation10 + $0x1d0] sm:$0xff]
    %v2594 = vld [vmem:[#allocation10 + $0x1d8] sm:$0xff]
    %v2595 = vld [vmem:[#allocation10 + $0x1e0] sm:$0xff]
    %v2596 = vld [vmem:[#allocation10 + $0x1e8] sm:$0xff]
    %v2597 = vld [vmem:[#allocation10 + $0x1f0] sm:$0xff]
    %v2598 = vld [vmem:[#allocation10 + $0x1f8] sm:$0xff]
    %2599 = vmatpush.msra.mxu0 %v2595
    %2600 = vmatpush.msra.mxu0 %v2591
    %2601 = vmatpush.msra.mxu0 %v2587
    %2602 = vmatpush.msra.mxu0 %v2583
    %2603 = vmatpush.msra.mxu0 %v2579
    %2604 = vmatpush.msra.mxu0 %v2575
    %2605 = vmatpush.msra.mxu0 %v2571
    %2606 = vmatpush.msra.mxu0 %v2567
    %2607 = vmatpush.msra.mxu0 %v2563
    %2608 = vmatpush.msra.mxu0 %v2559
    %2609 = vmatpush.msra.mxu0 %v2555
    %2610 = vmatpush.msra.mxu0 %v2551
    %2611 = vmatpush.msra.mxu0 %v2547
    %2612 = vmatpush.msra.mxu0 %v2543
    %2613 = vmatpush.msra.mxu0 %v2539
    %2614 = vmatpush.msra.mxu0 %v2535
    %2615 = vmatmul.f32.gmra.mxu0 %v2534
    %v2616 = vpop.f32.mrf.mxu0
    %v2617 = vadd.f32 0.0, %v2616
    %2618 = vdwg.mxu0
    %2619 = vmatpush.msra.mxu0 %v2596
    %2620 = vmatpush.msra.mxu0 %v2592
    %2621 = vmatpush.msra.mxu0 %v2588
    %2622 = vmatpush.msra.mxu0 %v2584
    %2623 = vmatpush.msra.mxu0 %v2580
    %2624 = vmatpush.msra.mxu0 %v2576
    %2625 = vmatpush.msra.mxu0 %v2572
    %2626 = vmatpush.msra.mxu0 %v2568
    %2627 = vmatpush.msra.mxu0 %v2564
    %2628 = vmatpush.msra.mxu0 %v2560
    %2629 = vmatpush.msra.mxu0 %v2556
    %2630 = vmatpush.msra.mxu0 %v2552
    %2631 = vmatpush.msra.mxu0 %v2548
    %2632 = vmatpush.msra.mxu0 %v2544
    %2633 = vmatpush.msra.mxu0 %v2540
    %2634 = vmatpush.msra.mxu0 %v2536
    %2635 = vmatmul.f32.gmra.mxu0 %v2534
    %v2636 = vpop.f32.mrf.mxu0
    %v2637 = vadd.f32 0.0, %v2636
    %2638 = vdwg.mxu0
    %2639 = vmatpush.msra.mxu0 %v2597
    %2640 = vmatpush.msra.mxu0 %v2593
    %2641 = vmatpush.msra.mxu0 %v2589
    %2642 = vmatpush.msra.mxu0 %v2585
    %2643 = vmatpush.msra.mxu0 %v2581
    %2644 = vmatpush.msra.mxu0 %v2577
    %2645 = vmatpush.msra.mxu0 %v2573
    %2646 = vmatpush.msra.mxu0 %v2569
    %2647 = vmatpush.msra.mxu0 %v2565
    %2648 = vmatpush.msra.mxu0 %v2561
    %2649 = vmatpush.msra.mxu0 %v2557
    %2650 = vmatpush.msra.mxu0 %v2553
    %2651 = vmatpush.msra.mxu0 %v2549
    %2652 = vmatpush.msra.mxu0 %v2545
    %2653 = vmatpush.msra.mxu0 %v2541
    %2654 = vmatpush.msra.mxu0 %v2537
    %2655 = vmatmul.f32.gmra.mxu0 %v2534
    %v2656 = vpop.f32.mrf.mxu0
    %v2657 = vadd.f32 0.0, %v2656
    %2658 = vdwg.mxu0
    %2659 = vmatpush.msra.mxu0 %v2598
    %2660 = vmatpush.msra.mxu0 %v2594
    %2661 = vmatpush.msra.mxu0 %v2590
    %2662 = vmatpush.msra.mxu0 %v2586
    %2663 = vmatpush.msra.mxu0 %v2582
    %2664 = vmatpush.msra.mxu0 %v2578
    %2665 = vmatpush.msra.mxu0 %v2574
    %2666 = vmatpush.msra.mxu0 %v2570
    %2667 = vmatpush.msra.mxu0 %v2566
    %2668 = vmatpush.msra.mxu0 %v2562
    %2669 = vmatpush.msra.mxu0 %v2558
    %2670 = vmatpush.msra.mxu0 %v2554
    %2671 = vmatpush.msra.mxu0 %v2550
    %2672 = vmatpush.msra.mxu0 %v2546
    %2673 = vmatpush.msra.mxu0 %v2542
    %2674 = vmatpush.msra.mxu0 %v2538
    %2675 = vmatmul.f32.gmra.mxu0 %v2534
    %v2676 = vpop.f32.mrf.mxu0
    %v2677 = vadd.f32 0.0, %v2676
    %2678 = vdwg.mxu0
    %2679 = vmatpush.msra.mxu0 %v2530
    %2680 = vmatpush.msra.mxu0 %v2526
    %2681 = vmatpush.msra.mxu0 %v2522
    %2682 = vmatpush.msra.mxu0 %v2518
    %2683 = vmatpush.msra.mxu0 %v2514
    %2684 = vmatpush.msra.mxu0 %v2510
    %2685 = vmatpush.msra.mxu0 %v2506
    %2686 = vmatpush.msra.mxu0 %v2502
    %2687 = vmatpush.msra.mxu0 %v2498
    %2688 = vmatpush.msra.mxu0 %v2494
    %2689 = vmatpush.msra.mxu0 %v2490
    %2690 = vmatpush.msra.mxu0 %v2486
    %2691 = vmatpush.msra.mxu0 %v2482
    %2692 = vmatpush.msra.mxu0 %v2478
    %2693 = vmatpush.msra.mxu0 %v2474
    %2694 = vmatpush.msra.mxu0 %v2470
    %2695 = vmatmul.f32.gmra.mxu0 %v2467
    %v2696 = vpop.f32.mrf.mxu0
    %v2697 = vadd.f32 %v2617, %v2696
    %2698 = vdwg.mxu0
    %2699 = vmatpush.msra.mxu0 %v2531
    %2700 = vmatpush.msra.mxu0 %v2527
    %2701 = vmatpush.msra.mxu0 %v2523
    %2702 = vmatpush.msra.mxu0 %v2519
    %2703 = vmatpush.msra.mxu0 %v2515
    %2704 = vmatpush.msra.mxu0 %v2511
    %2705 = vmatpush.msra.mxu0 %v2507
    %2706 = vmatpush.msra.mxu0 %v2503
    %2707 = vmatpush.msra.mxu0 %v2499
    %2708 = vmatpush.msra.mxu0 %v2495
    %2709 = vmatpush.msra.mxu0 %v2491
    %2710 = vmatpush.msra.mxu0 %v2487
    %2711 = vmatpush.msra.mxu0 %v2483
    %2712 = vmatpush.msra.mxu0 %v2479
    %2713 = vmatpush.msra.mxu0 %v2475
    %2714 = vmatpush.msra.mxu0 %v2471
    %2715 = vmatmul.f32.gmra.mxu0 %v2467
    %v2716 = vpop.f32.mrf.mxu0
    %v2717 = vadd.f32 %v2637, %v2716
    %2718 = vdwg.mxu0
    %2719 = vmatpush.msra.mxu0 %v2532
    %2720 = vmatpush.msra.mxu0 %v2528
    %2721 = vmatpush.msra.mxu0 %v2524
    %2722 = vmatpush.msra.mxu0 %v2520
    %2723 = vmatpush.msra.mxu0 %v2516
    %2724 = vmatpush.msra.mxu0 %v2512
    %2725 = vmatpush.msra.mxu0 %v2508
    %2726 = vmatpush.msra.mxu0 %v2504
    %2727 = vmatpush.msra.mxu0 %v2500
    %2728 = vmatpush.msra.mxu0 %v2496
    %2729 = vmatpush.msra.mxu0 %v2492
    %2730 = vmatpush.msra.mxu0 %v2488
    %2731 = vmatpush.msra.mxu0 %v2484
    %2732 = vmatpush.msra.mxu0 %v2480
    %2733 = vmatpush.msra.mxu0 %v2476
    %2734 = vmatpush.msra.mxu0 %v2472
    %2735 = vmatmul.f32.gmra.mxu0 %v2467
    %v2736 = vpop.f32.mrf.mxu0
    %v2737 = vadd.f32 %v2657, %v2736
    %2738 = vdwg.mxu0
    %2739 = vmatpush.msra.mxu0 %v2533
    %2740 = vmatpush.msra.mxu0 %v2529
    %2741 = vmatpush.msra.mxu0 %v2525
    %2742 = vmatpush.msra.mxu0 %v2521
    %2743 = vmatpush.msra.mxu0 %v2517
    %2744 = vmatpush.msra.mxu0 %v2513
    %2745 = vmatpush.msra.mxu0 %v2509
    %2746 = vmatpush.msra.mxu0 %v2505
    %2747 = vmatpush.msra.mxu0 %v2501
    %2748 = vmatpush.msra.mxu0 %v2497
    %2749 = vmatpush.msra.mxu0 %v2493
    %2750 = vmatpush.msra.mxu0 %v2489
    %2751 = vmatpush.msra.mxu0 %v2485
    %2752 = vmatpush.msra.mxu0 %v2481
    %2753 = vmatpush.msra.mxu0 %v2477
    %2754 = vmatpush.msra.mxu0 %v2473
    %2755 = vmatmul.f32.gmra.mxu0 %v2467
    %v2756 = vpop.f32.mrf.mxu0
    %v2757 = vadd.f32 %v2677, %v2756
    %2758 = vdwg.mxu0
    %v2759 = vadd.f32 %v2697, %v875
    %v2760 = vadd.f32 %v2717, %v876
    %v2761 = vadd.f32 %v2737, %v877
    %v2762 = vadd.f32 %v2757, %v878
    %v2763 = vld [vmem:[%s887] sm:$0xff]
    %v2764 = vxor.u32 %v2759, 2147483648
    %v2765 = vmul.f32 %v2764, 1.442695
    %v2766 = vpow.pop %v2765
    %v2767 = vadd.f32 %v2766, 1.0
    %v2768 = vrcp.pop %v2767
    %v2769 = vmul.f32 %v2767, %v2768
    %v2770 = vsub.f32 1.0, %v2769
    %v2771 = vmul.f32 %v2768, %v2770
    %v2772 = vadd.f32 %v2768, %v2771
    %vm2773 = vweird.f32 %v2767
    %vm2774 = vweird.f32 %v2768
    %vm2775 = vmor %vm2773, %vm2774
    %v2776 = vsel %vm2775, %v2768, %v2772
    %v2777 = vand.u32 2147483647, %v2767
    %vm2778 = vcmp.eq.f32.partialorder %v2777, 8.507059e+37
    %v2779 = vand.u32 %v2767, 2147483648
    %v2780 = vor.u32 1.1754944e-38, %v2779
    %v2781 = vsel %vm2778, %v2780, %v2776
    %v2782 = vmul.f32 1.0, %v2781
    %v2783 = vxor.u32 %v2760, 2147483648
    %v2784 = vmul.f32 %v2783, 1.442695
    %v2785 = vpow.pop %v2784
    %v2786 = vadd.f32 %v2785, 1.0
    %v2787 = vrcp.pop %v2786
    %v2788 = vmul.f32 %v2786, %v2787
    %v2789 = vsub.f32 1.0, %v2788
    %v2790 = vmul.f32 %v2787, %v2789
    %v2791 = vadd.f32 %v2787, %v2790
    %vm2792 = vweird.f32 %v2786
    %vm2793 = vweird.f32 %v2787
    %vm2794 = vmor %vm2792, %vm2793
    %v2795 = vsel %vm2794, %v2787, %v2791
    %v2796 = vand.u32 2147483647, %v2786
    %vm2797 = vcmp.eq.f32.partialorder %v2796, 8.507059e+37
    %v2798 = vand.u32 %v2786, 2147483648
    %v2799 = vor.u32 1.1754944e-38, %v2798
    %v2800 = vsel %vm2797, %v2799, %v2795
    %v2801 = vmul.f32 1.0, %v2800
    %v2802 = vtanh.pop %v2761
    %v2803 = vxor.u32 %v2762, 2147483648
    %v2804 = vmul.f32 %v2803, 1.442695
    %v2805 = vpow.pop %v2804
    %v2806 = vadd.f32 %v2805, 1.0
    %v2807 = vrcp.pop %v2806
    %v2808 = vmul.f32 %v2806, %v2807
    %v2809 = vsub.f32 1.0, %v2808
    %v2810 = vmul.f32 %v2807, %v2809
    %v2811 = vadd.f32 %v2807, %v2810
    %vm2812 = vweird.f32 %v2806
    %vm2813 = vweird.f32 %v2807
    %vm2814 = vmor %vm2812, %vm2813
    %v2815 = vsel %vm2814, %v2807, %v2811
    %v2816 = vand.u32 2147483647, %v2806
    %vm2817 = vcmp.eq.f32.partialorder %v2816, 8.507059e+37
    %v2818 = vand.u32 %v2806, 2147483648
    %v2819 = vor.u32 1.1754944e-38, %v2818
    %v2820 = vsel %vm2817, %v2819, %v2815
    %v2821 = vmul.f32 1.0, %v2820
    %v2822 = vmul.f32 %v2801, %v2763
    %v2823 = vmul.f32 %v2782, %v2802
    %v2824 = vadd.f32 %v2822, %v2823
    %v2825 = vtanh.pop %v2824
    %v2826 = vmul.f32 %v2821, %v2825
    %2827 = vst [vmem:[%s648] sm:$0xff] %v2826
    %2828 = vst [vmem:[%s887] sm:$0xff] %v2824
    %p2829 = scmp.eq.s32.totalorder %s2249, 7
    // Predicated region
    $region70: #{tpu_custom_call.1} parent=1 // pred_check
      %p2830 = pneg %p2829
    $region71: #{tpu_custom_call.1} parent=1 // pred_check_branch
      %2832 = sbr.rel (%p2830) target = $region73
    $region72: #{tpu_custom_call.1} parent=1 // pred_region
      %v2833 = vld [vmem:[#allocation11] sm:$0xff]
      %v2834 = vld [vmem:[#allocation11 + $0x8] sm:$0xff]
      %v2835 = vld [vmem:[#allocation11 + $0x10] sm:$0xff]
      %v2836 = vld [vmem:[#allocation11 + $0x18] sm:$0xff]
      %v2837 = vld [vmem:[#allocation11 + $0x20] sm:$0xff]
      %v2838 = vld [vmem:[#allocation11 + $0x28] sm:$0xff]
      %v2839 = vld [vmem:[#allocation11 + $0x30] sm:$0xff]
      %v2840 = vld [vmem:[#allocation11 + $0x38] sm:$0xff]
      %v2841 = vld [vmem:[#allocation11 + $0x40] sm:$0xff]
      %v2842 = vld [vmem:[#allocation11 + $0x48] sm:$0xff]
      %v2843 = vld [vmem:[#allocation11 + $0x50] sm:$0xff]
      %v2844 = vld [vmem:[#allocation11 + $0x58] sm:$0xff]
      %v2845 = vld [vmem:[#allocation11 + $0x60] sm:$0xff]
      %v2846 = vld [vmem:[#allocation11 + $0x68] sm:$0xff]
      %v2847 = vld [vmem:[#allocation11 + $0x70] sm:$0xff]
      %v2848 = vld [vmem:[#allocation11 + $0x78] sm:$0xff]
      %v2849 = vld [vmem:[%s8] sm:$0x1]
      %v2851 = vperm.slane %v2849, 0
      %2853 = vmatpush.msra.mxu0 %v2848
      %2854 = vmatpush.msra.mxu0 %v2847
      %2855 = vmatpush.msra.mxu0 %v2846
      %2856 = vmatpush.msra.mxu0 %v2845
      %2857 = vmatpush.msra.mxu0 %v2844
      %2858 = vmatpush.msra.mxu0 %v2843
      %2859 = vmatpush.msra.mxu0 %v2842
      %2860 = vmatpush.msra.mxu0 %v2841
      %2861 = vmatpush.msra.mxu0 %v2840
      %2862 = vmatpush.msra.mxu0 %v2839
      %2863 = vmatpush.msra.mxu0 %v2838
      %2864 = vmatpush.msra.mxu0 %v2837
      %2865 = vmatpush.msra.mxu0 %v2836
      %2866 = vmatpush.msra.mxu0 %v2835
      %2867 = vmatpush.msra.mxu0 %v2834
      %2868 = vmatpush.msra.mxu0 %v2833
      %2869 = vmatmul.f32.gmra.mxu0 %v2826
      %v2870 = vpop.f32.mrf.mxu0
      %v2871 = vadd.f32 %v2851, %v2870
      %2872 = vdwg.mxu0
      %2873 = vst [vmem:[#allocation13] sm:$0xff] %v2871
    $region73: #{tpu_custom_call.1} parent=1 // pred_fallthru
      _
    %s2874 = sadd.s32 %s364, 4
    %s2875 = scalar_lea.vmem [#allocation4], 128
    %v2876 = vld [vmem:[%s2875] sm:$0xff]
    %v2877 = vld [vmem:[%s2875 + $0x8] sm:$0xff]
    %v2878 = vld [vmem:[%s2875 + $0x10] sm:$0xff]
    %v2879 = vld [vmem:[%s2875 + $0x18] sm:$0xff]
    %v2880 = vld [vmem:[#allocation2] sm:$0xff]
    %v2881 = vld [vmem:[#allocation5] sm:$0xff]
    %v2882 = vld [vmem:[#allocation5 + $0x8] sm:$0xff]
    %v2883 = vld [vmem:[#allocation5 + $0x10] sm:$0xff]
    %v2884 = vld [vmem:[#allocation5 + $0x18] sm:$0xff]
    %v2885 = vld [vmem:[#allocation5 + $0x20] sm:$0xff]
    %v2886 = vld [vmem:[#allocation5 + $0x28] sm:$0xff]
    %v2887 = vld [vmem:[#allocation5 + $0x30] sm:$0xff]
    %v2888 = vld [vmem:[#allocation5 + $0x38] sm:$0xff]
    %v2889 = vld [vmem:[#allocation5 + $0x40] sm:$0xff]
    %v2890 = vld [vmem:[#allocation5 + $0x48] sm:$0xff]
    %v2891 = vld [vmem:[#allocation5 + $0x50] sm:$0xff]
    %v2892 = vld [vmem:[#allocation5 + $0x58] sm:$0xff]
    %v2893 = vld [vmem:[#allocation5 + $0x60] sm:$0xff]
    %v2894 = vld [vmem:[#allocation5 + $0x68] sm:$0xff]
    %v2895 = vld [vmem:[#allocation5 + $0x70] sm:$0xff]
    %v2896 = vld [vmem:[#allocation5 + $0x78] sm:$0xff]
    %v2897 = vld [vmem:[#allocation5 + $0x80] sm:$0xff]
    %v2898 = vld [vmem:[#allocation5 + $0x88] sm:$0xff]
    %v2899 = vld [vmem:[#allocation5 + $0x90] sm:$0xff]
    %v2900 = vld [vmem:[#allocation5 + $0x98] sm:$0xff]
    %v2901 = vld [vmem:[#allocation5 + $0xa0] sm:$0xff]
    %v2902 = vld [vmem:[#allocation5 + $0xa8] sm:$0xff]
    %v2903 = vld [vmem:[#allocation5 + $0xb0] sm:$0xff]
    %v2904 = vld [vmem:[#allocation5 + $0xb8] sm:$0xff]
    %v2905 = vld [vmem:[#allocation5 + $0xc0] sm:$0xff]
    %v2906 = vld [vmem:[#allocation5 + $0xc8] sm:$0xff]
    %v2907 = vld [vmem:[#allocation5 + $0xd0] sm:$0xff]
    %v2908 = vld [vmem:[#allocation5 + $0xd8] sm:$0xff]
    %v2909 = vld [vmem:[#allocation5 + $0xe0] sm:$0xff]
    %v2910 = vld [vmem:[#allocation5 + $0xe8] sm:$0xff]
    %v2911 = vld [vmem:[#allocation5 + $0xf0] sm:$0xff]
    %v2912 = vld [vmem:[#allocation5 + $0xf8] sm:$0xff]
    %v2913 = vld [vmem:[#allocation5 + $0x100] sm:$0xff]
    %v2914 = vld [vmem:[#allocation5 + $0x108] sm:$0xff]
    %v2915 = vld [vmem:[#allocation5 + $0x110] sm:$0xff]
    %v2916 = vld [vmem:[#allocation5 + $0x118] sm:$0xff]
    %v2917 = vld [vmem:[#allocation5 + $0x120] sm:$0xff]
    %v2918 = vld [vmem:[#allocation5 + $0x128] sm:$0xff]
    %v2919 = vld [vmem:[#allocation5 + $0x130] sm:$0xff]
    %v2920 = vld [vmem:[#allocation5 + $0x138] sm:$0xff]
    %v2921 = vld [vmem:[#allocation5 + $0x140] sm:$0xff]
    %v2922 = vld [vmem:[#allocation5 + $0x148] sm:$0xff]
    %v2923 = vld [vmem:[#allocation5 + $0x150] sm:$0xff]
    %v2924 = vld [vmem:[#allocation5 + $0x158] sm:$0xff]
    %v2925 = vld [vmem:[#allocation5 + $0x160] sm:$0xff]
    %v2926 = vld [vmem:[#allocation5 + $0x168] sm:$0xff]
    %v2927 = vld [vmem:[#allocation5 + $0x170] sm:$0xff]
    %v2928 = vld [vmem:[#allocation5 + $0x178] sm:$0xff]
    %v2929 = vld [vmem:[#allocation5 + $0x180] sm:$0xff]
    %v2930 = vld [vmem:[#allocation5 + $0x188] sm:$0xff]
    %v2931 = vld [vmem:[#allocation5 + $0x190] sm:$0xff]
    %v2932 = vld [vmem:[#allocation5 + $0x198] sm:$0xff]
    %v2933 = vld [vmem:[#allocation5 + $0x1a0] sm:$0xff]
    %v2934 = vld [vmem:[#allocation5 + $0x1a8] sm:$0xff]
    %v2935 = vld [vmem:[#allocation5 + $0x1b0] sm:$0xff]
    %v2936 = vld [vmem:[#allocation5 + $0x1b8] sm:$0xff]
    %v2937 = vld [vmem:[#allocation5 + $0x1c0] sm:$0xff]
    %v2938 = vld [vmem:[#allocation5 + $0x1c8] sm:$0xff]
    %v2939 = vld [vmem:[#allocation5 + $0x1d0] sm:$0xff]
    %v2940 = vld [vmem:[#allocation5 + $0x1d8] sm:$0xff]
    %v2941 = vld [vmem:[#allocation5 + $0x1e0] sm:$0xff]
    %v2942 = vld [vmem:[#allocation5 + $0x1e8] sm:$0xff]
    %v2943 = vld [vmem:[#allocation5 + $0x1f0] sm:$0xff]
    %v2944 = vld [vmem:[#allocation5 + $0x1f8] sm:$0xff]
    %2945 = vmatpush.msra.mxu0 %v2941
    %2946 = vmatpush.msra.mxu0 %v2937
    %2947 = vmatpush.msra.mxu0 %v2933
    %2948 = vmatpush.msra.mxu0 %v2929
    %2949 = vmatpush.msra.mxu0 %v2925
    %2950 = vmatpush.msra.mxu0 %v2921
    %2951 = vmatpush.msra.mxu0 %v2917
    %2952 = vmatpush.msra.mxu0 %v2913
    %2953 = vmatpush.msra.mxu0 %v2909
    %2954 = vmatpush.msra.mxu0 %v2905
    %2955 = vmatpush.msra.mxu0 %v2901
    %2956 = vmatpush.msra.mxu0 %v2897
    %2957 = vmatpush.msra.mxu0 %v2893
    %2958 = vmatpush.msra.mxu0 %v2889
    %2959 = vmatpush.msra.mxu0 %v2885
    %2960 = vmatpush.msra.mxu0 %v2881
    %2961 = vmatmul.f32.gmra.mxu0 %v2880
    %v2962 = vpop.f32.mrf.mxu0
    %v2963 = vadd.f32 0.0, %v2962
    %2964 = vdwg.mxu0
    %2965 = vmatpush.msra.mxu0 %v2942
    %2966 = vmatpush.msra.mxu0 %v2938
    %2967 = vmatpush.msra.mxu0 %v2934
    %2968 = vmatpush.msra.mxu0 %v2930
    %2969 = vmatpush.msra.mxu0 %v2926
    %2970 = vmatpush.msra.mxu0 %v2922
    %2971 = vmatpush.msra.mxu0 %v2918
    %2972 = vmatpush.msra.mxu0 %v2914
    %2973 = vmatpush.msra.mxu0 %v2910
    %2974 = vmatpush.msra.mxu0 %v2906
    %2975 = vmatpush.msra.mxu0 %v2902
    %2976 = vmatpush.msra.mxu0 %v2898
    %2977 = vmatpush.msra.mxu0 %v2894
    %2978 = vmatpush.msra.mxu0 %v2890
    %2979 = vmatpush.msra.mxu0 %v2886
    %2980 = vmatpush.msra.mxu0 %v2882
    %2981 = vmatmul.f32.gmra.mxu0 %v2880
    %v2982 = vpop.f32.mrf.mxu0
    %v2983 = vadd.f32 0.0, %v2982
    %2984 = vdwg.mxu0
    %2985 = vmatpush.msra.mxu0 %v2943
    %2986 = vmatpush.msra.mxu0 %v2939
    %2987 = vmatpush.msra.mxu0 %v2935
    %2988 = vmatpush.msra.mxu0 %v2931
    %2989 = vmatpush.msra.mxu0 %v2927
    %2990 = vmatpush.msra.mxu0 %v2923
    %2991 = vmatpush.msra.mxu0 %v2919
    %2992 = vmatpush.msra.mxu0 %v2915
    %2993 = vmatpush.msra.mxu0 %v2911
    %2994 = vmatpush.msra.mxu0 %v2907
    %2995 = vmatpush.msra.mxu0 %v2903
    %2996 = vmatpush.msra.mxu0 %v2899
    %2997 = vmatpush.msra.mxu0 %v2895
    %2998 = vmatpush.msra.mxu0 %v2891
    %2999 = vmatpush.msra.mxu0 %v2887
    %3000 = vmatpush.msra.mxu0 %v2883
    %3001 = vmatmul.f32.gmra.mxu0 %v2880
    %v3002 = vpop.f32.mrf.mxu0
    %v3003 = vadd.f32 0.0, %v3002
    %3004 = vdwg.mxu0
    %3005 = vmatpush.msra.mxu0 %v2944
    %3006 = vmatpush.msra.mxu0 %v2940
    %3007 = vmatpush.msra.mxu0 %v2936
    %3008 = vmatpush.msra.mxu0 %v2932
    %3009 = vmatpush.msra.mxu0 %v2928
    %3010 = vmatpush.msra.mxu0 %v2924
    %3011 = vmatpush.msra.mxu0 %v2920
    %3012 = vmatpush.msra.mxu0 %v2916
    %3013 = vmatpush.msra.mxu0 %v2912
    %3014 = vmatpush.msra.mxu0 %v2908
    %3015 = vmatpush.msra.mxu0 %v2904
    %3016 = vmatpush.msra.mxu0 %v2900
    %3017 = vmatpush.msra.mxu0 %v2896
    %3018 = vmatpush.msra.mxu0 %v2892
    %3019 = vmatpush.msra.mxu0 %v2888
    %3020 = vmatpush.msra.mxu0 %v2884
    %3021 = vmatmul.f32.gmra.mxu0 %v2880
    %v3022 = vpop.f32.mrf.mxu0
    %v3023 = vadd.f32 0.0, %v3022
    %3024 = vdwg.mxu0
    %v3025 = vadd.f32 %v2876, %v2963
    %v3026 = vadd.f32 %v2877, %v2983
    %v3027 = vadd.f32 %v2878, %v3003
    %v3028 = vadd.f32 %v2879, %v3023
    %v3029 = vld [vmem:[#allocation3] sm:$0xff]
    %v3030 = vxor.u32 %v3025, 2147483648
    %v3031 = vmul.f32 %v3030, 1.442695
    %v3032 = vpow.pop %v3031
    %v3033 = vadd.f32 %v3032, 1.0
    %v3034 = vrcp.pop %v3033
    %v3035 = vmul.f32 %v3033, %v3034
    %v3036 = vsub.f32 1.0, %v3035
    %v3037 = vmul.f32 %v3034, %v3036
    %v3038 = vadd.f32 %v3034, %v3037
    %vm3039 = vweird.f32 %v3033
    %vm3040 = vweird.f32 %v3034
    %vm3041 = vmor %vm3039, %vm3040
    %v3042 = vsel %vm3041, %v3034, %v3038
    %v3043 = vand.u32 2147483647, %v3033
    %vm3044 = vcmp.eq.f32.partialorder %v3043, 8.507059e+37
    %v3045 = vand.u32 %v3033, 2147483648
    %v3046 = vor.u32 1.1754944e-38, %v3045
    %v3047 = vsel %vm3044, %v3046, %v3042
    %v3048 = vmul.f32 1.0, %v3047
    %v3049 = vxor.u32 %v3026, 2147483648
    %v3050 = vmul.f32 %v3049, 1.442695
    %v3051 = vpow.pop %v3050
    %v3052 = vadd.f32 %v3051, 1.0
    %v3053 = vrcp.pop %v3052
    %v3054 = vmul.f32 %v3052, %v3053
    %v3055 = vsub.f32 1.0, %v3054
    %v3056 = vmul.f32 %v3053, %v3055
    %v3057 = vadd.f32 %v3053, %v3056
    %vm3058 = vweird.f32 %v3052
    %vm3059 = vweird.f32 %v3053
    %vm3060 = vmor %vm3058, %vm3059
    %v3061 = vsel %vm3060, %v3053, %v3057
    %v3062 = vand.u32 2147483647, %v3052
    %vm3063 = vcmp.eq.f32.partialorder %v3062, 8.507059e+37
    %v3064 = vand.u32 %v3052, 2147483648
    %v3065 = vor.u32 1.1754944e-38, %v3064
    %v3066 = vsel %vm3063, %v3065, %v3061
    %v3067 = vmul.f32 1.0, %v3066
    %v3068 = vtanh.pop %v3027
    %v3069 = vxor.u32 %v3028, 2147483648
    %v3070 = vmul.f32 %v3069, 1.442695
    %v3071 = vpow.pop %v3070
    %v3072 = vadd.f32 %v3071, 1.0
    %v3073 = vrcp.pop %v3072
    %v3074 = vmul.f32 %v3072, %v3073
    %v3075 = vsub.f32 1.0, %v3074
    %v3076 = vmul.f32 %v3073, %v3075
    %v3077 = vadd.f32 %v3073, %v3076
    %vm3078 = vweird.f32 %v3072
    %vm3079 = vweird.f32 %v3073
    %vm3080 = vmor %vm3078, %vm3079
    %v3081 = vsel %vm3080, %v3073, %v3077
    %v3082 = vand.u32 2147483647, %v3072
    %vm3083 = vcmp.eq.f32.partialorder %v3082, 8.507059e+37
    %v3084 = vand.u32 %v3072, 2147483648
    %v3085 = vor.u32 1.1754944e-38, %v3084
    %v3086 = vsel %vm3083, %v3085, %v3081
    %v3087 = vmul.f32 1.0, %v3086
    %v3088 = vmul.f32 %v3067, %v3029
    %v3089 = vmul.f32 %v3048, %v3068
    %v3090 = vadd.f32 %v3088, %v3089
    %v3091 = vtanh.pop %v3090
    %v3092 = vmul.f32 %v3087, %v3091
    %3093 = vst [vmem:[#allocation2] sm:$0xff] %v3092
    %3094 = vst [vmem:[#allocation3] sm:$0xff] %v3090
    %v3095 = vld [vmem:[#allocation8] sm:$0xff]
    %v3096 = vld [vmem:[#allocation8 + $0x8] sm:$0xff]
    %v3097 = vld [vmem:[#allocation8 + $0x10] sm:$0xff]
    %v3098 = vld [vmem:[#allocation8 + $0x18] sm:$0xff]
    %v3099 = vld [vmem:[#allocation8 + $0x20] sm:$0xff]
    %v3100 = vld [vmem:[#allocation8 + $0x28] sm:$0xff]
    %v3101 = vld [vmem:[#allocation8 + $0x30] sm:$0xff]
    %v3102 = vld [vmem:[#allocation8 + $0x38] sm:$0xff]
    %v3103 = vld [vmem:[#allocation8 + $0x40] sm:$0xff]
    %v3104 = vld [vmem:[#allocation8 + $0x48] sm:$0xff]
    %v3105 = vld [vmem:[#allocation8 + $0x50] sm:$0xff]
    %v3106 = vld [vmem:[#allocation8 + $0x58] sm:$0xff]
    %v3107 = vld [vmem:[#allocation8 + $0x60] sm:$0xff]
    %v3108 = vld [vmem:[#allocation8 + $0x68] sm:$0xff]
    %v3109 = vld [vmem:[#allocation8 + $0x70] sm:$0xff]
    %v3110 = vld [vmem:[#allocation8 + $0x78] sm:$0xff]
    %v3111 = vld [vmem:[#allocation8 + $0x80] sm:$0xff]
    %v3112 = vld [vmem:[#allocation8 + $0x88] sm:$0xff]
    %v3113 = vld [vmem:[#allocation8 + $0x90] sm:$0xff]
    %v3114 = vld [vmem:[#allocation8 + $0x98] sm:$0xff]
    %v3115 = vld [vmem:[#allocation8 + $0xa0] sm:$0xff]
    %v3116 = vld [vmem:[#allocation8 + $0xa8] sm:$0xff]
    %v3117 = vld [vmem:[#allocation8 + $0xb0] sm:$0xff]
    %v3118 = vld [vmem:[#allocation8 + $0xb8] sm:$0xff]
    %v3119 = vld [vmem:[#allocation8 + $0xc0] sm:$0xff]
    %v3120 = vld [vmem:[#allocation8 + $0xc8] sm:$0xff]
    %v3121 = vld [vmem:[#allocation8 + $0xd0] sm:$0xff]
    %v3122 = vld [vmem:[#allocation8 + $0xd8] sm:$0xff]
    %v3123 = vld [vmem:[#allocation8 + $0xe0] sm:$0xff]
    %v3124 = vld [vmem:[#allocation8 + $0xe8] sm:$0xff]
    %v3125 = vld [vmem:[#allocation8 + $0xf0] sm:$0xff]
    %v3126 = vld [vmem:[#allocation8 + $0xf8] sm:$0xff]
    %v3127 = vld [vmem:[#allocation8 + $0x100] sm:$0xff]
    %v3128 = vld [vmem:[#allocation8 + $0x108] sm:$0xff]
    %v3129 = vld [vmem:[#allocation8 + $0x110] sm:$0xff]
    %v3130 = vld [vmem:[#allocation8 + $0x118] sm:$0xff]
    %v3131 = vld [vmem:[#allocation8 + $0x120] sm:$0xff]
    %v3132 = vld [vmem:[#allocation8 + $0x128] sm:$0xff]
    %v3133 = vld [vmem:[#allocation8 + $0x130] sm:$0xff]
    %v3134 = vld [vmem:[#allocation8 + $0x138] sm:$0xff]
    %v3135 = vld [vmem:[#allocation8 + $0x140] sm:$0xff]
    %v3136 = vld [vmem:[#allocation8 + $0x148] sm:$0xff]
    %v3137 = vld [vmem:[#allocation8 + $0x150] sm:$0xff]
    %v3138 = vld [vmem:[#allocation8 + $0x158] sm:$0xff]
    %v3139 = vld [vmem:[#allocation8 + $0x160] sm:$0xff]
    %v3140 = vld [vmem:[#allocation8 + $0x168] sm:$0xff]
    %v3141 = vld [vmem:[#allocation8 + $0x170] sm:$0xff]
    %v3142 = vld [vmem:[#allocation8 + $0x178] sm:$0xff]
    %v3143 = vld [vmem:[#allocation8 + $0x180] sm:$0xff]
    %v3144 = vld [vmem:[#allocation8 + $0x188] sm:$0xff]
    %v3145 = vld [vmem:[#allocation8 + $0x190] sm:$0xff]
    %v3146 = vld [vmem:[#allocation8 + $0x198] sm:$0xff]
    %v3147 = vld [vmem:[#allocation8 + $0x1a0] sm:$0xff]
    %v3148 = vld [vmem:[#allocation8 + $0x1a8] sm:$0xff]
    %v3149 = vld [vmem:[#allocation8 + $0x1b0] sm:$0xff]
    %v3150 = vld [vmem:[#allocation8 + $0x1b8] sm:$0xff]
    %v3151 = vld [vmem:[#allocation8 + $0x1c0] sm:$0xff]
    %v3152 = vld [vmem:[#allocation8 + $0x1c8] sm:$0xff]
    %v3153 = vld [vmem:[#allocation8 + $0x1d0] sm:$0xff]
    %v3154 = vld [vmem:[#allocation8 + $0x1d8] sm:$0xff]
    %v3155 = vld [vmem:[#allocation8 + $0x1e0] sm:$0xff]
    %v3156 = vld [vmem:[#allocation8 + $0x1e8] sm:$0xff]
    %v3157 = vld [vmem:[#allocation8 + $0x1f0] sm:$0xff]
    %v3158 = vld [vmem:[#allocation8 + $0x1f8] sm:$0xff]
    %v3159 = vld [vmem:[%s648] sm:$0xff]
    %v3160 = vld [vmem:[#allocation10] sm:$0xff]
    %v3161 = vld [vmem:[#allocation10 + $0x8] sm:$0xff]
    %v3162 = vld [vmem:[#allocation10 + $0x10] sm:$0xff]
    %v3163 = vld [vmem:[#allocation10 + $0x18] sm:$0xff]
    %v3164 = vld [vmem:[#allocation10 + $0x20] sm:$0xff]
    %v3165 = vld [vmem:[#allocation10 + $0x28] sm:$0xff]
    %v3166 = vld [vmem:[#allocation10 + $0x30] sm:$0xff]
    %v3167 = vld [vmem:[#allocation10 + $0x38] sm:$0xff]
    %v3168 = vld [vmem:[#allocation10 + $0x40] sm:$0xff]
    %v3169 = vld [vmem:[#allocation10 + $0x48] sm:$0xff]
    %v3170 = vld [vmem:[#allocation10 + $0x50] sm:$0xff]
    %v3171 = vld [vmem:[#allocation10 + $0x58] sm:$0xff]
    %v3172 = vld [vmem:[#allocation10 + $0x60] sm:$0xff]
    %v3173 = vld [vmem:[#allocation10 + $0x68] sm:$0xff]
    %v3174 = vld [vmem:[#allocation10 + $0x70] sm:$0xff]
    %v3175 = vld [vmem:[#allocation10 + $0x78] sm:$0xff]
    %v3176 = vld [vmem:[#allocation10 + $0x80] sm:$0xff]
    %v3177 = vld [vmem:[#allocation10 + $0x88] sm:$0xff]
    %v3178 = vld [vmem:[#allocation10 + $0x90] sm:$0xff]
    %v3179 = vld [vmem:[#allocation10 + $0x98] sm:$0xff]
    %v3180 = vld [vmem:[#allocation10 + $0xa0] sm:$0xff]
    %v3181 = vld [vmem:[#allocation10 + $0xa8] sm:$0xff]
    %v3182 = vld [vmem:[#allocation10 + $0xb0] sm:$0xff]
    %v3183 = vld [vmem:[#allocation10 + $0xb8] sm:$0xff]
    %v3184 = vld [vmem:[#allocation10 + $0xc0] sm:$0xff]
    %v3185 = vld [vmem:[#allocation10 + $0xc8] sm:$0xff]
    %v3186 = vld [vmem:[#allocation10 + $0xd0] sm:$0xff]
    %v3187 = vld [vmem:[#allocation10 + $0xd8] sm:$0xff]
    %v3188 = vld [vmem:[#allocation10 + $0xe0] sm:$0xff]
    %v3189 = vld [vmem:[#allocation10 + $0xe8] sm:$0xff]
    %v3190 = vld [vmem:[#allocation10 + $0xf0] sm:$0xff]
    %v3191 = vld [vmem:[#allocation10 + $0xf8] sm:$0xff]
    %v3192 = vld [vmem:[#allocation10 + $0x100] sm:$0xff]
    %v3193 = vld [vmem:[#allocation10 + $0x108] sm:$0xff]
    %v3194 = vld [vmem:[#allocation10 + $0x110] sm:$0xff]
    %v3195 = vld [vmem:[#allocation10 + $0x118] sm:$0xff]
    %v3196 = vld [vmem:[#allocation10 + $0x120] sm:$0xff]
    %v3197 = vld [vmem:[#allocation10 + $0x128] sm:$0xff]
    %v3198 = vld [vmem:[#allocation10 + $0x130] sm:$0xff]
    %v3199 = vld [vmem:[#allocation10 + $0x138] sm:$0xff]
    %v3200 = vld [vmem:[#allocation10 + $0x140] sm:$0xff]
    %v3201 = vld [vmem:[#allocation10 + $0x148] sm:$0xff]
    %v3202 = vld [vmem:[#allocation10 + $0x150] sm:$0xff]
    %v3203 = vld [vmem:[#allocation10 + $0x158] sm:$0xff]
    %v3204 = vld [vmem:[#allocation10 + $0x160] sm:$0xff]
    %v3205 = vld [vmem:[#allocation10 + $0x168] sm:$0xff]
    %v3206 = vld [vmem:[#allocation10 + $0x170] sm:$0xff]
    %v3207 = vld [vmem:[#allocation10 + $0x178] sm:$0xff]
    %v3208 = vld [vmem:[#allocation10 + $0x180] sm:$0xff]
    %v3209 = vld [vmem:[#allocation10 + $0x188] sm:$0xff]
    %v3210 = vld [vmem:[#allocation10 + $0x190] sm:$0xff]
    %v3211 = vld [vmem:[#allocation10 + $0x198] sm:$0xff]
    %v3212 = vld [vmem:[#allocation10 + $0x1a0] sm:$0xff]
    %v3213 = vld [vmem:[#allocation10 + $0x1a8] sm:$0xff]
    %v3214 = vld [vmem:[#allocation10 + $0x1b0] sm:$0xff]
    %v3215 = vld [vmem:[#allocation10 + $0x1b8] sm:$0xff]
    %v3216 = vld [vmem:[#allocation10 + $0x1c0] sm:$0xff]
    %v3217 = vld [vmem:[#allocation10 + $0x1c8] sm:$0xff]
    %v3218 = vld [vmem:[#allocation10 + $0x1d0] sm:$0xff]
    %v3219 = vld [vmem:[#allocation10 + $0x1d8] sm:$0xff]
    %v3220 = vld [vmem:[#allocation10 + $0x1e0] sm:$0xff]
    %v3221 = vld [vmem:[#allocation10 + $0x1e8] sm:$0xff]
    %v3222 = vld [vmem:[#allocation10 + $0x1f0] sm:$0xff]
    %v3223 = vld [vmem:[#allocation10 + $0x1f8] sm:$0xff]
    %3224 = vmatpush.msra.mxu0 %v3220
    %3225 = vmatpush.msra.mxu0 %v3216
    %3226 = vmatpush.msra.mxu0 %v3212
    %3227 = vmatpush.msra.mxu0 %v3208
    %3228 = vmatpush.msra.mxu0 %v3204
    %3229 = vmatpush.msra.mxu0 %v3200
    %3230 = vmatpush.msra.mxu0 %v3196
    %3231 = vmatpush.msra.mxu0 %v3192
    %3232 = vmatpush.msra.mxu0 %v3188
    %3233 = vmatpush.msra.mxu0 %v3184
    %3234 = vmatpush.msra.mxu0 %v3180
    %3235 = vmatpush.msra.mxu0 %v3176
    %3236 = vmatpush.msra.mxu0 %v3172
    %3237 = vmatpush.msra.mxu0 %v3168
    %3238 = vmatpush.msra.mxu0 %v3164
    %3239 = vmatpush.msra.mxu0 %v3160
    %3240 = vmatmul.f32.gmra.mxu0 %v3159
    %v3241 = vpop.f32.mrf.mxu0
    %v3242 = vadd.f32 0.0, %v3241
    %3243 = vdwg.mxu0
    %3244 = vmatpush.msra.mxu0 %v3221
    %3245 = vmatpush.msra.mxu0 %v3217
    %3246 = vmatpush.msra.mxu0 %v3213
    %3247 = vmatpush.msra.mxu0 %v3209
    %3248 = vmatpush.msra.mxu0 %v3205
    %3249 = vmatpush.msra.mxu0 %v3201
    %3250 = vmatpush.msra.mxu0 %v3197
    %3251 = vmatpush.msra.mxu0 %v3193
    %3252 = vmatpush.msra.mxu0 %v3189
    %3253 = vmatpush.msra.mxu0 %v3185
    %3254 = vmatpush.msra.mxu0 %v3181
    %3255 = vmatpush.msra.mxu0 %v3177
    %3256 = vmatpush.msra.mxu0 %v3173
    %3257 = vmatpush.msra.mxu0 %v3169
    %3258 = vmatpush.msra.mxu0 %v3165
    %3259 = vmatpush.msra.mxu0 %v3161
    %3260 = vmatmul.f32.gmra.mxu0 %v3159
    %v3261 = vpop.f32.mrf.mxu0
    %v3262 = vadd.f32 0.0, %v3261
    %3263 = vdwg.mxu0
    %3264 = vmatpush.msra.mxu0 %v3222
    %3265 = vmatpush.msra.mxu0 %v3218
    %3266 = vmatpush.msra.mxu0 %v3214
    %3267 = vmatpush.msra.mxu0 %v3210
    %3268 = vmatpush.msra.mxu0 %v3206
    %3269 = vmatpush.msra.mxu0 %v3202
    %3270 = vmatpush.msra.mxu0 %v3198
    %3271 = vmatpush.msra.mxu0 %v3194
    %3272 = vmatpush.msra.mxu0 %v3190
    %3273 = vmatpush.msra.mxu0 %v3186
    %3274 = vmatpush.msra.mxu0 %v3182
    %3275 = vmatpush.msra.mxu0 %v3178
    %3276 = vmatpush.msra.mxu0 %v3174
    %3277 = vmatpush.msra.mxu0 %v3170
    %3278 = vmatpush.msra.mxu0 %v3166
    %3279 = vmatpush.msra.mxu0 %v3162
    %3280 = vmatmul.f32.gmra.mxu0 %v3159
    %v3281 = vpop.f32.mrf.mxu0
    %v3282 = vadd.f32 0.0, %v3281
    %3283 = vdwg.mxu0
    %3284 = vmatpush.msra.mxu0 %v3223
    %3285 = vmatpush.msra.mxu0 %v3219
    %3286 = vmatpush.msra.mxu0 %v3215
    %3287 = vmatpush.msra.mxu0 %v3211
    %3288 = vmatpush.msra.mxu0 %v3207
    %3289 = vmatpush.msra.mxu0 %v3203
    %3290 = vmatpush.msra.mxu0 %v3199
    %3291 = vmatpush.msra.mxu0 %v3195
    %3292 = vmatpush.msra.mxu0 %v3191
    %3293 = vmatpush.msra.mxu0 %v3187
    %3294 = vmatpush.msra.mxu0 %v3183
    %3295 = vmatpush.msra.mxu0 %v3179
    %3296 = vmatpush.msra.mxu0 %v3175
    %3297 = vmatpush.msra.mxu0 %v3171
    %3298 = vmatpush.msra.mxu0 %v3167
    %3299 = vmatpush.msra.mxu0 %v3163
    %3300 = vmatmul.f32.gmra.mxu0 %v3159
    %v3301 = vpop.f32.mrf.mxu0
    %v3302 = vadd.f32 0.0, %v3301
    %3303 = vdwg.mxu0
    %3304 = vmatpush.msra.mxu0 %v3155
    %3305 = vmatpush.msra.mxu0 %v3151
    %3306 = vmatpush.msra.mxu0 %v3147
    %3307 = vmatpush.msra.mxu0 %v3143
    %3308 = vmatpush.msra.mxu0 %v3139
    %3309 = vmatpush.msra.mxu0 %v3135
    %3310 = vmatpush.msra.mxu0 %v3131
    %3311 = vmatpush.msra.mxu0 %v3127
    %3312 = vmatpush.msra.mxu0 %v3123
    %3313 = vmatpush.msra.mxu0 %v3119
    %3314 = vmatpush.msra.mxu0 %v3115
    %3315 = vmatpush.msra.mxu0 %v3111
    %3316 = vmatpush.msra.mxu0 %v3107
    %3317 = vmatpush.msra.mxu0 %v3103
    %3318 = vmatpush.msra.mxu0 %v3099
    %3319 = vmatpush.msra.mxu0 %v3095
    %3320 = vmatmul.f32.gmra.mxu0 %v3092
    %v3321 = vpop.f32.mrf.mxu0
    %v3322 = vadd.f32 %v3242, %v3321
    %3323 = vdwg.mxu0
    %3324 = vmatpush.msra.mxu0 %v3156
    %3325 = vmatpush.msra.mxu0 %v3152
    %3326 = vmatpush.msra.mxu0 %v3148
    %3327 = vmatpush.msra.mxu0 %v3144
    %3328 = vmatpush.msra.mxu0 %v3140
    %3329 = vmatpush.msra.mxu0 %v3136
    %3330 = vmatpush.msra.mxu0 %v3132
    %3331 = vmatpush.msra.mxu0 %v3128
    %3332 = vmatpush.msra.mxu0 %v3124
    %3333 = vmatpush.msra.mxu0 %v3120
    %3334 = vmatpush.msra.mxu0 %v3116
    %3335 = vmatpush.msra.mxu0 %v3112
    %3336 = vmatpush.msra.mxu0 %v3108
    %3337 = vmatpush.msra.mxu0 %v3104
    %3338 = vmatpush.msra.mxu0 %v3100
    %3339 = vmatpush.msra.mxu0 %v3096
    %3340 = vmatmul.f32.gmra.mxu0 %v3092
    %v3341 = vpop.f32.mrf.mxu0
    %v3342 = vadd.f32 %v3262, %v3341
    %3343 = vdwg.mxu0
    %3344 = vmatpush.msra.mxu0 %v3157
    %3345 = vmatpush.msra.mxu0 %v3153
    %3346 = vmatpush.msra.mxu0 %v3149
    %3347 = vmatpush.msra.mxu0 %v3145
    %3348 = vmatpush.msra.mxu0 %v3141
    %3349 = vmatpush.msra.mxu0 %v3137
    %3350 = vmatpush.msra.mxu0 %v3133
    %3351 = vmatpush.msra.mxu0 %v3129
    %3352 = vmatpush.msra.mxu0 %v3125
    %3353 = vmatpush.msra.mxu0 %v3121
    %3354 = vmatpush.msra.mxu0 %v3117
    %3355 = vmatpush.msra.mxu0 %v3113
    %3356 = vmatpush.msra.mxu0 %v3109
    %3357 = vmatpush.msra.mxu0 %v3105
    %3358 = vmatpush.msra.mxu0 %v3101
    %3359 = vmatpush.msra.mxu0 %v3097
    %3360 = vmatmul.f32.gmra.mxu0 %v3092
    %v3361 = vpop.f32.mrf.mxu0
    %v3362 = vadd.f32 %v3282, %v3361
    %3363 = vdwg.mxu0
    %3364 = vmatpush.msra.mxu0 %v3158
    %3365 = vmatpush.msra.mxu0 %v3154
    %3366 = vmatpush.msra.mxu0 %v3150
    %3367 = vmatpush.msra.mxu0 %v3146
    %3368 = vmatpush.msra.mxu0 %v3142
    %3369 = vmatpush.msra.mxu0 %v3138
    %3370 = vmatpush.msra.mxu0 %v3134
    %3371 = vmatpush.msra.mxu0 %v3130
    %3372 = vmatpush.msra.mxu0 %v3126
    %3373 = vmatpush.msra.mxu0 %v3122
    %3374 = vmatpush.msra.mxu0 %v3118
    %3375 = vmatpush.msra.mxu0 %v3114
    %3376 = vmatpush.msra.mxu0 %v3110
    %3377 = vmatpush.msra.mxu0 %v3106
    %3378 = vmatpush.msra.mxu0 %v3102
    %3379 = vmatpush.msra.mxu0 %v3098
    %3380 = vmatmul.f32.gmra.mxu0 %v3092
    %v3381 = vpop.f32.mrf.mxu0
    %v3382 = vadd.f32 %v3302, %v3381
    %3383 = vdwg.mxu0
    %v3384 = vadd.f32 %v3322, %v875
    %v3385 = vadd.f32 %v3342, %v876
    %v3386 = vadd.f32 %v3362, %v877
    %v3387 = vadd.f32 %v3382, %v878
    %v3388 = vld [vmem:[%s887] sm:$0xff]
    %v3389 = vxor.u32 %v3384, 2147483648
    %v3390 = vmul.f32 %v3389, 1.442695
    %v3391 = vpow.pop %v3390
    %v3392 = vadd.f32 %v3391, 1.0
    %v3393 = vrcp.pop %v3392
    %v3394 = vmul.f32 %v3392, %v3393
    %v3395 = vsub.f32 1.0, %v3394
    %v3396 = vmul.f32 %v3393, %v3395
    %v3397 = vadd.f32 %v3393, %v3396
    %vm3398 = vweird.f32 %v3392
    %vm3399 = vweird.f32 %v3393
    %vm3400 = vmor %vm3398, %vm3399
    %v3401 = vsel %vm3400, %v3393, %v3397
    %v3402 = vand.u32 2147483647, %v3392
    %vm3403 = vcmp.eq.f32.partialorder %v3402, 8.507059e+37
    %v3404 = vand.u32 %v3392, 2147483648
    %v3405 = vor.u32 1.1754944e-38, %v3404
    %v3406 = vsel %vm3403, %v3405, %v3401
    %v3407 = vmul.f32 1.0, %v3406
    %v3408 = vxor.u32 %v3385, 2147483648
    %v3409 = vmul.f32 %v3408, 1.442695
    %v3410 = vpow.pop %v3409
    %v3411 = vadd.f32 %v3410, 1.0
    %v3412 = vrcp.pop %v3411
    %v3413 = vmul.f32 %v3411, %v3412
    %v3414 = vsub.f32 1.0, %v3413
    %v3415 = vmul.f32 %v3412, %v3414
    %v3416 = vadd.f32 %v3412, %v3415
    %vm3417 = vweird.f32 %v3411
    %vm3418 = vweird.f32 %v3412
    %vm3419 = vmor %vm3417, %vm3418
    %v3420 = vsel %vm3419, %v3412, %v3416
    %v3421 = vand.u32 2147483647, %v3411
    %vm3422 = vcmp.eq.f32.partialorder %v3421, 8.507059e+37
    %v3423 = vand.u32 %v3411, 2147483648
    %v3424 = vor.u32 1.1754944e-38, %v3423
    %v3425 = vsel %vm3422, %v3424, %v3420
    %v3426 = vmul.f32 1.0, %v3425
    %v3427 = vtanh.pop %v3386
    %v3428 = vxor.u32 %v3387, 2147483648
    %v3429 = vmul.f32 %v3428, 1.442695
    %v3430 = vpow.pop %v3429
    %v3431 = vadd.f32 %v3430, 1.0
    %v3432 = vrcp.pop %v3431
    %v3433 = vmul.f32 %v3431, %v3432
    %v3434 = vsub.f32 1.0, %v3433
    %v3435 = vmul.f32 %v3432, %v3434
    %v3436 = vadd.f32 %v3432, %v3435
    %vm3437 = vweird.f32 %v3431
    %vm3438 = vweird.f32 %v3432
    %vm3439 = vmor %vm3437, %vm3438
    %v3440 = vsel %vm3439, %v3432, %v3436
    %v3441 = vand.u32 2147483647, %v3431
    %vm3442 = vcmp.eq.f32.partialorder %v3441, 8.507059e+37
    %v3443 = vand.u32 %v3431, 2147483648
    %v3444 = vor.u32 1.1754944e-38, %v3443
    %v3445 = vsel %vm3442, %v3444, %v3440
    %v3446 = vmul.f32 1.0, %v3445
    %v3447 = vmul.f32 %v3426, %v3388
    %v3448 = vmul.f32 %v3407, %v3427
    %v3449 = vadd.f32 %v3447, %v3448
    %v3450 = vtanh.pop %v3449
    %v3451 = vmul.f32 %v3446, %v3450
    %3452 = vst [vmem:[%s648] sm:$0xff] %v3451
    %3453 = vst [vmem:[%s887] sm:$0xff] %v3449
    %p3454 = scmp.eq.s32.totalorder %s2874, 7
    // Predicated region
    $region74: #{tpu_custom_call.1} parent=1 // pred_check
      %p3455 = pneg %p3454
    $region75: #{tpu_custom_call.1} parent=1 // pred_check_branch
      %3457 = sbr.rel (%p3455) target = $region77
    $region76: #{tpu_custom_call.1} parent=1 // pred_region
      %v3458 = vld [vmem:[#allocation11] sm:$0xff]
      %v3459 = vld [vmem:[#allocation11 + $0x8] sm:$0xff]
      %v3460 = vld [vmem:[#allocation11 + $0x10] sm:$0xff]
      %v3461 = vld [vmem:[#allocation11 + $0x18] sm:$0xff]
      %v3462 = vld [vmem:[#allocation11 + $0x20] sm:$0xff]
      %v3463 = vld [vmem:[#allocation11 + $0x28] sm:$0xff]
      %v3464 = vld [vmem:[#allocation11 + $0x30] sm:$0xff]
      %v3465 = vld [vmem:[#allocation11 + $0x38] sm:$0xff]
      %v3466 = vld [vmem:[#allocation11 + $0x40] sm:$0xff]
      %v3467 = vld [vmem:[#allocation11 + $0x48] sm:$0xff]
      %v3468 = vld [vmem:[#allocation11 + $0x50] sm:$0xff]
      %v3469 = vld [vmem:[#allocation11 + $0x58] sm:$0xff]
      %v3470 = vld [vmem:[#allocation11 + $0x60] sm:$0xff]
      %v3471 = vld [vmem:[#allocation11 + $0x68] sm:$0xff]
      %v3472 = vld [vmem:[#allocation11 + $0x70] sm:$0xff]
      %v3473 = vld [vmem:[#allocation11 + $0x78] sm:$0xff]
      %v3474 = vld [vmem:[%s8] sm:$0x1]
      %v3476 = vperm.slane %v3474, 0
      %3478 = vmatpush.msra.mxu0 %v3473
      %3479 = vmatpush.msra.mxu0 %v3472
      %3480 = vmatpush.msra.mxu0 %v3471
      %3481 = vmatpush.msra.mxu0 %v3470
      %3482 = vmatpush.msra.mxu0 %v3469
      %3483 = vmatpush.msra.mxu0 %v3468
      %3484 = vmatpush.msra.mxu0 %v3467
      %3485 = vmatpush.msra.mxu0 %v3466
      %3486 = vmatpush.msra.mxu0 %v3465
      %3487 = vmatpush.msra.mxu0 %v3464
      %3488 = vmatpush.msra.mxu0 %v3463
      %3489 = vmatpush.msra.mxu0 %v3462
      %3490 = vmatpush.msra.mxu0 %v3461
      %3491 = vmatpush.msra.mxu0 %v3460
      %3492 = vmatpush.msra.mxu0 %v3459
      %3493 = vmatpush.msra.mxu0 %v3458
      %3494 = vmatmul.f32.gmra.mxu0 %v3451
      %v3495 = vpop.f32.mrf.mxu0
      %v3496 = vadd.f32 %v3476, %v3495
      %3497 = vdwg.mxu0
      %3498 = vst [vmem:[#allocation13] sm:$0xff] %v3496
    $region77: #{tpu_custom_call.1} parent=1 // pred_fallthru
      _
    %s3499 = sadd.s32 %s364, 5
    %s3500 = scalar_lea.vmem [#allocation4], 160
    %v3501 = vld [vmem:[%s3500] sm:$0xff]
    %v3502 = vld [vmem:[%s3500 + $0x8] sm:$0xff]
    %v3503 = vld [vmem:[%s3500 + $0x10] sm:$0xff]
    %v3504 = vld [vmem:[%s3500 + $0x18] sm:$0xff]
    %v3505 = vld [vmem:[#allocation2] sm:$0xff]
    %v3506 = vld [vmem:[#allocation5] sm:$0xff]
    %v3507 = vld [vmem:[#allocation5 + $0x8] sm:$0xff]
    %v3508 = vld [vmem:[#allocation5 + $0x10] sm:$0xff]
    %v3509 = vld [vmem:[#allocation5 + $0x18] sm:$0xff]
    %v3510 = vld [vmem:[#allocation5 + $0x20] sm:$0xff]
    %v3511 = vld [vmem:[#allocation5 + $0x28] sm:$0xff]
    %v3512 = vld [vmem:[#allocation5 + $0x30] sm:$0xff]
    %v3513 = vld [vmem:[#allocation5 + $0x38] sm:$0xff]
    %v3514 = vld [vmem:[#allocation5 + $0x40] sm:$0xff]
    %v3515 = vld [vmem:[#allocation5 + $0x48] sm:$0xff]
    %v3516 = vld [vmem:[#allocation5 + $0x50] sm:$0xff]
    %v3517 = vld [vmem:[#allocation5 + $0x58] sm:$0xff]
    %v3518 = vld [vmem:[#allocation5 + $0x60] sm:$0xff]
    %v3519 = vld [vmem:[#allocation5 + $0x68] sm:$0xff]
    %v3520 = vld [vmem:[#allocation5 + $0x70] sm:$0xff]
    %v3521 = vld [vmem:[#allocation5 + $0x78] sm:$0xff]
    %v3522 = vld [vmem:[#allocation5 + $0x80] sm:$0xff]
    %v3523 = vld [vmem:[#allocation5 + $0x88] sm:$0xff]
    %v3524 = vld [vmem:[#allocation5 + $0x90] sm:$0xff]
    %v3525 = vld [vmem:[#allocation5 + $0x98] sm:$0xff]
    %v3526 = vld [vmem:[#allocation5 + $0xa0] sm:$0xff]
    %v3527 = vld [vmem:[#allocation5 + $0xa8] sm:$0xff]
    %v3528 = vld [vmem:[#allocation5 + $0xb0] sm:$0xff]
    %v3529 = vld [vmem:[#allocation5 + $0xb8] sm:$0xff]
    %v3530 = vld [vmem:[#allocation5 + $0xc0] sm:$0xff]
    %v3531 = vld [vmem:[#allocation5 + $0xc8] sm:$0xff]
    %v3532 = vld [vmem:[#allocation5 + $0xd0] sm:$0xff]
    %v3533 = vld [vmem:[#allocation5 + $0xd8] sm:$0xff]
    %v3534 = vld [vmem:[#allocation5 + $0xe0] sm:$0xff]
    %v3535 = vld [vmem:[#allocation5 + $0xe8] sm:$0xff]
    %v3536 = vld [vmem:[#allocation5 + $0xf0] sm:$0xff]
    %v3537 = vld [vmem:[#allocation5 + $0xf8] sm:$0xff]
    %v3538 = vld [vmem:[#allocation5 + $0x100] sm:$0xff]
    %v3539 = vld [vmem:[#allocation5 + $0x108] sm:$0xff]
    %v3540 = vld [vmem:[#allocation5 + $0x110] sm:$0xff]
    %v3541 = vld [vmem:[#allocation5 + $0x118] sm:$0xff]
    %v3542 = vld [vmem:[#allocation5 + $0x120] sm:$0xff]
    %v3543 = vld [vmem:[#allocation5 + $0x128] sm:$0xff]
    %v3544 = vld [vmem:[#allocation5 + $0x130] sm:$0xff]
    %v3545 = vld [vmem:[#allocation5 + $0x138] sm:$0xff]
    %v3546 = vld [vmem:[#allocation5 + $0x140] sm:$0xff]
    %v3547 = vld [vmem:[#allocation5 + $0x148] sm:$0xff]
    %v3548 = vld [vmem:[#allocation5 + $0x150] sm:$0xff]
    %v3549 = vld [vmem:[#allocation5 + $0x158] sm:$0xff]
    %v3550 = vld [vmem:[#allocation5 + $0x160] sm:$0xff]
    %v3551 = vld [vmem:[#allocation5 + $0x168] sm:$0xff]
    %v3552 = vld [vmem:[#allocation5 + $0x170] sm:$0xff]
    %v3553 = vld [vmem:[#allocation5 + $0x178] sm:$0xff]
    %v3554 = vld [vmem:[#allocation5 + $0x180] sm:$0xff]
    %v3555 = vld [vmem:[#allocation5 + $0x188] sm:$0xff]
    %v3556 = vld [vmem:[#allocation5 + $0x190] sm:$0xff]
    %v3557 = vld [vmem:[#allocation5 + $0x198] sm:$0xff]
    %v3558 = vld [vmem:[#allocation5 + $0x1a0] sm:$0xff]
    %v3559 = vld [vmem:[#allocation5 + $0x1a8] sm:$0xff]
    %v3560 = vld [vmem:[#allocation5 + $0x1b0] sm:$0xff]
    %v3561 = vld [vmem:[#allocation5 + $0x1b8] sm:$0xff]
    %v3562 = vld [vmem:[#allocation5 + $0x1c0] sm:$0xff]
    %v3563 = vld [vmem:[#allocation5 + $0x1c8] sm:$0xff]
    %v3564 = vld [vmem:[#allocation5 + $0x1d0] sm:$0xff]
    %v3565 = vld [vmem:[#allocation5 + $0x1d8] sm:$0xff]
    %v3566 = vld [vmem:[#allocation5 + $0x1e0] sm:$0xff]
    %v3567 = vld [vmem:[#allocation5 + $0x1e8] sm:$0xff]
    %v3568 = vld [vmem:[#allocation5 + $0x1f0] sm:$0xff]
    %v3569 = vld [vmem:[#allocation5 + $0x1f8] sm:$0xff]
    %3570 = vmatpush.msra.mxu0 %v3566
    %3571 = vmatpush.msra.mxu0 %v3562
    %3572 = vmatpush.msra.mxu0 %v3558
    %3573 = vmatpush.msra.mxu0 %v3554
    %3574 = vmatpush.msra.mxu0 %v3550
    %3575 = vmatpush.msra.mxu0 %v3546
    %3576 = vmatpush.msra.mxu0 %v3542
    %3577 = vmatpush.msra.mxu0 %v3538
    %3578 = vmatpush.msra.mxu0 %v3534
    %3579 = vmatpush.msra.mxu0 %v3530
    %3580 = vmatpush.msra.mxu0 %v3526
    %3581 = vmatpush.msra.mxu0 %v3522
    %3582 = vmatpush.msra.mxu0 %v3518
    %3583 = vmatpush.msra.mxu0 %v3514
    %3584 = vmatpush.msra.mxu0 %v3510
    %3585 = vmatpush.msra.mxu0 %v3506
    %3586 = vmatmul.f32.gmra.mxu0 %v3505
    %v3587 = vpop.f32.mrf.mxu0
    %v3588 = vadd.f32 0.0, %v3587
    %3589 = vdwg.mxu0
    %3590 = vmatpush.msra.mxu0 %v3567
    %3591 = vmatpush.msra.mxu0 %v3563
    %3592 = vmatpush.msra.mxu0 %v3559
    %3593 = vmatpush.msra.mxu0 %v3555
    %3594 = vmatpush.msra.mxu0 %v3551
    %3595 = vmatpush.msra.mxu0 %v3547
    %3596 = vmatpush.msra.mxu0 %v3543
    %3597 = vmatpush.msra.mxu0 %v3539
    %3598 = vmatpush.msra.mxu0 %v3535
    %3599 = vmatpush.msra.mxu0 %v3531
    %3600 = vmatpush.msra.mxu0 %v3527
    %3601 = vmatpush.msra.mxu0 %v3523
    %3602 = vmatpush.msra.mxu0 %v3519
    %3603 = vmatpush.msra.mxu0 %v3515
    %3604 = vmatpush.msra.mxu0 %v3511
    %3605 = vmatpush.msra.mxu0 %v3507
    %3606 = vmatmul.f32.gmra.mxu0 %v3505
    %v3607 = vpop.f32.mrf.mxu0
    %v3608 = vadd.f32 0.0, %v3607
    %3609 = vdwg.mxu0
    %3610 = vmatpush.msra.mxu0 %v3568
    %3611 = vmatpush.msra.mxu0 %v3564
    %3612 = vmatpush.msra.mxu0 %v3560
    %3613 = vmatpush.msra.mxu0 %v3556
    %3614 = vmatpush.msra.mxu0 %v3552
    %3615 = vmatpush.msra.mxu0 %v3548
    %3616 = vmatpush.msra.mxu0 %v3544
    %3617 = vmatpush.msra.mxu0 %v3540
    %3618 = vmatpush.msra.mxu0 %v3536
    %3619 = vmatpush.msra.mxu0 %v3532
    %3620 = vmatpush.msra.mxu0 %v3528
    %3621 = vmatpush.msra.mxu0 %v3524
    %3622 = vmatpush.msra.mxu0 %v3520
    %3623 = vmatpush.msra.mxu0 %v3516
    %3624 = vmatpush.msra.mxu0 %v3512
    %3625 = vmatpush.msra.mxu0 %v3508
    %3626 = vmatmul.f32.gmra.mxu0 %v3505
    %v3627 = vpop.f32.mrf.mxu0
    %v3628 = vadd.f32 0.0, %v3627
    %3629 = vdwg.mxu0
    %3630 = vmatpush.msra.mxu0 %v3569
    %3631 = vmatpush.msra.mxu0 %v3565
    %3632 = vmatpush.msra.mxu0 %v3561
    %3633 = vmatpush.msra.mxu0 %v3557
    %3634 = vmatpush.msra.mxu0 %v3553
    %3635 = vmatpush.msra.mxu0 %v3549
    %3636 = vmatpush.msra.mxu0 %v3545
    %3637 = vmatpush.msra.mxu0 %v3541
    %3638 = vmatpush.msra.mxu0 %v3537
    %3639 = vmatpush.msra.mxu0 %v3533
    %3640 = vmatpush.msra.mxu0 %v3529
    %3641 = vmatpush.msra.mxu0 %v3525
    %3642 = vmatpush.msra.mxu0 %v3521
    %3643 = vmatpush.msra.mxu0 %v3517
    %3644 = vmatpush.msra.mxu0 %v3513
    %3645 = vmatpush.msra.mxu0 %v3509
    %3646 = vmatmul.f32.gmra.mxu0 %v3505
    %v3647 = vpop.f32.mrf.mxu0
    %v3648 = vadd.f32 0.0, %v3647
    %3649 = vdwg.mxu0
    %v3650 = vadd.f32 %v3501, %v3588
    %v3651 = vadd.f32 %v3502, %v3608
    %v3652 = vadd.f32 %v3503, %v3628
    %v3653 = vadd.f32 %v3504, %v3648
    %v3654 = vld [vmem:[#allocation3] sm:$0xff]
    %v3655 = vxor.u32 %v3650, 2147483648
    %v3656 = vmul.f32 %v3655, 1.442695
    %v3657 = vpow.pop %v3656
    %v3658 = vadd.f32 %v3657, 1.0
    %v3659 = vrcp.pop %v3658
    %v3660 = vmul.f32 %v3658, %v3659
    %v3661 = vsub.f32 1.0, %v3660
    %v3662 = vmul.f32 %v3659, %v3661
    %v3663 = vadd.f32 %v3659, %v3662
    %vm3664 = vweird.f32 %v3658
    %vm3665 = vweird.f32 %v3659
    %vm3666 = vmor %vm3664, %vm3665
    %v3667 = vsel %vm3666, %v3659, %v3663
    %v3668 = vand.u32 2147483647, %v3658
    %vm3669 = vcmp.eq.f32.partialorder %v3668, 8.507059e+37
    %v3670 = vand.u32 %v3658, 2147483648
    %v3671 = vor.u32 1.1754944e-38, %v3670
    %v3672 = vsel %vm3669, %v3671, %v3667
    %v3673 = vmul.f32 1.0, %v3672
    %v3674 = vxor.u32 %v3651, 2147483648
    %v3675 = vmul.f32 %v3674, 1.442695
    %v3676 = vpow.pop %v3675
    %v3677 = vadd.f32 %v3676, 1.0
    %v3678 = vrcp.pop %v3677
    %v3679 = vmul.f32 %v3677, %v3678
    %v3680 = vsub.f32 1.0, %v3679
    %v3681 = vmul.f32 %v3678, %v3680
    %v3682 = vadd.f32 %v3678, %v3681
    %vm3683 = vweird.f32 %v3677
    %vm3684 = vweird.f32 %v3678
    %vm3685 = vmor %vm3683, %vm3684
    %v3686 = vsel %vm3685, %v3678, %v3682
    %v3687 = vand.u32 2147483647, %v3677
    %vm3688 = vcmp.eq.f32.partialorder %v3687, 8.507059e+37
    %v3689 = vand.u32 %v3677, 2147483648
    %v3690 = vor.u32 1.1754944e-38, %v3689
    %v3691 = vsel %vm3688, %v3690, %v3686
    %v3692 = vmul.f32 1.0, %v3691
    %v3693 = vtanh.pop %v3652
    %v3694 = vxor.u32 %v3653, 2147483648
    %v3695 = vmul.f32 %v3694, 1.442695
    %v3696 = vpow.pop %v3695
    %v3697 = vadd.f32 %v3696, 1.0
    %v3698 = vrcp.pop %v3697
    %v3699 = vmul.f32 %v3697, %v3698
    %v3700 = vsub.f32 1.0, %v3699
    %v3701 = vmul.f32 %v3698, %v3700
    %v3702 = vadd.f32 %v3698, %v3701
    %vm3703 = vweird.f32 %v3697
    %vm3704 = vweird.f32 %v3698
    %vm3705 = vmor %vm3703, %vm3704
    %v3706 = vsel %vm3705, %v3698, %v3702
    %v3707 = vand.u32 2147483647, %v3697
    %vm3708 = vcmp.eq.f32.partialorder %v3707, 8.507059e+37
    %v3709 = vand.u32 %v3697, 2147483648
    %v3710 = vor.u32 1.1754944e-38, %v3709
    %v3711 = vsel %vm3708, %v3710, %v3706
    %v3712 = vmul.f32 1.0, %v3711
    %v3713 = vmul.f32 %v3692, %v3654
    %v3714 = vmul.f32 %v3673, %v3693
    %v3715 = vadd.f32 %v3713, %v3714
    %v3716 = vtanh.pop %v3715
    %v3717 = vmul.f32 %v3712, %v3716
    %3718 = vst [vmem:[#allocation2] sm:$0xff] %v3717
    %3719 = vst [vmem:[#allocation3] sm:$0xff] %v3715
    %v3720 = vld [vmem:[#allocation8] sm:$0xff]
    %v3721 = vld [vmem:[#allocation8 + $0x8] sm:$0xff]
    %v3722 = vld [vmem:[#allocation8 + $0x10] sm:$0xff]
    %v3723 = vld [vmem:[#allocation8 + $0x18] sm:$0xff]
    %v3724 = vld [vmem:[#allocation8 + $0x20] sm:$0xff]
    %v3725 = vld [vmem:[#allocation8 + $0x28] sm:$0xff]
    %v3726 = vld [vmem:[#allocation8 + $0x30] sm:$0xff]
    %v3727 = vld [vmem:[#allocation8 + $0x38] sm:$0xff]
    %v3728 = vld [vmem:[#allocation8 + $0x40] sm:$0xff]
    %v3729 = vld [vmem:[#allocation8 + $0x48] sm:$0xff]
    %v3730 = vld [vmem:[#allocation8 + $0x50] sm:$0xff]
    %v3731 = vld [vmem:[#allocation8 + $0x58] sm:$0xff]
    %v3732 = vld [vmem:[#allocation8 + $0x60] sm:$0xff]
    %v3733 = vld [vmem:[#allocation8 + $0x68] sm:$0xff]
    %v3734 = vld [vmem:[#allocation8 + $0x70] sm:$0xff]
    %v3735 = vld [vmem:[#allocation8 + $0x78] sm:$0xff]
    %v3736 = vld [vmem:[#allocation8 + $0x80] sm:$0xff]
    %v3737 = vld [vmem:[#allocation8 + $0x88] sm:$0xff]
    %v3738 = vld [vmem:[#allocation8 + $0x90] sm:$0xff]
    %v3739 = vld [vmem:[#allocation8 + $0x98] sm:$0xff]
    %v3740 = vld [vmem:[#allocation8 + $0xa0] sm:$0xff]
    %v3741 = vld [vmem:[#allocation8 + $0xa8] sm:$0xff]
    %v3742 = vld [vmem:[#allocation8 + $0xb0] sm:$0xff]
    %v3743 = vld [vmem:[#allocation8 + $0xb8] sm:$0xff]
    %v3744 = vld [vmem:[#allocation8 + $0xc0] sm:$0xff]
    %v3745 = vld [vmem:[#allocation8 + $0xc8] sm:$0xff]
    %v3746 = vld [vmem:[#allocation8 + $0xd0] sm:$0xff]
    %v3747 = vld [vmem:[#allocation8 + $0xd8] sm:$0xff]
    %v3748 = vld [vmem:[#allocation8 + $0xe0] sm:$0xff]
    %v3749 = vld [vmem:[#allocation8 + $0xe8] sm:$0xff]
    %v3750 = vld [vmem:[#allocation8 + $0xf0] sm:$0xff]
    %v3751 = vld [vmem:[#allocation8 + $0xf8] sm:$0xff]
    %v3752 = vld [vmem:[#allocation8 + $0x100] sm:$0xff]
    %v3753 = vld [vmem:[#allocation8 + $0x108] sm:$0xff]
    %v3754 = vld [vmem:[#allocation8 + $0x110] sm:$0xff]
    %v3755 = vld [vmem:[#allocation8 + $0x118] sm:$0xff]
    %v3756 = vld [vmem:[#allocation8 + $0x120] sm:$0xff]
    %v3757 = vld [vmem:[#allocation8 + $0x128] sm:$0xff]
    %v3758 = vld [vmem:[#allocation8 + $0x130] sm:$0xff]
    %v3759 = vld [vmem:[#allocation8 + $0x138] sm:$0xff]
    %v3760 = vld [vmem:[#allocation8 + $0x140] sm:$0xff]
    %v3761 = vld [vmem:[#allocation8 + $0x148] sm:$0xff]
    %v3762 = vld [vmem:[#allocation8 + $0x150] sm:$0xff]
    %v3763 = vld [vmem:[#allocation8 + $0x158] sm:$0xff]
    %v3764 = vld [vmem:[#allocation8 + $0x160] sm:$0xff]
    %v3765 = vld [vmem:[#allocation8 + $0x168] sm:$0xff]
    %v3766 = vld [vmem:[#allocation8 + $0x170] sm:$0xff]
    %v3767 = vld [vmem:[#allocation8 + $0x178] sm:$0xff]
    %v3768 = vld [vmem:[#allocation8 + $0x180] sm:$0xff]
    %v3769 = vld [vmem:[#allocation8 + $0x188] sm:$0xff]
    %v3770 = vld [vmem:[#allocation8 + $0x190] sm:$0xff]
    %v3771 = vld [vmem:[#allocation8 + $0x198] sm:$0xff]
    %v3772 = vld [vmem:[#allocation8 + $0x1a0] sm:$0xff]
    %v3773 = vld [vmem:[#allocation8 + $0x1a8] sm:$0xff]
    %v3774 = vld [vmem:[#allocation8 + $0x1b0] sm:$0xff]
    %v3775 = vld [vmem:[#allocation8 + $0x1b8] sm:$0xff]
    %v3776 = vld [vmem:[#allocation8 + $0x1c0] sm:$0xff]
    %v3777 = vld [vmem:[#allocation8 + $0x1c8] sm:$0xff]
    %v3778 = vld [vmem:[#allocation8 + $0x1d0] sm:$0xff]
    %v3779 = vld [vmem:[#allocation8 + $0x1d8] sm:$0xff]
    %v3780 = vld [vmem:[#allocation8 + $0x1e0] sm:$0xff]
    %v3781 = vld [vmem:[#allocation8 + $0x1e8] sm:$0xff]
    %v3782 = vld [vmem:[#allocation8 + $0x1f0] sm:$0xff]
    %v3783 = vld [vmem:[#allocation8 + $0x1f8] sm:$0xff]
    %v3784 = vld [vmem:[%s648] sm:$0xff]
    %v3785 = vld [vmem:[#allocation10] sm:$0xff]
    %v3786 = vld [vmem:[#allocation10 + $0x8] sm:$0xff]
    %v3787 = vld [vmem:[#allocation10 + $0x10] sm:$0xff]
    %v3788 = vld [vmem:[#allocation10 + $0x18] sm:$0xff]
    %v3789 = vld [vmem:[#allocation10 + $0x20] sm:$0xff]
    %v3790 = vld [vmem:[#allocation10 + $0x28] sm:$0xff]
    %v3791 = vld [vmem:[#allocation10 + $0x30] sm:$0xff]
    %v3792 = vld [vmem:[#allocation10 + $0x38] sm:$0xff]
    %v3793 = vld [vmem:[#allocation10 + $0x40] sm:$0xff]
    %v3794 = vld [vmem:[#allocation10 + $0x48] sm:$0xff]
    %v3795 = vld [vmem:[#allocation10 + $0x50] sm:$0xff]
    %v3796 = vld [vmem:[#allocation10 + $0x58] sm:$0xff]
    %v3797 = vld [vmem:[#allocation10 + $0x60] sm:$0xff]
    %v3798 = vld [vmem:[#allocation10 + $0x68] sm:$0xff]
    %v3799 = vld [vmem:[#allocation10 + $0x70] sm:$0xff]
    %v3800 = vld [vmem:[#allocation10 + $0x78] sm:$0xff]
    %v3801 = vld [vmem:[#allocation10 + $0x80] sm:$0xff]
    %v3802 = vld [vmem:[#allocation10 + $0x88] sm:$0xff]
    %v3803 = vld [vmem:[#allocation10 + $0x90] sm:$0xff]
    %v3804 = vld [vmem:[#allocation10 + $0x98] sm:$0xff]
    %v3805 = vld [vmem:[#allocation10 + $0xa0] sm:$0xff]
    %v3806 = vld [vmem:[#allocation10 + $0xa8] sm:$0xff]
    %v3807 = vld [vmem:[#allocation10 + $0xb0] sm:$0xff]
    %v3808 = vld [vmem:[#allocation10 + $0xb8] sm:$0xff]
    %v3809 = vld [vmem:[#allocation10 + $0xc0] sm:$0xff]
    %v3810 = vld [vmem:[#allocation10 + $0xc8] sm:$0xff]
    %v3811 = vld [vmem:[#allocation10 + $0xd0] sm:$0xff]
    %v3812 = vld [vmem:[#allocation10 + $0xd8] sm:$0xff]
    %v3813 = vld [vmem:[#allocation10 + $0xe0] sm:$0xff]
    %v3814 = vld [vmem:[#allocation10 + $0xe8] sm:$0xff]
    %v3815 = vld [vmem:[#allocation10 + $0xf0] sm:$0xff]
    %v3816 = vld [vmem:[#allocation10 + $0xf8] sm:$0xff]
    %v3817 = vld [vmem:[#allocation10 + $0x100] sm:$0xff]
    %v3818 = vld [vmem:[#allocation10 + $0x108] sm:$0xff]
    %v3819 = vld [vmem:[#allocation10 + $0x110] sm:$0xff]
    %v3820 = vld [vmem:[#allocation10 + $0x118] sm:$0xff]
    %v3821 = vld [vmem:[#allocation10 + $0x120] sm:$0xff]
    %v3822 = vld [vmem:[#allocation10 + $0x128] sm:$0xff]
    %v3823 = vld [vmem:[#allocation10 + $0x130] sm:$0xff]
    %v3824 = vld [vmem:[#allocation10 + $0x138] sm:$0xff]
    %v3825 = vld [vmem:[#allocation10 + $0x140] sm:$0xff]
    %v3826 = vld [vmem:[#allocation10 + $0x148] sm:$0xff]
    %v3827 = vld [vmem:[#allocation10 + $0x150] sm:$0xff]
    %v3828 = vld [vmem:[#allocation10 + $0x158] sm:$0xff]
    %v3829 = vld [vmem:[#allocation10 + $0x160] sm:$0xff]
    %v3830 = vld [vmem:[#allocation10 + $0x168] sm:$0xff]
    %v3831 = vld [vmem:[#allocation10 + $0x170] sm:$0xff]
    %v3832 = vld [vmem:[#allocation10 + $0x178] sm:$0xff]
    %v3833 = vld [vmem:[#allocation10 + $0x180] sm:$0xff]
    %v3834 = vld [vmem:[#allocation10 + $0x188] sm:$0xff]
    %v3835 = vld [vmem:[#allocation10 + $0x190] sm:$0xff]
    %v3836 = vld [vmem:[#allocation10 + $0x198] sm:$0xff]
    %v3837 = vld [vmem:[#allocation10 + $0x1a0] sm:$0xff]
    %v3838 = vld [vmem:[#allocation10 + $0x1a8] sm:$0xff]
    %v3839 = vld [vmem:[#allocation10 + $0x1b0] sm:$0xff]
    %v3840 = vld [vmem:[#allocation10 + $0x1b8] sm:$0xff]
    %v3841 = vld [vmem:[#allocation10 + $0x1c0] sm:$0xff]
    %v3842 = vld [vmem:[#allocation10 + $0x1c8] sm:$0xff]
    %v3843 = vld [vmem:[#allocation10 + $0x1d0] sm:$0xff]
    %v3844 = vld [vmem:[#allocation10 + $0x1d8] sm:$0xff]
    %v3845 = vld [vmem:[#allocation10 + $0x1e0] sm:$0xff]
    %v3846 = vld [vmem:[#allocation10 + $0x1e8] sm:$0xff]
    %v3847 = vld [vmem:[#allocation10 + $0x1f0] sm:$0xff]
    %v3848 = vld [vmem:[#allocation10 + $0x1f8] sm:$0xff]
    %3849 = vmatpush.msra.mxu0 %v3845
    %3850 = vmatpush.msra.mxu0 %v3841
    %3851 = vmatpush.msra.mxu0 %v3837
    %3852 = vmatpush.msra.mxu0 %v3833
    %3853 = vmatpush.msra.mxu0 %v3829
    %3854 = vmatpush.msra.mxu0 %v3825
    %3855 = vmatpush.msra.mxu0 %v3821
    %3856 = vmatpush.msra.mxu0 %v3817
    %3857 = vmatpush.msra.mxu0 %v3813
    %3858 = vmatpush.msra.mxu0 %v3809
    %3859 = vmatpush.msra.mxu0 %v3805
    %3860 = vmatpush.msra.mxu0 %v3801
    %3861 = vmatpush.msra.mxu0 %v3797
    %3862 = vmatpush.msra.mxu0 %v3793
    %3863 = vmatpush.msra.mxu0 %v3789
    %3864 = vmatpush.msra.mxu0 %v3785
    %3865 = vmatmul.f32.gmra.mxu0 %v3784
    %v3866 = vpop.f32.mrf.mxu0
    %v3867 = vadd.f32 0.0, %v3866
    %3868 = vdwg.mxu0
    %3869 = vmatpush.msra.mxu0 %v3846
    %3870 = vmatpush.msra.mxu0 %v3842
    %3871 = vmatpush.msra.mxu0 %v3838
    %3872 = vmatpush.msra.mxu0 %v3834
    %3873 = vmatpush.msra.mxu0 %v3830
    %3874 = vmatpush.msra.mxu0 %v3826
    %3875 = vmatpush.msra.mxu0 %v3822
    %3876 = vmatpush.msra.mxu0 %v3818
    %3877 = vmatpush.msra.mxu0 %v3814
    %3878 = vmatpush.msra.mxu0 %v3810
    %3879 = vmatpush.msra.mxu0 %v3806
    %3880 = vmatpush.msra.mxu0 %v3802
    %3881 = vmatpush.msra.mxu0 %v3798
    %3882 = vmatpush.msra.mxu0 %v3794
    %3883 = vmatpush.msra.mxu0 %v3790
    %3884 = vmatpush.msra.mxu0 %v3786
    %3885 = vmatmul.f32.gmra.mxu0 %v3784
    %v3886 = vpop.f32.mrf.mxu0
    %v3887 = vadd.f32 0.0, %v3886
    %3888 = vdwg.mxu0
    %3889 = vmatpush.msra.mxu0 %v3847
    %3890 = vmatpush.msra.mxu0 %v3843
    %3891 = vmatpush.msra.mxu0 %v3839
    %3892 = vmatpush.msra.mxu0 %v3835
    %3893 = vmatpush.msra.mxu0 %v3831
    %3894 = vmatpush.msra.mxu0 %v3827
    %3895 = vmatpush.msra.mxu0 %v3823
    %3896 = vmatpush.msra.mxu0 %v3819
    %3897 = vmatpush.msra.mxu0 %v3815
    %3898 = vmatpush.msra.mxu0 %v3811
    %3899 = vmatpush.msra.mxu0 %v3807
    %3900 = vmatpush.msra.mxu0 %v3803
    %3901 = vmatpush.msra.mxu0 %v3799
    %3902 = vmatpush.msra.mxu0 %v3795
    %3903 = vmatpush.msra.mxu0 %v3791
    %3904 = vmatpush.msra.mxu0 %v3787
    %3905 = vmatmul.f32.gmra.mxu0 %v3784
    %v3906 = vpop.f32.mrf.mxu0
    %v3907 = vadd.f32 0.0, %v3906
    %3908 = vdwg.mxu0
    %3909 = vmatpush.msra.mxu0 %v3848
    %3910 = vmatpush.msra.mxu0 %v3844
    %3911 = vmatpush.msra.mxu0 %v3840
    %3912 = vmatpush.msra.mxu0 %v3836
    %3913 = vmatpush.msra.mxu0 %v3832
    %3914 = vmatpush.msra.mxu0 %v3828
    %3915 = vmatpush.msra.mxu0 %v3824
    %3916 = vmatpush.msra.mxu0 %v3820
    %3917 = vmatpush.msra.mxu0 %v3816
    %3918 = vmatpush.msra.mxu0 %v3812
    %3919 = vmatpush.msra.mxu0 %v3808
    %3920 = vmatpush.msra.mxu0 %v3804
    %3921 = vmatpush.msra.mxu0 %v3800
    %3922 = vmatpush.msra.mxu0 %v3796
    %3923 = vmatpush.msra.mxu0 %v3792
    %3924 = vmatpush.msra.mxu0 %v3788
    %3925 = vmatmul.f32.gmra.mxu0 %v3784
    %v3926 = vpop.f32.mrf.mxu0
    %v3927 = vadd.f32 0.0, %v3926
    %3928 = vdwg.mxu0
    %3929 = vmatpush.msra.mxu0 %v3780
    %3930 = vmatpush.msra.mxu0 %v3776
    %3931 = vmatpush.msra.mxu0 %v3772
    %3932 = vmatpush.msra.mxu0 %v3768
    %3933 = vmatpush.msra.mxu0 %v3764
    %3934 = vmatpush.msra.mxu0 %v3760
    %3935 = vmatpush.msra.mxu0 %v3756
    %3936 = vmatpush.msra.mxu0 %v3752
    %3937 = vmatpush.msra.mxu0 %v3748
    %3938 = vmatpush.msra.mxu0 %v3744
    %3939 = vmatpush.msra.mxu0 %v3740
    %3940 = vmatpush.msra.mxu0 %v3736
    %3941 = vmatpush.msra.mxu0 %v3732
    %3942 = vmatpush.msra.mxu0 %v3728
    %3943 = vmatpush.msra.mxu0 %v3724
    %3944 = vmatpush.msra.mxu0 %v3720
    %3945 = vmatmul.f32.gmra.mxu0 %v3717
    %v3946 = vpop.f32.mrf.mxu0
    %v3947 = vadd.f32 %v3867, %v3946
    %3948 = vdwg.mxu0
    %3949 = vmatpush.msra.mxu0 %v3781
    %3950 = vmatpush.msra.mxu0 %v3777
    %3951 = vmatpush.msra.mxu0 %v3773
    %3952 = vmatpush.msra.mxu0 %v3769
    %3953 = vmatpush.msra.mxu0 %v3765
    %3954 = vmatpush.msra.mxu0 %v3761
    %3955 = vmatpush.msra.mxu0 %v3757
    %3956 = vmatpush.msra.mxu0 %v3753
    %3957 = vmatpush.msra.mxu0 %v3749
    %3958 = vmatpush.msra.mxu0 %v3745
    %3959 = vmatpush.msra.mxu0 %v3741
    %3960 = vmatpush.msra.mxu0 %v3737
    %3961 = vmatpush.msra.mxu0 %v3733
    %3962 = vmatpush.msra.mxu0 %v3729
    %3963 = vmatpush.msra.mxu0 %v3725
    %3964 = vmatpush.msra.mxu0 %v3721
    %3965 = vmatmul.f32.gmra.mxu0 %v3717
    %v3966 = vpop.f32.mrf.mxu0
    %v3967 = vadd.f32 %v3887, %v3966
    %3968 = vdwg.mxu0
    %3969 = vmatpush.msra.mxu0 %v3782
    %3970 = vmatpush.msra.mxu0 %v3778
    %3971 = vmatpush.msra.mxu0 %v3774
    %3972 = vmatpush.msra.mxu0 %v3770
    %3973 = vmatpush.msra.mxu0 %v3766
    %3974 = vmatpush.msra.mxu0 %v3762
    %3975 = vmatpush.msra.mxu0 %v3758
    %3976 = vmatpush.msra.mxu0 %v3754
    %3977 = vmatpush.msra.mxu0 %v3750
    %3978 = vmatpush.msra.mxu0 %v3746
    %3979 = vmatpush.msra.mxu0 %v3742
    %3980 = vmatpush.msra.mxu0 %v3738
    %3981 = vmatpush.msra.mxu0 %v3734
    %3982 = vmatpush.msra.mxu0 %v3730
    %3983 = vmatpush.msra.mxu0 %v3726
    %3984 = vmatpush.msra.mxu0 %v3722
    %3985 = vmatmul.f32.gmra.mxu0 %v3717
    %v3986 = vpop.f32.mrf.mxu0
    %v3987 = vadd.f32 %v3907, %v3986
    %3988 = vdwg.mxu0
    %3989 = vmatpush.msra.mxu0 %v3783
    %3990 = vmatpush.msra.mxu0 %v3779
    %3991 = vmatpush.msra.mxu0 %v3775
    %3992 = vmatpush.msra.mxu0 %v3771
    %3993 = vmatpush.msra.mxu0 %v3767
    %3994 = vmatpush.msra.mxu0 %v3763
    %3995 = vmatpush.msra.mxu0 %v3759
    %3996 = vmatpush.msra.mxu0 %v3755
    %3997 = vmatpush.msra.mxu0 %v3751
    %3998 = vmatpush.msra.mxu0 %v3747
    %3999 = vmatpush.msra.mxu0 %v3743
    %4000 = vmatpush.msra.mxu0 %v3739
    %4001 = vmatpush.msra.mxu0 %v3735
    %4002 = vmatpush.msra.mxu0 %v3731
    %4003 = vmatpush.msra.mxu0 %v3727
    %4004 = vmatpush.msra.mxu0 %v3723
    %4005 = vmatmul.f32.gmra.mxu0 %v3717
    %v4006 = vpop.f32.mrf.mxu0
    %v4007 = vadd.f32 %v3927, %v4006
    %4008 = vdwg.mxu0
    %v4009 = vadd.f32 %v3947, %v875
    %v4010 = vadd.f32 %v3967, %v876
    %v4011 = vadd.f32 %v3987, %v877
    %v4012 = vadd.f32 %v4007, %v878
    %v4013 = vld [vmem:[%s887] sm:$0xff]
    %v4014 = vxor.u32 %v4009, 2147483648
    %v4015 = vmul.f32 %v4014, 1.442695
    %v4016 = vpow.pop %v4015
    %v4017 = vadd.f32 %v4016, 1.0
    %v4018 = vrcp.pop %v4017
    %v4019 = vmul.f32 %v4017, %v4018
    %v4020 = vsub.f32 1.0, %v4019
    %v4021 = vmul.f32 %v4018, %v4020
    %v4022 = vadd.f32 %v4018, %v4021
    %vm4023 = vweird.f32 %v4017
    %vm4024 = vweird.f32 %v4018
    %vm4025 = vmor %vm4023, %vm4024
    %v4026 = vsel %vm4025, %v4018, %v4022
    %v4027 = vand.u32 2147483647, %v4017
    %vm4028 = vcmp.eq.f32.partialorder %v4027, 8.507059e+37
    %v4029 = vand.u32 %v4017, 2147483648
    %v4030 = vor.u32 1.1754944e-38, %v4029
    %v4031 = vsel %vm4028, %v4030, %v4026
    %v4032 = vmul.f32 1.0, %v4031
    %v4033 = vxor.u32 %v4010, 2147483648
    %v4034 = vmul.f32 %v4033, 1.442695
    %v4035 = vpow.pop %v4034
    %v4036 = vadd.f32 %v4035, 1.0
    %v4037 = vrcp.pop %v4036
    %v4038 = vmul.f32 %v4036, %v4037
    %v4039 = vsub.f32 1.0, %v4038
    %v4040 = vmul.f32 %v4037, %v4039
    %v4041 = vadd.f32 %v4037, %v4040
    %vm4042 = vweird.f32 %v4036
    %vm4043 = vweird.f32 %v4037
    %vm4044 = vmor %vm4042, %vm4043
    %v4045 = vsel %vm4044, %v4037, %v4041
    %v4046 = vand.u32 2147483647, %v4036
    %vm4047 = vcmp.eq.f32.partialorder %v4046, 8.507059e+37
    %v4048 = vand.u32 %v4036, 2147483648
    %v4049 = vor.u32 1.1754944e-38, %v4048
    %v4050 = vsel %vm4047, %v4049, %v4045
    %v4051 = vmul.f32 1.0, %v4050
    %v4052 = vtanh.pop %v4011
    %v4053 = vxor.u32 %v4012, 2147483648
    %v4054 = vmul.f32 %v4053, 1.442695
    %v4055 = vpow.pop %v4054
    %v4056 = vadd.f32 %v4055, 1.0
    %v4057 = vrcp.pop %v4056
    %v4058 = vmul.f32 %v4056, %v4057
    %v4059 = vsub.f32 1.0, %v4058
    %v4060 = vmul.f32 %v4057, %v4059
    %v4061 = vadd.f32 %v4057, %v4060
    %vm4062 = vweird.f32 %v4056
    %vm4063 = vweird.f32 %v4057
    %vm4064 = vmor %vm4062, %vm4063
    %v4065 = vsel %vm4064, %v4057, %v4061
    %v4066 = vand.u32 2147483647, %v4056
    %vm4067 = vcmp.eq.f32.partialorder %v4066, 8.507059e+37
    %v4068 = vand.u32 %v4056, 2147483648
    %v4069 = vor.u32 1.1754944e-38, %v4068
    %v4070 = vsel %vm4067, %v4069, %v4065
    %v4071 = vmul.f32 1.0, %v4070
    %v4072 = vmul.f32 %v4051, %v4013
    %v4073 = vmul.f32 %v4032, %v4052
    %v4074 = vadd.f32 %v4072, %v4073
    %v4075 = vtanh.pop %v4074
    %v4076 = vmul.f32 %v4071, %v4075
    %4077 = vst [vmem:[%s648] sm:$0xff] %v4076
    %4078 = vst [vmem:[%s887] sm:$0xff] %v4074
    %p4079 = scmp.eq.s32.totalorder %s3499, 7
    // Predicated region
    $region78: #{tpu_custom_call.1} parent=1 // pred_check
      %p4080 = pneg %p4079
    $region79: #{tpu_custom_call.1} parent=1 // pred_check_branch
      %4082 = sbr.rel (%p4080) target = $region81
    $region80: #{tpu_custom_call.1} parent=1 // pred_region
      %v4083 = vld [vmem:[#allocation11] sm:$0xff]
      %v4084 = vld [vmem:[#allocation11 + $0x8] sm:$0xff]
      %v4085 = vld [vmem:[#allocation11 + $0x10] sm:$0xff]
      %v4086 = vld [vmem:[#allocation11 + $0x18] sm:$0xff]
      %v4087 = vld [vmem:[#allocation11 + $0x20] sm:$0xff]
      %v4088 = vld [vmem:[#allocation11 + $0x28] sm:$0xff]
      %v4089 = vld [vmem:[#allocation11 + $0x30] sm:$0xff]
      %v4090 = vld [vmem:[#allocation11 + $0x38] sm:$0xff]
      %v4091 = vld [vmem:[#allocation11 + $0x40] sm:$0xff]
      %v4092 = vld [vmem:[#allocation11 + $0x48] sm:$0xff]
      %v4093 = vld [vmem:[#allocation11 + $0x50] sm:$0xff]
      %v4094 = vld [vmem:[#allocation11 + $0x58] sm:$0xff]
      %v4095 = vld [vmem:[#allocation11 + $0x60] sm:$0xff]
      %v4096 = vld [vmem:[#allocation11 + $0x68] sm:$0xff]
      %v4097 = vld [vmem:[#allocation11 + $0x70] sm:$0xff]
      %v4098 = vld [vmem:[#allocation11 + $0x78] sm:$0xff]
      %v4099 = vld [vmem:[%s8] sm:$0x1]
      %v4101 = vperm.slane %v4099, 0
      %4103 = vmatpush.msra.mxu0 %v4098
      %4104 = vmatpush.msra.mxu0 %v4097
      %4105 = vmatpush.msra.mxu0 %v4096
      %4106 = vmatpush.msra.mxu0 %v4095
      %4107 = vmatpush.msra.mxu0 %v4094
      %4108 = vmatpush.msra.mxu0 %v4093
      %4109 = vmatpush.msra.mxu0 %v4092
      %4110 = vmatpush.msra.mxu0 %v4091
      %4111 = vmatpush.msra.mxu0 %v4090
      %4112 = vmatpush.msra.mxu0 %v4089
      %4113 = vmatpush.msra.mxu0 %v4088
      %4114 = vmatpush.msra.mxu0 %v4087
      %4115 = vmatpush.msra.mxu0 %v4086
      %4116 = vmatpush.msra.mxu0 %v4085
      %4117 = vmatpush.msra.mxu0 %v4084
      %4118 = vmatpush.msra.mxu0 %v4083
      %4119 = vmatmul.f32.gmra.mxu0 %v4076
      %v4120 = vpop.f32.mrf.mxu0
      %v4121 = vadd.f32 %v4101, %v4120
      %4122 = vdwg.mxu0
      %4123 = vst [vmem:[#allocation13] sm:$0xff] %v4121
    $region81: #{tpu_custom_call.1} parent=1 // pred_fallthru
      _
    %s4124 = sadd.s32 %s364, 6
    %s4125 = scalar_lea.vmem [#allocation4], 192
    %v4126 = vld [vmem:[%s4125] sm:$0xff]
    %v4127 = vld [vmem:[%s4125 + $0x8] sm:$0xff]
    %v4128 = vld [vmem:[%s4125 + $0x10] sm:$0xff]
    %v4129 = vld [vmem:[%s4125 + $0x18] sm:$0xff]
    %v4130 = vld [vmem:[#allocation2] sm:$0xff]
    %v4131 = vld [vmem:[#allocation5] sm:$0xff]
    %v4132 = vld [vmem:[#allocation5 + $0x8] sm:$0xff]
    %v4133 = vld [vmem:[#allocation5 + $0x10] sm:$0xff]
    %v4134 = vld [vmem:[#allocation5 + $0x18] sm:$0xff]
    %v4135 = vld [vmem:[#allocation5 + $0x20] sm:$0xff]
    %v4136 = vld [vmem:[#allocation5 + $0x28] sm:$0xff]
    %v4137 = vld [vmem:[#allocation5 + $0x30] sm:$0xff]
    %v4138 = vld [vmem:[#allocation5 + $0x38] sm:$0xff]
    %v4139 = vld [vmem:[#allocation5 + $0x40] sm:$0xff]
    %v4140 = vld [vmem:[#allocation5 + $0x48] sm:$0xff]
    %v4141 = vld [vmem:[#allocation5 + $0x50] sm:$0xff]
    %v4142 = vld [vmem:[#allocation5 + $0x58] sm:$0xff]
    %v4143 = vld [vmem:[#allocation5 + $0x60] sm:$0xff]
    %v4144 = vld [vmem:[#allocation5 + $0x68] sm:$0xff]
    %v4145 = vld [vmem:[#allocation5 + $0x70] sm:$0xff]
    %v4146 = vld [vmem:[#allocation5 + $0x78] sm:$0xff]
    %v4147 = vld [vmem:[#allocation5 + $0x80] sm:$0xff]
    %v4148 = vld [vmem:[#allocation5 + $0x88] sm:$0xff]
    %v4149 = vld [vmem:[#allocation5 + $0x90] sm:$0xff]
    %v4150 = vld [vmem:[#allocation5 + $0x98] sm:$0xff]
    %v4151 = vld [vmem:[#allocation5 + $0xa0] sm:$0xff]
    %v4152 = vld [vmem:[#allocation5 + $0xa8] sm:$0xff]
    %v4153 = vld [vmem:[#allocation5 + $0xb0] sm:$0xff]
    %v4154 = vld [vmem:[#allocation5 + $0xb8] sm:$0xff]
    %v4155 = vld [vmem:[#allocation5 + $0xc0] sm:$0xff]
    %v4156 = vld [vmem:[#allocation5 + $0xc8] sm:$0xff]
    %v4157 = vld [vmem:[#allocation5 + $0xd0] sm:$0xff]
    %v4158 = vld [vmem:[#allocation5 + $0xd8] sm:$0xff]
    %v4159 = vld [vmem:[#allocation5 + $0xe0] sm:$0xff]
    %v4160 = vld [vmem:[#allocation5 + $0xe8] sm:$0xff]
    %v4161 = vld [vmem:[#allocation5 + $0xf0] sm:$0xff]
    %v4162 = vld [vmem:[#allocation5 + $0xf8] sm:$0xff]
    %v4163 = vld [vmem:[#allocation5 + $0x100] sm:$0xff]
    %v4164 = vld [vmem:[#allocation5 + $0x108] sm:$0xff]
    %v4165 = vld [vmem:[#allocation5 + $0x110] sm:$0xff]
    %v4166 = vld [vmem:[#allocation5 + $0x118] sm:$0xff]
    %v4167 = vld [vmem:[#allocation5 + $0x120] sm:$0xff]
    %v4168 = vld [vmem:[#allocation5 + $0x128] sm:$0xff]
    %v4169 = vld [vmem:[#allocation5 + $0x130] sm:$0xff]
    %v4170 = vld [vmem:[#allocation5 + $0x138] sm:$0xff]
    %v4171 = vld [vmem:[#allocation5 + $0x140] sm:$0xff]
    %v4172 = vld [vmem:[#allocation5 + $0x148] sm:$0xff]
    %v4173 = vld [vmem:[#allocation5 + $0x150] sm:$0xff]
    %v4174 = vld [vmem:[#allocation5 + $0x158] sm:$0xff]
    %v4175 = vld [vmem:[#allocation5 + $0x160] sm:$0xff]
    %v4176 = vld [vmem:[#allocation5 + $0x168] sm:$0xff]
    %v4177 = vld [vmem:[#allocation5 + $0x170] sm:$0xff]
    %v4178 = vld [vmem:[#allocation5 + $0x178] sm:$0xff]
    %v4179 = vld [vmem:[#allocation5 + $0x180] sm:$0xff]
    %v4180 = vld [vmem:[#allocation5 + $0x188] sm:$0xff]
    %v4181 = vld [vmem:[#allocation5 + $0x190] sm:$0xff]
    %v4182 = vld [vmem:[#allocation5 + $0x198] sm:$0xff]
    %v4183 = vld [vmem:[#allocation5 + $0x1a0] sm:$0xff]
    %v4184 = vld [vmem:[#allocation5 + $0x1a8] sm:$0xff]
    %v4185 = vld [vmem:[#allocation5 + $0x1b0] sm:$0xff]
    %v4186 = vld [vmem:[#allocation5 + $0x1b8] sm:$0xff]
    %v4187 = vld [vmem:[#allocation5 + $0x1c0] sm:$0xff]
    %v4188 = vld [vmem:[#allocation5 + $0x1c8] sm:$0xff]
    %v4189 = vld [vmem:[#allocation5 + $0x1d0] sm:$0xff]
    %v4190 = vld [vmem:[#allocation5 + $0x1d8] sm:$0xff]
    %v4191 = vld [vmem:[#allocation5 + $0x1e0] sm:$0xff]
    %v4192 = vld [vmem:[#allocation5 + $0x1e8] sm:$0xff]
    %v4193 = vld [vmem:[#allocation5 + $0x1f0] sm:$0xff]
    %v4194 = vld [vmem:[#allocation5 + $0x1f8] sm:$0xff]
    %4195 = vmatpush.msra.mxu0 %v4191
    %4196 = vmatpush.msra.mxu0 %v4187
    %4197 = vmatpush.msra.mxu0 %v4183
    %4198 = vmatpush.msra.mxu0 %v4179
    %4199 = vmatpush.msra.mxu0 %v4175
    %4200 = vmatpush.msra.mxu0 %v4171
    %4201 = vmatpush.msra.mxu0 %v4167
    %4202 = vmatpush.msra.mxu0 %v4163
    %4203 = vmatpush.msra.mxu0 %v4159
    %4204 = vmatpush.msra.mxu0 %v4155
    %4205 = vmatpush.msra.mxu0 %v4151
    %4206 = vmatpush.msra.mxu0 %v4147
    %4207 = vmatpush.msra.mxu0 %v4143
    %4208 = vmatpush.msra.mxu0 %v4139
    %4209 = vmatpush.msra.mxu0 %v4135
    %4210 = vmatpush.msra.mxu0 %v4131
    %4211 = vmatmul.f32.gmra.mxu0 %v4130
    %v4212 = vpop.f32.mrf.mxu0
    %v4213 = vadd.f32 0.0, %v4212
    %4214 = vdwg.mxu0
    %4215 = vmatpush.msra.mxu0 %v4192
    %4216 = vmatpush.msra.mxu0 %v4188
    %4217 = vmatpush.msra.mxu0 %v4184
    %4218 = vmatpush.msra.mxu0 %v4180
    %4219 = vmatpush.msra.mxu0 %v4176
    %4220 = vmatpush.msra.mxu0 %v4172
    %4221 = vmatpush.msra.mxu0 %v4168
    %4222 = vmatpush.msra.mxu0 %v4164
    %4223 = vmatpush.msra.mxu0 %v4160
    %4224 = vmatpush.msra.mxu0 %v4156
    %4225 = vmatpush.msra.mxu0 %v4152
    %4226 = vmatpush.msra.mxu0 %v4148
    %4227 = vmatpush.msra.mxu0 %v4144
    %4228 = vmatpush.msra.mxu0 %v4140
    %4229 = vmatpush.msra.mxu0 %v4136
    %4230 = vmatpush.msra.mxu0 %v4132
    %4231 = vmatmul.f32.gmra.mxu0 %v4130
    %v4232 = vpop.f32.mrf.mxu0
    %v4233 = vadd.f32 0.0, %v4232
    %4234 = vdwg.mxu0
    %4235 = vmatpush.msra.mxu0 %v4193
    %4236 = vmatpush.msra.mxu0 %v4189
    %4237 = vmatpush.msra.mxu0 %v4185
    %4238 = vmatpush.msra.mxu0 %v4181
    %4239 = vmatpush.msra.mxu0 %v4177
    %4240 = vmatpush.msra.mxu0 %v4173
    %4241 = vmatpush.msra.mxu0 %v4169
    %4242 = vmatpush.msra.mxu0 %v4165
    %4243 = vmatpush.msra.mxu0 %v4161
    %4244 = vmatpush.msra.mxu0 %v4157
    %4245 = vmatpush.msra.mxu0 %v4153
    %4246 = vmatpush.msra.mxu0 %v4149
    %4247 = vmatpush.msra.mxu0 %v4145
    %4248 = vmatpush.msra.mxu0 %v4141
    %4249 = vmatpush.msra.mxu0 %v4137
    %4250 = vmatpush.msra.mxu0 %v4133
    %4251 = vmatmul.f32.gmra.mxu0 %v4130
    %v4252 = vpop.f32.mrf.mxu0
    %v4253 = vadd.f32 0.0, %v4252
    %4254 = vdwg.mxu0
    %4255 = vmatpush.msra.mxu0 %v4194
    %4256 = vmatpush.msra.mxu0 %v4190
    %4257 = vmatpush.msra.mxu0 %v4186
    %4258 = vmatpush.msra.mxu0 %v4182
    %4259 = vmatpush.msra.mxu0 %v4178
    %4260 = vmatpush.msra.mxu0 %v4174
    %4261 = vmatpush.msra.mxu0 %v4170
    %4262 = vmatpush.msra.mxu0 %v4166
    %4263 = vmatpush.msra.mxu0 %v4162
    %4264 = vmatpush.msra.mxu0 %v4158
    %4265 = vmatpush.msra.mxu0 %v4154
    %4266 = vmatpush.msra.mxu0 %v4150
    %4267 = vmatpush.msra.mxu0 %v4146
    %4268 = vmatpush.msra.mxu0 %v4142
    %4269 = vmatpush.msra.mxu0 %v4138
    %4270 = vmatpush.msra.mxu0 %v4134
    %4271 = vmatmul.f32.gmra.mxu0 %v4130
    %v4272 = vpop.f32.mrf.mxu0
    %v4273 = vadd.f32 0.0, %v4272
    %4274 = vdwg.mxu0
    %v4275 = vadd.f32 %v4126, %v4213
    %v4276 = vadd.f32 %v4127, %v4233
    %v4277 = vadd.f32 %v4128, %v4253
    %v4278 = vadd.f32 %v4129, %v4273
    %v4279 = vld [vmem:[#allocation3] sm:$0xff]
    %v4280 = vxor.u32 %v4275, 2147483648
    %v4281 = vmul.f32 %v4280, 1.442695
    %v4282 = vpow.pop %v4281
    %v4283 = vadd.f32 %v4282, 1.0
    %v4284 = vrcp.pop %v4283
    %v4285 = vmul.f32 %v4283, %v4284
    %v4286 = vsub.f32 1.0, %v4285
    %v4287 = vmul.f32 %v4284, %v4286
    %v4288 = vadd.f32 %v4284, %v4287
    %vm4289 = vweird.f32 %v4283
    %vm4290 = vweird.f32 %v4284
    %vm4291 = vmor %vm4289, %vm4290
    %v4292 = vsel %vm4291, %v4284, %v4288
    %v4293 = vand.u32 2147483647, %v4283
    %vm4294 = vcmp.eq.f32.partialorder %v4293, 8.507059e+37
    %v4295 = vand.u32 %v4283, 2147483648
    %v4296 = vor.u32 1.1754944e-38, %v4295
    %v4297 = vsel %vm4294, %v4296, %v4292
    %v4298 = vmul.f32 1.0, %v4297
    %v4299 = vxor.u32 %v4276, 2147483648
    %v4300 = vmul.f32 %v4299, 1.442695
    %v4301 = vpow.pop %v4300
    %v4302 = vadd.f32 %v4301, 1.0
    %v4303 = vrcp.pop %v4302
    %v4304 = vmul.f32 %v4302, %v4303
    %v4305 = vsub.f32 1.0, %v4304
    %v4306 = vmul.f32 %v4303, %v4305
    %v4307 = vadd.f32 %v4303, %v4306
    %vm4308 = vweird.f32 %v4302
    %vm4309 = vweird.f32 %v4303
    %vm4310 = vmor %vm4308, %vm4309
    %v4311 = vsel %vm4310, %v4303, %v4307
    %v4312 = vand.u32 2147483647, %v4302
    %vm4313 = vcmp.eq.f32.partialorder %v4312, 8.507059e+37
    %v4314 = vand.u32 %v4302, 2147483648
    %v4315 = vor.u32 1.1754944e-38, %v4314
    %v4316 = vsel %vm4313, %v4315, %v4311
    %v4317 = vmul.f32 1.0, %v4316
    %v4318 = vtanh.pop %v4277
    %v4319 = vxor.u32 %v4278, 2147483648
    %v4320 = vmul.f32 %v4319, 1.442695
    %v4321 = vpow.pop %v4320
    %v4322 = vadd.f32 %v4321, 1.0
    %v4323 = vrcp.pop %v4322
    %v4324 = vmul.f32 %v4322, %v4323
    %v4325 = vsub.f32 1.0, %v4324
    %v4326 = vmul.f32 %v4323, %v4325
    %v4327 = vadd.f32 %v4323, %v4326
    %vm4328 = vweird.f32 %v4322
    %vm4329 = vweird.f32 %v4323
    %vm4330 = vmor %vm4328, %vm4329
    %v4331 = vsel %vm4330, %v4323, %v4327
    %v4332 = vand.u32 2147483647, %v4322
    %vm4333 = vcmp.eq.f32.partialorder %v4332, 8.507059e+37
    %v4334 = vand.u32 %v4322, 2147483648
    %v4335 = vor.u32 1.1754944e-38, %v4334
    %v4336 = vsel %vm4333, %v4335, %v4331
    %v4337 = vmul.f32 1.0, %v4336
    %v4338 = vmul.f32 %v4317, %v4279
    %v4339 = vmul.f32 %v4298, %v4318
    %v4340 = vadd.f32 %v4338, %v4339
    %v4341 = vtanh.pop %v4340
    %v4342 = vmul.f32 %v4337, %v4341
    %4343 = vst [vmem:[#allocation2] sm:$0xff] %v4342
    %4344 = vst [vmem:[#allocation3] sm:$0xff] %v4340
    %v4345 = vld [vmem:[#allocation8] sm:$0xff]
    %v4346 = vld [vmem:[#allocation8 + $0x8] sm:$0xff]
    %v4347 = vld [vmem:[#allocation8 + $0x10] sm:$0xff]
    %v4348 = vld [vmem:[#allocation8 + $0x18] sm:$0xff]
    %v4349 = vld [vmem:[#allocation8 + $0x20] sm:$0xff]
    %v4350 = vld [vmem:[#allocation8 + $0x28] sm:$0xff]
    %v4351 = vld [vmem:[#allocation8 + $0x30] sm:$0xff]
    %v4352 = vld [vmem:[#allocation8 + $0x38] sm:$0xff]
    %v4353 = vld [vmem:[#allocation8 + $0x40] sm:$0xff]
    %v4354 = vld [vmem:[#allocation8 + $0x48] sm:$0xff]
    %v4355 = vld [vmem:[#allocation8 + $0x50] sm:$0xff]
    %v4356 = vld [vmem:[#allocation8 + $0x58] sm:$0xff]
    %v4357 = vld [vmem:[#allocation8 + $0x60] sm:$0xff]
    %v4358 = vld [vmem:[#allocation8 + $0x68] sm:$0xff]
    %v4359 = vld [vmem:[#allocation8 + $0x70] sm:$0xff]
    %v4360 = vld [vmem:[#allocation8 + $0x78] sm:$0xff]
    %v4361 = vld [vmem:[#allocation8 + $0x80] sm:$0xff]
    %v4362 = vld [vmem:[#allocation8 + $0x88] sm:$0xff]
    %v4363 = vld [vmem:[#allocation8 + $0x90] sm:$0xff]
    %v4364 = vld [vmem:[#allocation8 + $0x98] sm:$0xff]
    %v4365 = vld [vmem:[#allocation8 + $0xa0] sm:$0xff]
    %v4366 = vld [vmem:[#allocation8 + $0xa8] sm:$0xff]
    %v4367 = vld [vmem:[#allocation8 + $0xb0] sm:$0xff]
    %v4368 = vld [vmem:[#allocation8 + $0xb8] sm:$0xff]
    %v4369 = vld [vmem:[#allocation8 + $0xc0] sm:$0xff]
    %v4370 = vld [vmem:[#allocation8 + $0xc8] sm:$0xff]
    %v4371 = vld [vmem:[#allocation8 + $0xd0] sm:$0xff]
    %v4372 = vld [vmem:[#allocation8 + $0xd8] sm:$0xff]
    %v4373 = vld [vmem:[#allocation8 + $0xe0] sm:$0xff]
    %v4374 = vld [vmem:[#allocation8 + $0xe8] sm:$0xff]
    %v4375 = vld [vmem:[#allocation8 + $0xf0] sm:$0xff]
    %v4376 = vld [vmem:[#allocation8 + $0xf8] sm:$0xff]
    %v4377 = vld [vmem:[#allocation8 + $0x100] sm:$0xff]
    %v4378 = vld [vmem:[#allocation8 + $0x108] sm:$0xff]
    %v4379 = vld [vmem:[#allocation8 + $0x110] sm:$0xff]
    %v4380 = vld [vmem:[#allocation8 + $0x118] sm:$0xff]
    %v4381 = vld [vmem:[#allocation8 + $0x120] sm:$0xff]
    %v4382 = vld [vmem:[#allocation8 + $0x128] sm:$0xff]
    %v4383 = vld [vmem:[#allocation8 + $0x130] sm:$0xff]
    %v4384 = vld [vmem:[#allocation8 + $0x138] sm:$0xff]
    %v4385 = vld [vmem:[#allocation8 + $0x140] sm:$0xff]
    %v4386 = vld [vmem:[#allocation8 + $0x148] sm:$0xff]
    %v4387 = vld [vmem:[#allocation8 + $0x150] sm:$0xff]
    %v4388 = vld [vmem:[#allocation8 + $0x158] sm:$0xff]
    %v4389 = vld [vmem:[#allocation8 + $0x160] sm:$0xff]
    %v4390 = vld [vmem:[#allocation8 + $0x168] sm:$0xff]
    %v4391 = vld [vmem:[#allocation8 + $0x170] sm:$0xff]
    %v4392 = vld [vmem:[#allocation8 + $0x178] sm:$0xff]
    %v4393 = vld [vmem:[#allocation8 + $0x180] sm:$0xff]
    %v4394 = vld [vmem:[#allocation8 + $0x188] sm:$0xff]
    %v4395 = vld [vmem:[#allocation8 + $0x190] sm:$0xff]
    %v4396 = vld [vmem:[#allocation8 + $0x198] sm:$0xff]
    %v4397 = vld [vmem:[#allocation8 + $0x1a0] sm:$0xff]
    %v4398 = vld [vmem:[#allocation8 + $0x1a8] sm:$0xff]
    %v4399 = vld [vmem:[#allocation8 + $0x1b0] sm:$0xff]
    %v4400 = vld [vmem:[#allocation8 + $0x1b8] sm:$0xff]
    %v4401 = vld [vmem:[#allocation8 + $0x1c0] sm:$0xff]
    %v4402 = vld [vmem:[#allocation8 + $0x1c8] sm:$0xff]
    %v4403 = vld [vmem:[#allocation8 + $0x1d0] sm:$0xff]
    %v4404 = vld [vmem:[#allocation8 + $0x1d8] sm:$0xff]
    %v4405 = vld [vmem:[#allocation8 + $0x1e0] sm:$0xff]
    %v4406 = vld [vmem:[#allocation8 + $0x1e8] sm:$0xff]
    %v4407 = vld [vmem:[#allocation8 + $0x1f0] sm:$0xff]
    %v4408 = vld [vmem:[#allocation8 + $0x1f8] sm:$0xff]
    %v4409 = vld [vmem:[%s648] sm:$0xff]
    %v4410 = vld [vmem:[#allocation10] sm:$0xff]
    %v4411 = vld [vmem:[#allocation10 + $0x8] sm:$0xff]
    %v4412 = vld [vmem:[#allocation10 + $0x10] sm:$0xff]
    %v4413 = vld [vmem:[#allocation10 + $0x18] sm:$0xff]
    %v4414 = vld [vmem:[#allocation10 + $0x20] sm:$0xff]
    %v4415 = vld [vmem:[#allocation10 + $0x28] sm:$0xff]
    %v4416 = vld [vmem:[#allocation10 + $0x30] sm:$0xff]
    %v4417 = vld [vmem:[#allocation10 + $0x38] sm:$0xff]
    %v4418 = vld [vmem:[#allocation10 + $0x40] sm:$0xff]
    %v4419 = vld [vmem:[#allocation10 + $0x48] sm:$0xff]
    %v4420 = vld [vmem:[#allocation10 + $0x50] sm:$0xff]
    %v4421 = vld [vmem:[#allocation10 + $0x58] sm:$0xff]
    %v4422 = vld [vmem:[#allocation10 + $0x60] sm:$0xff]
    %v4423 = vld [vmem:[#allocation10 + $0x68] sm:$0xff]
    %v4424 = vld [vmem:[#allocation10 + $0x70] sm:$0xff]
    %v4425 = vld [vmem:[#allocation10 + $0x78] sm:$0xff]
    %v4426 = vld [vmem:[#allocation10 + $0x80] sm:$0xff]
    %v4427 = vld [vmem:[#allocation10 + $0x88] sm:$0xff]
    %v4428 = vld [vmem:[#allocation10 + $0x90] sm:$0xff]
    %v4429 = vld [vmem:[#allocation10 + $0x98] sm:$0xff]
    %v4430 = vld [vmem:[#allocation10 + $0xa0] sm:$0xff]
    %v4431 = vld [vmem:[#allocation10 + $0xa8] sm:$0xff]
    %v4432 = vld [vmem:[#allocation10 + $0xb0] sm:$0xff]
    %v4433 = vld [vmem:[#allocation10 + $0xb8] sm:$0xff]
    %v4434 = vld [vmem:[#allocation10 + $0xc0] sm:$0xff]
    %v4435 = vld [vmem:[#allocation10 + $0xc8] sm:$0xff]
    %v4436 = vld [vmem:[#allocation10 + $0xd0] sm:$0xff]
    %v4437 = vld [vmem:[#allocation10 + $0xd8] sm:$0xff]
    %v4438 = vld [vmem:[#allocation10 + $0xe0] sm:$0xff]
    %v4439 = vld [vmem:[#allocation10 + $0xe8] sm:$0xff]
    %v4440 = vld [vmem:[#allocation10 + $0xf0] sm:$0xff]
    %v4441 = vld [vmem:[#allocation10 + $0xf8] sm:$0xff]
    %v4442 = vld [vmem:[#allocation10 + $0x100] sm:$0xff]
    %v4443 = vld [vmem:[#allocation10 + $0x108] sm:$0xff]
    %v4444 = vld [vmem:[#allocation10 + $0x110] sm:$0xff]
    %v4445 = vld [vmem:[#allocation10 + $0x118] sm:$0xff]
    %v4446 = vld [vmem:[#allocation10 + $0x120] sm:$0xff]
    %v4447 = vld [vmem:[#allocation10 + $0x128] sm:$0xff]
    %v4448 = vld [vmem:[#allocation10 + $0x130] sm:$0xff]
    %v4449 = vld [vmem:[#allocation10 + $0x138] sm:$0xff]
    %v4450 = vld [vmem:[#allocation10 + $0x140] sm:$0xff]
    %v4451 = vld [vmem:[#allocation10 + $0x148] sm:$0xff]
    %v4452 = vld [vmem:[#allocation10 + $0x150] sm:$0xff]
    %v4453 = vld [vmem:[#allocation10 + $0x158] sm:$0xff]
    %v4454 = vld [vmem:[#allocation10 + $0x160] sm:$0xff]
    %v4455 = vld [vmem:[#allocation10 + $0x168] sm:$0xff]
    %v4456 = vld [vmem:[#allocation10 + $0x170] sm:$0xff]
    %v4457 = vld [vmem:[#allocation10 + $0x178] sm:$0xff]
    %v4458 = vld [vmem:[#allocation10 + $0x180] sm:$0xff]
    %v4459 = vld [vmem:[#allocation10 + $0x188] sm:$0xff]
    %v4460 = vld [vmem:[#allocation10 + $0x190] sm:$0xff]
    %v4461 = vld [vmem:[#allocation10 + $0x198] sm:$0xff]
    %v4462 = vld [vmem:[#allocation10 + $0x1a0] sm:$0xff]
    %v4463 = vld [vmem:[#allocation10 + $0x1a8] sm:$0xff]
    %v4464 = vld [vmem:[#allocation10 + $0x1b0] sm:$0xff]
    %v4465 = vld [vmem:[#allocation10 + $0x1b8] sm:$0xff]
    %v4466 = vld [vmem:[#allocation10 + $0x1c0] sm:$0xff]
    %v4467 = vld [vmem:[#allocation10 + $0x1c8] sm:$0xff]
    %v4468 = vld [vmem:[#allocation10 + $0x1d0] sm:$0xff]
    %v4469 = vld [vmem:[#allocation10 + $0x1d8] sm:$0xff]
    %v4470 = vld [vmem:[#allocation10 + $0x1e0] sm:$0xff]
    %v4471 = vld [vmem:[#allocation10 + $0x1e8] sm:$0xff]
    %v4472 = vld [vmem:[#allocation10 + $0x1f0] sm:$0xff]
    %v4473 = vld [vmem:[#allocation10 + $0x1f8] sm:$0xff]
    %4474 = vmatpush.msra.mxu0 %v4470
    %4475 = vmatpush.msra.mxu0 %v4466
    %4476 = vmatpush.msra.mxu0 %v4462
    %4477 = vmatpush.msra.mxu0 %v4458
    %4478 = vmatpush.msra.mxu0 %v4454
    %4479 = vmatpush.msra.mxu0 %v4450
    %4480 = vmatpush.msra.mxu0 %v4446
    %4481 = vmatpush.msra.mxu0 %v4442
    %4482 = vmatpush.msra.mxu0 %v4438
    %4483 = vmatpush.msra.mxu0 %v4434
    %4484 = vmatpush.msra.mxu0 %v4430
    %4485 = vmatpush.msra.mxu0 %v4426
    %4486 = vmatpush.msra.mxu0 %v4422
    %4487 = vmatpush.msra.mxu0 %v4418
    %4488 = vmatpush.msra.mxu0 %v4414
    %4489 = vmatpush.msra.mxu0 %v4410
    %4490 = vmatmul.f32.gmra.mxu0 %v4409
    %v4491 = vpop.f32.mrf.mxu0
    %v4492 = vadd.f32 0.0, %v4491
    %4493 = vdwg.mxu0
    %4494 = vmatpush.msra.mxu0 %v4471
    %4495 = vmatpush.msra.mxu0 %v4467
    %4496 = vmatpush.msra.mxu0 %v4463
    %4497 = vmatpush.msra.mxu0 %v4459
    %4498 = vmatpush.msra.mxu0 %v4455
    %4499 = vmatpush.msra.mxu0 %v4451
    %4500 = vmatpush.msra.mxu0 %v4447
    %4501 = vmatpush.msra.mxu0 %v4443
    %4502 = vmatpush.msra.mxu0 %v4439
    %4503 = vmatpush.msra.mxu0 %v4435
    %4504 = vmatpush.msra.mxu0 %v4431
    %4505 = vmatpush.msra.mxu0 %v4427
    %4506 = vmatpush.msra.mxu0 %v4423
    %4507 = vmatpush.msra.mxu0 %v4419
    %4508 = vmatpush.msra.mxu0 %v4415
    %4509 = vmatpush.msra.mxu0 %v4411
    %4510 = vmatmul.f32.gmra.mxu0 %v4409
    %v4511 = vpop.f32.mrf.mxu0
    %v4512 = vadd.f32 0.0, %v4511
    %4513 = vdwg.mxu0
    %4514 = vmatpush.msra.mxu0 %v4472
    %4515 = vmatpush.msra.mxu0 %v4468
    %4516 = vmatpush.msra.mxu0 %v4464
    %4517 = vmatpush.msra.mxu0 %v4460
    %4518 = vmatpush.msra.mxu0 %v4456
    %4519 = vmatpush.msra.mxu0 %v4452
    %4520 = vmatpush.msra.mxu0 %v4448
    %4521 = vmatpush.msra.mxu0 %v4444
    %4522 = vmatpush.msra.mxu0 %v4440
    %4523 = vmatpush.msra.mxu0 %v4436
    %4524 = vmatpush.msra.mxu0 %v4432
    %4525 = vmatpush.msra.mxu0 %v4428
    %4526 = vmatpush.msra.mxu0 %v4424
    %4527 = vmatpush.msra.mxu0 %v4420
    %4528 = vmatpush.msra.mxu0 %v4416
    %4529 = vmatpush.msra.mxu0 %v4412
    %4530 = vmatmul.f32.gmra.mxu0 %v4409
    %v4531 = vpop.f32.mrf.mxu0
    %v4532 = vadd.f32 0.0, %v4531
    %4533 = vdwg.mxu0
    %4534 = vmatpush.msra.mxu0 %v4473
    %4535 = vmatpush.msra.mxu0 %v4469
    %4536 = vmatpush.msra.mxu0 %v4465
    %4537 = vmatpush.msra.mxu0 %v4461
    %4538 = vmatpush.msra.mxu0 %v4457
    %4539 = vmatpush.msra.mxu0 %v4453
    %4540 = vmatpush.msra.mxu0 %v4449
    %4541 = vmatpush.msra.mxu0 %v4445
    %4542 = vmatpush.msra.mxu0 %v4441
    %4543 = vmatpush.msra.mxu0 %v4437
    %4544 = vmatpush.msra.mxu0 %v4433
    %4545 = vmatpush.msra.mxu0 %v4429
    %4546 = vmatpush.msra.mxu0 %v4425
    %4547 = vmatpush.msra.mxu0 %v4421
    %4548 = vmatpush.msra.mxu0 %v4417
    %4549 = vmatpush.msra.mxu0 %v4413
    %4550 = vmatmul.f32.gmra.mxu0 %v4409
    %v4551 = vpop.f32.mrf.mxu0
    %v4552 = vadd.f32 0.0, %v4551
    %4553 = vdwg.mxu0
    %4554 = vmatpush.msra.mxu0 %v4405
    %4555 = vmatpush.msra.mxu0 %v4401
    %4556 = vmatpush.msra.mxu0 %v4397
    %4557 = vmatpush.msra.mxu0 %v4393
    %4558 = vmatpush.msra.mxu0 %v4389
    %4559 = vmatpush.msra.mxu0 %v4385
    %4560 = vmatpush.msra.mxu0 %v4381
    %4561 = vmatpush.msra.mxu0 %v4377
    %4562 = vmatpush.msra.mxu0 %v4373
    %4563 = vmatpush.msra.mxu0 %v4369
    %4564 = vmatpush.msra.mxu0 %v4365
    %4565 = vmatpush.msra.mxu0 %v4361
    %4566 = vmatpush.msra.mxu0 %v4357
    %4567 = vmatpush.msra.mxu0 %v4353
    %4568 = vmatpush.msra.mxu0 %v4349
    %4569 = vmatpush.msra.mxu0 %v4345
    %4570 = vmatmul.f32.gmra.mxu0 %v4342
    %v4571 = vpop.f32.mrf.mxu0
    %v4572 = vadd.f32 %v4492, %v4571
    %4573 = vdwg.mxu0
    %4574 = vmatpush.msra.mxu0 %v4406
    %4575 = vmatpush.msra.mxu0 %v4402
    %4576 = vmatpush.msra.mxu0 %v4398
    %4577 = vmatpush.msra.mxu0 %v4394
    %4578 = vmatpush.msra.mxu0 %v4390
    %4579 = vmatpush.msra.mxu0 %v4386
    %4580 = vmatpush.msra.mxu0 %v4382
    %4581 = vmatpush.msra.mxu0 %v4378
    %4582 = vmatpush.msra.mxu0 %v4374
    %4583 = vmatpush.msra.mxu0 %v4370
    %4584 = vmatpush.msra.mxu0 %v4366
    %4585 = vmatpush.msra.mxu0 %v4362
    %4586 = vmatpush.msra.mxu0 %v4358
    %4587 = vmatpush.msra.mxu0 %v4354
    %4588 = vmatpush.msra.mxu0 %v4350
    %4589 = vmatpush.msra.mxu0 %v4346
    %4590 = vmatmul.f32.gmra.mxu0 %v4342
    %v4591 = vpop.f32.mrf.mxu0
    %v4592 = vadd.f32 %v4512, %v4591
    %4593 = vdwg.mxu0
    %4594 = vmatpush.msra.mxu0 %v4407
    %4595 = vmatpush.msra.mxu0 %v4403
    %4596 = vmatpush.msra.mxu0 %v4399
    %4597 = vmatpush.msra.mxu0 %v4395
    %4598 = vmatpush.msra.mxu0 %v4391
    %4599 = vmatpush.msra.mxu0 %v4387
    %4600 = vmatpush.msra.mxu0 %v4383
    %4601 = vmatpush.msra.mxu0 %v4379
    %4602 = vmatpush.msra.mxu0 %v4375
    %4603 = vmatpush.msra.mxu0 %v4371
    %4604 = vmatpush.msra.mxu0 %v4367
    %4605 = vmatpush.msra.mxu0 %v4363
    %4606 = vmatpush.msra.mxu0 %v4359
    %4607 = vmatpush.msra.mxu0 %v4355
    %4608 = vmatpush.msra.mxu0 %v4351
    %4609 = vmatpush.msra.mxu0 %v4347
    %4610 = vmatmul.f32.gmra.mxu0 %v4342
    %v4611 = vpop.f32.mrf.mxu0
    %v4612 = vadd.f32 %v4532, %v4611
    %4613 = vdwg.mxu0
    %4614 = vmatpush.msra.mxu0 %v4408
    %4615 = vmatpush.msra.mxu0 %v4404
    %4616 = vmatpush.msra.mxu0 %v4400
    %4617 = vmatpush.msra.mxu0 %v4396
    %4618 = vmatpush.msra.mxu0 %v4392
    %4619 = vmatpush.msra.mxu0 %v4388
    %4620 = vmatpush.msra.mxu0 %v4384
    %4621 = vmatpush.msra.mxu0 %v4380
    %4622 = vmatpush.msra.mxu0 %v4376
    %4623 = vmatpush.msra.mxu0 %v4372
    %4624 = vmatpush.msra.mxu0 %v4368
    %4625 = vmatpush.msra.mxu0 %v4364
    %4626 = vmatpush.msra.mxu0 %v4360
    %4627 = vmatpush.msra.mxu0 %v4356
    %4628 = vmatpush.msra.mxu0 %v4352
    %4629 = vmatpush.msra.mxu0 %v4348
    %4630 = vmatmul.f32.gmra.mxu0 %v4342
    %v4631 = vpop.f32.mrf.mxu0
    %v4632 = vadd.f32 %v4552, %v4631
    %4633 = vdwg.mxu0
    %v4634 = vadd.f32 %v4572, %v875
    %v4635 = vadd.f32 %v4592, %v876
    %v4636 = vadd.f32 %v4612, %v877
    %v4637 = vadd.f32 %v4632, %v878
    %v4638 = vld [vmem:[%s887] sm:$0xff]
    %v4639 = vxor.u32 %v4634, 2147483648
    %v4640 = vmul.f32 %v4639, 1.442695
    %v4641 = vpow.pop %v4640
    %v4642 = vadd.f32 %v4641, 1.0
    %v4643 = vrcp.pop %v4642
    %v4644 = vmul.f32 %v4642, %v4643
    %v4645 = vsub.f32 1.0, %v4644
    %v4646 = vmul.f32 %v4643, %v4645
    %v4647 = vadd.f32 %v4643, %v4646
    %vm4648 = vweird.f32 %v4642
    %vm4649 = vweird.f32 %v4643
    %vm4650 = vmor %vm4648, %vm4649
    %v4651 = vsel %vm4650, %v4643, %v4647
    %v4652 = vand.u32 2147483647, %v4642
    %vm4653 = vcmp.eq.f32.partialorder %v4652, 8.507059e+37
    %v4654 = vand.u32 %v4642, 2147483648
    %v4655 = vor.u32 1.1754944e-38, %v4654
    %v4656 = vsel %vm4653, %v4655, %v4651
    %v4657 = vmul.f32 1.0, %v4656
    %v4658 = vxor.u32 %v4635, 2147483648
    %v4659 = vmul.f32 %v4658, 1.442695
    %v4660 = vpow.pop %v4659
    %v4661 = vadd.f32 %v4660, 1.0
    %v4662 = vrcp.pop %v4661
    %v4663 = vmul.f32 %v4661, %v4662
    %v4664 = vsub.f32 1.0, %v4663
    %v4665 = vmul.f32 %v4662, %v4664
    %v4666 = vadd.f32 %v4662, %v4665
    %vm4667 = vweird.f32 %v4661
    %vm4668 = vweird.f32 %v4662
    %vm4669 = vmor %vm4667, %vm4668
    %v4670 = vsel %vm4669, %v4662, %v4666
    %v4671 = vand.u32 2147483647, %v4661
    %vm4672 = vcmp.eq.f32.partialorder %v4671, 8.507059e+37
    %v4673 = vand.u32 %v4661, 2147483648
    %v4674 = vor.u32 1.1754944e-38, %v4673
    %v4675 = vsel %vm4672, %v4674, %v4670
    %v4676 = vmul.f32 1.0, %v4675
    %v4677 = vtanh.pop %v4636
    %v4678 = vxor.u32 %v4637, 2147483648
    %v4679 = vmul.f32 %v4678, 1.442695
    %v4680 = vpow.pop %v4679
    %v4681 = vadd.f32 %v4680, 1.0
    %v4682 = vrcp.pop %v4681
    %v4683 = vmul.f32 %v4681, %v4682
    %v4684 = vsub.f32 1.0, %v4683
    %v4685 = vmul.f32 %v4682, %v4684
    %v4686 = vadd.f32 %v4682, %v4685
    %vm4687 = vweird.f32 %v4681
    %vm4688 = vweird.f32 %v4682
    %vm4689 = vmor %vm4687, %vm4688
    %v4690 = vsel %vm4689, %v4682, %v4686
    %v4691 = vand.u32 2147483647, %v4681
    %vm4692 = vcmp.eq.f32.partialorder %v4691, 8.507059e+37
    %v4693 = vand.u32 %v4681, 2147483648
    %v4694 = vor.u32 1.1754944e-38, %v4693
    %v4695 = vsel %vm4692, %v4694, %v4690
    %v4696 = vmul.f32 1.0, %v4695
    %v4697 = vmul.f32 %v4676, %v4638
    %v4698 = vmul.f32 %v4657, %v4677
    %v4699 = vadd.f32 %v4697, %v4698
    %v4700 = vtanh.pop %v4699
    %v4701 = vmul.f32 %v4696, %v4700
    %4702 = vst [vmem:[%s648] sm:$0xff] %v4701
    %4703 = vst [vmem:[%s887] sm:$0xff] %v4699
    %p4704 = scmp.eq.s32.totalorder %s4124, 7
    // Predicated region
    $region82: #{tpu_custom_call.1} parent=1 // pred_check
      %p4705 = pneg %p4704
    $region83: #{tpu_custom_call.1} parent=1 // pred_check_branch
      %4707 = sbr.rel (%p4705) target = $region85
    $region84: #{tpu_custom_call.1} parent=1 // pred_region
      %v4708 = vld [vmem:[#allocation11] sm:$0xff]
      %v4709 = vld [vmem:[#allocation11 + $0x8] sm:$0xff]
      %v4710 = vld [vmem:[#allocation11 + $0x10] sm:$0xff]
      %v4711 = vld [vmem:[#allocation11 + $0x18] sm:$0xff]
      %v4712 = vld [vmem:[#allocation11 + $0x20] sm:$0xff]
      %v4713 = vld [vmem:[#allocation11 + $0x28] sm:$0xff]
      %v4714 = vld [vmem:[#allocation11 + $0x30] sm:$0xff]
      %v4715 = vld [vmem:[#allocation11 + $0x38] sm:$0xff]
      %v4716 = vld [vmem:[#allocation11 + $0x40] sm:$0xff]
      %v4717 = vld [vmem:[#allocation11 + $0x48] sm:$0xff]
      %v4718 = vld [vmem:[#allocation11 + $0x50] sm:$0xff]
      %v4719 = vld [vmem:[#allocation11 + $0x58] sm:$0xff]
      %v4720 = vld [vmem:[#allocation11 + $0x60] sm:$0xff]
      %v4721 = vld [vmem:[#allocation11 + $0x68] sm:$0xff]
      %v4722 = vld [vmem:[#allocation11 + $0x70] sm:$0xff]
      %v4723 = vld [vmem:[#allocation11 + $0x78] sm:$0xff]
      %v4724 = vld [vmem:[%s8] sm:$0x1]
      %v4726 = vperm.slane %v4724, 0
      %4728 = vmatpush.msra.mxu0 %v4723
      %4729 = vmatpush.msra.mxu0 %v4722
      %4730 = vmatpush.msra.mxu0 %v4721
      %4731 = vmatpush.msra.mxu0 %v4720
      %4732 = vmatpush.msra.mxu0 %v4719
      %4733 = vmatpush.msra.mxu0 %v4718
      %4734 = vmatpush.msra.mxu0 %v4717
      %4735 = vmatpush.msra.mxu0 %v4716
      %4736 = vmatpush.msra.mxu0 %v4715
      %4737 = vmatpush.msra.mxu0 %v4714
      %4738 = vmatpush.msra.mxu0 %v4713
      %4739 = vmatpush.msra.mxu0 %v4712
      %4740 = vmatpush.msra.mxu0 %v4711
      %4741 = vmatpush.msra.mxu0 %v4710
      %4742 = vmatpush.msra.mxu0 %v4709
      %4743 = vmatpush.msra.mxu0 %v4708
      %4744 = vmatmul.f32.gmra.mxu0 %v4701
      %v4745 = vpop.f32.mrf.mxu0
      %v4746 = vadd.f32 %v4726, %v4745
      %4747 = vdwg.mxu0
      %4748 = vst [vmem:[#allocation13] sm:$0xff] %v4746
    $region85: #{tpu_custom_call.1} parent=1 // pred_fallthru
      _
    %s4749 = sadd.s32 %s364, 7
    %s4750 = scalar_lea.vmem [#allocation4], 224
    %v4751 = vld [vmem:[%s4750] sm:$0xff]
    %v4752 = vld [vmem:[%s4750 + $0x8] sm:$0xff]
    %v4753 = vld [vmem:[%s4750 + $0x10] sm:$0xff]
    %v4754 = vld [vmem:[%s4750 + $0x18] sm:$0xff]
    %v4755 = vld [vmem:[#allocation2] sm:$0xff]
    %v4756 = vld [vmem:[#allocation5] sm:$0xff]
    %v4757 = vld [vmem:[#allocation5 + $0x8] sm:$0xff]
    %v4758 = vld [vmem:[#allocation5 + $0x10] sm:$0xff]
    %v4759 = vld [vmem:[#allocation5 + $0x18] sm:$0xff]
    %v4760 = vld [vmem:[#allocation5 + $0x20] sm:$0xff]
    %v4761 = vld [vmem:[#allocation5 + $0x28] sm:$0xff]
    %v4762 = vld [vmem:[#allocation5 + $0x30] sm:$0xff]
    %v4763 = vld [vmem:[#allocation5 + $0x38] sm:$0xff]
    %v4764 = vld [vmem:[#allocation5 + $0x40] sm:$0xff]
    %v4765 = vld [vmem:[#allocation5 + $0x48] sm:$0xff]
    %v4766 = vld [vmem:[#allocation5 + $0x50] sm:$0xff]
    %v4767 = vld [vmem:[#allocation5 + $0x58] sm:$0xff]
    %v4768 = vld [vmem:[#allocation5 + $0x60] sm:$0xff]
    %v4769 = vld [vmem:[#allocation5 + $0x68] sm:$0xff]
    %v4770 = vld [vmem:[#allocation5 + $0x70] sm:$0xff]
    %v4771 = vld [vmem:[#allocation5 + $0x78] sm:$0xff]
    %v4772 = vld [vmem:[#allocation5 + $0x80] sm:$0xff]
    %v4773 = vld [vmem:[#allocation5 + $0x88] sm:$0xff]
    %v4774 = vld [vmem:[#allocation5 + $0x90] sm:$0xff]
    %v4775 = vld [vmem:[#allocation5 + $0x98] sm:$0xff]
    %v4776 = vld [vmem:[#allocation5 + $0xa0] sm:$0xff]
    %v4777 = vld [vmem:[#allocation5 + $0xa8] sm:$0xff]
    %v4778 = vld [vmem:[#allocation5 + $0xb0] sm:$0xff]
    %v4779 = vld [vmem:[#allocation5 + $0xb8] sm:$0xff]
    %v4780 = vld [vmem:[#allocation5 + $0xc0] sm:$0xff]
    %v4781 = vld [vmem:[#allocation5 + $0xc8] sm:$0xff]
    %v4782 = vld [vmem:[#allocation5 + $0xd0] sm:$0xff]
    %v4783 = vld [vmem:[#allocation5 + $0xd8] sm:$0xff]
    %v4784 = vld [vmem:[#allocation5 + $0xe0] sm:$0xff]
    %v4785 = vld [vmem:[#allocation5 + $0xe8] sm:$0xff]
    %v4786 = vld [vmem:[#allocation5 + $0xf0] sm:$0xff]
    %v4787 = vld [vmem:[#allocation5 + $0xf8] sm:$0xff]
    %v4788 = vld [vmem:[#allocation5 + $0x100] sm:$0xff]
    %v4789 = vld [vmem:[#allocation5 + $0x108] sm:$0xff]
    %v4790 = vld [vmem:[#allocation5 + $0x110] sm:$0xff]
    %v4791 = vld [vmem:[#allocation5 + $0x118] sm:$0xff]
    %v4792 = vld [vmem:[#allocation5 + $0x120] sm:$0xff]
    %v4793 = vld [vmem:[#allocation5 + $0x128] sm:$0xff]
    %v4794 = vld [vmem:[#allocation5 + $0x130] sm:$0xff]
    %v4795 = vld [vmem:[#allocation5 + $0x138] sm:$0xff]
    %v4796 = vld [vmem:[#allocation5 + $0x140] sm:$0xff]
    %v4797 = vld [vmem:[#allocation5 + $0x148] sm:$0xff]
    %v4798 = vld [vmem:[#allocation5 + $0x150] sm:$0xff]
    %v4799 = vld [vmem:[#allocation5 + $0x158] sm:$0xff]
    %v4800 = vld [vmem:[#allocation5 + $0x160] sm:$0xff]
    %v4801 = vld [vmem:[#allocation5 + $0x168] sm:$0xff]
    %v4802 = vld [vmem:[#allocation5 + $0x170] sm:$0xff]
    %v4803 = vld [vmem:[#allocation5 + $0x178] sm:$0xff]
    %v4804 = vld [vmem:[#allocation5 + $0x180] sm:$0xff]
    %v4805 = vld [vmem:[#allocation5 + $0x188] sm:$0xff]
    %v4806 = vld [vmem:[#allocation5 + $0x190] sm:$0xff]
    %v4807 = vld [vmem:[#allocation5 + $0x198] sm:$0xff]
    %v4808 = vld [vmem:[#allocation5 + $0x1a0] sm:$0xff]
    %v4809 = vld [vmem:[#allocation5 + $0x1a8] sm:$0xff]
    %v4810 = vld [vmem:[#allocation5 + $0x1b0] sm:$0xff]
    %v4811 = vld [vmem:[#allocation5 + $0x1b8] sm:$0xff]
    %v4812 = vld [vmem:[#allocation5 + $0x1c0] sm:$0xff]
    %v4813 = vld [vmem:[#allocation5 + $0x1c8] sm:$0xff]
    %v4814 = vld [vmem:[#allocation5 + $0x1d0] sm:$0xff]
    %v4815 = vld [vmem:[#allocation5 + $0x1d8] sm:$0xff]
    %v4816 = vld [vmem:[#allocation5 + $0x1e0] sm:$0xff]
    %v4817 = vld [vmem:[#allocation5 + $0x1e8] sm:$0xff]
    %v4818 = vld [vmem:[#allocation5 + $0x1f0] sm:$0xff]
    %v4819 = vld [vmem:[#allocation5 + $0x1f8] sm:$0xff]
    %4820 = vmatpush.msra.mxu0 %v4816
    %4821 = vmatpush.msra.mxu0 %v4812
    %4822 = vmatpush.msra.mxu0 %v4808
    %4823 = vmatpush.msra.mxu0 %v4804
    %4824 = vmatpush.msra.mxu0 %v4800
    %4825 = vmatpush.msra.mxu0 %v4796
    %4826 = vmatpush.msra.mxu0 %v4792
    %4827 = vmatpush.msra.mxu0 %v4788
    %4828 = vmatpush.msra.mxu0 %v4784
    %4829 = vmatpush.msra.mxu0 %v4780
    %4830 = vmatpush.msra.mxu0 %v4776
    %4831 = vmatpush.msra.mxu0 %v4772
    %4832 = vmatpush.msra.mxu0 %v4768
    %4833 = vmatpush.msra.mxu0 %v4764
    %4834 = vmatpush.msra.mxu0 %v4760
    %4835 = vmatpush.msra.mxu0 %v4756
    %4836 = vmatmul.f32.gmra.mxu0 %v4755
    %v4837 = vpop.f32.mrf.mxu0
    %v4838 = vadd.f32 0.0, %v4837
    %4839 = vdwg.mxu0
    %4840 = vmatpush.msra.mxu0 %v4817
    %4841 = vmatpush.msra.mxu0 %v4813
    %4842 = vmatpush.msra.mxu0 %v4809
    %4843 = vmatpush.msra.mxu0 %v4805
    %4844 = vmatpush.msra.mxu0 %v4801
    %4845 = vmatpush.msra.mxu0 %v4797
    %4846 = vmatpush.msra.mxu0 %v4793
    %4847 = vmatpush.msra.mxu0 %v4789
    %4848 = vmatpush.msra.mxu0 %v4785
    %4849 = vmatpush.msra.mxu0 %v4781
    %4850 = vmatpush.msra.mxu0 %v4777
    %4851 = vmatpush.msra.mxu0 %v4773
    %4852 = vmatpush.msra.mxu0 %v4769
    %4853 = vmatpush.msra.mxu0 %v4765
    %4854 = vmatpush.msra.mxu0 %v4761
    %4855 = vmatpush.msra.mxu0 %v4757
    %4856 = vmatmul.f32.gmra.mxu0 %v4755
    %v4857 = vpop.f32.mrf.mxu0
    %v4858 = vadd.f32 0.0, %v4857
    %4859 = vdwg.mxu0
    %4860 = vmatpush.msra.mxu0 %v4818
    %4861 = vmatpush.msra.mxu0 %v4814
    %4862 = vmatpush.msra.mxu0 %v4810
    %4863 = vmatpush.msra.mxu0 %v4806
    %4864 = vmatpush.msra.mxu0 %v4802
    %4865 = vmatpush.msra.mxu0 %v4798
    %4866 = vmatpush.msra.mxu0 %v4794
    %4867 = vmatpush.msra.mxu0 %v4790
    %4868 = vmatpush.msra.mxu0 %v4786
    %4869 = vmatpush.msra.mxu0 %v4782
    %4870 = vmatpush.msra.mxu0 %v4778
    %4871 = vmatpush.msra.mxu0 %v4774
    %4872 = vmatpush.msra.mxu0 %v4770
    %4873 = vmatpush.msra.mxu0 %v4766
    %4874 = vmatpush.msra.mxu0 %v4762
    %4875 = vmatpush.msra.mxu0 %v4758
    %4876 = vmatmul.f32.gmra.mxu0 %v4755
    %v4877 = vpop.f32.mrf.mxu0
    %v4878 = vadd.f32 0.0, %v4877
    %4879 = vdwg.mxu0
    %4880 = vmatpush.msra.mxu0 %v4819
    %4881 = vmatpush.msra.mxu0 %v4815
    %4882 = vmatpush.msra.mxu0 %v4811
    %4883 = vmatpush.msra.mxu0 %v4807
    %4884 = vmatpush.msra.mxu0 %v4803
    %4885 = vmatpush.msra.mxu0 %v4799
    %4886 = vmatpush.msra.mxu0 %v4795
    %4887 = vmatpush.msra.mxu0 %v4791
    %4888 = vmatpush.msra.mxu0 %v4787
    %4889 = vmatpush.msra.mxu0 %v4783
    %4890 = vmatpush.msra.mxu0 %v4779
    %4891 = vmatpush.msra.mxu0 %v4775
    %4892 = vmatpush.msra.mxu0 %v4771
    %4893 = vmatpush.msra.mxu0 %v4767
    %4894 = vmatpush.msra.mxu0 %v4763
    %4895 = vmatpush.msra.mxu0 %v4759
    %4896 = vmatmul.f32.gmra.mxu0 %v4755
    %v4897 = vpop.f32.mrf.mxu0
    %v4898 = vadd.f32 0.0, %v4897
    %4899 = vdwg.mxu0
    %v4900 = vadd.f32 %v4751, %v4838
    %v4901 = vadd.f32 %v4752, %v4858
    %v4902 = vadd.f32 %v4753, %v4878
    %v4903 = vadd.f32 %v4754, %v4898
    %v4904 = vld [vmem:[#allocation3] sm:$0xff]
    %v4905 = vxor.u32 %v4900, 2147483648
    %v4906 = vmul.f32 %v4905, 1.442695
    %v4907 = vpow.pop %v4906
    %v4908 = vadd.f32 %v4907, 1.0
    %v4909 = vrcp.pop %v4908
    %v4910 = vmul.f32 %v4908, %v4909
    %v4911 = vsub.f32 1.0, %v4910
    %v4912 = vmul.f32 %v4909, %v4911
    %v4913 = vadd.f32 %v4909, %v4912
    %vm4914 = vweird.f32 %v4908
    %vm4915 = vweird.f32 %v4909
    %vm4916 = vmor %vm4914, %vm4915
    %v4917 = vsel %vm4916, %v4909, %v4913
    %v4918 = vand.u32 2147483647, %v4908
    %vm4919 = vcmp.eq.f32.partialorder %v4918, 8.507059e+37
    %v4920 = vand.u32 %v4908, 2147483648
    %v4921 = vor.u32 1.1754944e-38, %v4920
    %v4922 = vsel %vm4919, %v4921, %v4917
    %v4923 = vmul.f32 1.0, %v4922
    %v4924 = vxor.u32 %v4901, 2147483648
    %v4925 = vmul.f32 %v4924, 1.442695
    %v4926 = vpow.pop %v4925
    %v4927 = vadd.f32 %v4926, 1.0
    %v4928 = vrcp.pop %v4927
    %v4929 = vmul.f32 %v4927, %v4928
    %v4930 = vsub.f32 1.0, %v4929
    %v4931 = vmul.f32 %v4928, %v4930
    %v4932 = vadd.f32 %v4928, %v4931
    %vm4933 = vweird.f32 %v4927
    %vm4934 = vweird.f32 %v4928
    %vm4935 = vmor %vm4933, %vm4934
    %v4936 = vsel %vm4935, %v4928, %v4932
    %v4937 = vand.u32 2147483647, %v4927
    %vm4938 = vcmp.eq.f32.partialorder %v4937, 8.507059e+37
    %v4939 = vand.u32 %v4927, 2147483648
    %v4940 = vor.u32 1.1754944e-38, %v4939
    %v4941 = vsel %vm4938, %v4940, %v4936
    %v4942 = vmul.f32 1.0, %v4941
    %v4943 = vtanh.pop %v4902
    %v4944 = vxor.u32 %v4903, 2147483648
    %v4945 = vmul.f32 %v4944, 1.442695
    %v4946 = vpow.pop %v4945
    %v4947 = vadd.f32 %v4946, 1.0
    %v4948 = vrcp.pop %v4947
    %v4949 = vmul.f32 %v4947, %v4948
    %v4950 = vsub.f32 1.0, %v4949
    %v4951 = vmul.f32 %v4948, %v4950
    %v4952 = vadd.f32 %v4948, %v4951
    %vm4953 = vweird.f32 %v4947
    %vm4954 = vweird.f32 %v4948
    %vm4955 = vmor %vm4953, %vm4954
    %v4956 = vsel %vm4955, %v4948, %v4952
    %v4957 = vand.u32 2147483647, %v4947
    %vm4958 = vcmp.eq.f32.partialorder %v4957, 8.507059e+37
    %v4959 = vand.u32 %v4947, 2147483648
    %v4960 = vor.u32 1.1754944e-38, %v4959
    %v4961 = vsel %vm4958, %v4960, %v4956
    %v4962 = vmul.f32 1.0, %v4961
    %v4963 = vmul.f32 %v4942, %v4904
    %v4964 = vmul.f32 %v4923, %v4943
    %v4965 = vadd.f32 %v4963, %v4964
    %v4966 = vtanh.pop %v4965
    %v4967 = vmul.f32 %v4962, %v4966
    %4968 = vst [vmem:[#allocation2] sm:$0xff] %v4967
    %4969 = vst [vmem:[#allocation3] sm:$0xff] %v4965
    %v4970 = vld [vmem:[#allocation8] sm:$0xff]
    %v4971 = vld [vmem:[#allocation8 + $0x8] sm:$0xff]
    %v4972 = vld [vmem:[#allocation8 + $0x10] sm:$0xff]
    %v4973 = vld [vmem:[#allocation8 + $0x18] sm:$0xff]
    %v4974 = vld [vmem:[#allocation8 + $0x20] sm:$0xff]
    %v4975 = vld [vmem:[#allocation8 + $0x28] sm:$0xff]
    %v4976 = vld [vmem:[#allocation8 + $0x30] sm:$0xff]
    %v4977 = vld [vmem:[#allocation8 + $0x38] sm:$0xff]
    %v4978 = vld [vmem:[#allocation8 + $0x40] sm:$0xff]
    %v4979 = vld [vmem:[#allocation8 + $0x48] sm:$0xff]
    %v4980 = vld [vmem:[#allocation8 + $0x50] sm:$0xff]
    %v4981 = vld [vmem:[#allocation8 + $0x58] sm:$0xff]
    %v4982 = vld [vmem:[#allocation8 + $0x60] sm:$0xff]
    %v4983 = vld [vmem:[#allocation8 + $0x68] sm:$0xff]
    %v4984 = vld [vmem:[#allocation8 + $0x70] sm:$0xff]
    %v4985 = vld [vmem:[#allocation8 + $0x78] sm:$0xff]
    %v4986 = vld [vmem:[#allocation8 + $0x80] sm:$0xff]
    %v4987 = vld [vmem:[#allocation8 + $0x88] sm:$0xff]
    %v4988 = vld [vmem:[#allocation8 + $0x90] sm:$0xff]
    %v4989 = vld [vmem:[#allocation8 + $0x98] sm:$0xff]
    %v4990 = vld [vmem:[#allocation8 + $0xa0] sm:$0xff]
    %v4991 = vld [vmem:[#allocation8 + $0xa8] sm:$0xff]
    %v4992 = vld [vmem:[#allocation8 + $0xb0] sm:$0xff]
    %v4993 = vld [vmem:[#allocation8 + $0xb8] sm:$0xff]
    %v4994 = vld [vmem:[#allocation8 + $0xc0] sm:$0xff]
    %v4995 = vld [vmem:[#allocation8 + $0xc8] sm:$0xff]
    %v4996 = vld [vmem:[#allocation8 + $0xd0] sm:$0xff]
    %v4997 = vld [vmem:[#allocation8 + $0xd8] sm:$0xff]
    %v4998 = vld [vmem:[#allocation8 + $0xe0] sm:$0xff]
    %v4999 = vld [vmem:[#allocation8 + $0xe8] sm:$0xff]
    %v5000 = vld [vmem:[#allocation8 + $0xf0] sm:$0xff]
    %v5001 = vld [vmem:[#allocation8 + $0xf8] sm:$0xff]
    %v5002 = vld [vmem:[#allocation8 + $0x100] sm:$0xff]
    %v5003 = vld [vmem:[#allocation8 + $0x108] sm:$0xff]
    %v5004 = vld [vmem:[#allocation8 + $0x110] sm:$0xff]
    %v5005 = vld [vmem:[#allocation8 + $0x118] sm:$0xff]
    %v5006 = vld [vmem:[#allocation8 + $0x120] sm:$0xff]
    %v5007 = vld [vmem:[#allocation8 + $0x128] sm:$0xff]
    %v5008 = vld [vmem:[#allocation8 + $0x130] sm:$0xff]
    %v5009 = vld [vmem:[#allocation8 + $0x138] sm:$0xff]
    %v5010 = vld [vmem:[#allocation8 + $0x140] sm:$0xff]
    %v5011 = vld [vmem:[#allocation8 + $0x148] sm:$0xff]
    %v5012 = vld [vmem:[#allocation8 + $0x150] sm:$0xff]
    %v5013 = vld [vmem:[#allocation8 + $0x158] sm:$0xff]
    %v5014 = vld [vmem:[#allocation8 + $0x160] sm:$0xff]
    %v5015 = vld [vmem:[#allocation8 + $0x168] sm:$0xff]
    %v5016 = vld [vmem:[#allocation8 + $0x170] sm:$0xff]
    %v5017 = vld [vmem:[#allocation8 + $0x178] sm:$0xff]
    %v5018 = vld [vmem:[#allocation8 + $0x180] sm:$0xff]
    %v5019 = vld [vmem:[#allocation8 + $0x188] sm:$0xff]
    %v5020 = vld [vmem:[#allocation8 + $0x190] sm:$0xff]
    %v5021 = vld [vmem:[#allocation8 + $0x198] sm:$0xff]
    %v5022 = vld [vmem:[#allocation8 + $0x1a0] sm:$0xff]
    %v5023 = vld [vmem:[#allocation8 + $0x1a8] sm:$0xff]
    %v5024 = vld [vmem:[#allocation8 + $0x1b0] sm:$0xff]
    %v5025 = vld [vmem:[#allocation8 + $0x1b8] sm:$0xff]
    %v5026 = vld [vmem:[#allocation8 + $0x1c0] sm:$0xff]
    %v5027 = vld [vmem:[#allocation8 + $0x1c8] sm:$0xff]
    %v5028 = vld [vmem:[#allocation8 + $0x1d0] sm:$0xff]
    %v5029 = vld [vmem:[#allocation8 + $0x1d8] sm:$0xff]
    %v5030 = vld [vmem:[#allocation8 + $0x1e0] sm:$0xff]
    %v5031 = vld [vmem:[#allocation8 + $0x1e8] sm:$0xff]
    %v5032 = vld [vmem:[#allocation8 + $0x1f0] sm:$0xff]
    %v5033 = vld [vmem:[#allocation8 + $0x1f8] sm:$0xff]
    %v5034 = vld [vmem:[%s648] sm:$0xff]
    %v5035 = vld [vmem:[#allocation10] sm:$0xff]
    %v5036 = vld [vmem:[#allocation10 + $0x8] sm:$0xff]
    %v5037 = vld [vmem:[#allocation10 + $0x10] sm:$0xff]
    %v5038 = vld [vmem:[#allocation10 + $0x18] sm:$0xff]
    %v5039 = vld [vmem:[#allocation10 + $0x20] sm:$0xff]
    %v5040 = vld [vmem:[#allocation10 + $0x28] sm:$0xff]
    %v5041 = vld [vmem:[#allocation10 + $0x30] sm:$0xff]
    %v5042 = vld [vmem:[#allocation10 + $0x38] sm:$0xff]
    %v5043 = vld [vmem:[#allocation10 + $0x40] sm:$0xff]
    %v5044 = vld [vmem:[#allocation10 + $0x48] sm:$0xff]
    %v5045 = vld [vmem:[#allocation10 + $0x50] sm:$0xff]
    %v5046 = vld [vmem:[#allocation10 + $0x58] sm:$0xff]
    %v5047 = vld [vmem:[#allocation10 + $0x60] sm:$0xff]
    %v5048 = vld [vmem:[#allocation10 + $0x68] sm:$0xff]
    %v5049 = vld [vmem:[#allocation10 + $0x70] sm:$0xff]
    %v5050 = vld [vmem:[#allocation10 + $0x78] sm:$0xff]
    %v5051 = vld [vmem:[#allocation10 + $0x80] sm:$0xff]
    %v5052 = vld [vmem:[#allocation10 + $0x88] sm:$0xff]
    %v5053 = vld [vmem:[#allocation10 + $0x90] sm:$0xff]
    %v5054 = vld [vmem:[#allocation10 + $0x98] sm:$0xff]
    %v5055 = vld [vmem:[#allocation10 + $0xa0] sm:$0xff]
    %v5056 = vld [vmem:[#allocation10 + $0xa8] sm:$0xff]
    %v5057 = vld [vmem:[#allocation10 + $0xb0] sm:$0xff]
    %v5058 = vld [vmem:[#allocation10 + $0xb8] sm:$0xff]
    %v5059 = vld [vmem:[#allocation10 + $0xc0] sm:$0xff]
    %v5060 = vld [vmem:[#allocation10 + $0xc8] sm:$0xff]
    %v5061 = vld [vmem:[#allocation10 + $0xd0] sm:$0xff]
    %v5062 = vld [vmem:[#allocation10 + $0xd8] sm:$0xff]
    %v5063 = vld [vmem:[#allocation10 + $0xe0] sm:$0xff]
    %v5064 = vld [vmem:[#allocation10 + $0xe8] sm:$0xff]
    %v5065 = vld [vmem:[#allocation10 + $0xf0] sm:$0xff]
    %v5066 = vld [vmem:[#allocation10 + $0xf8] sm:$0xff]
    %v5067 = vld [vmem:[#allocation10 + $0x100] sm:$0xff]
    %v5068 = vld [vmem:[#allocation10 + $0x108] sm:$0xff]
    %v5069 = vld [vmem:[#allocation10 + $0x110] sm:$0xff]
    %v5070 = vld [vmem:[#allocation10 + $0x118] sm:$0xff]
    %v5071 = vld [vmem:[#allocation10 + $0x120] sm:$0xff]
    %v5072 = vld [vmem:[#allocation10 + $0x128] sm:$0xff]
    %v5073 = vld [vmem:[#allocation10 + $0x130] sm:$0xff]
    %v5074 = vld [vmem:[#allocation10 + $0x138] sm:$0xff]
    %v5075 = vld [vmem:[#allocation10 + $0x140] sm:$0xff]
    %v5076 = vld [vmem:[#allocation10 + $0x148] sm:$0xff]
    %v5077 = vld [vmem:[#allocation10 + $0x150] sm:$0xff]
    %v5078 = vld [vmem:[#allocation10 + $0x158] sm:$0xff]
    %v5079 = vld [vmem:[#allocation10 + $0x160] sm:$0xff]
    %v5080 = vld [vmem:[#allocation10 + $0x168] sm:$0xff]
    %v5081 = vld [vmem:[#allocation10 + $0x170] sm:$0xff]
    %v5082 = vld [vmem:[#allocation10 + $0x178] sm:$0xff]
    %v5083 = vld [vmem:[#allocation10 + $0x180] sm:$0xff]
    %v5084 = vld [vmem:[#allocation10 + $0x188] sm:$0xff]
    %v5085 = vld [vmem:[#allocation10 + $0x190] sm:$0xff]
    %v5086 = vld [vmem:[#allocation10 + $0x198] sm:$0xff]
    %v5087 = vld [vmem:[#allocation10 + $0x1a0] sm:$0xff]
    %v5088 = vld [vmem:[#allocation10 + $0x1a8] sm:$0xff]
    %v5089 = vld [vmem:[#allocation10 + $0x1b0] sm:$0xff]
    %v5090 = vld [vmem:[#allocation10 + $0x1b8] sm:$0xff]
    %v5091 = vld [vmem:[#allocation10 + $0x1c0] sm:$0xff]
    %v5092 = vld [vmem:[#allocation10 + $0x1c8] sm:$0xff]
    %v5093 = vld [vmem:[#allocation10 + $0x1d0] sm:$0xff]
    %v5094 = vld [vmem:[#allocation10 + $0x1d8] sm:$0xff]
    %v5095 = vld [vmem:[#allocation10 + $0x1e0] sm:$0xff]
    %v5096 = vld [vmem:[#allocation10 + $0x1e8] sm:$0xff]
    %v5097 = vld [vmem:[#allocation10 + $0x1f0] sm:$0xff]
    %v5098 = vld [vmem:[#allocation10 + $0x1f8] sm:$0xff]
    %5099 = vmatpush.msra.mxu0 %v5095
    %5100 = vmatpush.msra.mxu0 %v5091
    %5101 = vmatpush.msra.mxu0 %v5087
    %5102 = vmatpush.msra.mxu0 %v5083
    %5103 = vmatpush.msra.mxu0 %v5079
    %5104 = vmatpush.msra.mxu0 %v5075
    %5105 = vmatpush.msra.mxu0 %v5071
    %5106 = vmatpush.msra.mxu0 %v5067
    %5107 = vmatpush.msra.mxu0 %v5063
    %5108 = vmatpush.msra.mxu0 %v5059
    %5109 = vmatpush.msra.mxu0 %v5055
    %5110 = vmatpush.msra.mxu0 %v5051
    %5111 = vmatpush.msra.mxu0 %v5047
    %5112 = vmatpush.msra.mxu0 %v5043
    %5113 = vmatpush.msra.mxu0 %v5039
    %5114 = vmatpush.msra.mxu0 %v5035
    %5115 = vmatmul.f32.gmra.mxu0 %v5034
    %v5116 = vpop.f32.mrf.mxu0
    %v5117 = vadd.f32 0.0, %v5116
    %5118 = vdwg.mxu0
    %5119 = vmatpush.msra.mxu0 %v5096
    %5120 = vmatpush.msra.mxu0 %v5092
    %5121 = vmatpush.msra.mxu0 %v5088
    %5122 = vmatpush.msra.mxu0 %v5084
    %5123 = vmatpush.msra.mxu0 %v5080
    %5124 = vmatpush.msra.mxu0 %v5076
    %5125 = vmatpush.msra.mxu0 %v5072
    %5126 = vmatpush.msra.mxu0 %v5068
    %5127 = vmatpush.msra.mxu0 %v5064
    %5128 = vmatpush.msra.mxu0 %v5060
    %5129 = vmatpush.msra.mxu0 %v5056
    %5130 = vmatpush.msra.mxu0 %v5052
    %5131 = vmatpush.msra.mxu0 %v5048
    %5132 = vmatpush.msra.mxu0 %v5044
    %5133 = vmatpush.msra.mxu0 %v5040
    %5134 = vmatpush.msra.mxu0 %v5036
    %5135 = vmatmul.f32.gmra.mxu0 %v5034
    %v5136 = vpop.f32.mrf.mxu0
    %v5137 = vadd.f32 0.0, %v5136
    %5138 = vdwg.mxu0
    %5139 = vmatpush.msra.mxu0 %v5097
    %5140 = vmatpush.msra.mxu0 %v5093
    %5141 = vmatpush.msra.mxu0 %v5089
    %5142 = vmatpush.msra.mxu0 %v5085
    %5143 = vmatpush.msra.mxu0 %v5081
    %5144 = vmatpush.msra.mxu0 %v5077
    %5145 = vmatpush.msra.mxu0 %v5073
    %5146 = vmatpush.msra.mxu0 %v5069
    %5147 = vmatpush.msra.mxu0 %v5065
    %5148 = vmatpush.msra.mxu0 %v5061
    %5149 = vmatpush.msra.mxu0 %v5057
    %5150 = vmatpush.msra.mxu0 %v5053
    %5151 = vmatpush.msra.mxu0 %v5049
    %5152 = vmatpush.msra.mxu0 %v5045
    %5153 = vmatpush.msra.mxu0 %v5041
    %5154 = vmatpush.msra.mxu0 %v5037
    %5155 = vmatmul.f32.gmra.mxu0 %v5034
    %v5156 = vpop.f32.mrf.mxu0
    %v5157 = vadd.f32 0.0, %v5156
    %5158 = vdwg.mxu0
    %5159 = vmatpush.msra.mxu0 %v5098
    %5160 = vmatpush.msra.mxu0 %v5094
    %5161 = vmatpush.msra.mxu0 %v5090
    %5162 = vmatpush.msra.mxu0 %v5086
    %5163 = vmatpush.msra.mxu0 %v5082
    %5164 = vmatpush.msra.mxu0 %v5078
    %5165 = vmatpush.msra.mxu0 %v5074
    %5166 = vmatpush.msra.mxu0 %v5070
    %5167 = vmatpush.msra.mxu0 %v5066
    %5168 = vmatpush.msra.mxu0 %v5062
    %5169 = vmatpush.msra.mxu0 %v5058
    %5170 = vmatpush.msra.mxu0 %v5054
    %5171 = vmatpush.msra.mxu0 %v5050
    %5172 = vmatpush.msra.mxu0 %v5046
    %5173 = vmatpush.msra.mxu0 %v5042
    %5174 = vmatpush.msra.mxu0 %v5038
    %5175 = vmatmul.f32.gmra.mxu0 %v5034
    %v5176 = vpop.f32.mrf.mxu0
    %v5177 = vadd.f32 0.0, %v5176
    %5178 = vdwg.mxu0
    %5179 = vmatpush.msra.mxu0 %v5030
    %5180 = vmatpush.msra.mxu0 %v5026
    %5181 = vmatpush.msra.mxu0 %v5022
    %5182 = vmatpush.msra.mxu0 %v5018
    %5183 = vmatpush.msra.mxu0 %v5014
    %5184 = vmatpush.msra.mxu0 %v5010
    %5185 = vmatpush.msra.mxu0 %v5006
    %5186 = vmatpush.msra.mxu0 %v5002
    %5187 = vmatpush.msra.mxu0 %v4998
    %5188 = vmatpush.msra.mxu0 %v4994
    %5189 = vmatpush.msra.mxu0 %v4990
    %5190 = vmatpush.msra.mxu0 %v4986
    %5191 = vmatpush.msra.mxu0 %v4982
    %5192 = vmatpush.msra.mxu0 %v4978
    %5193 = vmatpush.msra.mxu0 %v4974
    %5194 = vmatpush.msra.mxu0 %v4970
    %5195 = vmatmul.f32.gmra.mxu0 %v4967
    %v5196 = vpop.f32.mrf.mxu0
    %v5197 = vadd.f32 %v5117, %v5196
    %5198 = vdwg.mxu0
    %5199 = vmatpush.msra.mxu0 %v5031
    %5200 = vmatpush.msra.mxu0 %v5027
    %5201 = vmatpush.msra.mxu0 %v5023
    %5202 = vmatpush.msra.mxu0 %v5019
    %5203 = vmatpush.msra.mxu0 %v5015
    %5204 = vmatpush.msra.mxu0 %v5011
    %5205 = vmatpush.msra.mxu0 %v5007
    %5206 = vmatpush.msra.mxu0 %v5003
    %5207 = vmatpush.msra.mxu0 %v4999
    %5208 = vmatpush.msra.mxu0 %v4995
    %5209 = vmatpush.msra.mxu0 %v4991
    %5210 = vmatpush.msra.mxu0 %v4987
    %5211 = vmatpush.msra.mxu0 %v4983
    %5212 = vmatpush.msra.mxu0 %v4979
    %5213 = vmatpush.msra.mxu0 %v4975
    %5214 = vmatpush.msra.mxu0 %v4971
    %5215 = vmatmul.f32.gmra.mxu0 %v4967
    %v5216 = vpop.f32.mrf.mxu0
    %v5217 = vadd.f32 %v5137, %v5216
    %5218 = vdwg.mxu0
    %5219 = vmatpush.msra.mxu0 %v5032
    %5220 = vmatpush.msra.mxu0 %v5028
    %5221 = vmatpush.msra.mxu0 %v5024
    %5222 = vmatpush.msra.mxu0 %v5020
    %5223 = vmatpush.msra.mxu0 %v5016
    %5224 = vmatpush.msra.mxu0 %v5012
    %5225 = vmatpush.msra.mxu0 %v5008
    %5226 = vmatpush.msra.mxu0 %v5004
    %5227 = vmatpush.msra.mxu0 %v5000
    %5228 = vmatpush.msra.mxu0 %v4996
    %5229 = vmatpush.msra.mxu0 %v4992
    %5230 = vmatpush.msra.mxu0 %v4988
    %5231 = vmatpush.msra.mxu0 %v4984
    %5232 = vmatpush.msra.mxu0 %v4980
    %5233 = vmatpush.msra.mxu0 %v4976
    %5234 = vmatpush.msra.mxu0 %v4972
    %5235 = vmatmul.f32.gmra.mxu0 %v4967
    %v5236 = vpop.f32.mrf.mxu0
    %v5237 = vadd.f32 %v5157, %v5236
    %5238 = vdwg.mxu0
    %5239 = vmatpush.msra.mxu0 %v5033
    %5240 = vmatpush.msra.mxu0 %v5029
    %5241 = vmatpush.msra.mxu0 %v5025
    %5242 = vmatpush.msra.mxu0 %v5021
    %5243 = vmatpush.msra.mxu0 %v5017
    %5244 = vmatpush.msra.mxu0 %v5013
    %5245 = vmatpush.msra.mxu0 %v5009
    %5246 = vmatpush.msra.mxu0 %v5005
    %5247 = vmatpush.msra.mxu0 %v5001
    %5248 = vmatpush.msra.mxu0 %v4997
    %5249 = vmatpush.msra.mxu0 %v4993
    %5250 = vmatpush.msra.mxu0 %v4989
    %5251 = vmatpush.msra.mxu0 %v4985
    %5252 = vmatpush.msra.mxu0 %v4981
    %5253 = vmatpush.msra.mxu0 %v4977
    %5254 = vmatpush.msra.mxu0 %v4973
    %5255 = vmatmul.f32.gmra.mxu0 %v4967
    %v5256 = vpop.f32.mrf.mxu0
    %v5257 = vadd.f32 %v5177, %v5256
    %5258 = vdwg.mxu0
    %v5259 = vadd.f32 %v5197, %v875
    %v5260 = vadd.f32 %v5217, %v876
    %v5261 = vadd.f32 %v5237, %v877
    %v5262 = vadd.f32 %v5257, %v878
    %v5263 = vld [vmem:[%s887] sm:$0xff]
    %v5264 = vxor.u32 %v5259, 2147483648
    %v5265 = vmul.f32 %v5264, 1.442695
    %v5266 = vpow.pop %v5265
    %v5267 = vadd.f32 %v5266, 1.0
    %v5268 = vrcp.pop %v5267
    %v5269 = vmul.f32 %v5267, %v5268
    %v5270 = vsub.f32 1.0, %v5269
    %v5271 = vmul.f32 %v5268, %v5270
    %v5272 = vadd.f32 %v5268, %v5271
    %vm5273 = vweird.f32 %v5267
    %vm5274 = vweird.f32 %v5268
    %vm5275 = vmor %vm5273, %vm5274
    %v5276 = vsel %vm5275, %v5268, %v5272
    %v5277 = vand.u32 2147483647, %v5267
    %vm5278 = vcmp.eq.f32.partialorder %v5277, 8.507059e+37
    %v5279 = vand.u32 %v5267, 2147483648
    %v5280 = vor.u32 1.1754944e-38, %v5279
    %v5281 = vsel %vm5278, %v5280, %v5276
    %v5282 = vmul.f32 1.0, %v5281
    %v5283 = vxor.u32 %v5260, 2147483648
    %v5284 = vmul.f32 %v5283, 1.442695
    %v5285 = vpow.pop %v5284
    %v5286 = vadd.f32 %v5285, 1.0
    %v5287 = vrcp.pop %v5286
    %v5288 = vmul.f32 %v5286, %v5287
    %v5289 = vsub.f32 1.0, %v5288
    %v5290 = vmul.f32 %v5287, %v5289
    %v5291 = vadd.f32 %v5287, %v5290
    %vm5292 = vweird.f32 %v5286
    %vm5293 = vweird.f32 %v5287
    %vm5294 = vmor %vm5292, %vm5293
    %v5295 = vsel %vm5294, %v5287, %v5291
    %v5296 = vand.u32 2147483647, %v5286
    %vm5297 = vcmp.eq.f32.partialorder %v5296, 8.507059e+37
    %v5298 = vand.u32 %v5286, 2147483648
    %v5299 = vor.u32 1.1754944e-38, %v5298
    %v5300 = vsel %vm5297, %v5299, %v5295
    %v5301 = vmul.f32 1.0, %v5300
    %v5302 = vtanh.pop %v5261
    %v5303 = vxor.u32 %v5262, 2147483648
    %v5304 = vmul.f32 %v5303, 1.442695
    %v5305 = vpow.pop %v5304
    %v5306 = vadd.f32 %v5305, 1.0
    %v5307 = vrcp.pop %v5306
    %v5308 = vmul.f32 %v5306, %v5307
    %v5309 = vsub.f32 1.0, %v5308
    %v5310 = vmul.f32 %v5307, %v5309
    %v5311 = vadd.f32 %v5307, %v5310
    %vm5312 = vweird.f32 %v5306
    %vm5313 = vweird.f32 %v5307
    %vm5314 = vmor %vm5312, %vm5313
    %v5315 = vsel %vm5314, %v5307, %v5311
    %v5316 = vand.u32 2147483647, %v5306
    %vm5317 = vcmp.eq.f32.partialorder %v5316, 8.507059e+37
    %v5318 = vand.u32 %v5306, 2147483648
    %v5319 = vor.u32 1.1754944e-38, %v5318
    %v5320 = vsel %vm5317, %v5319, %v5315
    %v5321 = vmul.f32 1.0, %v5320
    %v5322 = vmul.f32 %v5301, %v5263
    %v5323 = vmul.f32 %v5282, %v5302
    %v5324 = vadd.f32 %v5322, %v5323
    %v5325 = vtanh.pop %v5324
    %v5326 = vmul.f32 %v5321, %v5325
    %5327 = vst [vmem:[%s648] sm:$0xff] %v5326
    %5328 = vst [vmem:[%s887] sm:$0xff] %v5324
    %p5329 = scmp.eq.s32.totalorder %s4749, 7
    // Predicated region
    $region86: #{tpu_custom_call.1} parent=1 // pred_check
      %p5330 = pneg %p5329
    $region87: #{tpu_custom_call.1} parent=1 // pred_check_branch
      %5332 = sbr.rel (%p5330) target = $region89
    $region88: #{tpu_custom_call.1} parent=1 // pred_region
      %v5333 = vld [vmem:[#allocation11] sm:$0xff]
      %v5334 = vld [vmem:[#allocation11 + $0x8] sm:$0xff]
      %v5335 = vld [vmem:[#allocation11 + $0x10] sm:$0xff]
      %v5336 = vld [vmem:[#allocation11 + $0x18] sm:$0xff]
      %v5337 = vld [vmem:[#allocation11 + $0x20] sm:$0xff]
      %v5338 = vld [vmem:[#allocation11 + $0x28] sm:$0xff]
      %v5339 = vld [vmem:[#allocation11 + $0x30] sm:$0xff]
      %v5340 = vld [vmem:[#allocation11 + $0x38] sm:$0xff]
      %v5341 = vld [vmem:[#allocation11 + $0x40] sm:$0xff]
      %v5342 = vld [vmem:[#allocation11 + $0x48] sm:$0xff]
      %v5343 = vld [vmem:[#allocation11 + $0x50] sm:$0xff]
      %v5344 = vld [vmem:[#allocation11 + $0x58] sm:$0xff]
      %v5345 = vld [vmem:[#allocation11 + $0x60] sm:$0xff]
      %v5346 = vld [vmem:[#allocation11 + $0x68] sm:$0xff]
      %v5347 = vld [vmem:[#allocation11 + $0x70] sm:$0xff]
      %v5348 = vld [vmem:[#allocation11 + $0x78] sm:$0xff]
      %v5349 = vld [vmem:[%s8] sm:$0x1]
      %v5351 = vperm.slane %v5349, 0
      %5353 = vmatpush.msra.mxu0 %v5348
      %5354 = vmatpush.msra.mxu0 %v5347
      %5355 = vmatpush.msra.mxu0 %v5346
      %5356 = vmatpush.msra.mxu0 %v5345
      %5357 = vmatpush.msra.mxu0 %v5344
      %5358 = vmatpush.msra.mxu0 %v5343
      %5359 = vmatpush.msra.mxu0 %v5342
      %5360 = vmatpush.msra.mxu0 %v5341
      %5361 = vmatpush.msra.mxu0 %v5340
      %5362 = vmatpush.msra.mxu0 %v5339
      %5363 = vmatpush.msra.mxu0 %v5338
      %5364 = vmatpush.msra.mxu0 %v5337
      %5365 = vmatpush.msra.mxu0 %v5336
      %5366 = vmatpush.msra.mxu0 %v5335
      %5367 = vmatpush.msra.mxu0 %v5334
      %5368 = vmatpush.msra.mxu0 %v5333
      %5369 = vmatmul.f32.gmra.mxu0 %v5326
      %v5370 = vpop.f32.mrf.mxu0
      %v5371 = vadd.f32 %v5351, %v5370
      %5372 = vdwg.mxu0
      %5373 = vst [vmem:[#allocation13] sm:$0xff] %v5371
    $region89: #{tpu_custom_call.1} parent=1 // pred_fallthru
      _
    // Predicated region
    $region90: #{tpu_custom_call.1} parent=1 // pred_check
      _
    $region91: #{tpu_custom_call.1} parent=1 // pred_check_branch
      %5375 = sbr.rel (0) target = $region93
    $region92: #{tpu_custom_call.1} parent=1 // pred_region
      %5377 = vsyncadd [#allocation7], 0
      %s5379 = sshll.u32 [#allocation13], 4
      %s5380 = int_to_ptr.vmem [resolvable:$true] %s5379
      %s5381 = sshll.u32 %s9, 4
      %s5382 = int_to_ptr.hbm [resolvable:$true] %s5381
      %5384 = dma.vmem_to_hbm [thread:$0]  %s5380, 128, %s5382, [#allocation7]
    $region93: #{tpu_custom_call.1} parent=1 // pred_fallthru
      _
    // Predicated region
    $region94: #{tpu_custom_call.1} parent=1 // pred_check
      _
    $region95: #{tpu_custom_call.1} parent=1 // pred_check_branch
      %5386 = sbr.rel (0) target = $region97
    $region96: #{tpu_custom_call.1} parent=1 // pred_region
      %5388 = dma.done [#allocation7], 128
    $region97: #{tpu_custom_call.1} parent=1 // pred_fallthru
      _
    %5389 = vsyncpa [#allocation6], 1
    %5390 = vsyncpa [#allocation9], 1
    %5391 = vsyncpa [#allocation12], 1
    %5392 = vsyncpa [#allocation7], 1

</llo_original>
